<compile_context>
chip_gen: v5e
topology: v5e:2x2
jax: 0.10.0
libtpu: 0.0.40
codegen_flags: <defaults>
</compile_context>

<pallas_src>
import functools

import jax
import jax.numpy as jnp
from jax.experimental import pallas as pl
from jax.experimental.pallas import tpu as pltpu


def _perceptual_kernel(H, W, C2, nb, fold_conv2,
                       p_ref, w1_ref, b1_ref, w2_ref,
                       out_ref, dpad_ref):
    """One grid step = nb images.  out_ref (1, 1, 2*C2) accumulates per-channel sums
    of |diff| for conv1 (lanes [:C2]) and conv2-of-ReLU-diff (lanes [C2:])."""
    s = pl.program_id(1)
    M = nb * H * W
    K1 = p_ref.shape[-1]                     # 9 * C1

    @pl.when(s == 0)
    def _():
        # Per-output-block accumulator init + zero of the padded scratch
        # (border must be zero; the interior is overwritten every step).
        out_ref[...] = jnp.zeros_like(out_ref)
        dpad_ref[...] = jnp.zeros_like(dpad_ref)

    # ----- conv1 (VGG19 features[0]) on x and y stacked along M -----
    # p_ref holds wrapper-built im2col patches: (2, nb*H*W, 9*C1) bf16; rows 0..M-1
    # of the reshaped view are x patches, rows M..2M-1 are y patches.
    p1 = p_ref[...].reshape(2 * M, K1)                                    # (2M, 9*C1)
    f1 = jnp.dot(p1, w1_ref[...], preferred_element_type=jnp.float32)     # (2M, C2) f32

    # loss1 term: the bias b1 cancels in f1x - f1y.
    s1 = jnp.sum(jnp.abs(f1[:M] - f1[M:]), axis=0, keepdims=True)         # (1, C2)

    # ReLU needs the bias; conv2's input is the ReLU difference.
    r = jnp.maximum(f1 + b1_ref[...], 0.0)                                # (2M, C2)
    d = r[:M] - r[M:]                                                     # (M, C2) f32

    # Write the interior of the zero-padded scratch (border stays zero).
    dpad_ref[:, 1:H + 1, 1:W + 1, :] = d.reshape(nb, H, W, C2)

    # ----- conv2 (VGG19 features[2]) applied once to the ReLU difference -----
    taps = [dpad_ref[:, dy:dy + H, dx:dx + W, :]                          # (nb, H, W, C2)
            for dy in range(3) for dx in range(3)]
    if fold_conv2:
        # Single K = 9*C2 = 576 matmul (im2col built in VMEM, cast to bf16).
        p2 = jnp.concatenate(taps, axis=-1).reshape(M, 9 * C2).astype(jnp.bfloat16)
        f2d = jnp.dot(p2, w2_ref[...], preferred_element_type=jnp.float32)
    else:
        # Fallback: per-tap K = C2 matmuls accumulated in f32 (same math).
        f2d = jnp.zeros((M, C2), jnp.float32)
        for t, tap in enumerate(taps):
            f2d += jnp.dot(tap.reshape(M, C2).astype(jnp.bfloat16),
                           w2_ref[t * C2:(t + 1) * C2],
                           preferred_element_type=jnp.float32)
    s3 = jnp.sum(jnp.abs(f2d), axis=0, keepdims=True)                     # (1, C2)

    # Lane-dense 2*C2 (=128) accumulator.
    out_ref[...] += jnp.concatenate([s1, s3], axis=-1).reshape(1, 1, 2 * C2)


def _pick_batch_block(B, H, W, C2, vmem_budget_bytes=10 << 20):
    """Largest batch block (divisor of B) whose main per-step buffers fit a VMEM budget."""
    hw = H * W
    hp, wp = H + 2, W + 2
    per_img = (2 * 2 * hw * 27 * 2            # stacked x/y conv1 patches (bf16, double buffered)
               + hp * wp * C2 * 4             # padded ReLU-diff scratch (f32)
               + hw * 9 * C2 * (4 + 2)        # conv2 im2col (f32 build + bf16 copy)
               + 6 * hw * C2 * 4)             # f1 / relu / diff / conv2-out f32 temps
    nb = int(max(1, min(B, vmem_budget_bytes // max(per_img, 1))))
    if B >= 2:
        nb = min(nb, B // 2)                  # keep >=2 batch blocks so both v7x TCs get work
    while B % nb:
        nb -= 1
    return nb


def perceptual_loss2(x_nchw, y_nchw, w1, b1, w2, b2, fold_conv2_taps=True):
    """x/y: (B, C1, H, W) f32;  w1: (C2, C1, 3, 3);  w2: (C2, C2, 3, 3);  b1/b2: (C2,)."""
    B, C1, H, W = x_nchw.shape
    C2 = w1.shape[0]
    HW = H * W
    del b2  # cancels in |conv2(relu f1x)+b2 - conv2(relu f1y)-b2|

    # --- wrapper-side layout plumbing (plain XLA): NHWC pad + conv1 im2col, bf16 cast ---
    def conv1_patches(a):
        a = jnp.transpose(a.astype(jnp.float32), (0, 2, 3, 1))            # NHWC
        a = jnp.pad(a, ((0, 0), (1, 1), (1, 1), (0, 0)))                  # pad=1
        taps = [a[:, dy:dy + H, dx:dx + W, :] for dy in range(3) for dx in range(3)]
        p = jnp.concatenate(taps, axis=-1)                                # (B, H, W, 9*C1)
        return p.reshape(B * HW, 9 * C1).astype(jnp.bfloat16)

    # Stack x and y along a leading axis: one input stream / one DMA per step.
    p = jnp.stack([conv1_patches(x_nchw), conv1_patches(y_nchw)], axis=0)  # (2, B*HW, 9*C1)

    # (Cout, Cin, kh, kw) -> (kh*kw*Cin, Cout); row order matches the patch column order.
    w1k = jnp.transpose(w1, (2, 3, 1, 0)).reshape(9 * C1, C2).astype(jnp.bfloat16)
    w2k = jnp.transpose(w2, (2, 3, 1, 0)).reshape(9 * C2, C2).astype(jnp.bfloat16)
    b1k = b1.reshape(1, C2).astype(jnp.float32)

    nb = _pick_batch_block(B, H, W, C2)
    nblocks = B // nb
    ncore = 2 if nblocks % 2 == 0 else 1       # leading "parallel" axis feeds both v7x cores
    steps = nblocks // ncore

    # TODO(synk): for large images (e.g. 224x224 on v7x's 64 MiB VMEM) tile the image
    # over rows with a 2-row halo instead of whole-image-per-step.

    kernel = functools.partial(_perceptual_kernel, H, W, C2, nb, fold_conv2_taps)

    sums = pl.pallas_call(
        kernel,
        out_shape=jax.ShapeDtypeStruct((ncore, 1, 2 * C2), jnp.float32),
        grid_spec=pltpu.PrefetchScalarGridSpec(
            num_scalar_prefetch=0,
            grid=(ncore, steps),
            in_specs=[
                pl.BlockSpec((2, nb * HW, 9 * C1), lambda g, s: (0, g * steps + s, 0)),
                pl.BlockSpec((9 * C1, C2), lambda g, s: (0, 0)),
                pl.BlockSpec((1, C2), lambda g, s: (0, 0)),
                pl.BlockSpec((9 * C2, C2), lambda g, s: (0, 0)),
            ],
            out_specs=pl.BlockSpec((1, 1, 2 * C2), lambda g, s: (g, 0, 0)),
            scratch_shapes=[
                pltpu.VMEM((nb, H + 2, W + 2, C2), jnp.float32),   # padded ReLU-diff
            ],
        ),
        compiler_params=pltpu.CompilerParams(
            dimension_semantics=("parallel", "arbitrary"),
            vmem_limit_bytes=32 * 1024 * 1024),
    )(p, w1k, b1k, w2k)

    n = B * C2 * H * W                         # L1Loss 'mean' denominator (same for both)
    total = jnp.sum(sums, axis=(0, 1))         # reduce per-core partial sums -> (2*C2,)
    loss1 = jnp.sum(total[:C2]) / n
    loss3 = jnp.sum(total[C2:]) / n
    return 0.5 * loss1 + 0.5 * loss3


def _reference(x, y, w1, b1, w2, b2):
    """Pure-JAX reference (NCHW, same semantics as the PyTorch module)."""
    dn = ('NCHW', 'OIHW', 'NCHW')

    def conv(a, w, b):
        out = jax.lax.conv_general_dilated(a, w, (1, 1), ((1, 1), (1, 1)),
                                           dimension_numbers=dn)
        return out + b.reshape(1, -1, 1, 1)

    f1x, f1y = conv(x, w1, b1), conv(y, w1, b1)
    loss1 = jnp.mean(jnp.abs(f1x - f1y))
    f2x = conv(jax.nn.relu(f1x), w2, b2)
    f2y = conv(jax.nn.relu(f1y), w2, b2)
    loss3 = jnp.mean(jnp.abs(f2x - f2y))
    return 0.5 * loss1 + 0.5 * loss3


if __name__ == "__main__":
    B, C1, H, W = 2, 3, 16, 16
    C2 = 64  # VGG19 first-block channel count

    key = jax.random.PRNGKey(0)
    kx, ky, kw1, kb1, kw2, kb2 = jax.random.split(key, 6)

    x = jax.random.normal(kx, (B, C1, H, W), jnp.float32)
    y = jax.random.normal(ky, (B, C1, H, W), jnp.float32)

    # Deterministic synthetic "VGG19" weights (frozen / eval-mode in the module).
    w1 = 0.05 * jax.random.normal(kw1, (C2, C1, 3, 3), jnp.float32)
    b1 = 0.01 * jax.random.normal(kb1, (C2,), jnp.float32)
    w2 = 0.05 * jax.random.normal(kw2, (C2, C2, 3, 3), jnp.float32)
    b2 = 0.01 * jax.random.normal(kb2, (C2,), jnp.float32)

    # Prefer the folded (single K=576 matmul) conv2; fall back to per-tap matmuls if
    # the installed Mosaic version rejects the unaligned lane-dim im2col concatenate.
    loss, err = None, None
    for fold in (True, False):
        try:
            fn = jax.jit(functools.partial(perceptual_loss2, fold_conv2_taps=fold))
            loss = fn(x, y, w1, b1, w2, b2)
            jax.block_until_ready(loss)
            break
        except Exception as e:  # lowering support differs across jax/Mosaic versions
            loss, err = None, e
    if loss is None:
        raise err

    ref = _reference(x, y, w1, b1, w2, b2)
    assert jnp.allclose(loss, ref, rtol=1e-2, atol=1e-3), (loss, ref)

    print("KERNEL_OK")
</pallas_src>

<mosaic_0001>
module attributes {stable_mosaic.version = 11 : i64} {
  func.func @_perceptual_kernel(%arg0: i32, %arg1: i32, %arg2: memref<2x256x27xbf16, #tpu.memory_space<vmem>>, %arg3: memref<27x64xbf16, #tpu.memory_space<vmem>>, %arg4: memref<1x64xf32, #tpu.memory_space<vmem>>, %arg5: memref<576x64xbf16, #tpu.memory_space<vmem>>, %arg6: memref<1x1x128xf32, #tpu.memory_space<vmem>>, %arg7: memref<1x18x18x64xf32, #tpu.memory_space<vmem>>) attributes {dimension_semantics = [#tpu.dimension_semantics<parallel>, #tpu.dimension_semantics<arbitrary>], iteration_bounds = array<i64: 2, 1>, scalar_prefetch = 0 : i64, scratch_operands = 1 : i64, tpu.core_type = #tpu.core_type<tc>, window_params = [{transform_indices = @transform_0, window_bounds = array<i64: 2, 256, 27>}, {pipeline_mode = #tpu.pipeline_mode<synchronous>, transform_indices = @transform_1, window_bounds = array<i64: 27, 64>}, {pipeline_mode = #tpu.pipeline_mode<synchronous>, transform_indices = @transform_2, window_bounds = array<i64: 1, 64>}, {pipeline_mode = #tpu.pipeline_mode<synchronous>, transform_indices = @transform_3, window_bounds = array<i64: 576, 64>}, {transform_indices = @transform_4, window_bounds = array<i64: 1, 1, 128>}]} {
    %c0_i32 = arith.constant 0 : i32
    %0 = arith.cmpi eq, %arg1, %c0_i32 : i32
    %1 = arith.extui %0 : i1 to i32
    %c0_i32_0 = arith.constant 0 : i32
    %2 = arith.cmpi ne, %1, %c0_i32_0 : i32
    scf.if %2 {
      %cst_57 = arith.constant 0.000000e+00 : f32
      %45 = vector.broadcast %cst_57 : f32 to vector<1x1x128xf32>
      %c0_58 = arith.constant 0 : index
      %c0_59 = arith.constant 0 : index
      %c0_60 = arith.constant 0 : index
      %46 = vector.load %arg6[%c0_58, %c0_59, %c0_60] : memref<1x1x128xf32, #tpu.memory_space<vmem>>, vector<1x1x128xf32>
      tpu.vector_store %arg6[%c0_58, %c0_59, %c0_60], %45 {strides = array<i32>} : memref<1x1x128xf32, #tpu.memory_space<vmem>>, vector<1x1x128xf32>,
      %cst_61 = arith.constant 0.000000e+00 : f32
      %47 = vector.broadcast %cst_61 : f32 to vector<1x18x18x64xf32>
      %c0_62 = arith.constant 0 : index
      %c0_63 = arith.constant 0 : index
      %c0_64 = arith.constant 0 : index
      %c0_65 = arith.constant 0 : index
      %48 = vector.load %arg7[%c0_62, %c0_63, %c0_64, %c0_65] : memref<1x18x18x64xf32, #tpu.memory_space<vmem>>, vector<1x18x18x64xf32>
      tpu.vector_store %arg7[%c0_62, %c0_63, %c0_64, %c0_65], %47 {strides = array<i32>} : memref<1x18x18x64xf32, #tpu.memory_space<vmem>>, vector<1x18x18x64xf32>,
    } else {
    }
    %c0 = arith.constant 0 : index
    %c0_1 = arith.constant 0 : index
    %c0_2 = arith.constant 0 : index
    %3 = vector.load %arg2[%c0, %c0_1, %c0_2] : memref<2x256x27xbf16, #tpu.memory_space<vmem>>, vector<2x256x27xbf16>
    %4 = vector.shape_cast %3 : vector<2x256x27xbf16> to vector<512x27xbf16>
    %c0_3 = arith.constant 0 : index
    %c0_4 = arith.constant 0 : index
    %5 = vector.load %arg3[%c0_3, %c0_4] : memref<27x64xbf16, #tpu.memory_space<vmem>>, vector<27x64xbf16>
    %cst = arith.constant dense<0.000000e+00> : vector<512x64xf32>
    %6 = tpu.matmul %4, %5, %cst {dimension_numbers = #tpu.dot_dimension_numbers<[1], [0], [0], [1], [0, 0, 1, 1], [], []>} : vector<512x27xbf16>, vector<27x64xbf16>, vector<512x64xf32> -> vector<512x64xf32>
    %7 = vector.extract_strided_slice %6 {offsets = [0, 0], sizes = [256, 64], strides = [1, 1]} : vector<512x64xf32> to vector<256x64xf32>
    %8 = vector.extract_strided_slice %6 {offsets = [256, 0], sizes = [256, 64], strides = [1, 1]} : vector<512x64xf32> to vector<256x64xf32>
    %9 = arith.subf %7, %8 : vector<256x64xf32>
    %10 = math.absf %9 : vector<256x64xf32>
    %cst_5 = arith.constant dense<0.000000e+00> : vector<64xf32>
    %11 = vector.multi_reduction <add>, %10, %cst_5 [0] : vector<256x64xf32> to vector<64xf32>
    %12 = vector.shape_cast %11 : vector<64xf32> to vector<1x64xf32>
    %c0_6 = arith.constant 0 : index
    %c0_7 = arith.constant 0 : index
    %13 = vector.load %arg4[%c0_6, %c0_7] : memref<1x64xf32, #tpu.memory_space<vmem>>, vector<1x64xf32>
    %14 = vector.broadcast %13 : vector<1x64xf32> to vector<512x64xf32>
    %15 = arith.addf %6, %14 : vector<512x64xf32>
    %cst_8 = arith.constant 0.000000e+00 : f32
    %16 = vector.broadcast %cst_8 : f32 to vector<512x64xf32>
    %17 = arith.maximumf %15, %16 : vector<512x64xf32>
    %18 = vector.extract_strided_slice %17 {offsets = [0, 0], sizes = [256, 64], strides = [1, 1]} : vector<512x64xf32> to vector<256x64xf32>
    %19 = vector.extract_strided_slice %17 {offsets = [256, 0], sizes = [256, 64], strides = [1, 1]} : vector<512x64xf32> to vector<256x64xf32>
    %20 = arith.subf %18, %19 : vector<256x64xf32>
    %21 = vector.shape_cast %20 : vector<256x64xf32> to vector<1x16x16x64xf32>
    %c0_9 = arith.constant 0 : index
    %c1 = arith.constant 1 : index
    %c1_10 = arith.constant 1 : index
    %c0_11 = arith.constant 0 : index
    %22 = vector.load %arg7[%c0_9, %c1, %c1_10, %c0_11] : memref<1x18x18x64xf32, #tpu.memory_space<vmem>>, vector<1x16x16x64xf32>
    tpu.vector_store %arg7[%c0_9, %c1, %c1_10, %c0_11], %21 {strides = array<i32>} : memref<1x18x18x64xf32, #tpu.memory_space<vmem>>, vector<1x16x16x64xf32>,
    %c0_12 = arith.constant 0 : index
    %c0_13 = arith.constant 0 : index
    %c0_14 = arith.constant 0 : index
    %c0_15 = arith.constant 0 : index
    %23 = vector.load %arg7[%c0_12, %c0_13, %c0_14, %c0_15] : memref<1x18x18x64xf32, #tpu.memory_space<vmem>>, vector<1x16x16x64xf32>
    %c0_16 = arith.constant 0 : index
    %c0_17 = arith.constant 0 : index
    %c1_18 = arith.constant 1 : index
    %c0_19 = arith.constant 0 : index
    %24 = vector.load %arg7[%c0_16, %c0_17, %c1_18, %c0_19] : memref<1x18x18x64xf32, #tpu.memory_space<vmem>>, vector<1x16x16x64xf32>
    %c0_20 = arith.constant 0 : index
    %c0_21 = arith.constant 0 : index
    %c2 = arith.constant 2 : index
    %c0_22 = arith.constant 0 : index
    %25 = vector.load %arg7[%c0_20, %c0_21, %c2, %c0_22] : memref<1x18x18x64xf32, #tpu.memory_space<vmem>>, vector<1x16x16x64xf32>
    %c0_23 = arith.constant 0 : index
    %c1_24 = arith.constant 1 : index
    %c0_25 = arith.constant 0 : index
    %c0_26 = arith.constant 0 : index
    %26 = vector.load %arg7[%c0_23, %c1_24, %c0_25, %c0_26] : memref<1x18x18x64xf32, #tpu.memory_space<vmem>>, vector<1x16x16x64xf32>
    %c0_27 = arith.constant 0 : index
    %c1_28 = arith.constant 1 : index
    %c1_29 = arith.constant 1 : index
    %c0_30 = arith.constant 0 : index
    %27 = vector.load %arg7[%c0_27, %c1_28, %c1_29, %c0_30] : memref<1x18x18x64xf32, #tpu.memory_space<vmem>>, vector<1x16x16x64xf32>
    %c0_31 = arith.constant 0 : index
    %c1_32 = arith.constant 1 : index
    %c2_33 = arith.constant 2 : index
    %c0_34 = arith.constant 0 : index
    %28 = vector.load %arg7[%c0_31, %c1_32, %c2_33, %c0_34] : memref<1x18x18x64xf32, #tpu.memory_space<vmem>>, vector<1x16x16x64xf32>
    %c0_35 = arith.constant 0 : index
    %c2_36 = arith.constant 2 : index
    %c0_37 = arith.constant 0 : index
    %c0_38 = arith.constant 0 : index
    %29 = vector.load %arg7[%c0_35, %c2_36, %c0_37, %c0_38] : memref<1x18x18x64xf32, #tpu.memory_space<vmem>>, vector<1x16x16x64xf32>
    %c0_39 = arith.constant 0 : index
    %c2_40 = arith.constant 2 : index
    %c1_41 = arith.constant 1 : index
    %c0_42 = arith.constant 0 : index
    %30 = vector.load %arg7[%c0_39, %c2_40, %c1_41, %c0_42] : memref<1x18x18x64xf32, #tpu.memory_space<vmem>>, vector<1x16x16x64xf32>
    %c0_43 = arith.constant 0 : index
    %c2_44 = arith.constant 2 : index
    %c2_45 = arith.constant 2 : index
    %c0_46 = arith.constant 0 : index
    %31 = vector.load %arg7[%c0_43, %c2_44, %c2_45, %c0_46] : memref<1x18x18x64xf32, #tpu.memory_space<vmem>>, vector<1x16x16x64xf32>
    %32 = tpu.concatenate %23, %24, %25, %26, %27, %28, %29, %30, %31 in 3 : vector<1x16x16x64xf32>, vector<1x16x16x64xf32>, vector<1x16x16x64xf32>, vector<1x16x16x64xf32>, vector<1x16x16x64xf32>, vector<1x16x16x64xf32>, vector<1x16x16x64xf32>, vector<1x16x16x64xf32>, vector<1x16x16x64xf32> -> vector<1x16x16x576xf32>
    %33 = vector.shape_cast %32 : vector<1x16x16x576xf32> to vector<256x576xf32>
    %34 = arith.truncf %33 : vector<256x576xf32> to vector<256x576xbf16>
    %c0_47 = arith.constant 0 : index
    %c0_48 = arith.constant 0 : index
    %35 = vector.load %arg5[%c0_47, %c0_48] : memref<576x64xbf16, #tpu.memory_space<vmem>>, vector<576x64xbf16>
    %cst_49 = arith.constant dense<0.000000e+00> : vector<256x64xf32>
    %36 = tpu.matmul %34, %35, %cst_49 {dimension_numbers = #tpu.dot_dimension_numbers<[1], [0], [0], [1], [0, 0, 1, 1], [], []>} : vector<256x576xbf16>, vector<576x64xbf16>, vector<256x64xf32> -> vector<256x64xf32>
    %37 = math.absf %36 : vector<256x64xf32>
    %cst_50 = arith.constant dense<0.000000e+00> : vector<64xf32>
    %38 = vector.multi_reduction <add>, %37, %cst_50 [0] : vector<256x64xf32> to vector<64xf32>
    %39 = vector.shape_cast %38 : vector<64xf32> to vector<1x64xf32>
    %c0_51 = arith.constant 0 : index
    %c0_52 = arith.constant 0 : index
    %c0_53 = arith.constant 0 : index
    %40 = vector.load %arg6[%c0_51, %c0_52, %c0_53] : memref<1x1x128xf32, #tpu.memory_space<vmem>>, vector<1x1x128xf32>
    %41 = tpu.concatenate %12, %39 in 1 : vector<1x64xf32>, vector<1x64xf32> -> vector<1x128xf32>
    %42 = vector.shape_cast %41 : vector<1x128xf32> to vector<1x1x128xf32>
    %43 = arith.addf %40, %42 : vector<1x1x128xf32>
    %c0_54 = arith.constant 0 : index
    %c0_55 = arith.constant 0 : index
    %c0_56 = arith.constant 0 : index
    %44 = vector.load %arg6[%c0_54, %c0_55, %c0_56] : memref<1x1x128xf32, #tpu.memory_space<vmem>>, vector<1x1x128xf32>
    tpu.vector_store %arg6[%c0_54, %c0_55, %c0_56], %43 {strides = array<i32>} : memref<1x1x128xf32, #tpu.memory_space<vmem>>, vector<1x1x128xf32>,
    return
  }
  func.func @transform_0(%arg0: i32, %arg1: i32) -> (i32, i32, i32) {
    %c1_i32 = arith.constant 1 : i32
    %0 = arith.muli %arg0, %c1_i32 : i32
    %1 = arith.addi %0, %arg1 : i32
    %c0_i32 = arith.constant 0 : i32
    %c0_i32_0 = arith.constant 0 : i32
    %c0_i32_1 = arith.constant 0 : i32
    return %c0_i32, %1, %c0_i32_0 : i32, i32, i32
  }
  func.func @transform_1(%arg0: i32, %arg1: i32) -> (i32, i32) {
    %c0_i32 = arith.constant 0 : i32
    %c0_i32_0 = arith.constant 0 : i32
    %c0_i32_1 = arith.constant 0 : i32
    return %c0_i32, %c0_i32_0 : i32, i32
  }
  func.func @transform_2(%arg0: i32, %arg1: i32) -> (i32, i32) {
    %c0_i32 = arith.constant 0 : i32
    %c0_i32_0 = arith.constant 0 : i32
    %c0_i32_1 = arith.constant 0 : i32
    return %c0_i32, %c0_i32_0 : i32, i32
  }
  func.func @transform_3(%arg0: i32, %arg1: i32) -> (i32, i32) {
    %c0_i32 = arith.constant 0 : i32
    %c0_i32_0 = arith.constant 0 : i32
    %c0_i32_1 = arith.constant 0 : i32
    return %c0_i32, %c0_i32_0 : i32, i32
  }
  func.func @transform_4(%arg0: i32, %arg1: i32) -> (i32, i32, i32) {
    %c0_i32 = arith.constant 0 : i32
    %c0_i32_0 = arith.constant 0 : i32
    %c0_i32_1 = arith.constant 0 : i32
    return %arg0, %c0_i32, %c0_i32_0 : i32, i32, i32
  }
}

module attributes {stable_mosaic.version = 11 : i64} {
  func.func @_perceptual_kernel(%arg0: i32, %arg1: i32, %arg2: memref<2x256x27xbf16, #tpu.memory_space<vmem>>, %arg3: memref<27x64xbf16, #tpu.memory_space<vmem>>, %arg4: memref<1x64xf32, #tpu.memory_space<vmem>>, %arg5: memref<576x64xbf16, #tpu.memory_space<vmem>>, %arg6: memref<1x1x128xf32, #tpu.memory_space<vmem>>, %arg7: memref<1x18x18x64xf32, #tpu.memory_space<vmem>>) attributes {dimension_semantics = [#tpu.dimension_semantics<parallel>, #tpu.dimension_semantics<arbitrary>], iteration_bounds = array<i64: 2, 1>, scalar_prefetch = 0 : i64, scratch_operands = 1 : i64, tpu.core_type = #tpu.core_type<tc>, window_params = [{transform_indices = @transform_0, window_bounds = array<i64: 2, 256, 27>}, {pipeline_mode = #tpu.pipeline_mode<synchronous>, transform_indices = @transform_1, window_bounds = array<i64: 27, 64>}, {pipeline_mode = #tpu.pipeline_mode<synchronous>, transform_indices = @transform_2, window_bounds = array<i64: 1, 64>}, {pipeline_mode = #tpu.pipeline_mode<synchronous>, transform_indices = @transform_3, window_bounds = array<i64: 576, 64>}, {transform_indices = @transform_4, window_bounds = array<i64: 1, 1, 128>}]} {
    %c0_i32 = arith.constant 0 : i32
    %0 = arith.cmpi eq, %arg1, %c0_i32 : i32
    %1 = arith.extui %0 : i1 to i32
    %c0_i32_0 = arith.constant 0 : i32
    %2 = arith.cmpi ne, %1, %c0_i32_0 : i32
    scf.if %2 {
      %cst_74 = arith.constant 0.000000e+00 : f32
      %86 = vector.broadcast %cst_74 : f32 to vector<1x1x128xf32>
      %c0_75 = arith.constant 0 : index
      %c0_76 = arith.constant 0 : index
      %c0_77 = arith.constant 0 : index
      %87 = vector.load %arg6[%c0_75, %c0_76, %c0_77] : memref<1x1x128xf32, #tpu.memory_space<vmem>>, vector<1x1x128xf32>
      tpu.vector_store %arg6[%c0_75, %c0_76, %c0_77], %86 {strides = array<i32>} : memref<1x1x128xf32, #tpu.memory_space<vmem>>, vector<1x1x128xf32>,
      %cst_78 = arith.constant 0.000000e+00 : f32
      %88 = vector.broadcast %cst_78 : f32 to vector<1x18x18x64xf32>
      %c0_79 = arith.constant 0 : index
      %c0_80 = arith.constant 0 : index
      %c0_81 = arith.constant 0 : index
      %c0_82 = arith.constant 0 : index
      %89 = vector.load %arg7[%c0_79, %c0_80, %c0_81, %c0_82] : memref<1x18x18x64xf32, #tpu.memory_space<vmem>>, vector<1x18x18x64xf32>
      tpu.vector_store %arg7[%c0_79, %c0_80, %c0_81, %c0_82], %88 {strides = array<i32>} : memref<1x18x18x64xf32, #tpu.memory_space<vmem>>, vector<1x18x18x64xf32>,
    } else {
    }
    %c0 = arith.constant 0 : index
    %c0_1 = arith.constant 0 : index
    %c0_2 = arith.constant 0 : index
    %3 = vector.load %arg2[%c0, %c0_1, %c0_2] : memref<2x256x27xbf16, #tpu.memory_space<vmem>>, vector<2x256x27xbf16>
    %4 = vector.shape_cast %3 : vector<2x256x27xbf16> to vector<512x27xbf16>
    %c0_3 = arith.constant 0 : index
    %c0_4 = arith.constant 0 : index
    %5 = vector.load %arg3[%c0_3, %c0_4] : memref<27x64xbf16, #tpu.memory_space<vmem>>, vector<27x64xbf16>
    %cst = arith.constant dense<0.000000e+00> : vector<512x64xf32>
    %6 = tpu.matmul %4, %5, %cst {dimension_numbers = #tpu.dot_dimension_numbers<[1], [0], [0], [1], [0, 0, 1, 1], [], []>} : vector<512x27xbf16>, vector<27x64xbf16>, vector<512x64xf32> -> vector<512x64xf32>
    %7 = vector.extract_strided_slice %6 {offsets = [0, 0], sizes = [256, 64], strides = [1, 1]} : vector<512x64xf32> to vector<256x64xf32>
    %8 = vector.extract_strided_slice %6 {offsets = [256, 0], sizes = [256, 64], strides = [1, 1]} : vector<512x64xf32> to vector<256x64xf32>
    %9 = arith.subf %7, %8 : vector<256x64xf32>
    %10 = math.absf %9 : vector<256x64xf32>
    %cst_5 = arith.constant dense<0.000000e+00> : vector<64xf32>
    %11 = vector.multi_reduction <add>, %10, %cst_5 [0] : vector<256x64xf32> to vector<64xf32>
    %12 = vector.shape_cast %11 : vector<64xf32> to vector<1x64xf32>
    %c0_6 = arith.constant 0 : index
    %c0_7 = arith.constant 0 : index
    %13 = vector.load %arg4[%c0_6, %c0_7] : memref<1x64xf32, #tpu.memory_space<vmem>>, vector<1x64xf32>
    %14 = vector.broadcast %13 : vector<1x64xf32> to vector<512x64xf32>
    %15 = arith.addf %6, %14 : vector<512x64xf32>
    %cst_8 = arith.constant 0.000000e+00 : f32
    %16 = vector.broadcast %cst_8 : f32 to vector<512x64xf32>
    %17 = arith.maximumf %15, %16 : vector<512x64xf32>
    %18 = vector.extract_strided_slice %17 {offsets = [0, 0], sizes = [256, 64], strides = [1, 1]} : vector<512x64xf32> to vector<256x64xf32>
    %19 = vector.extract_strided_slice %17 {offsets = [256, 0], sizes = [256, 64], strides = [1, 1]} : vector<512x64xf32> to vector<256x64xf32>
    %20 = arith.subf %18, %19 : vector<256x64xf32>
    %21 = vector.shape_cast %20 : vector<256x64xf32> to vector<1x16x16x64xf32>
    %c0_9 = arith.constant 0 : index
    %c1 = arith.constant 1 : index
    %c1_10 = arith.constant 1 : index
    %c0_11 = arith.constant 0 : index
    %22 = vector.load %arg7[%c0_9, %c1, %c1_10, %c0_11] : memref<1x18x18x64xf32, #tpu.memory_space<vmem>>, vector<1x16x16x64xf32>
    tpu.vector_store %arg7[%c0_9, %c1, %c1_10, %c0_11], %21 {strides = array<i32>} : memref<1x18x18x64xf32, #tpu.memory_space<vmem>>, vector<1x16x16x64xf32>,
    %c0_12 = arith.constant 0 : index
    %c0_13 = arith.constant 0 : index
    %c0_14 = arith.constant 0 : index
    %c0_15 = arith.constant 0 : index
    %23 = vector.load %arg7[%c0_12, %c0_13, %c0_14, %c0_15] : memref<1x18x18x64xf32, #tpu.memory_space<vmem>>, vector<1x16x16x64xf32>
    %c0_16 = arith.constant 0 : index
    %c0_17 = arith.constant 0 : index
    %c1_18 = arith.constant 1 : index
    %c0_19 = arith.constant 0 : index
    %24 = vector.load %arg7[%c0_16, %c0_17, %c1_18, %c0_19] : memref<1x18x18x64xf32, #tpu.memory_space<vmem>>, vector<1x16x16x64xf32>
    %c0_20 = arith.constant 0 : index
    %c0_21 = arith.constant 0 : index
    %c2 = arith.constant 2 : index
    %c0_22 = arith.constant 0 : index
    %25 = vector.load %arg7[%c0_20, %c0_21, %c2, %c0_22] : memref<1x18x18x64xf32, #tpu.memory_space<vmem>>, vector<1x16x16x64xf32>
    %c0_23 = arith.constant 0 : index
    %c1_24 = arith.constant 1 : index
    %c0_25 = arith.constant 0 : index
    %c0_26 = arith.constant 0 : index
    %26 = vector.load %arg7[%c0_23, %c1_24, %c0_25, %c0_26] : memref<1x18x18x64xf32, #tpu.memory_space<vmem>>, vector<1x16x16x64xf32>
    %c0_27 = arith.constant 0 : index
    %c1_28 = arith.constant 1 : index
    %c1_29 = arith.constant 1 : index
    %c0_30 = arith.constant 0 : index
    %27 = vector.load %arg7[%c0_27, %c1_28, %c1_29, %c0_30] : memref<1x18x18x64xf32, #tpu.memory_space<vmem>>, vector<1x16x16x64xf32>
    %c0_31 = arith.constant 0 : index
    %c1_32 = arith.constant 1 : index
    %c2_33 = arith.constant 2 : index
    %c0_34 = arith.constant 0 : index
    %28 = vector.load %arg7[%c0_31, %c1_32, %c2_33, %c0_34] : memref<1x18x18x64xf32, #tpu.memory_space<vmem>>, vector<1x16x16x64xf32>
    %c0_35 = arith.constant 0 : index
    %c2_36 = arith.constant 2 : index
    %c0_37 = arith.constant 0 : index
    %c0_38 = arith.constant 0 : index
    %29 = vector.load %arg7[%c0_35, %c2_36, %c0_37, %c0_38] : memref<1x18x18x64xf32, #tpu.memory_space<vmem>>, vector<1x16x16x64xf32>
    %c0_39 = arith.constant 0 : index
    %c2_40 = arith.constant 2 : index
    %c1_41 = arith.constant 1 : index
    %c0_42 = arith.constant 0 : index
    %30 = vector.load %arg7[%c0_39, %c2_40, %c1_41, %c0_42] : memref<1x18x18x64xf32, #tpu.memory_space<vmem>>, vector<1x16x16x64xf32>
    %c0_43 = arith.constant 0 : index
    %c2_44 = arith.constant 2 : index
    %c2_45 = arith.constant 2 : index
    %c0_46 = arith.constant 0 : index
    %31 = vector.load %arg7[%c0_43, %c2_44, %c2_45, %c0_46] : memref<1x18x18x64xf32, #tpu.memory_space<vmem>>, vector<1x16x16x64xf32>
    %cst_47 = arith.constant 0.000000e+00 : f32
    %32 = vector.broadcast %cst_47 : f32 to vector<256x64xf32>
    %33 = vector.shape_cast %23 : vector<1x16x16x64xf32> to vector<256x64xf32>
    %34 = arith.truncf %33 : vector<256x64xf32> to vector<256x64xbf16>
    %c0_48 = arith.constant 0 : index
    %c0_49 = arith.constant 0 : index
    %35 = vector.load %arg5[%c0_48, %c0_49] : memref<576x64xbf16, #tpu.memory_space<vmem>>, vector<64x64xbf16>
    %cst_50 = arith.constant dense<0.000000e+00> : vector<256x64xf32>
    %36 = tpu.matmul %34, %35, %cst_50 {dimension_numbers = #tpu.dot_dimension_numbers<[1], [0], [0], [1], [0, 0, 1, 1], [], []>} : vector<256x64xbf16>, vector<64x64xbf16>, vector<256x64xf32> -> vector<256x64xf32>
    %37 = arith.addf %32, %36 : vector<256x64xf32>
    %38 = vector.shape_cast %24 : vector<1x16x16x64xf32> to vector<256x64xf32>
    %39 = arith.truncf %38 : vector<256x64xf32> to vector<256x64xbf16>
    %c64 = arith.constant 64 : index
    %c0_51 = arith.constant 0 : index
    %40 = vector.load %arg5[%c64, %c0_51] : memref<576x64xbf16, #tpu.memory_space<vmem>>, vector<64x64xbf16>
    %cst_52 = arith.constant dense<0.000000e+00> : vector<256x64xf32>
    %41 = tpu.matmul %39, %40, %cst_52 {dimension_numbers = #tpu.dot_dimension_numbers<[1], [0], [0], [1], [0, 0, 1, 1], [], []>} : vector<256x64xbf16>, vector<64x64xbf16>, vector<256x64xf32> -> vector<256x64xf32>
    %42 = arith.addf %37, %41 : vector<256x64xf32>
    %43 = vector.shape_cast %25 : vector<1x16x16x64xf32> to vector<256x64xf32>
    %44 = arith.truncf %43 : vector<256x64xf32> to vector<256x64xbf16>
    %c128 = arith.constant 128 : index
    %c0_53 = arith.constant 0 : index
    %45 = vector.load %arg5[%c128, %c0_53] : memref<576x64xbf16, #tpu.memory_space<vmem>>, vector<64x64xbf16>
    %cst_54 = arith.constant dense<0.000000e+00> : vector<256x64xf32>
    %46 = tpu.matmul %44, %45, %cst_54 {dimension_numbers = #tpu.dot_dimension_numbers<[1], [0], [0], [1], [0, 0, 1, 1], [], []>} : vector<256x64xbf16>, vector<64x64xbf16>, vector<256x64xf32> -> vector<256x64xf32>
    %47 = arith.addf %42, %46 : vector<256x64xf32>
    %48 = vector.shape_cast %26 : vector<1x16x16x64xf32> to vector<256x64xf32>
    %49 = arith.truncf %48 : vector<256x64xf32> to vector<256x64xbf16>
    %c192 = arith.constant 192 : index
    %c0_55 = arith.constant 0 : index
    %50 = vector.load %arg5[%c192, %c0_55] : memref<576x64xbf16, #tpu.memory_space<vmem>>, vector<64x64xbf16>
    %cst_56 = arith.constant dense<0.000000e+00> : vector<256x64xf32>
    %51 = tpu.matmul %49, %50, %cst_56 {dimension_numbers = #tpu.dot_dimension_numbers<[1], [0], [0], [1], [0, 0, 1, 1], [], []>} : vector<256x64xbf16>, vector<64x64xbf16>, vector<256x64xf32> -> vector<256x64xf32>
    %52 = arith.addf %47, %51 : vector<256x64xf32>
    %53 = vector.shape_cast %27 : vector<1x16x16x64xf32> to vector<256x64xf32>
    %54 = arith.truncf %53 : vector<256x64xf32> to vector<256x64xbf16>
    %c256 = arith.constant 256 : index
    %c0_57 = arith.constant 0 : index
    %55 = vector.load %arg5[%c256, %c0_57] : memref<576x64xbf16, #tpu.memory_space<vmem>>, vector<64x64xbf16>
    %cst_58 = arith.constant dense<0.000000e+00> : vector<256x64xf32>
    %56 = tpu.matmul %54, %55, %cst_58 {dimension_numbers = #tpu.dot_dimension_numbers<[1], [0], [0], [1], [0, 0, 1, 1], [], []>} : vector<256x64xbf16>, vector<64x64xbf16>, vector<256x64xf32> -> vector<256x64xf32>
    %57 = arith.addf %52, %56 : vector<256x64xf32>
    %58 = vector.shape_cast %28 : vector<1x16x16x64xf32> to vector<256x64xf32>
    %59 = arith.truncf %58 : vector<256x64xf32> to vector<256x64xbf16>
    %c320 = arith.constant 320 : index
    %c0_59 = arith.constant 0 : index
    %60 = vector.load %arg5[%c320, %c0_59] : memref<576x64xbf16, #tpu.memory_space<vmem>>, vector<64x64xbf16>
    %cst_60 = arith.constant dense<0.000000e+00> : vector<256x64xf32>
    %61 = tpu.matmul %59, %60, %cst_60 {dimension_numbers = #tpu.dot_dimension_numbers<[1], [0], [0], [1], [0, 0, 1, 1], [], []>} : vector<256x64xbf16>, vector<64x64xbf16>, vector<256x64xf32> -> vector<256x64xf32>
    %62 = arith.addf %57, %61 : vector<256x64xf32>
    %63 = vector.shape_cast %29 : vector<1x16x16x64xf32> to vector<256x64xf32>
    %64 = arith.truncf %63 : vector<256x64xf32> to vector<256x64xbf16>
    %c384 = arith.constant 384 : index
    %c0_61 = arith.constant 0 : index
    %65 = vector.load %arg5[%c384, %c0_61] : memref<576x64xbf16, #tpu.memory_space<vmem>>, vector<64x64xbf16>
    %cst_62 = arith.constant dense<0.000000e+00> : vector<256x64xf32>
    %66 = tpu.matmul %64, %65, %cst_62 {dimension_numbers = #tpu.dot_dimension_numbers<[1], [0], [0], [1], [0, 0, 1, 1], [], []>} : vector<256x64xbf16>, vector<64x64xbf16>, vector<256x64xf32> -> vector<256x64xf32>
    %67 = arith.addf %62, %66 : vector<256x64xf32>
    %68 = vector.shape_cast %30 : vector<1x16x16x64xf32> to vector<256x64xf32>
    %69 = arith.truncf %68 : vector<256x64xf32> to vector<256x64xbf16>
    %c448 = arith.constant 448 : index
    %c0_63 = arith.constant 0 : index
    %70 = vector.load %arg5[%c448, %c0_63] : memref<576x64xbf16, #tpu.memory_space<vmem>>, vector<64x64xbf16>
    %cst_64 = arith.constant dense<0.000000e+00> : vector<256x64xf32>
    %71 = tpu.matmul %69, %70, %cst_64 {dimension_numbers = #tpu.dot_dimension_numbers<[1], [0], [0], [1], [0, 0, 1, 1], [], []>} : vector<256x64xbf16>, vector<64x64xbf16>, vector<256x64xf32> -> vector<256x64xf32>
    %72 = arith.addf %67, %71 : vector<256x64xf32>
    %73 = vector.shape_cast %31 : vector<1x16x16x64xf32> to vector<256x64xf32>
    %74 = arith.truncf %73 : vector<256x64xf32> to vector<256x64xbf16>
    %c512 = arith.constant 512 : index
    %c0_65 = arith.constant 0 : index
    %75 = vector.load %arg5[%c512, %c0_65] : memref<576x64xbf16, #tpu.memory_space<vmem>>, vector<64x64xbf16>
    %cst_66 = arith.constant dense<0.000000e+00> : vector<256x64xf32>
    %76 = tpu.matmul %74, %75, %cst_66 {dimension_numbers = #tpu.dot_dimension_numbers<[1], [0], [0], [1], [0, 0, 1, 1], [], []>} : vector<256x64xbf16>, vector<64x64xbf16>, vector<256x64xf32> -> vector<256x64xf32>
    %77 = arith.addf %72, %76 : vector<256x64xf32>
    %78 = math.absf %77 : vector<256x64xf32>
    %cst_67 = arith.constant dense<0.000000e+00> : vector<64xf32>
    %79 = vector.multi_reduction <add>, %78, %cst_67 [0] : vector<256x64xf32> to vector<64xf32>
    %80 = vector.shape_cast %79 : vector<64xf32> to vector<1x64xf32>
    %c0_68 = arith.constant 0 : index
    %c0_69 = arith.constant 0 : index
    %c0_70 = arith.constant 0 : index
    %81 = vector.load %arg6[%c0_68, %c0_69, %c0_70] : memref<1x1x128xf32, #tpu.memory_space<vmem>>, vector<1x1x128xf32>
    %82 = tpu.concatenate %12, %80 in 1 : vector<1x64xf32>, vector<1x64xf32> -> vector<1x128xf32>
    %83 = vector.shape_cast %82 : vector<1x128xf32> to vector<1x1x128xf32>
    %84 = arith.addf %81, %83 : vector<1x1x128xf32>
    %c0_71 = arith.constant 0 : index
    %c0_72 = arith.constant 0 : index
    %c0_73 = arith.constant 0 : index
    %85 = vector.load %arg6[%c0_71, %c0_72, %c0_73] : memref<1x1x128xf32, #tpu.memory_space<vmem>>, vector<1x1x128xf32>
    tpu.vector_store %arg6[%c0_71, %c0_72, %c0_73], %84 {strides = array<i32>} : memref<1x1x128xf32, #tpu.memory_space<vmem>>, vector<1x1x128xf32>,
    return
  }
  func.func @transform_0(%arg0: i32, %arg1: i32) -> (i32, i32, i32) {
    %c1_i32 = arith.constant 1 : i32
    %0 = arith.muli %arg0, %c1_i32 : i32
    %1 = arith.addi %0, %arg1 : i32
    %c0_i32 = arith.constant 0 : i32
    %c0_i32_0 = arith.constant 0 : i32
    %c0_i32_1 = arith.constant 0 : i32
    return %c0_i32, %1, %c0_i32_0 : i32, i32, i32
  }
  func.func @transform_1(%arg0: i32, %arg1: i32) -> (i32, i32) {
    %c0_i32 = arith.constant 0 : i32
    %c0_i32_0 = arith.constant 0 : i32
    %c0_i32_1 = arith.constant 0 : i32
    return %c0_i32, %c0_i32_0 : i32, i32
  }
  func.func @transform_2(%arg0: i32, %arg1: i32) -> (i32, i32) {
    %c0_i32 = arith.constant 0 : i32
    %c0_i32_0 = arith.constant 0 : i32
    %c0_i32_1 = arith.constant 0 : i32
    return %c0_i32, %c0_i32_0 : i32, i32
  }
  func.func @transform_3(%arg0: i32, %arg1: i32) -> (i32, i32) {
    %c0_i32 = arith.constant 0 : i32
    %c0_i32_0 = arith.constant 0 : i32
    %c0_i32_1 = arith.constant 0 : i32
    return %c0_i32, %c0_i32_0 : i32, i32
  }
  func.func @transform_4(%arg0: i32, %arg1: i32) -> (i32, i32, i32) {
    %c0_i32 = arith.constant 0 : i32
    %c0_i32_0 = arith.constant 0 : i32
    %c0_i32_1 = arith.constant 0 : i32
    return %arg0, %c0_i32, %c0_i32_0 : i32, i32, i32
  }
}

</mosaic_0001>

<llo_original>
// kernel: perceptual_loss2.1
$region0: #{perceptual_loss2.1}
  #allocation0 [shape = 'u32[]', space=smem, size = 0x4, offset = 0x4, fixed_abs, tag = 'smem constant byte address 0x4 - core index']
  #allocation1 [shape = 'u32[72,128]{1,0:T(1,128)}', space=vmem, size = 0x9000, scoped, tag = 'internal scratch']
  #allocation2 [shape = 'f32[1,18,18,64]{3,2,1,0:T(8,128)}', space=vmem, size = 0x36000, scoped, tag = 'scratch operand']
  %s0 = inlined_call_operand.vmem [shape: bf16[2,512,27], index: 0, kind: input, shape index: {}]
  %s1 = inlined_call_operand.vmem [shape: bf16[27,64], index: 1, kind: input, shape index: {}]
  %s2 = inlined_call_operand.vmem [shape: f32[1,64], index: 2, kind: input, shape index: {}]
  %s3 = inlined_call_operand.vmem [shape: bf16[576,64], index: 3, kind: input, shape index: {}]
  %s4 = inlined_call_operand.vmem [shape: f32[2,1,128], index: 4, kind: output, shape index: {}]
  %s5 = sld [smem:[#allocation0]]
  $region94: #{perceptual_loss2.1} parent=0
    _
  %s7 = ssub.s32 1, %s5
  %s8 = scalar_select 0, %s7, %s5
  $region1: #{perceptual_loss2.1} parent=0
    #allocation3 [shape = 'u8[262144]{0}', space=vmem, size = 0x40000, scoped, tag = 'input window, operand 0']
    loop: start=0, step=1, limit=4
    $region2: #{perceptual_loss2.1} parent=1 // loop_pre_header
      _
    $region3: #{perceptual_loss2.1} parent=1 // loop_header
      %s10 = sphi 0, %s14
      %p11 = scmp.ge.s32.totalorder %s10, 4
      %s17 = sphi 0, %s29
      %s18 = sphi 0, %s25
      %s19 = sphi 0, %s17
      %s20 = sphi 0, %s18
      %s21 = sphi 0, %s19
      %s22 = sphi 0, %s20
      %s34 = sphi 0, %s36
      %s37 = sphi 0, %s34
      %s38 = sphi 0, %s37
      %s54 = sphi 0, %s38
      %s58 = sphi 0, %s58
      %s60 = sphi 0, %s58
      %s61 = sphi 0, %s60
      %s75 = sphi 0, %s61
      %s79 = sphi 0, %s79
      %s81 = sphi 0, %s79
      %s82 = sphi 0, %s81
      %s96 = sphi 0, %s82
      %s100 = sphi 0, %s100
      %s102 = sphi 0, %s100
      %s103 = sphi 0, %s102
      %s117 = sphi 0, %s103
      %s123 = sphi 0, %s125
      %s126 = sphi 0, %s123
      %s127 = sphi 0, %s126
      %s143 = sphi 0, %s127
    $region4: #{perceptual_loss2.1} parent=1 // loop_header_branch
      %13 = sbr.rel (%p11) target = $region8
    $region5: #{perceptual_loss2.1} parent=1 // loop_body
      %s15 = ssub.s32 %s10, 1
      %s16 = ssub.s32 %s10, 2
      %s23 = sadd.s32 1, %s18
      %p24 = scmp.ge.s32.totalorder %s23, 1
      %s25 = scalar_select %p24, 0, %s23
      %s26 = sadd.s32 1, %s17
      %s27 = scalar_select %p24, %s26, %s17
      %p28 = scmp.ge.s32.totalorder %s27, 2
      %s29 = scalar_select %p28, 0, %s27
      %s30 = sadd.s32 %s17, %s18
      %s31 = sadd.s32 %s29, %s25
      %s32 = ssub.s32 %s30, %s31
      %p33 = scmp.eq.s32.totalorder %s32, 0
      %s35 = sadd.s32 %s34, 1
      %s36 = scalar_select %p33, %s34, %s35
      %p39 = pneg %p33
      %p40 = scmp.eq.s32.totalorder %s10, 1
      %p41 = por %p39, %p40
      %p42 = scmp.ne.s32.totalorder %s34, %s37
      %p43 = scmp.eq.s32.totalorder %s10, 0
      %p44 = por %p42, %p43
      %p45 = scmp.ne.s32.totalorder %s34, %s37
      %p46 = scmp.eq.s32.totalorder %s15, 1
      %p47 = por %p45, %p46
      %p48 = scmp.ne.s32.totalorder %s37, %s38
      %p49 = scmp.eq.s32.totalorder %s15, 0
      %p50 = por %p48, %p49
      %p51 = scmp.ne.s32.totalorder %s37, %s38
      %p52 = scmp.eq.s32.totalorder %s16, 1
      %p53 = por %p51, %p52
      %p55 = scmp.ne.s32.totalorder %s38, %s54
      %p56 = scmp.eq.s32.totalorder %s16, 0
      %p57 = por %p55, %p56
      %s59 = sadd.s32 %s58, 1
      %p62 = scmp.eq.s32.totalorder %s10, 1
      %p63 = scmp.ne.s32.totalorder %s58, %s60
      %p64 = scmp.eq.s32.totalorder %s10, 0
      %p65 = por %p63, %p64
      %p66 = scmp.ne.s32.totalorder %s58, %s60
      %p67 = scmp.eq.s32.totalorder %s15, 1
      %p68 = por %p66, %p67
      %p69 = scmp.ne.s32.totalorder %s60, %s61
      %p70 = scmp.eq.s32.totalorder %s15, 0
      %p71 = por %p69, %p70
      %p72 = scmp.ne.s32.totalorder %s60, %s61
      %p73 = scmp.eq.s32.totalorder %s16, 1
      %p74 = por %p72, %p73
      %p76 = scmp.ne.s32.totalorder %s61, %s75
      %p77 = scmp.eq.s32.totalorder %s16, 0
      %p78 = por %p76, %p77
      %s80 = sadd.s32 %s79, 1
      %p83 = scmp.eq.s32.totalorder %s10, 1
      %p84 = scmp.ne.s32.totalorder %s79, %s81
      %p85 = scmp.eq.s32.totalorder %s10, 0
      %p86 = por %p84, %p85
      %p87 = scmp.ne.s32.totalorder %s79, %s81
      %p88 = scmp.eq.s32.totalorder %s15, 1
      %p89 = por %p87, %p88
      %p90 = scmp.ne.s32.totalorder %s81, %s82
      %p91 = scmp.eq.s32.totalorder %s15, 0
      %p92 = por %p90, %p91
      %p93 = scmp.ne.s32.totalorder %s81, %s82
      %p94 = scmp.eq.s32.totalorder %s16, 1
      %p95 = por %p93, %p94
      %p97 = scmp.ne.s32.totalorder %s82, %s96
      %p98 = scmp.eq.s32.totalorder %s16, 0
      %p99 = por %p97, %p98
      %s101 = sadd.s32 %s100, 1
      %p104 = scmp.eq.s32.totalorder %s10, 1
      %p105 = scmp.ne.s32.totalorder %s100, %s102
      %p106 = scmp.eq.s32.totalorder %s10, 0
      %p107 = por %p105, %p106
      %p108 = scmp.ne.s32.totalorder %s100, %s102
      %p109 = scmp.eq.s32.totalorder %s15, 1
      %p110 = por %p108, %p109
      %p111 = scmp.ne.s32.totalorder %s102, %s103
      %p112 = scmp.eq.s32.totalorder %s15, 0
      %p113 = por %p111, %p112
      %p114 = scmp.ne.s32.totalorder %s102, %s103
      %p115 = scmp.eq.s32.totalorder %s16, 1
      %p116 = por %p114, %p115
      %p118 = scmp.ne.s32.totalorder %s103, %s117
      %p119 = scmp.eq.s32.totalorder %s16, 0
      %p120 = por %p118, %p119
      %s121 = ssub.s32 %s17, %s29
      %p122 = scmp.eq.s32.totalorder %s121, 0
      %s124 = sadd.s32 %s123, 1
      %s125 = scalar_select %p122, %s123, %s124
      %p128 = pneg %p122
      %p129 = scmp.eq.s32.totalorder %s10, 1
      %p130 = por %p128, %p129
      %p131 = scmp.ne.s32.totalorder %s123, %s126
      %p132 = scmp.eq.s32.totalorder %s10, 0
      %p133 = por %p131, %p132
      %p134 = scmp.ne.s32.totalorder %s123, %s126
      %p135 = scmp.eq.s32.totalorder %s15, 1
      %p136 = por %p134, %p135
      %p137 = scmp.ne.s32.totalorder %s126, %s127
      %p138 = scmp.eq.s32.totalorder %s15, 0
      %p139 = por %p137, %p138
      %p140 = scmp.ne.s32.totalorder %s126, %s127
      %p141 = scmp.eq.s32.totalorder %s16, 1
      %p142 = por %p140, %p141
      %p144 = scmp.ne.s32.totalorder %s127, %s143
      %p145 = scmp.eq.s32.totalorder %s16, 0
      %p146 = por %p144, %p145
      %p147 = scmp.le.s32.totalorder 1, %s10
      %p148 = scmp.lt.s32.totalorder %s10, 3
      %p149 = pnand %p147, %p148
      %p150 = pneg %p149
      // Predicated region
      $region9: #{perceptual_loss2.1} parent=5 // pred_check
        _
      $region10: #{perceptual_loss2.1} parent=5 // pred_check_branch
        %152 = sbr.rel (%p149) target = $region12
      $region11: #{perceptual_loss2.1} parent=5 // pred_region
        %s153 = ssub.s32 %s10, 1
        // Predicated region
        $region13: #{perceptual_loss2.1} parent=11 // pred_check
          %p154 = pneg %p71
        $region14: #{perceptual_loss2.1} parent=11 // pred_check_branch
          %156 = sbr.rel (%p154) target = $region16
        $region15: #{perceptual_loss2.1} parent=11 // pred_region
          _
        $region16: #{perceptual_loss2.1} parent=11 // pred_fallthru
          _
        // Predicated region
        $region17: #{perceptual_loss2.1} parent=11 // pred_check
          %p157 = pneg %p92
        $region18: #{perceptual_loss2.1} parent=11 // pred_check_branch
          %159 = sbr.rel (%p157) target = $region20
        $region19: #{perceptual_loss2.1} parent=11 // pred_region
          _
        $region20: #{perceptual_loss2.1} parent=11 // pred_fallthru
          _
        // Predicated region
        $region21: #{perceptual_loss2.1} parent=11 // pred_check
          %p160 = pneg %p113
        $region22: #{perceptual_loss2.1} parent=11 // pred_check_branch
          %162 = sbr.rel (%p160) target = $region24
        $region23: #{perceptual_loss2.1} parent=11 // pred_region
          _
        $region24: #{perceptual_loss2.1} parent=11 // pred_fallthru
          _
      $region12: #{perceptual_loss2.1} parent=5 // pred_fallthru
        _
      %p163 = scmp.lt.s32.totalorder %s10, 2
      // Predicated region
      $region25: #{perceptual_loss2.1} parent=5 // pred_check
        %p164 = pneg %p163
      $region26: #{perceptual_loss2.1} parent=5 // pred_check_branch
        %166 = sbr.rel (%p164) target = $region28
      $region27: #{perceptual_loss2.1} parent=5 // pred_region
        // Predicated region
        $region29: #{perceptual_loss2.1} parent=27 // pred_check
          %p167 = pneg %p44
        $region30: #{perceptual_loss2.1} parent=27 // pred_check_branch
          %169 = sbr.rel (%p167) target = $region32
        $region31: #{perceptual_loss2.1} parent=27 // pred_region
          %s170 = sand.u32 %s34, 1
          %s171 = sand.u32 %s34, 1
          %s172 = smul.addr %s171, 256
          %s173 = scalar_lea.vmem [#allocation3], %s172
          %s174 = sadd.s32 %s17, %s18
          %s175 = smul.u32 32, %s174
          %s176 = smul.addr %s175, 4
          %s177 = scalar_lea.vmem %s0, %s176
          // Predicated region
          $region33: #{perceptual_loss2.1} parent=31 // pred_check
            _
          $region34: #{perceptual_loss2.1} parent=31 // pred_check_branch
            %179 = sbr.rel (0) target = $region36
          $region35: #{perceptual_loss2.1} parent=31 // pred_region
            // Predicated region
            $region37: #{perceptual_loss2.1} parent=35 // pred_check
              _
            $region38: #{perceptual_loss2.1} parent=35 // pred_check_branch
              %181 = sbr.rel target = $region40
            $region39: #{perceptual_loss2.1} parent=35 // pred_region
              // Predicated region
              $region52: #{perceptual_loss2.1} parent=39 // pred_check
                _
              $region53: #{perceptual_loss2.1} parent=39 // pred_check_branch
                %323 = sbr.rel (0) target = $region55
              $region54: #{perceptual_loss2.1} parent=39 // pred_region
                loop: start=0, step=1, limit=1
                $region56: #{perceptual_loss2.1} parent=54 // loop_pre_header
                  _
                $region57: #{perceptual_loss2.1} parent=54 // loop_header
                  %s325 = sphi 0, %s329
                  %p326 = scmp.ge.s32.totalorder %s325, 1
                  %s330 = sphi %s177, %s177
                  %s331 = sphi %s173, %s173
                $region58: #{perceptual_loss2.1} parent=54 // loop_header_branch
                  %328 = sbr.rel (%p326) target = $region62
                $region59: #{perceptual_loss2.1} parent=54 // loop_body
                  _
                $region60: #{perceptual_loss2.1} parent=54 // loop_footer
                  %s329 = sadd.s32 1, %s325
                $region61: #{perceptual_loss2.1} parent=54 // loop_footer_branch
                  %324 = sbr.rel target = $region57
                $region62: #{perceptual_loss2.1} parent=54 // loop_exit
                  _
                %s333 = ssub.s32 16, 1
                loop: start=0, step=1, limit=1
                $region63: #{perceptual_loss2.1} parent=54 // loop_pre_header
                  _
                $region64: #{perceptual_loss2.1} parent=54 // loop_header
                  %s335 = sphi 0, %s339
                  %p336 = scmp.ge.s32.totalorder %s335, 1
                  %s340 = sphi %s177, %s177
                  %s341 = sphi %s173, %s173
                $region65: #{perceptual_loss2.1} parent=54 // loop_header_branch
                  %338 = sbr.rel (%p336) target = $region69
                $region66: #{perceptual_loss2.1} parent=54 // loop_body
                  %v342 = vld [vmem:[%s340] sm:%s333]
                  %343 = vst [vmem:[%s341] sm:%s333] %v342
                  %v344 = vld [vmem:[%s340 + $0x4] sm:%s333]
                  %345 = vst [vmem:[%s341 + $0x4] sm:%s333] %v344
                  %v346 = vld [vmem:[%s340 + $0x8] sm:%s333]
                  %347 = vst [vmem:[%s341 + $0x8] sm:%s333] %v346
                  %v348 = vld [vmem:[%s340 + $0xc] sm:%s333]
                  %349 = vst [vmem:[%s341 + $0xc] sm:%s333] %v348
                  %v350 = vld [vmem:[%s340 + $0x10] sm:%s333]
                  %351 = vst [vmem:[%s341 + $0x10] sm:%s333] %v350
                  %v352 = vld [vmem:[%s340 + $0x14] sm:%s333]
                  %353 = vst [vmem:[%s341 + $0x14] sm:%s333] %v352
                  %v354 = vld [vmem:[%s340 + $0x18] sm:%s333]
                  %355 = vst [vmem:[%s341 + $0x18] sm:%s333] %v354
                  %v356 = vld [vmem:[%s340 + $0x1c] sm:%s333]
                  %357 = vst [vmem:[%s341 + $0x1c] sm:%s333] %v356
                  %v358 = vld [vmem:[%s340 + $0x20] sm:%s333]
                  %359 = vst [vmem:[%s341 + $0x20] sm:%s333] %v358
                  %v360 = vld [vmem:[%s340 + $0x24] sm:%s333]
                  %361 = vst [vmem:[%s341 + $0x24] sm:%s333] %v360
                  %v362 = vld [vmem:[%s340 + $0x28] sm:%s333]
                  %363 = vst [vmem:[%s341 + $0x28] sm:%s333] %v362
                  %v364 = vld [vmem:[%s340 + $0x2c] sm:%s333]
                  %365 = vst [vmem:[%s341 + $0x2c] sm:%s333] %v364
                  %v366 = vld [vmem:[%s340 + $0x30] sm:%s333]
                  %367 = vst [vmem:[%s341 + $0x30] sm:%s333] %v366
                  %v368 = vld [vmem:[%s340 + $0x34] sm:%s333]
                  %369 = vst [vmem:[%s341 + $0x34] sm:%s333] %v368
                  %v370 = vld [vmem:[%s340 + $0x38] sm:%s333]
                  %371 = vst [vmem:[%s341 + $0x38] sm:%s333] %v370
                  %v372 = vld [vmem:[%s340 + $0x3c] sm:%s333]
                  %373 = vst [vmem:[%s341 + $0x3c] sm:%s333] %v372
                  %v374 = vld [vmem:[%s340 + $0x40] sm:%s333]
                  %375 = vst [vmem:[%s341 + $0x40] sm:%s333] %v374
                  %v376 = vld [vmem:[%s340 + $0x44] sm:%s333]
                  %377 = vst [vmem:[%s341 + $0x44] sm:%s333] %v376
                  %v378 = vld [vmem:[%s340 + $0x48] sm:%s333]
                  %379 = vst [vmem:[%s341 + $0x48] sm:%s333] %v378
                  %v380 = vld [vmem:[%s340 + $0x4c] sm:%s333]
                  %381 = vst [vmem:[%s341 + $0x4c] sm:%s333] %v380
                  %v382 = vld [vmem:[%s340 + $0x50] sm:%s333]
                  %383 = vst [vmem:[%s341 + $0x50] sm:%s333] %v382
                  %v384 = vld [vmem:[%s340 + $0x54] sm:%s333]
                  %385 = vst [vmem:[%s341 + $0x54] sm:%s333] %v384
                  %v386 = vld [vmem:[%s340 + $0x58] sm:%s333]
                  %387 = vst [vmem:[%s341 + $0x58] sm:%s333] %v386
                  %v388 = vld [vmem:[%s340 + $0x5c] sm:%s333]
                  %389 = vst [vmem:[%s341 + $0x5c] sm:%s333] %v388
                  %v390 = vld [vmem:[%s340 + $0x60] sm:%s333]
                  %391 = vst [vmem:[%s341 + $0x60] sm:%s333] %v390
                  %v392 = vld [vmem:[%s340 + $0x64] sm:%s333]
                  %393 = vst [vmem:[%s341 + $0x64] sm:%s333] %v392
                  %v394 = vld [vmem:[%s340 + $0x68] sm:%s333]
                  %395 = vst [vmem:[%s341 + $0x68] sm:%s333] %v394
                  %v396 = vld [vmem:[%s340 + $0x6c] sm:%s333]
                  %397 = vst [vmem:[%s341 + $0x6c] sm:%s333] %v396
                  %v398 = vld [vmem:[%s340 + $0x70] sm:%s333]
                  %399 = vst [vmem:[%s341 + $0x70] sm:%s333] %v398
                  %v400 = vld [vmem:[%s340 + $0x74] sm:%s333]
                  %401 = vst [vmem:[%s341 + $0x74] sm:%s333] %v400
                  %v402 = vld [vmem:[%s340 + $0x78] sm:%s333]
                  %403 = vst [vmem:[%s341 + $0x78] sm:%s333] %v402
                  %v404 = vld [vmem:[%s340 + $0x7c] sm:%s333]
                  %405 = vst [vmem:[%s341 + $0x7c] sm:%s333] %v404
                  %v406 = vld [vmem:[%s340 + $0x100] sm:%s333]
                  %407 = vst [vmem:[%s341 + $0x80] sm:%s333] %v406
                  %v408 = vld [vmem:[%s340 + $0x104] sm:%s333]
                  %409 = vst [vmem:[%s341 + $0x84] sm:%s333] %v408
                  %v410 = vld [vmem:[%s340 + $0x108] sm:%s333]
                  %411 = vst [vmem:[%s341 + $0x88] sm:%s333] %v410
                  %v412 = vld [vmem:[%s340 + $0x10c] sm:%s333]
                  %413 = vst [vmem:[%s341 + $0x8c] sm:%s333] %v412
                  %v414 = vld [vmem:[%s340 + $0x110] sm:%s333]
                  %415 = vst [vmem:[%s341 + $0x90] sm:%s333] %v414
                  %v416 = vld [vmem:[%s340 + $0x114] sm:%s333]
                  %417 = vst [vmem:[%s341 + $0x94] sm:%s333] %v416
                  %v418 = vld [vmem:[%s340 + $0x118] sm:%s333]
                  %419 = vst [vmem:[%s341 + $0x98] sm:%s333] %v418
                  %v420 = vld [vmem:[%s340 + $0x11c] sm:%s333]
                  %421 = vst [vmem:[%s341 + $0x9c] sm:%s333] %v420
                  %v422 = vld [vmem:[%s340 + $0x120] sm:%s333]
                  %423 = vst [vmem:[%s341 + $0xa0] sm:%s333] %v422
                  %v424 = vld [vmem:[%s340 + $0x124] sm:%s333]
                  %425 = vst [vmem:[%s341 + $0xa4] sm:%s333] %v424
                  %v426 = vld [vmem:[%s340 + $0x128] sm:%s333]
                  %427 = vst [vmem:[%s341 + $0xa8] sm:%s333] %v426
                  %v428 = vld [vmem:[%s340 + $0x12c] sm:%s333]
                  %429 = vst [vmem:[%s341 + $0xac] sm:%s333] %v428
                  %v430 = vld [vmem:[%s340 + $0x130] sm:%s333]
                  %431 = vst [vmem:[%s341 + $0xb0] sm:%s333] %v430
                  %v432 = vld [vmem:[%s340 + $0x134] sm:%s333]
                  %433 = vst [vmem:[%s341 + $0xb4] sm:%s333] %v432
                  %v434 = vld [vmem:[%s340 + $0x138] sm:%s333]
                  %435 = vst [vmem:[%s341 + $0xb8] sm:%s333] %v434
                  %v436 = vld [vmem:[%s340 + $0x13c] sm:%s333]
                  %437 = vst [vmem:[%s341 + $0xbc] sm:%s333] %v436
                  %v438 = vld [vmem:[%s340 + $0x140] sm:%s333]
                  %439 = vst [vmem:[%s341 + $0xc0] sm:%s333] %v438
                  %v440 = vld [vmem:[%s340 + $0x144] sm:%s333]
                  %441 = vst [vmem:[%s341 + $0xc4] sm:%s333] %v440
                  %v442 = vld [vmem:[%s340 + $0x148] sm:%s333]
                  %443 = vst [vmem:[%s341 + $0xc8] sm:%s333] %v442
                  %v444 = vld [vmem:[%s340 + $0x14c] sm:%s333]
                  %445 = vst [vmem:[%s341 + $0xcc] sm:%s333] %v444
                  %v446 = vld [vmem:[%s340 + $0x150] sm:%s333]
                  %447 = vst [vmem:[%s341 + $0xd0] sm:%s333] %v446
                  %v448 = vld [vmem:[%s340 + $0x154] sm:%s333]
                  %449 = vst [vmem:[%s341 + $0xd4] sm:%s333] %v448
                  %v450 = vld [vmem:[%s340 + $0x158] sm:%s333]
                  %451 = vst [vmem:[%s341 + $0xd8] sm:%s333] %v450
                  %v452 = vld [vmem:[%s340 + $0x15c] sm:%s333]
                  %453 = vst [vmem:[%s341 + $0xdc] sm:%s333] %v452
                  %v454 = vld [vmem:[%s340 + $0x160] sm:%s333]
                  %455 = vst [vmem:[%s341 + $0xe0] sm:%s333] %v454
                  %v456 = vld [vmem:[%s340 + $0x164] sm:%s333]
                  %457 = vst [vmem:[%s341 + $0xe4] sm:%s333] %v456
                  %v458 = vld [vmem:[%s340 + $0x168] sm:%s333]
                  %459 = vst [vmem:[%s341 + $0xe8] sm:%s333] %v458
                  %v460 = vld [vmem:[%s340 + $0x16c] sm:%s333]
                  %461 = vst [vmem:[%s341 + $0xec] sm:%s333] %v460
                  %v462 = vld [vmem:[%s340 + $0x170] sm:%s333]
                  %463 = vst [vmem:[%s341 + $0xf0] sm:%s333] %v462
                  %v464 = vld [vmem:[%s340 + $0x174] sm:%s333]
                  %465 = vst [vmem:[%s341 + $0xf4] sm:%s333] %v464
                  %v466 = vld [vmem:[%s340 + $0x178] sm:%s333]
                  %467 = vst [vmem:[%s341 + $0xf8] sm:%s333] %v466
                  %v468 = vld [vmem:[%s340 + $0x17c] sm:%s333]
                  %469 = vst [vmem:[%s341 + $0xfc] sm:%s333] %v468
                $region67: #{perceptual_loss2.1} parent=54 // loop_footer
                  %s339 = sadd.s32 1, %s335
                $region68: #{perceptual_loss2.1} parent=54 // loop_footer_branch
                  %334 = sbr.rel target = $region64
                $region69: #{perceptual_loss2.1} parent=54 // loop_exit
                  _
              $region55: #{perceptual_loss2.1} parent=39 // pred_fallthru
                _
            $region40: #{perceptual_loss2.1} parent=35 // pred_fallthru
              _
            // Predicated region
            $region41: #{perceptual_loss2.1} parent=35 // pred_check
              _
            $region42: #{perceptual_loss2.1} parent=35 // pred_check_branch
              %183 = sbr.rel (0) target = $region44
            $region43: #{perceptual_loss2.1} parent=35 // pred_region
              %s185 = ssub.s32 16, 1
              loop: start=0, step=1, limit=1
              $region45: #{perceptual_loss2.1} parent=43 // loop_pre_header
                _
              $region46: #{perceptual_loss2.1} parent=43 // loop_header
                %s187 = sphi 0, %s191
                %p188 = scmp.ge.s32.totalorder %s187, 1
                %s192 = sphi %s177, %s177
                %s193 = sphi %s173, %s173
              $region47: #{perceptual_loss2.1} parent=43 // loop_header_branch
                %190 = sbr.rel (%p188) target = $region51
              $region48: #{perceptual_loss2.1} parent=43 // loop_body
                %v194 = vld [vmem:[%s192] sm:%s185]
                %195 = vst [vmem:[%s193] sm:%s185] %v194
                %v196 = vld [vmem:[%s192 + $0x4] sm:%s185]
                %197 = vst [vmem:[%s193 + $0x4] sm:%s185] %v196
                %v198 = vld [vmem:[%s192 + $0x8] sm:%s185]
                %199 = vst [vmem:[%s193 + $0x8] sm:%s185] %v198
                %v200 = vld [vmem:[%s192 + $0xc] sm:%s185]
                %201 = vst [vmem:[%s193 + $0xc] sm:%s185] %v200
                %v202 = vld [vmem:[%s192 + $0x10] sm:%s185]
                %203 = vst [vmem:[%s193 + $0x10] sm:%s185] %v202
                %v204 = vld [vmem:[%s192 + $0x14] sm:%s185]
                %205 = vst [vmem:[%s193 + $0x14] sm:%s185] %v204
                %v206 = vld [vmem:[%s192 + $0x18] sm:%s185]
                %207 = vst [vmem:[%s193 + $0x18] sm:%s185] %v206
                %v208 = vld [vmem:[%s192 + $0x1c] sm:%s185]
                %209 = vst [vmem:[%s193 + $0x1c] sm:%s185] %v208
                %v210 = vld [vmem:[%s192 + $0x20] sm:%s185]
                %211 = vst [vmem:[%s193 + $0x20] sm:%s185] %v210
                %v212 = vld [vmem:[%s192 + $0x24] sm:%s185]
                %213 = vst [vmem:[%s193 + $0x24] sm:%s185] %v212
                %v214 = vld [vmem:[%s192 + $0x28] sm:%s185]
                %215 = vst [vmem:[%s193 + $0x28] sm:%s185] %v214
                %v216 = vld [vmem:[%s192 + $0x2c] sm:%s185]
                %217 = vst [vmem:[%s193 + $0x2c] sm:%s185] %v216
                %v218 = vld [vmem:[%s192 + $0x30] sm:%s185]
                %219 = vst [vmem:[%s193 + $0x30] sm:%s185] %v218
                %v220 = vld [vmem:[%s192 + $0x34] sm:%s185]
                %221 = vst [vmem:[%s193 + $0x34] sm:%s185] %v220
                %v222 = vld [vmem:[%s192 + $0x38] sm:%s185]
                %223 = vst [vmem:[%s193 + $0x38] sm:%s185] %v222
                %v224 = vld [vmem:[%s192 + $0x3c] sm:%s185]
                %225 = vst [vmem:[%s193 + $0x3c] sm:%s185] %v224
                %v226 = vld [vmem:[%s192 + $0x40] sm:%s185]
                %227 = vst [vmem:[%s193 + $0x40] sm:%s185] %v226
                %v228 = vld [vmem:[%s192 + $0x44] sm:%s185]
                %229 = vst [vmem:[%s193 + $0x44] sm:%s185] %v228
                %v230 = vld [vmem:[%s192 + $0x48] sm:%s185]
                %231 = vst [vmem:[%s193 + $0x48] sm:%s185] %v230
                %v232 = vld [vmem:[%s192 + $0x4c] sm:%s185]
                %233 = vst [vmem:[%s193 + $0x4c] sm:%s185] %v232
                %v234 = vld [vmem:[%s192 + $0x50] sm:%s185]
                %235 = vst [vmem:[%s193 + $0x50] sm:%s185] %v234
                %v236 = vld [vmem:[%s192 + $0x54] sm:%s185]
                %237 = vst [vmem:[%s193 + $0x54] sm:%s185] %v236
                %v238 = vld [vmem:[%s192 + $0x58] sm:%s185]
                %239 = vst [vmem:[%s193 + $0x58] sm:%s185] %v238
                %v240 = vld [vmem:[%s192 + $0x5c] sm:%s185]
                %241 = vst [vmem:[%s193 + $0x5c] sm:%s185] %v240
                %v242 = vld [vmem:[%s192 + $0x60] sm:%s185]
                %243 = vst [vmem:[%s193 + $0x60] sm:%s185] %v242
                %v244 = vld [vmem:[%s192 + $0x64] sm:%s185]
                %245 = vst [vmem:[%s193 + $0x64] sm:%s185] %v244
                %v246 = vld [vmem:[%s192 + $0x68] sm:%s185]
                %247 = vst [vmem:[%s193 + $0x68] sm:%s185] %v246
                %v248 = vld [vmem:[%s192 + $0x6c] sm:%s185]
                %249 = vst [vmem:[%s193 + $0x6c] sm:%s185] %v248
                %v250 = vld [vmem:[%s192 + $0x70] sm:%s185]
                %251 = vst [vmem:[%s193 + $0x70] sm:%s185] %v250
                %v252 = vld [vmem:[%s192 + $0x74] sm:%s185]
                %253 = vst [vmem:[%s193 + $0x74] sm:%s185] %v252
                %v254 = vld [vmem:[%s192 + $0x78] sm:%s185]
                %255 = vst [vmem:[%s193 + $0x78] sm:%s185] %v254
                %v256 = vld [vmem:[%s192 + $0x7c] sm:%s185]
                %257 = vst [vmem:[%s193 + $0x7c] sm:%s185] %v256
                %v258 = vld [vmem:[%s192 + $0x100] sm:%s185]
                %259 = vst [vmem:[%s193 + $0x80] sm:%s185] %v258
                %v260 = vld [vmem:[%s192 + $0x104] sm:%s185]
                %261 = vst [vmem:[%s193 + $0x84] sm:%s185] %v260
                %v262 = vld [vmem:[%s192 + $0x108] sm:%s185]
                %263 = vst [vmem:[%s193 + $0x88] sm:%s185] %v262
                %v264 = vld [vmem:[%s192 + $0x10c] sm:%s185]
                %265 = vst [vmem:[%s193 + $0x8c] sm:%s185] %v264
                %v266 = vld [vmem:[%s192 + $0x110] sm:%s185]
                %267 = vst [vmem:[%s193 + $0x90] sm:%s185] %v266
                %v268 = vld [vmem:[%s192 + $0x114] sm:%s185]
                %269 = vst [vmem:[%s193 + $0x94] sm:%s185] %v268
                %v270 = vld [vmem:[%s192 + $0x118] sm:%s185]
                %271 = vst [vmem:[%s193 + $0x98] sm:%s185] %v270
                %v272 = vld [vmem:[%s192 + $0x11c] sm:%s185]
                %273 = vst [vmem:[%s193 + $0x9c] sm:%s185] %v272
                %v274 = vld [vmem:[%s192 + $0x120] sm:%s185]
                %275 = vst [vmem:[%s193 + $0xa0] sm:%s185] %v274
                %v276 = vld [vmem:[%s192 + $0x124] sm:%s185]
                %277 = vst [vmem:[%s193 + $0xa4] sm:%s185] %v276
                %v278 = vld [vmem:[%s192 + $0x128] sm:%s185]
                %279 = vst [vmem:[%s193 + $0xa8] sm:%s185] %v278
                %v280 = vld [vmem:[%s192 + $0x12c] sm:%s185]
                %281 = vst [vmem:[%s193 + $0xac] sm:%s185] %v280
                %v282 = vld [vmem:[%s192 + $0x130] sm:%s185]
                %283 = vst [vmem:[%s193 + $0xb0] sm:%s185] %v282
                %v284 = vld [vmem:[%s192 + $0x134] sm:%s185]
                %285 = vst [vmem:[%s193 + $0xb4] sm:%s185] %v284
                %v286 = vld [vmem:[%s192 + $0x138] sm:%s185]
                %287 = vst [vmem:[%s193 + $0xb8] sm:%s185] %v286
                %v288 = vld [vmem:[%s192 + $0x13c] sm:%s185]
                %289 = vst [vmem:[%s193 + $0xbc] sm:%s185] %v288
                %v290 = vld [vmem:[%s192 + $0x140] sm:%s185]
                %291 = vst [vmem:[%s193 + $0xc0] sm:%s185] %v290
                %v292 = vld [vmem:[%s192 + $0x144] sm:%s185]
                %293 = vst [vmem:[%s193 + $0xc4] sm:%s185] %v292
                %v294 = vld [vmem:[%s192 + $0x148] sm:%s185]
                %295 = vst [vmem:[%s193 + $0xc8] sm:%s185] %v294
                %v296 = vld [vmem:[%s192 + $0x14c] sm:%s185]
                %297 = vst [vmem:[%s193 + $0xcc] sm:%s185] %v296
                %v298 = vld [vmem:[%s192 + $0x150] sm:%s185]
                %299 = vst [vmem:[%s193 + $0xd0] sm:%s185] %v298
                %v300 = vld [vmem:[%s192 + $0x154] sm:%s185]
                %301 = vst [vmem:[%s193 + $0xd4] sm:%s185] %v300
                %v302 = vld [vmem:[%s192 + $0x158] sm:%s185]
                %303 = vst [vmem:[%s193 + $0xd8] sm:%s185] %v302
                %v304 = vld [vmem:[%s192 + $0x15c] sm:%s185]
                %305 = vst [vmem:[%s193 + $0xdc] sm:%s185] %v304
                %v306 = vld [vmem:[%s192 + $0x160] sm:%s185]
                %307 = vst [vmem:[%s193 + $0xe0] sm:%s185] %v306
                %v308 = vld [vmem:[%s192 + $0x164] sm:%s185]
                %309 = vst [vmem:[%s193 + $0xe4] sm:%s185] %v308
                %v310 = vld [vmem:[%s192 + $0x168] sm:%s185]
                %311 = vst [vmem:[%s193 + $0xe8] sm:%s185] %v310
                %v312 = vld [vmem:[%s192 + $0x16c] sm:%s185]
                %313 = vst [vmem:[%s193 + $0xec] sm:%s185] %v312
                %v314 = vld [vmem:[%s192 + $0x170] sm:%s185]
                %315 = vst [vmem:[%s193 + $0xf0] sm:%s185] %v314
                %v316 = vld [vmem:[%s192 + $0x174] sm:%s185]
                %317 = vst [vmem:[%s193 + $0xf4] sm:%s185] %v316
                %v318 = vld [vmem:[%s192 + $0x178] sm:%s185]
                %319 = vst [vmem:[%s193 + $0xf8] sm:%s185] %v318
                %v320 = vld [vmem:[%s192 + $0x17c] sm:%s185]
                %321 = vst [vmem:[%s193 + $0xfc] sm:%s185] %v320
              $region49: #{perceptual_loss2.1} parent=43 // loop_footer
                %s191 = sadd.s32 1, %s187
              $region50: #{perceptual_loss2.1} parent=43 // loop_footer_branch
                %186 = sbr.rel target = $region46
              $region51: #{perceptual_loss2.1} parent=43 // loop_exit
                _
            $region44: #{perceptual_loss2.1} parent=35 // pred_fallthru
              _
          $region36: #{perceptual_loss2.1} parent=31 // pred_fallthru
            _
          %470 = vnop
        $region32: #{perceptual_loss2.1} parent=27 // pred_fallthru
          _
      $region28: #{perceptual_loss2.1} parent=5 // pred_fallthru
        _
      %p471 = scmp.le.s32.totalorder 1, %s10
      %p472 = scmp.lt.s32.totalorder %s10, 3
      %p473 = pnand %p471, %p472
      %p474 = pneg %p473
      // Predicated region
      $region70: #{perceptual_loss2.1} parent=5 // pred_check
        _
      $region71: #{perceptual_loss2.1} parent=5 // pred_check_branch
        %476 = sbr.rel (%p473) target = $region73
      $region72: #{perceptual_loss2.1} parent=5 // pred_region
        %s477 = ssub.s32 %s10, 1
        %s478 = sand.u32 %s37, 1
        %s479 = sand.u32 %s37, 1
        %s480 = smul.addr %s479, 256
        %s481 = scalar_lea.vmem [#allocation3], %s480
        // Predicated region
        $region74: #{perceptual_loss2.1} parent=72 // pred_check
          %p482 = pneg %p50
        $region75: #{perceptual_loss2.1} parent=72 // pred_check_branch
          %484 = sbr.rel (%p482) target = $region77
        $region76: #{perceptual_loss2.1} parent=72 // pred_region
          _
        $region77: #{perceptual_loss2.1} parent=72 // pred_fallthru
          _
        %s485 = sand.u32 %s37, 1
        %s486 = sand.u32 %s37, 1
        %s487 = smul.addr %s486, 256
        %s488 = scalar_lea.vmem [#allocation3], %s487
        %p489 = pneg %p50
        %p490 = pneg %p47
        %p491 = pneg %p71
        %p492 = pneg %p68
        %p493 = pneg %p92
        %p494 = pneg %p89
        %p495 = pneg %p113
        %p496 = pneg %p110
        %p497 = pneg %p139
        %p498 = pneg %p136
        %p499 = scmp.lt.s32.totalorder %s19, 1
        %s500 = scalar_select %p499, %s19, 1
        %s501 = scalar_lea.vmem %s4, %s500
        %s502 = sadd.s32 %s19, %s20
        %s503 = smul.u32 32, %s502
        %p504 = scmp.lt.s32.totalorder %s19, 1
        %s505 = scalar_select %p504, %s19, 1
        %s506 = scalar_lea.vmem %s4, %s505
        %p508 = scmp.eq.s32.totalorder %s20, 0
        // Predicated region
        $region78: #{perceptual_loss2.1} parent=72 // pred_check
          %p509 = pneg %p508
        $region79: #{perceptual_loss2.1} parent=72 // pred_check_branch
          %511 = sbr.rel (%p509) target = $region81
        $region80: #{perceptual_loss2.1} parent=72 // pred_region
          %512 = vst [vmem:[%s506] sm:$0x1] 0.0
          %vm513 = vcmask 523264
          %514 = vst.msk [vmem:[#allocation2] sm:$0xff] %vm513, 0.0
          %515 = vst.msk [vmem:[#allocation2 + $0x8] sm:$0xff] %vm513, 0.0
          %vm516 = vcmask 517120
          %517 = vst.msk [vmem:[#allocation2 + $0x10] sm:$0x3] %vm516, 0.0
          %518 = vst.msk [vmem:[#allocation2 + $0x18] sm:$0xff] %vm513, 0.0
          %519 = vst.msk [vmem:[#allocation2 + $0x20] sm:$0xff] %vm513, 0.0
          %520 = vst.msk [vmem:[#allocation2 + $0x28] sm:$0x3] %vm516, 0.0
          %521 = vst.msk [vmem:[#allocation2 + $0x30] sm:$0xff] %vm513, 0.0
          %522 = vst.msk [vmem:[#allocation2 + $0x38] sm:$0xff] %vm513, 0.0
          %523 = vst.msk [vmem:[#allocation2 + $0x40] sm:$0x3] %vm516, 0.0
          %524 = vst.msk [vmem:[#allocation2 + $0x48] sm:$0xff] %vm513, 0.0
          %525 = vst.msk [vmem:[#allocation2 + $0x50] sm:$0xff] %vm513, 0.0
          %526 = vst.msk [vmem:[#allocation2 + $0x58] sm:$0x3] %vm516, 0.0
          %527 = vst.msk [vmem:[#allocation2 + $0x60] sm:$0xff] %vm513, 0.0
          %528 = vst.msk [vmem:[#allocation2 + $0x68] sm:$0xff] %vm513, 0.0
          %529 = vst.msk [vmem:[#allocation2 + $0x70] sm:$0x3] %vm516, 0.0
          %530 = vst.msk [vmem:[#allocation2 + $0x78] sm:$0xff] %vm513, 0.0
          %531 = vst.msk [vmem:[#allocation2 + $0x80] sm:$0xff] %vm513, 0.0
          %532 = vst.msk [vmem:[#allocation2 + $0x88] sm:$0x3] %vm516, 0.0
          %533 = vst.msk [vmem:[#allocation2 + $0x90] sm:$0xff] %vm513, 0.0
          %534 = vst.msk [vmem:[#allocation2 + $0x98] sm:$0xff] %vm513, 0.0
          %535 = vst.msk [vmem:[#allocation2 + $0xa0] sm:$0x3] %vm516, 0.0
          %536 = vst.msk [vmem:[#allocation2 + $0xa8] sm:$0xff] %vm513, 0.0
          %537 = vst.msk [vmem:[#allocation2 + $0xb0] sm:$0xff] %vm513, 0.0
          %538 = vst.msk [vmem:[#allocation2 + $0xb8] sm:$0x3] %vm516, 0.0
          %539 = vst.msk [vmem:[#allocation2 + $0xc0] sm:$0xff] %vm513, 0.0
          %540 = vst.msk [vmem:[#allocation2 + $0xc8] sm:$0xff] %vm513, 0.0
          %541 = vst.msk [vmem:[#allocation2 + $0xd0] sm:$0x3] %vm516, 0.0
          %542 = vst.msk [vmem:[#allocation2 + $0xd8] sm:$0xff] %vm513, 0.0
          %543 = vst.msk [vmem:[#allocation2 + $0xe0] sm:$0xff] %vm513, 0.0
          %544 = vst.msk [vmem:[#allocation2 + $0xe8] sm:$0x3] %vm516, 0.0
          %545 = vst.msk [vmem:[#allocation2 + $0xf0] sm:$0xff] %vm513, 0.0
          %546 = vst.msk [vmem:[#allocation2 + $0xf8] sm:$0xff] %vm513, 0.0
          %547 = vst.msk [vmem:[#allocation2 + $0x100] sm:$0x3] %vm516, 0.0
          %548 = vst.msk [vmem:[#allocation2 + $0x108] sm:$0xff] %vm513, 0.0
          %549 = vst.msk [vmem:[#allocation2 + $0x110] sm:$0xff] %vm513, 0.0
          %550 = vst.msk [vmem:[#allocation2 + $0x118] sm:$0x3] %vm516, 0.0
          %551 = vst.msk [vmem:[#allocation2 + $0x120] sm:$0xff] %vm513, 0.0
          %552 = vst.msk [vmem:[#allocation2 + $0x128] sm:$0xff] %vm513, 0.0
          %553 = vst.msk [vmem:[#allocation2 + $0x130] sm:$0x3] %vm516, 0.0
          %554 = vst.msk [vmem:[#allocation2 + $0x138] sm:$0xff] %vm513, 0.0
          %555 = vst.msk [vmem:[#allocation2 + $0x140] sm:$0xff] %vm513, 0.0
          %556 = vst.msk [vmem:[#allocation2 + $0x148] sm:$0x3] %vm516, 0.0
          %557 = vst.msk [vmem:[#allocation2 + $0x150] sm:$0xff] %vm513, 0.0
          %558 = vst.msk [vmem:[#allocation2 + $0x158] sm:$0xff] %vm513, 0.0
          %559 = vst.msk [vmem:[#allocation2 + $0x160] sm:$0x3] %vm516, 0.0
          %560 = vst.msk [vmem:[#allocation2 + $0x168] sm:$0xff] %vm513, 0.0
          %561 = vst.msk [vmem:[#allocation2 + $0x170] sm:$0xff] %vm513, 0.0
          %562 = vst.msk [vmem:[#allocation2 + $0x178] sm:$0x3] %vm516, 0.0
          %563 = vst.msk [vmem:[#allocation2 + $0x180] sm:$0xff] %vm513, 0.0
          %564 = vst.msk [vmem:[#allocation2 + $0x188] sm:$0xff] %vm513, 0.0
          %565 = vst.msk [vmem:[#allocation2 + $0x190] sm:$0x3] %vm516, 0.0
          %566 = vst.msk [vmem:[#allocation2 + $0x198] sm:$0xff] %vm513, 0.0
          %567 = vst.msk [vmem:[#allocation2 + $0x1a0] sm:$0xff] %vm513, 0.0
          %568 = vst.msk [vmem:[#allocation2 + $0x1a8] sm:$0x3] %vm516, 0.0
        $region81: #{perceptual_loss2.1} parent=72 // pred_fallthru
          _
        %v569 = vld [vmem:[%s481] sm:$0xf]
        %v570 = vld [vmem:[%s481 + $0x4] sm:$0xf]
        %v571 = vld [vmem:[%s481 + $0x8] sm:$0xf]
        %v572 = vld [vmem:[%s481 + $0xc] sm:$0xf]
        %v573 = vld [vmem:[%s481 + $0x10] sm:$0xf]
        %v574 = vld [vmem:[%s481 + $0x14] sm:$0xf]
        %v575 = vld [vmem:[%s481 + $0x18] sm:$0xf]
        %v576 = vld [vmem:[%s481 + $0x1c] sm:$0xf]
        %v577 = vld [vmem:[%s481 + $0x20] sm:$0xf]
        %v578 = vld [vmem:[%s481 + $0x24] sm:$0xf]
        %v579 = vld [vmem:[%s481 + $0x28] sm:$0xf]
        %v580 = vld [vmem:[%s481 + $0x2c] sm:$0xf]
        %v581 = vld [vmem:[%s481 + $0x30] sm:$0xf]
        %v582 = vld [vmem:[%s481 + $0x34] sm:$0xf]
        %v583 = vld [vmem:[%s481 + $0x38] sm:$0xf]
        %v584 = vld [vmem:[%s481 + $0x3c] sm:$0xf]
        %v585 = vld [vmem:[%s481 + $0x40] sm:$0xf]
        %v586 = vld [vmem:[%s481 + $0x44] sm:$0xf]
        %v587 = vld [vmem:[%s481 + $0x48] sm:$0xf]
        %v588 = vld [vmem:[%s481 + $0x4c] sm:$0xf]
        %v589 = vld [vmem:[%s481 + $0x50] sm:$0xf]
        %v590 = vld [vmem:[%s481 + $0x54] sm:$0xf]
        %v591 = vld [vmem:[%s481 + $0x58] sm:$0xf]
        %v592 = vld [vmem:[%s481 + $0x5c] sm:$0xf]
        %v593 = vld [vmem:[%s481 + $0x60] sm:$0xf]
        %v594 = vld [vmem:[%s481 + $0x64] sm:$0xf]
        %v595 = vld [vmem:[%s481 + $0x68] sm:$0xf]
        %v596 = vld [vmem:[%s481 + $0x6c] sm:$0xf]
        %v597 = vld [vmem:[%s481 + $0x70] sm:$0xf]
        %v598 = vld [vmem:[%s481 + $0x74] sm:$0xf]
        %v599 = vld [vmem:[%s481 + $0x78] sm:$0xf]
        %v600 = vld [vmem:[%s481 + $0x7c] sm:$0xf]
        %v601 = vld [vmem:[%s481 + $0x80] sm:$0xf]
        %v602 = vld [vmem:[%s481 + $0x84] sm:$0xf]
        %v603 = vld [vmem:[%s481 + $0x88] sm:$0xf]
        %v604 = vld [vmem:[%s481 + $0x8c] sm:$0xf]
        %v605 = vld [vmem:[%s481 + $0x90] sm:$0xf]
        %v606 = vld [vmem:[%s481 + $0x94] sm:$0xf]
        %v607 = vld [vmem:[%s481 + $0x98] sm:$0xf]
        %v608 = vld [vmem:[%s481 + $0x9c] sm:$0xf]
        %v609 = vld [vmem:[%s481 + $0xa0] sm:$0xf]
        %v610 = vld [vmem:[%s481 + $0xa4] sm:$0xf]
        %v611 = vld [vmem:[%s481 + $0xa8] sm:$0xf]
        %v612 = vld [vmem:[%s481 + $0xac] sm:$0xf]
        %v613 = vld [vmem:[%s481 + $0xb0] sm:$0xf]
        %v614 = vld [vmem:[%s481 + $0xb4] sm:$0xf]
        %v615 = vld [vmem:[%s481 + $0xb8] sm:$0xf]
        %v616 = vld [vmem:[%s481 + $0xbc] sm:$0xf]
        %v617 = vld [vmem:[%s481 + $0xc0] sm:$0xf]
        %v618 = vld [vmem:[%s481 + $0xc4] sm:$0xf]
        %v619 = vld [vmem:[%s481 + $0xc8] sm:$0xf]
        %v620 = vld [vmem:[%s481 + $0xcc] sm:$0xf]
        %v621 = vld [vmem:[%s481 + $0xd0] sm:$0xf]
        %v622 = vld [vmem:[%s481 + $0xd4] sm:$0xf]
        %v623 = vld [vmem:[%s481 + $0xd8] sm:$0xf]
        %v624 = vld [vmem:[%s481 + $0xdc] sm:$0xf]
        %v625 = vld [vmem:[%s481 + $0xe0] sm:$0xf]
        %v626 = vld [vmem:[%s481 + $0xe4] sm:$0xf]
        %v627 = vld [vmem:[%s481 + $0xe8] sm:$0xf]
        %v628 = vld [vmem:[%s481 + $0xec] sm:$0xf]
        %v629 = vld [vmem:[%s481 + $0xf0] sm:$0xf]
        %v630 = vld [vmem:[%s481 + $0xf4] sm:$0xf]
        %v631 = vld [vmem:[%s481 + $0xf8] sm:$0xf]
        %v632 = vld [vmem:[%s481 + $0xfc] sm:$0xf]
        %v633 = vld [vmem:[%s1] sm:$0xf]
        %v634 = vld [vmem:[%s1 + $0x4] sm:$0xf]
        %v635 = vld [vmem:[%s1 + $0x8] sm:$0xf]
        %v636 = vld [vmem:[%s1 + $0xc] sm:$0x3]
        %v701 = vunpack.c.l.b16 %v569
        %v702 = vunpack.c.l.b16 %v570
        %v703 = vunpack.c.l.b16 %v571
        %v704 = vunpack.c.l.b16 %v572
        %v705 = vunpack.c.l.b16 %v573
        %v706 = vunpack.c.l.b16 %v574
        %v707 = vunpack.c.l.b16 %v575
        %v708 = vunpack.c.l.b16 %v576
        %v709 = vunpack.c.l.b16 %v577
        %v710 = vunpack.c.l.b16 %v578
        %v711 = vunpack.c.l.b16 %v579
        %v712 = vunpack.c.l.b16 %v580
        %v713 = vunpack.c.l.b16 %v581
        %v714 = vunpack.c.l.b16 %v582
        %v715 = vunpack.c.l.b16 %v583
        %v716 = vunpack.c.l.b16 %v584
        %v717 = vunpack.c.l.b16 %v585
        %v718 = vunpack.c.l.b16 %v586
        %v719 = vunpack.c.l.b16 %v587
        %v720 = vunpack.c.l.b16 %v588
        %v721 = vunpack.c.l.b16 %v589
        %v722 = vunpack.c.l.b16 %v590
        %v723 = vunpack.c.l.b16 %v591
        %v724 = vunpack.c.l.b16 %v592
        %v725 = vunpack.c.l.b16 %v593
        %v726 = vunpack.c.l.b16 %v594
        %v727 = vunpack.c.l.b16 %v595
        %v728 = vunpack.c.l.b16 %v596
        %v729 = vunpack.c.l.b16 %v597
        %v730 = vunpack.c.l.b16 %v598
        %v731 = vunpack.c.l.b16 %v599
        %v732 = vunpack.c.l.b16 %v600
        %v733 = vunpack.c.l.b16 %v601
        %v734 = vunpack.c.l.b16 %v602
        %v735 = vunpack.c.l.b16 %v603
        %v736 = vunpack.c.l.b16 %v604
        %v737 = vunpack.c.l.b16 %v605
        %v738 = vunpack.c.l.b16 %v606
        %v739 = vunpack.c.l.b16 %v607
        %v740 = vunpack.c.l.b16 %v608
        %v741 = vunpack.c.l.b16 %v609
        %v742 = vunpack.c.l.b16 %v610
        %v743 = vunpack.c.l.b16 %v611
        %v744 = vunpack.c.l.b16 %v612
        %v745 = vunpack.c.l.b16 %v613
        %v746 = vunpack.c.l.b16 %v614
        %v747 = vunpack.c.l.b16 %v615
        %v748 = vunpack.c.l.b16 %v616
        %v749 = vunpack.c.l.b16 %v617
        %v750 = vunpack.c.l.b16 %v618
        %v751 = vunpack.c.l.b16 %v619
        %v752 = vunpack.c.l.b16 %v620
        %v753 = vunpack.c.l.b16 %v621
        %v754 = vunpack.c.l.b16 %v622
        %v755 = vunpack.c.l.b16 %v623
        %v756 = vunpack.c.l.b16 %v624
        %v757 = vunpack.c.l.b16 %v625
        %v758 = vunpack.c.l.b16 %v626
        %v759 = vunpack.c.l.b16 %v627
        %v760 = vunpack.c.l.b16 %v628
        %v761 = vunpack.c.l.b16 %v629
        %v762 = vunpack.c.l.b16 %v630
        %v763 = vunpack.c.l.b16 %v631
        %v764 = vunpack.c.l.b16 %v632
        %v765 = vpack.c.b16 %v702, %v701
        %v766 = vpack.c.b16 %v704, %v703
        %v767 = vpack.c.b16 %v706, %v705
        %v768 = vpack.c.b16 %v708, %v707
        %v769 = vpack.c.b16 %v710, %v709
        %v770 = vpack.c.b16 %v712, %v711
        %v771 = vpack.c.b16 %v714, %v713
        %v772 = vpack.c.b16 %v716, %v715
        %v773 = vpack.c.b16 %v718, %v717
        %v774 = vpack.c.b16 %v720, %v719
        %v775 = vpack.c.b16 %v722, %v721
        %v776 = vpack.c.b16 %v724, %v723
        %v777 = vpack.c.b16 %v726, %v725
        %v778 = vpack.c.b16 %v728, %v727
        %v779 = vpack.c.b16 %v730, %v729
        %v780 = vpack.c.b16 %v732, %v731
        %v781 = vpack.c.b16 %v734, %v733
        %v782 = vpack.c.b16 %v736, %v735
        %v783 = vpack.c.b16 %v738, %v737
        %v784 = vpack.c.b16 %v740, %v739
        %v785 = vpack.c.b16 %v742, %v741
        %v786 = vpack.c.b16 %v744, %v743
        %v787 = vpack.c.b16 %v746, %v745
        %v788 = vpack.c.b16 %v748, %v747
        %v789 = vpack.c.b16 %v750, %v749
        %v790 = vpack.c.b16 %v752, %v751
        %v791 = vpack.c.b16 %v754, %v753
        %v792 = vpack.c.b16 %v756, %v755
        %v793 = vpack.c.b16 %v758, %v757
        %v794 = vpack.c.b16 %v760, %v759
        %v795 = vpack.c.b16 %v762, %v761
        %v796 = vpack.c.b16 %v764, %v763
        %v801 = vunpack.c.l.b16 %v633
        %v802 = vunpack.c.l.b16 %v634
        %v803 = vunpack.c.l.b16 %v635
        %v804 = vunpack.c.l.b16 %v636
        %v805 = vpack.c.b16 %v802, %v801
        %v806 = vpack.c.b16 %v804, %v803
        %vm808 = vcmask 220160
        %v810 = vsel %vm808, %v765, 0
        %v813 = vsel %vm808, %v766, 0
        %v816 = vsel %vm808, %v767, 0
        %v819 = vsel %vm808, %v768, 0
        %v822 = vsel %vm808, %v769, 0
        %v825 = vsel %vm808, %v770, 0
        %v828 = vsel %vm808, %v771, 0
        %v831 = vsel %vm808, %v772, 0
        %v834 = vsel %vm808, %v773, 0
        %v837 = vsel %vm808, %v774, 0
        %v840 = vsel %vm808, %v775, 0
        %v843 = vsel %vm808, %v776, 0
        %v846 = vsel %vm808, %v777, 0
        %v849 = vsel %vm808, %v778, 0
        %v852 = vsel %vm808, %v779, 0
        %v855 = vsel %vm808, %v780, 0
        %v858 = vsel %vm808, %v781, 0
        %v861 = vsel %vm808, %v782, 0
        %v864 = vsel %vm808, %v783, 0
        %v867 = vsel %vm808, %v784, 0
        %v870 = vsel %vm808, %v785, 0
        %v873 = vsel %vm808, %v786, 0
        %v876 = vsel %vm808, %v787, 0
        %v879 = vsel %vm808, %v788, 0
        %v882 = vsel %vm808, %v789, 0
        %v885 = vsel %vm808, %v790, 0
        %v888 = vsel %vm808, %v791, 0
        %v891 = vsel %vm808, %v792, 0
        %v894 = vsel %vm808, %v793, 0
        %v897 = vsel %vm808, %v794, 0
        %v900 = vsel %vm808, %v795, 0
        %v903 = vsel %vm808, %v796, 0
        %vm905 = vcmask 1044480
        %vm906 = vcmask 1045504
        %v907 = vsel %vm905, 4294967295, 65535
        %v908 = vsel %vm906, %v907, 0
        %v910 = vand.u32 %v806, %v908
        %912 = vmatpush.bf16.msra.mxu0 0
        %913 = vmatpush.bf16.msra.mxu0 0
        %914 = vmatpush.bf16.msra.mxu0 0
        %915 = vmatpush.bf16.msra.mxu0 0
        %916 = vmatpush.bf16.msra.mxu0 0
        %917 = vmatpush.bf16.msra.mxu0 0
        %918 = vmatpush.bf16.msra.mxu0 %v910
        %919 = vmatpush.bf16.msra.mxu0 %v805
        %920 = vmatmul.bf16.gmra.mxu0 %v810
        %v921 = vpop.f32.mrf.mxu0
        %v922 = vadd.f32 0.0, %v921
        %v923 = vpop.f32.mrf.mxu0
        %v924 = vadd.f32 0.0, %v923
        %925 = vmatmul.bf16.gmra.mxu0 %v813
        %v926 = vpop.f32.mrf.mxu0
        %v927 = vadd.f32 0.0, %v926
        %v928 = vpop.f32.mrf.mxu0
        %v929 = vadd.f32 0.0, %v928
        %930 = vmatmul.bf16.gmra.mxu0 %v816
        %v931 = vpop.f32.mrf.mxu0
        %v932 = vadd.f32 0.0, %v931
        %v933 = vpop.f32.mrf.mxu0
        %v934 = vadd.f32 0.0, %v933
        %935 = vmatmul.bf16.gmra.mxu0 %v819
        %v936 = vpop.f32.mrf.mxu0
        %v937 = vadd.f32 0.0, %v936
        %v938 = vpop.f32.mrf.mxu0
        %v939 = vadd.f32 0.0, %v938
        %940 = vmatmul.bf16.gmra.mxu0 %v822
        %v941 = vpop.f32.mrf.mxu0
        %v942 = vadd.f32 0.0, %v941
        %v943 = vpop.f32.mrf.mxu0
        %v944 = vadd.f32 0.0, %v943
        %945 = vmatmul.bf16.gmra.mxu0 %v825
        %v946 = vpop.f32.mrf.mxu0
        %v947 = vadd.f32 0.0, %v946
        %v948 = vpop.f32.mrf.mxu0
        %v949 = vadd.f32 0.0, %v948
        %950 = vmatmul.bf16.gmra.mxu0 %v828
        %v951 = vpop.f32.mrf.mxu0
        %v952 = vadd.f32 0.0, %v951
        %v953 = vpop.f32.mrf.mxu0
        %v954 = vadd.f32 0.0, %v953
        %955 = vmatmul.bf16.gmra.mxu0 %v831
        %v956 = vpop.f32.mrf.mxu0
        %v957 = vadd.f32 0.0, %v956
        %v958 = vpop.f32.mrf.mxu0
        %v959 = vadd.f32 0.0, %v958
        %960 = vmatmul.bf16.gmra.mxu0 %v834
        %v961 = vpop.f32.mrf.mxu0
        %v962 = vadd.f32 0.0, %v961
        %v963 = vpop.f32.mrf.mxu0
        %v964 = vadd.f32 0.0, %v963
        %965 = vmatmul.bf16.gmra.mxu0 %v837
        %v966 = vpop.f32.mrf.mxu0
        %v967 = vadd.f32 0.0, %v966
        %v968 = vpop.f32.mrf.mxu0
        %v969 = vadd.f32 0.0, %v968
        %970 = vmatmul.bf16.gmra.mxu0 %v840
        %v971 = vpop.f32.mrf.mxu0
        %v972 = vadd.f32 0.0, %v971
        %v973 = vpop.f32.mrf.mxu0
        %v974 = vadd.f32 0.0, %v973
        %975 = vmatmul.bf16.gmra.mxu0 %v843
        %v976 = vpop.f32.mrf.mxu0
        %v977 = vadd.f32 0.0, %v976
        %v978 = vpop.f32.mrf.mxu0
        %v979 = vadd.f32 0.0, %v978
        %980 = vmatmul.bf16.gmra.mxu0 %v846
        %v981 = vpop.f32.mrf.mxu0
        %v982 = vadd.f32 0.0, %v981
        %v983 = vpop.f32.mrf.mxu0
        %v984 = vadd.f32 0.0, %v983
        %985 = vmatmul.bf16.gmra.mxu0 %v849
        %v986 = vpop.f32.mrf.mxu0
        %v987 = vadd.f32 0.0, %v986
        %v988 = vpop.f32.mrf.mxu0
        %v989 = vadd.f32 0.0, %v988
        %990 = vmatmul.bf16.gmra.mxu0 %v852
        %v991 = vpop.f32.mrf.mxu0
        %v992 = vadd.f32 0.0, %v991
        %v993 = vpop.f32.mrf.mxu0
        %v994 = vadd.f32 0.0, %v993
        %995 = vmatmul.bf16.gmra.mxu0 %v855
        %v996 = vpop.f32.mrf.mxu0
        %v997 = vadd.f32 0.0, %v996
        %v998 = vpop.f32.mrf.mxu0
        %v999 = vadd.f32 0.0, %v998
        %1000 = vmatmul.bf16.gmra.mxu0 %v858
        %v1001 = vpop.f32.mrf.mxu0
        %v1002 = vadd.f32 0.0, %v1001
        %v1003 = vpop.f32.mrf.mxu0
        %v1004 = vadd.f32 0.0, %v1003
        %1005 = vmatmul.bf16.gmra.mxu0 %v861
        %v1006 = vpop.f32.mrf.mxu0
        %v1007 = vadd.f32 0.0, %v1006
        %v1008 = vpop.f32.mrf.mxu0
        %v1009 = vadd.f32 0.0, %v1008
        %1010 = vmatmul.bf16.gmra.mxu0 %v864
        %v1011 = vpop.f32.mrf.mxu0
        %v1012 = vadd.f32 0.0, %v1011
        %v1013 = vpop.f32.mrf.mxu0
        %v1014 = vadd.f32 0.0, %v1013
        %1015 = vmatmul.bf16.gmra.mxu0 %v867
        %v1016 = vpop.f32.mrf.mxu0
        %v1017 = vadd.f32 0.0, %v1016
        %v1018 = vpop.f32.mrf.mxu0
        %v1019 = vadd.f32 0.0, %v1018
        %1020 = vmatmul.bf16.gmra.mxu0 %v870
        %v1021 = vpop.f32.mrf.mxu0
        %v1022 = vadd.f32 0.0, %v1021
        %v1023 = vpop.f32.mrf.mxu0
        %v1024 = vadd.f32 0.0, %v1023
        %1025 = vmatmul.bf16.gmra.mxu0 %v873
        %v1026 = vpop.f32.mrf.mxu0
        %v1027 = vadd.f32 0.0, %v1026
        %v1028 = vpop.f32.mrf.mxu0
        %v1029 = vadd.f32 0.0, %v1028
        %1030 = vmatmul.bf16.gmra.mxu0 %v876
        %v1031 = vpop.f32.mrf.mxu0
        %v1032 = vadd.f32 0.0, %v1031
        %v1033 = vpop.f32.mrf.mxu0
        %v1034 = vadd.f32 0.0, %v1033
        %1035 = vmatmul.bf16.gmra.mxu0 %v879
        %v1036 = vpop.f32.mrf.mxu0
        %v1037 = vadd.f32 0.0, %v1036
        %v1038 = vpop.f32.mrf.mxu0
        %v1039 = vadd.f32 0.0, %v1038
        %1040 = vmatmul.bf16.gmra.mxu0 %v882
        %v1041 = vpop.f32.mrf.mxu0
        %v1042 = vadd.f32 0.0, %v1041
        %v1043 = vpop.f32.mrf.mxu0
        %v1044 = vadd.f32 0.0, %v1043
        %1045 = vmatmul.bf16.gmra.mxu0 %v885
        %v1046 = vpop.f32.mrf.mxu0
        %v1047 = vadd.f32 0.0, %v1046
        %v1048 = vpop.f32.mrf.mxu0
        %v1049 = vadd.f32 0.0, %v1048
        %1050 = vmatmul.bf16.gmra.mxu0 %v888
        %v1051 = vpop.f32.mrf.mxu0
        %v1052 = vadd.f32 0.0, %v1051
        %v1053 = vpop.f32.mrf.mxu0
        %v1054 = vadd.f32 0.0, %v1053
        %1055 = vmatmul.bf16.gmra.mxu0 %v891
        %v1056 = vpop.f32.mrf.mxu0
        %v1057 = vadd.f32 0.0, %v1056
        %v1058 = vpop.f32.mrf.mxu0
        %v1059 = vadd.f32 0.0, %v1058
        %1060 = vmatmul.bf16.gmra.mxu0 %v894
        %v1061 = vpop.f32.mrf.mxu0
        %v1062 = vadd.f32 0.0, %v1061
        %v1063 = vpop.f32.mrf.mxu0
        %v1064 = vadd.f32 0.0, %v1063
        %1065 = vmatmul.bf16.gmra.mxu0 %v897
        %v1066 = vpop.f32.mrf.mxu0
        %v1067 = vadd.f32 0.0, %v1066
        %v1068 = vpop.f32.mrf.mxu0
        %v1069 = vadd.f32 0.0, %v1068
        %1070 = vmatmul.bf16.gmra.mxu0 %v900
        %v1071 = vpop.f32.mrf.mxu0
        %v1072 = vadd.f32 0.0, %v1071
        %v1073 = vpop.f32.mrf.mxu0
        %v1074 = vadd.f32 0.0, %v1073
        %1075 = vmatmul.bf16.gmra.mxu0 %v903
        %v1076 = vpop.f32.mrf.mxu0
        %v1077 = vadd.f32 0.0, %v1076
        %v1078 = vpop.f32.mrf.mxu0
        %v1079 = vadd.f32 0.0, %v1078
        %1080 = vdwg.mxu0
        %v1081 = vsub.f32 %v922, %v1002
        %v1082 = vsub.f32 %v924, %v1004
        %v1083 = vsub.f32 %v927, %v1007
        %v1084 = vsub.f32 %v929, %v1009
        %v1085 = vsub.f32 %v932, %v1012
        %v1086 = vsub.f32 %v934, %v1014
        %v1087 = vsub.f32 %v937, %v1017
        %v1088 = vsub.f32 %v939, %v1019
        %v1089 = vsub.f32 %v942, %v1022
        %v1090 = vsub.f32 %v944, %v1024
        %v1091 = vsub.f32 %v947, %v1027
        %v1092 = vsub.f32 %v949, %v1029
        %v1093 = vsub.f32 %v952, %v1032
        %v1094 = vsub.f32 %v954, %v1034
        %v1095 = vsub.f32 %v957, %v1037
        %v1096 = vsub.f32 %v959, %v1039
        %v1097 = vsub.f32 %v962, %v1042
        %v1098 = vsub.f32 %v964, %v1044
        %v1099 = vsub.f32 %v967, %v1047
        %v1100 = vsub.f32 %v969, %v1049
        %v1101 = vsub.f32 %v972, %v1052
        %v1102 = vsub.f32 %v974, %v1054
        %v1103 = vsub.f32 %v977, %v1057
        %v1104 = vsub.f32 %v979, %v1059
        %v1105 = vsub.f32 %v982, %v1062
        %v1106 = vsub.f32 %v984, %v1064
        %v1107 = vsub.f32 %v987, %v1067
        %v1108 = vsub.f32 %v989, %v1069
        %v1109 = vsub.f32 %v992, %v1072
        %v1110 = vsub.f32 %v994, %v1074
        %v1111 = vsub.f32 %v997, %v1077
        %v1112 = vsub.f32 %v999, %v1079
        %v1113 = vand.u32 2147483647, %v1081
        %v1114 = vand.u32 2147483647, %v1082
        %v1115 = vand.u32 2147483647, %v1083
        %v1116 = vand.u32 2147483647, %v1084
        %v1117 = vand.u32 2147483647, %v1085
        %v1118 = vand.u32 2147483647, %v1086
        %v1119 = vand.u32 2147483647, %v1087
        %v1120 = vand.u32 2147483647, %v1088
        %v1121 = vand.u32 2147483647, %v1089
        %v1122 = vand.u32 2147483647, %v1090
        %v1123 = vand.u32 2147483647, %v1091
        %v1124 = vand.u32 2147483647, %v1092
        %v1125 = vand.u32 2147483647, %v1093
        %v1126 = vand.u32 2147483647, %v1094
        %v1127 = vand.u32 2147483647, %v1095
        %v1128 = vand.u32 2147483647, %v1096
        %v1129 = vand.u32 2147483647, %v1097
        %v1130 = vand.u32 2147483647, %v1098
        %v1131 = vand.u32 2147483647, %v1099
        %v1132 = vand.u32 2147483647, %v1100
        %v1133 = vand.u32 2147483647, %v1101
        %v1134 = vand.u32 2147483647, %v1102
        %v1135 = vand.u32 2147483647, %v1103
        %v1136 = vand.u32 2147483647, %v1104
        %v1137 = vand.u32 2147483647, %v1105
        %v1138 = vand.u32 2147483647, %v1106
        %v1139 = vand.u32 2147483647, %v1107
        %v1140 = vand.u32 2147483647, %v1108
        %v1141 = vand.u32 2147483647, %v1109
        %v1142 = vand.u32 2147483647, %v1110
        %v1143 = vand.u32 2147483647, %v1111
        %v1144 = vand.u32 2147483647, %v1112
        %vm1145 = vcmask 523264
        %v1146 = vsel %vm1145, %v1113, 0.0
        %v1147 = vsel %vm1145, %v1114, 0.0
        %v1148 = vadd.f32 %v1146, %v1147
        %v1149 = vsel %vm1145, %v1115, 0.0
        %v1150 = vadd.f32 %v1148, %v1149
        %v1151 = vsel %vm1145, %v1116, 0.0
        %v1152 = vadd.f32 %v1150, %v1151
        %v1153 = vsel %vm1145, %v1117, 0.0
        %v1154 = vadd.f32 %v1152, %v1153
        %v1155 = vsel %vm1145, %v1118, 0.0
        %v1156 = vadd.f32 %v1154, %v1155
        %v1157 = vsel %vm1145, %v1119, 0.0
        %v1158 = vadd.f32 %v1156, %v1157
        %v1159 = vsel %vm1145, %v1120, 0.0
        %v1160 = vadd.f32 %v1158, %v1159
        %v1161 = vsel %vm1145, %v1121, 0.0
        %v1162 = vadd.f32 %v1160, %v1161
        %v1163 = vsel %vm1145, %v1122, 0.0
        %v1164 = vadd.f32 %v1162, %v1163
        %v1165 = vsel %vm1145, %v1123, 0.0
        %v1166 = vadd.f32 %v1164, %v1165
        %v1167 = vsel %vm1145, %v1124, 0.0
        %v1168 = vadd.f32 %v1166, %v1167
        %v1169 = vsel %vm1145, %v1125, 0.0
        %v1170 = vadd.f32 %v1168, %v1169
        %v1171 = vsel %vm1145, %v1126, 0.0
        %v1172 = vadd.f32 %v1170, %v1171
        %v1173 = vsel %vm1145, %v1127, 0.0
        %v1174 = vadd.f32 %v1172, %v1173
        %v1175 = vsel %vm1145, %v1128, 0.0
        %v1176 = vadd.f32 %v1174, %v1175
        %v1177 = vsel %vm1145, %v1129, 0.0
        %v1178 = vadd.f32 %v1176, %v1177
        %v1179 = vsel %vm1145, %v1130, 0.0
        %v1180 = vadd.f32 %v1178, %v1179
        %v1181 = vsel %vm1145, %v1131, 0.0
        %v1182 = vadd.f32 %v1180, %v1181
        %v1183 = vsel %vm1145, %v1132, 0.0
        %v1184 = vadd.f32 %v1182, %v1183
        %v1185 = vsel %vm1145, %v1133, 0.0
        %v1186 = vadd.f32 %v1184, %v1185
        %v1187 = vsel %vm1145, %v1134, 0.0
        %v1188 = vadd.f32 %v1186, %v1187
        %v1189 = vsel %vm1145, %v1135, 0.0
        %v1190 = vadd.f32 %v1188, %v1189
        %v1191 = vsel %vm1145, %v1136, 0.0
        %v1192 = vadd.f32 %v1190, %v1191
        %v1193 = vsel %vm1145, %v1137, 0.0
        %v1194 = vadd.f32 %v1192, %v1193
        %v1195 = vsel %vm1145, %v1138, 0.0
        %v1196 = vadd.f32 %v1194, %v1195
        %v1197 = vsel %vm1145, %v1139, 0.0
        %v1198 = vadd.f32 %v1196, %v1197
        %v1199 = vsel %vm1145, %v1140, 0.0
        %v1200 = vadd.f32 %v1198, %v1199
        %v1201 = vsel %vm1145, %v1141, 0.0
        %v1202 = vadd.f32 %v1200, %v1201
        %v1203 = vsel %vm1145, %v1142, 0.0
        %v1204 = vadd.f32 %v1202, %v1203
        %v1205 = vsel %vm1145, %v1143, 0.0
        %v1206 = vadd.f32 %v1204, %v1205
        %v1207 = vsel %vm1145, %v1144, 0.0
        %v1208 = vadd.f32 %v1206, %v1207
        %v1209 = vrot.slane %v1208, 4
        %v1210 = vadd.f32 %v1208, %v1209
        %v1211 = vrot.slane %v1210, 2
        %v1212 = vadd.f32 %v1210, %v1211
        %v1213 = vrot.slane %v1212, 1
        %v1214 = vadd.f32 %v1212, %v1213
        %v1215 = vld [vmem:[%s2] sm:$0x1]
        %v1217 = vperm.slane %v1215, 0
        %v1219 = vadd.f32 %v922, %v1217
        %v1220 = vadd.f32 %v924, %v1217
        %v1221 = vadd.f32 %v927, %v1217
        %v1222 = vadd.f32 %v929, %v1217
        %v1223 = vadd.f32 %v932, %v1217
        %v1224 = vadd.f32 %v934, %v1217
        %v1225 = vadd.f32 %v937, %v1217
        %v1226 = vadd.f32 %v939, %v1217
        %v1227 = vadd.f32 %v942, %v1217
        %v1228 = vadd.f32 %v944, %v1217
        %v1229 = vadd.f32 %v947, %v1217
        %v1230 = vadd.f32 %v949, %v1217
        %v1231 = vadd.f32 %v952, %v1217
        %v1232 = vadd.f32 %v954, %v1217
        %v1233 = vadd.f32 %v957, %v1217
        %v1234 = vadd.f32 %v959, %v1217
        %v1235 = vadd.f32 %v962, %v1217
        %v1236 = vadd.f32 %v964, %v1217
        %v1237 = vadd.f32 %v967, %v1217
        %v1238 = vadd.f32 %v969, %v1217
        %v1239 = vadd.f32 %v972, %v1217
        %v1240 = vadd.f32 %v974, %v1217
        %v1241 = vadd.f32 %v977, %v1217
        %v1242 = vadd.f32 %v979, %v1217
        %v1243 = vadd.f32 %v982, %v1217
        %v1244 = vadd.f32 %v984, %v1217
        %v1245 = vadd.f32 %v987, %v1217
        %v1246 = vadd.f32 %v989, %v1217
        %v1247 = vadd.f32 %v992, %v1217
        %v1248 = vadd.f32 %v994, %v1217
        %v1249 = vadd.f32 %v997, %v1217
        %v1250 = vadd.f32 %v999, %v1217
        %v1251 = vadd.f32 %v1002, %v1217
        %v1252 = vadd.f32 %v1004, %v1217
        %v1253 = vadd.f32 %v1007, %v1217
        %v1254 = vadd.f32 %v1009, %v1217
        %v1255 = vadd.f32 %v1012, %v1217
        %v1256 = vadd.f32 %v1014, %v1217
        %v1257 = vadd.f32 %v1017, %v1217
        %v1258 = vadd.f32 %v1019, %v1217
        %v1259 = vadd.f32 %v1022, %v1217
        %v1260 = vadd.f32 %v1024, %v1217
        %v1261 = vadd.f32 %v1027, %v1217
        %v1262 = vadd.f32 %v1029, %v1217
        %v1263 = vadd.f32 %v1032, %v1217
        %v1264 = vadd.f32 %v1034, %v1217
        %v1265 = vadd.f32 %v1037, %v1217
        %v1266 = vadd.f32 %v1039, %v1217
        %v1267 = vadd.f32 %v1042, %v1217
        %v1268 = vadd.f32 %v1044, %v1217
        %v1269 = vadd.f32 %v1047, %v1217
        %v1270 = vadd.f32 %v1049, %v1217
        %v1271 = vadd.f32 %v1052, %v1217
        %v1272 = vadd.f32 %v1054, %v1217
        %v1273 = vadd.f32 %v1057, %v1217
        %v1274 = vadd.f32 %v1059, %v1217
        %v1275 = vadd.f32 %v1062, %v1217
        %v1276 = vadd.f32 %v1064, %v1217
        %v1277 = vadd.f32 %v1067, %v1217
        %v1278 = vadd.f32 %v1069, %v1217
        %v1279 = vadd.f32 %v1072, %v1217
        %v1280 = vadd.f32 %v1074, %v1217
        %v1281 = vadd.f32 %v1077, %v1217
        %v1282 = vadd.f32 %v1079, %v1217
        %v1283 = vmax.f32 %v1219, 0.0
        %v1284 = vmax.f32 %v1220, 0.0
        %v1285 = vmax.f32 %v1221, 0.0
        %v1286 = vmax.f32 %v1222, 0.0
        %v1287 = vmax.f32 %v1223, 0.0
        %v1288 = vmax.f32 %v1224, 0.0
        %v1289 = vmax.f32 %v1225, 0.0
        %v1290 = vmax.f32 %v1226, 0.0
        %v1291 = vmax.f32 %v1227, 0.0
        %v1292 = vmax.f32 %v1228, 0.0
        %v1293 = vmax.f32 %v1229, 0.0
        %v1294 = vmax.f32 %v1230, 0.0
        %v1295 = vmax.f32 %v1231, 0.0
        %v1296 = vmax.f32 %v1232, 0.0
        %v1297 = vmax.f32 %v1233, 0.0
        %v1298 = vmax.f32 %v1234, 0.0
        %v1299 = vmax.f32 %v1235, 0.0
        %v1300 = vmax.f32 %v1236, 0.0
        %v1301 = vmax.f32 %v1237, 0.0
        %v1302 = vmax.f32 %v1238, 0.0
        %v1303 = vmax.f32 %v1239, 0.0
        %v1304 = vmax.f32 %v1240, 0.0
        %v1305 = vmax.f32 %v1241, 0.0
        %v1306 = vmax.f32 %v1242, 0.0
        %v1307 = vmax.f32 %v1243, 0.0
        %v1308 = vmax.f32 %v1244, 0.0
        %v1309 = vmax.f32 %v1245, 0.0
        %v1310 = vmax.f32 %v1246, 0.0
        %v1311 = vmax.f32 %v1247, 0.0
        %v1312 = vmax.f32 %v1248, 0.0
        %v1313 = vmax.f32 %v1249, 0.0
        %v1314 = vmax.f32 %v1250, 0.0
        %v1315 = vmax.f32 %v1251, 0.0
        %v1316 = vmax.f32 %v1252, 0.0
        %v1317 = vmax.f32 %v1253, 0.0
        %v1318 = vmax.f32 %v1254, 0.0
        %v1319 = vmax.f32 %v1255, 0.0
        %v1320 = vmax.f32 %v1256, 0.0
        %v1321 = vmax.f32 %v1257, 0.0
        %v1322 = vmax.f32 %v1258, 0.0
        %v1323 = vmax.f32 %v1259, 0.0
        %v1324 = vmax.f32 %v1260, 0.0
        %v1325 = vmax.f32 %v1261, 0.0
        %v1326 = vmax.f32 %v1262, 0.0
        %v1327 = vmax.f32 %v1263, 0.0
        %v1328 = vmax.f32 %v1264, 0.0
        %v1329 = vmax.f32 %v1265, 0.0
        %v1330 = vmax.f32 %v1266, 0.0
        %v1331 = vmax.f32 %v1267, 0.0
        %v1332 = vmax.f32 %v1268, 0.0
        %v1333 = vmax.f32 %v1269, 0.0
        %v1334 = vmax.f32 %v1270, 0.0
        %v1335 = vmax.f32 %v1271, 0.0
        %v1336 = vmax.f32 %v1272, 0.0
        %v1337 = vmax.f32 %v1273, 0.0
        %v1338 = vmax.f32 %v1274, 0.0
        %v1339 = vmax.f32 %v1275, 0.0
        %v1340 = vmax.f32 %v1276, 0.0
        %v1341 = vmax.f32 %v1277, 0.0
        %v1342 = vmax.f32 %v1278, 0.0
        %v1343 = vmax.f32 %v1279, 0.0
        %v1344 = vmax.f32 %v1280, 0.0
        %v1345 = vmax.f32 %v1281, 0.0
        %v1346 = vmax.f32 %v1282, 0.0
        %v1347 = vsub.f32 %v1283, %v1315
        %v1348 = vsub.f32 %v1284, %v1316
        %v1349 = vsub.f32 %v1285, %v1317
        %v1350 = vsub.f32 %v1286, %v1318
        %v1351 = vsub.f32 %v1287, %v1319
        %v1352 = vsub.f32 %v1288, %v1320
        %v1353 = vsub.f32 %v1289, %v1321
        %v1354 = vsub.f32 %v1290, %v1322
        %v1355 = vsub.f32 %v1291, %v1323
        %v1356 = vsub.f32 %v1292, %v1324
        %v1357 = vsub.f32 %v1293, %v1325
        %v1358 = vsub.f32 %v1294, %v1326
        %v1359 = vsub.f32 %v1295, %v1327
        %v1360 = vsub.f32 %v1296, %v1328
        %v1361 = vsub.f32 %v1297, %v1329
        %v1362 = vsub.f32 %v1298, %v1330
        %v1363 = vsub.f32 %v1299, %v1331
        %v1364 = vsub.f32 %v1300, %v1332
        %v1365 = vsub.f32 %v1301, %v1333
        %v1366 = vsub.f32 %v1302, %v1334
        %v1367 = vsub.f32 %v1303, %v1335
        %v1368 = vsub.f32 %v1304, %v1336
        %v1369 = vsub.f32 %v1305, %v1337
        %v1370 = vsub.f32 %v1306, %v1338
        %v1371 = vsub.f32 %v1307, %v1339
        %v1372 = vsub.f32 %v1308, %v1340
        %v1373 = vsub.f32 %v1309, %v1341
        %v1374 = vsub.f32 %v1310, %v1342
        %v1375 = vsub.f32 %v1311, %v1343
        %v1376 = vsub.f32 %v1312, %v1344
        %v1377 = vsub.f32 %v1313, %v1345
        %v1378 = vsub.f32 %v1314, %v1346
        %s1379 = scalar_lea.vmem [#allocation2], 24
        %1380 = vst.msk [vmem:[%s1379 + $0x1] sm:$0xff] %vm1145, %v1347
        %1381 = vst.msk [vmem:[%s1379 + $0x9] sm:$0xff] %vm1145, %v1348
        %1382 = vst.msk [vmem:[%s1379 + $0x19] sm:$0xff] %vm1145, %v1349
        %1383 = vst.msk [vmem:[%s1379 + $0x21] sm:$0xff] %vm1145, %v1350
        %1384 = vst.msk [vmem:[%s1379 + $0x31] sm:$0xff] %vm1145, %v1351
        %1385 = vst.msk [vmem:[%s1379 + $0x39] sm:$0xff] %vm1145, %v1352
        %1386 = vst.msk [vmem:[%s1379 + $0x49] sm:$0xff] %vm1145, %v1353
        %1387 = vst.msk [vmem:[%s1379 + $0x51] sm:$0xff] %vm1145, %v1354
        %1388 = vst.msk [vmem:[%s1379 + $0x61] sm:$0xff] %vm1145, %v1355
        %1389 = vst.msk [vmem:[%s1379 + $0x69] sm:$0xff] %vm1145, %v1356
        %1390 = vst.msk [vmem:[%s1379 + $0x79] sm:$0xff] %vm1145, %v1357
        %1391 = vst.msk [vmem:[%s1379 + $0x81] sm:$0xff] %vm1145, %v1358
        %1392 = vst.msk [vmem:[%s1379 + $0x91] sm:$0xff] %vm1145, %v1359
        %1393 = vst.msk [vmem:[%s1379 + $0x99] sm:$0xff] %vm1145, %v1360
        %1394 = vst.msk [vmem:[%s1379 + $0xa9] sm:$0xff] %vm1145, %v1361
        %1395 = vst.msk [vmem:[%s1379 + $0xb1] sm:$0xff] %vm1145, %v1362
        %1396 = vst.msk [vmem:[%s1379 + $0xc1] sm:$0xff] %vm1145, %v1363
        %1397 = vst.msk [vmem:[%s1379 + $0xc9] sm:$0xff] %vm1145, %v1364
        %1398 = vst.msk [vmem:[%s1379 + $0xd9] sm:$0xff] %vm1145, %v1365
        %1399 = vst.msk [vmem:[%s1379 + $0xe1] sm:$0xff] %vm1145, %v1366
        %1400 = vst.msk [vmem:[%s1379 + $0xf1] sm:$0xff] %vm1145, %v1367
        %1401 = vst.msk [vmem:[%s1379 + $0xf9] sm:$0xff] %vm1145, %v1368
        %1402 = vst.msk [vmem:[%s1379 + $0x109] sm:$0xff] %vm1145, %v1369
        %1403 = vst.msk [vmem:[%s1379 + $0x111] sm:$0xff] %vm1145, %v1370
        %1404 = vst.msk [vmem:[%s1379 + $0x121] sm:$0xff] %vm1145, %v1371
        %1405 = vst.msk [vmem:[%s1379 + $0x129] sm:$0xff] %vm1145, %v1372
        %1406 = vst.msk [vmem:[%s1379 + $0x139] sm:$0xff] %vm1145, %v1373
        %1407 = vst.msk [vmem:[%s1379 + $0x141] sm:$0xff] %vm1145, %v1374
        %1408 = vst.msk [vmem:[%s1379 + $0x151] sm:$0xff] %vm1145, %v1375
        %1409 = vst.msk [vmem:[%s1379 + $0x159] sm:$0xff] %vm1145, %v1376
        %1410 = vst.msk [vmem:[%s1379 + $0x169] sm:$0xff] %vm1145, %v1377
        %1411 = vst.msk [vmem:[%s1379 + $0x171] sm:$0xff] %vm1145, %v1378
        %v1412 = vld [vmem:[#allocation2] sm:$0xff]
        %v1413 = vld [vmem:[#allocation2 + $0x8] sm:$0xff]
        %v1414 = vld [vmem:[#allocation2 + $0x18] sm:$0xff]
        %v1415 = vld [vmem:[#allocation2 + $0x20] sm:$0xff]
        %v1416 = vld [vmem:[#allocation2 + $0x30] sm:$0xff]
        %v1417 = vld [vmem:[#allocation2 + $0x38] sm:$0xff]
        %v1418 = vld [vmem:[#allocation2 + $0x48] sm:$0xff]
        %v1419 = vld [vmem:[#allocation2 + $0x50] sm:$0xff]
        %v1420 = vld [vmem:[#allocation2 + $0x60] sm:$0xff]
        %v1421 = vld [vmem:[#allocation2 + $0x68] sm:$0xff]
        %v1422 = vld [vmem:[#allocation2 + $0x78] sm:$0xff]
        %v1423 = vld [vmem:[#allocation2 + $0x80] sm:$0xff]
        %v1424 = vld [vmem:[#allocation2 + $0x90] sm:$0xff]
        %v1425 = vld [vmem:[#allocation2 + $0x98] sm:$0xff]
        %v1426 = vld [vmem:[#allocation2 + $0xa8] sm:$0xff]
        %v1427 = vld [vmem:[#allocation2 + $0xb0] sm:$0xff]
        %v1428 = vld [vmem:[#allocation2 + $0xc0] sm:$0xff]
        %v1429 = vld [vmem:[#allocation2 + $0xc8] sm:$0xff]
        %v1430 = vld [vmem:[#allocation2 + $0xd8] sm:$0xff]
        %v1431 = vld [vmem:[#allocation2 + $0xe0] sm:$0xff]
        %v1432 = vld [vmem:[#allocation2 + $0xf0] sm:$0xff]
        %v1433 = vld [vmem:[#allocation2 + $0xf8] sm:$0xff]
        %v1434 = vld [vmem:[#allocation2 + $0x108] sm:$0xff]
        %v1435 = vld [vmem:[#allocation2 + $0x110] sm:$0xff]
        %v1436 = vld [vmem:[#allocation2 + $0x120] sm:$0xff]
        %v1437 = vld [vmem:[#allocation2 + $0x128] sm:$0xff]
        %v1438 = vld [vmem:[#allocation2 + $0x138] sm:$0xff]
        %v1439 = vld [vmem:[#allocation2 + $0x140] sm:$0xff]
        %v1440 = vld [vmem:[#allocation2 + $0x150] sm:$0xff]
        %v1441 = vld [vmem:[#allocation2 + $0x158] sm:$0xff]
        %v1442 = vld [vmem:[#allocation2 + $0x168] sm:$0xff]
        %v1443 = vld [vmem:[#allocation2 + $0x170] sm:$0xff]
        %v1444 = vld [vmem:[#allocation2 + $0x1] sm:$0xff]
        %v1445 = vld [vmem:[#allocation2 + $0x9] sm:$0xff]
        %v1446 = vld [vmem:[#allocation2 + $0x19] sm:$0xff]
        %v1447 = vld [vmem:[#allocation2 + $0x21] sm:$0xff]
        %v1448 = vld [vmem:[#allocation2 + $0x31] sm:$0xff]
        %v1449 = vld [vmem:[#allocation2 + $0x39] sm:$0xff]
        %v1450 = vld [vmem:[#allocation2 + $0x49] sm:$0xff]
        %v1451 = vld [vmem:[#allocation2 + $0x51] sm:$0xff]
        %v1452 = vld [vmem:[#allocation2 + $0x61] sm:$0xff]
        %v1453 = vld [vmem:[#allocation2 + $0x69] sm:$0xff]
        %v1454 = vld [vmem:[#allocation2 + $0x79] sm:$0xff]
        %v1455 = vld [vmem:[#allocation2 + $0x81] sm:$0xff]
        %v1456 = vld [vmem:[#allocation2 + $0x91] sm:$0xff]
        %v1457 = vld [vmem:[#allocation2 + $0x99] sm:$0xff]
        %v1458 = vld [vmem:[#allocation2 + $0xa9] sm:$0xff]
        %v1459 = vld [vmem:[#allocation2 + $0xb1] sm:$0xff]
        %v1460 = vld [vmem:[#allocation2 + $0xc1] sm:$0xff]
        %v1461 = vld [vmem:[#allocation2 + $0xc9] sm:$0xff]
        %v1462 = vld [vmem:[#allocation2 + $0xd9] sm:$0xff]
        %v1463 = vld [vmem:[#allocation2 + $0xe1] sm:$0xff]
        %v1464 = vld [vmem:[#allocation2 + $0xf1] sm:$0xff]
        %v1465 = vld [vmem:[#allocation2 + $0xf9] sm:$0xff]
        %v1466 = vld [vmem:[#allocation2 + $0x109] sm:$0xff]
        %v1467 = vld [vmem:[#allocation2 + $0x111] sm:$0xff]
        %v1468 = vld [vmem:[#allocation2 + $0x121] sm:$0xff]
        %v1469 = vld [vmem:[#allocation2 + $0x129] sm:$0xff]
        %v1470 = vld [vmem:[#allocation2 + $0x139] sm:$0xff]
        %v1471 = vld [vmem:[#allocation2 + $0x141] sm:$0xff]
        %v1472 = vld [vmem:[#allocation2 + $0x151] sm:$0xff]
        %v1473 = vld [vmem:[#allocation2 + $0x159] sm:$0xff]
        %v1474 = vld [vmem:[#allocation2 + $0x169] sm:$0xff]
        %v1475 = vld [vmem:[#allocation2 + $0x171] sm:$0xff]
        %v1476 = vld [vmem:[#allocation2 + $0x2] sm:$0xff]
        %v1477 = vld [vmem:[#allocation2 + $0xa] sm:$0xff]
        %v1478 = vld [vmem:[#allocation2 + $0x1a] sm:$0xff]
        %v1479 = vld [vmem:[#allocation2 + $0x22] sm:$0xff]
        %v1480 = vld [vmem:[#allocation2 + $0x32] sm:$0xff]
        %v1481 = vld [vmem:[#allocation2 + $0x3a] sm:$0xff]
        %v1482 = vld [vmem:[#allocation2 + $0x4a] sm:$0xff]
        %v1483 = vld [vmem:[#allocation2 + $0x52] sm:$0xff]
        %v1484 = vld [vmem:[#allocation2 + $0x62] sm:$0xff]
        %v1485 = vld [vmem:[#allocation2 + $0x6a] sm:$0xff]
        %v1486 = vld [vmem:[#allocation2 + $0x7a] sm:$0xff]
        %v1487 = vld [vmem:[#allocation2 + $0x82] sm:$0xff]
        %v1488 = vld [vmem:[#allocation2 + $0x92] sm:$0xff]
        %v1489 = vld [vmem:[#allocation2 + $0x9a] sm:$0xff]
        %v1490 = vld [vmem:[#allocation2 + $0xaa] sm:$0xff]
        %v1491 = vld [vmem:[#allocation2 + $0xb2] sm:$0xff]
        %v1492 = vld [vmem:[#allocation2 + $0xc2] sm:$0xff]
        %v1493 = vld [vmem:[#allocation2 + $0xca] sm:$0xff]
        %v1494 = vld [vmem:[#allocation2 + $0xda] sm:$0xff]
        %v1495 = vld [vmem:[#allocation2 + $0xe2] sm:$0xff]
        %v1496 = vld [vmem:[#allocation2 + $0xf2] sm:$0xff]
        %v1497 = vld [vmem:[#allocation2 + $0xfa] sm:$0xff]
        %v1498 = vld [vmem:[#allocation2 + $0x10a] sm:$0xff]
        %v1499 = vld [vmem:[#allocation2 + $0x112] sm:$0xff]
        %v1500 = vld [vmem:[#allocation2 + $0x122] sm:$0xff]
        %v1501 = vld [vmem:[#allocation2 + $0x12a] sm:$0xff]
        %v1502 = vld [vmem:[#allocation2 + $0x13a] sm:$0xff]
        %v1503 = vld [vmem:[#allocation2 + $0x142] sm:$0xff]
        %v1504 = vld [vmem:[#allocation2 + $0x152] sm:$0xff]
        %v1505 = vld [vmem:[#allocation2 + $0x15a] sm:$0xff]
        %v1506 = vld [vmem:[#allocation2 + $0x16a] sm:$0xff]
        %v1507 = vld [vmem:[#allocation2 + $0x172] sm:$0xff]
        %v1508 = vld [vmem:[%s1379] sm:$0xff]
        %v1509 = vld [vmem:[%s1379 + $0x8] sm:$0xff]
        %v1510 = vld [vmem:[%s1379 + $0x18] sm:$0xff]
        %v1511 = vld [vmem:[%s1379 + $0x20] sm:$0xff]
        %v1512 = vld [vmem:[%s1379 + $0x30] sm:$0xff]
        %v1513 = vld [vmem:[%s1379 + $0x38] sm:$0xff]
        %v1514 = vld [vmem:[%s1379 + $0x48] sm:$0xff]
        %v1515 = vld [vmem:[%s1379 + $0x50] sm:$0xff]
        %v1516 = vld [vmem:[%s1379 + $0x60] sm:$0xff]
        %v1517 = vld [vmem:[%s1379 + $0x68] sm:$0xff]
        %v1518 = vld [vmem:[%s1379 + $0x78] sm:$0xff]
        %v1519 = vld [vmem:[%s1379 + $0x80] sm:$0xff]
        %v1520 = vld [vmem:[%s1379 + $0x90] sm:$0xff]
        %v1521 = vld [vmem:[%s1379 + $0x98] sm:$0xff]
        %v1522 = vld [vmem:[%s1379 + $0xa8] sm:$0xff]
        %v1523 = vld [vmem:[%s1379 + $0xb0] sm:$0xff]
        %v1524 = vld [vmem:[%s1379 + $0xc0] sm:$0xff]
        %v1525 = vld [vmem:[%s1379 + $0xc8] sm:$0xff]
        %v1526 = vld [vmem:[%s1379 + $0xd8] sm:$0xff]
        %v1527 = vld [vmem:[%s1379 + $0xe0] sm:$0xff]
        %v1528 = vld [vmem:[%s1379 + $0xf0] sm:$0xff]
        %v1529 = vld [vmem:[%s1379 + $0xf8] sm:$0xff]
        %v1530 = vld [vmem:[%s1379 + $0x108] sm:$0xff]
        %v1531 = vld [vmem:[%s1379 + $0x110] sm:$0xff]
        %v1532 = vld [vmem:[%s1379 + $0x120] sm:$0xff]
        %v1533 = vld [vmem:[%s1379 + $0x128] sm:$0xff]
        %v1534 = vld [vmem:[%s1379 + $0x138] sm:$0xff]
        %v1535 = vld [vmem:[%s1379 + $0x140] sm:$0xff]
        %v1536 = vld [vmem:[%s1379 + $0x150] sm:$0xff]
        %v1537 = vld [vmem:[%s1379 + $0x158] sm:$0xff]
        %v1538 = vld [vmem:[%s1379 + $0x168] sm:$0xff]
        %v1539 = vld [vmem:[%s1379 + $0x170] sm:$0xff]
        %v1540 = vld [vmem:[%s1379 + $0x1] sm:$0xff]
        %v1541 = vld [vmem:[%s1379 + $0x9] sm:$0xff]
        %v1542 = vld [vmem:[%s1379 + $0x19] sm:$0xff]
        %v1543 = vld [vmem:[%s1379 + $0x21] sm:$0xff]
        %v1544 = vld [vmem:[%s1379 + $0x31] sm:$0xff]
        %v1545 = vld [vmem:[%s1379 + $0x39] sm:$0xff]
        %v1546 = vld [vmem:[%s1379 + $0x49] sm:$0xff]
        %v1547 = vld [vmem:[%s1379 + $0x51] sm:$0xff]
        %v1548 = vld [vmem:[%s1379 + $0x61] sm:$0xff]
        %v1549 = vld [vmem:[%s1379 + $0x69] sm:$0xff]
        %v1550 = vld [vmem:[%s1379 + $0x79] sm:$0xff]
        %v1551 = vld [vmem:[%s1379 + $0x81] sm:$0xff]
        %v1552 = vld [vmem:[%s1379 + $0x91] sm:$0xff]
        %v1553 = vld [vmem:[%s1379 + $0x99] sm:$0xff]
        %v1554 = vld [vmem:[%s1379 + $0xa9] sm:$0xff]
        %v1555 = vld [vmem:[%s1379 + $0xb1] sm:$0xff]
        %v1556 = vld [vmem:[%s1379 + $0xc1] sm:$0xff]
        %v1557 = vld [vmem:[%s1379 + $0xc9] sm:$0xff]
        %v1558 = vld [vmem:[%s1379 + $0xd9] sm:$0xff]
        %v1559 = vld [vmem:[%s1379 + $0xe1] sm:$0xff]
        %v1560 = vld [vmem:[%s1379 + $0xf1] sm:$0xff]
        %v1561 = vld [vmem:[%s1379 + $0xf9] sm:$0xff]
        %v1562 = vld [vmem:[%s1379 + $0x109] sm:$0xff]
        %v1563 = vld [vmem:[%s1379 + $0x111] sm:$0xff]
        %v1564 = vld [vmem:[%s1379 + $0x121] sm:$0xff]
        %v1565 = vld [vmem:[%s1379 + $0x129] sm:$0xff]
        %v1566 = vld [vmem:[%s1379 + $0x139] sm:$0xff]
        %v1567 = vld [vmem:[%s1379 + $0x141] sm:$0xff]
        %v1568 = vld [vmem:[%s1379 + $0x151] sm:$0xff]
        %v1569 = vld [vmem:[%s1379 + $0x159] sm:$0xff]
        %v1570 = vld [vmem:[%s1379 + $0x169] sm:$0xff]
        %v1571 = vld [vmem:[%s1379 + $0x171] sm:$0xff]
        %v1572 = vld [vmem:[%s1379 + $0x2] sm:$0xff]
        %v1573 = vld [vmem:[%s1379 + $0xa] sm:$0xff]
        %v1574 = vld [vmem:[%s1379 + $0x1a] sm:$0xff]
        %v1575 = vld [vmem:[%s1379 + $0x22] sm:$0xff]
        %v1576 = vld [vmem:[%s1379 + $0x32] sm:$0xff]
        %v1577 = vld [vmem:[%s1379 + $0x3a] sm:$0xff]
        %v1578 = vld [vmem:[%s1379 + $0x4a] sm:$0xff]
        %v1579 = vld [vmem:[%s1379 + $0x52] sm:$0xff]
        %v1580 = vld [vmem:[%s1379 + $0x62] sm:$0xff]
        %v1581 = vld [vmem:[%s1379 + $0x6a] sm:$0xff]
        %v1582 = vld [vmem:[%s1379 + $0x7a] sm:$0xff]
        %v1583 = vld [vmem:[%s1379 + $0x82] sm:$0xff]
        %v1584 = vld [vmem:[%s1379 + $0x92] sm:$0xff]
        %v1585 = vld [vmem:[%s1379 + $0x9a] sm:$0xff]
        %v1586 = vld [vmem:[%s1379 + $0xaa] sm:$0xff]
        %v1587 = vld [vmem:[%s1379 + $0xb2] sm:$0xff]
        %v1588 = vld [vmem:[%s1379 + $0xc2] sm:$0xff]
        %v1589 = vld [vmem:[%s1379 + $0xca] sm:$0xff]
        %v1590 = vld [vmem:[%s1379 + $0xda] sm:$0xff]
        %v1591 = vld [vmem:[%s1379 + $0xe2] sm:$0xff]
        %v1592 = vld [vmem:[%s1379 + $0xf2] sm:$0xff]
        %v1593 = vld [vmem:[%s1379 + $0xfa] sm:$0xff]
        %v1594 = vld [vmem:[%s1379 + $0x10a] sm:$0xff]
        %v1595 = vld [vmem:[%s1379 + $0x112] sm:$0xff]
        %v1596 = vld [vmem:[%s1379 + $0x122] sm:$0xff]
        %v1597 = vld [vmem:[%s1379 + $0x12a] sm:$0xff]
        %v1598 = vld [vmem:[%s1379 + $0x13a] sm:$0xff]
        %v1599 = vld [vmem:[%s1379 + $0x142] sm:$0xff]
        %v1600 = vld [vmem:[%s1379 + $0x152] sm:$0xff]
        %v1601 = vld [vmem:[%s1379 + $0x15a] sm:$0xff]
        %v1602 = vld [vmem:[%s1379 + $0x16a] sm:$0xff]
        %v1603 = vld [vmem:[%s1379 + $0x172] sm:$0xff]
        %s1604 = scalar_lea.vmem [#allocation2], 48
        %v1605 = vld [vmem:[%s1604] sm:$0xff]
        %v1606 = vld [vmem:[%s1604 + $0x8] sm:$0xff]
        %v1607 = vld [vmem:[%s1604 + $0x18] sm:$0xff]
        %v1608 = vld [vmem:[%s1604 + $0x20] sm:$0xff]
        %v1609 = vld [vmem:[%s1604 + $0x30] sm:$0xff]
        %v1610 = vld [vmem:[%s1604 + $0x38] sm:$0xff]
        %v1611 = vld [vmem:[%s1604 + $0x48] sm:$0xff]
        %v1612 = vld [vmem:[%s1604 + $0x50] sm:$0xff]
        %v1613 = vld [vmem:[%s1604 + $0x60] sm:$0xff]
        %v1614 = vld [vmem:[%s1604 + $0x68] sm:$0xff]
        %v1615 = vld [vmem:[%s1604 + $0x78] sm:$0xff]
        %v1616 = vld [vmem:[%s1604 + $0x80] sm:$0xff]
        %v1617 = vld [vmem:[%s1604 + $0x90] sm:$0xff]
        %v1618 = vld [vmem:[%s1604 + $0x98] sm:$0xff]
        %v1619 = vld [vmem:[%s1604 + $0xa8] sm:$0xff]
        %v1620 = vld [vmem:[%s1604 + $0xb0] sm:$0xff]
        %v1621 = vld [vmem:[%s1604 + $0xc0] sm:$0xff]
        %v1622 = vld [vmem:[%s1604 + $0xc8] sm:$0xff]
        %v1623 = vld [vmem:[%s1604 + $0xd8] sm:$0xff]
        %v1624 = vld [vmem:[%s1604 + $0xe0] sm:$0xff]
        %v1625 = vld [vmem:[%s1604 + $0xf0] sm:$0xff]
        %v1626 = vld [vmem:[%s1604 + $0xf8] sm:$0xff]
        %v1627 = vld [vmem:[%s1604 + $0x108] sm:$0xff]
        %v1628 = vld [vmem:[%s1604 + $0x110] sm:$0xff]
        %v1629 = vld [vmem:[%s1604 + $0x120] sm:$0xff]
        %v1630 = vld [vmem:[%s1604 + $0x128] sm:$0xff]
        %v1631 = vld [vmem:[%s1604 + $0x138] sm:$0xff]
        %v1632 = vld [vmem:[%s1604 + $0x140] sm:$0xff]
        %v1633 = vld [vmem:[%s1604 + $0x150] sm:$0xff]
        %v1634 = vld [vmem:[%s1604 + $0x158] sm:$0xff]
        %v1635 = vld [vmem:[%s1604 + $0x168] sm:$0xff]
        %v1636 = vld [vmem:[%s1604 + $0x170] sm:$0xff]
        %v1637 = vld [vmem:[%s1604 + $0x1] sm:$0xff]
        %v1638 = vld [vmem:[%s1604 + $0x9] sm:$0xff]
        %v1639 = vld [vmem:[%s1604 + $0x19] sm:$0xff]
        %v1640 = vld [vmem:[%s1604 + $0x21] sm:$0xff]
        %v1641 = vld [vmem:[%s1604 + $0x31] sm:$0xff]
        %v1642 = vld [vmem:[%s1604 + $0x39] sm:$0xff]
        %v1643 = vld [vmem:[%s1604 + $0x49] sm:$0xff]
        %v1644 = vld [vmem:[%s1604 + $0x51] sm:$0xff]
        %v1645 = vld [vmem:[%s1604 + $0x61] sm:$0xff]
        %v1646 = vld [vmem:[%s1604 + $0x69] sm:$0xff]
        %v1647 = vld [vmem:[%s1604 + $0x79] sm:$0xff]
        %v1648 = vld [vmem:[%s1604 + $0x81] sm:$0xff]
        %v1649 = vld [vmem:[%s1604 + $0x91] sm:$0xff]
        %v1650 = vld [vmem:[%s1604 + $0x99] sm:$0xff]
        %v1651 = vld [vmem:[%s1604 + $0xa9] sm:$0xff]
        %v1652 = vld [vmem:[%s1604 + $0xb1] sm:$0xff]
        %v1653 = vld [vmem:[%s1604 + $0xc1] sm:$0xff]
        %v1654 = vld [vmem:[%s1604 + $0xc9] sm:$0xff]
        %v1655 = vld [vmem:[%s1604 + $0xd9] sm:$0xff]
        %v1656 = vld [vmem:[%s1604 + $0xe1] sm:$0xff]
        %v1657 = vld [vmem:[%s1604 + $0xf1] sm:$0xff]
        %v1658 = vld [vmem:[%s1604 + $0xf9] sm:$0xff]
        %v1659 = vld [vmem:[%s1604 + $0x109] sm:$0xff]
        %v1660 = vld [vmem:[%s1604 + $0x111] sm:$0xff]
        %v1661 = vld [vmem:[%s1604 + $0x121] sm:$0xff]
        %v1662 = vld [vmem:[%s1604 + $0x129] sm:$0xff]
        %v1663 = vld [vmem:[%s1604 + $0x139] sm:$0xff]
        %v1664 = vld [vmem:[%s1604 + $0x141] sm:$0xff]
        %v1665 = vld [vmem:[%s1604 + $0x151] sm:$0xff]
        %v1666 = vld [vmem:[%s1604 + $0x159] sm:$0xff]
        %v1667 = vld [vmem:[%s1604 + $0x169] sm:$0xff]
        %v1668 = vld [vmem:[%s1604 + $0x171] sm:$0xff]
        %v1669 = vld [vmem:[%s1604 + $0x2] sm:$0xff]
        %v1670 = vld [vmem:[%s1604 + $0xa] sm:$0xff]
        %v1671 = vld [vmem:[%s1604 + $0x1a] sm:$0xff]
        %v1672 = vld [vmem:[%s1604 + $0x22] sm:$0xff]
        %v1673 = vld [vmem:[%s1604 + $0x32] sm:$0xff]
        %v1674 = vld [vmem:[%s1604 + $0x3a] sm:$0xff]
        %v1675 = vld [vmem:[%s1604 + $0x4a] sm:$0xff]
        %v1676 = vld [vmem:[%s1604 + $0x52] sm:$0xff]
        %v1677 = vld [vmem:[%s1604 + $0x62] sm:$0xff]
        %v1678 = vld [vmem:[%s1604 + $0x6a] sm:$0xff]
        %v1679 = vld [vmem:[%s1604 + $0x7a] sm:$0xff]
        %v1680 = vld [vmem:[%s1604 + $0x82] sm:$0xff]
        %v1681 = vld [vmem:[%s1604 + $0x92] sm:$0xff]
        %v1682 = vld [vmem:[%s1604 + $0x9a] sm:$0xff]
        %v1683 = vld [vmem:[%s1604 + $0xaa] sm:$0xff]
        %v1684 = vld [vmem:[%s1604 + $0xb2] sm:$0xff]
        %v1685 = vld [vmem:[%s1604 + $0xc2] sm:$0xff]
        %v1686 = vld [vmem:[%s1604 + $0xca] sm:$0xff]
        %v1687 = vld [vmem:[%s1604 + $0xda] sm:$0xff]
        %v1688 = vld [vmem:[%s1604 + $0xe2] sm:$0xff]
        %v1689 = vld [vmem:[%s1604 + $0xf2] sm:$0xff]
        %v1690 = vld [vmem:[%s1604 + $0xfa] sm:$0xff]
        %v1691 = vld [vmem:[%s1604 + $0x10a] sm:$0xff]
        %v1692 = vld [vmem:[%s1604 + $0x112] sm:$0xff]
        %v1693 = vld [vmem:[%s1604 + $0x122] sm:$0xff]
        %v1694 = vld [vmem:[%s1604 + $0x12a] sm:$0xff]
        %v1695 = vld [vmem:[%s1604 + $0x13a] sm:$0xff]
        %v1696 = vld [vmem:[%s1604 + $0x142] sm:$0xff]
        %v1697 = vld [vmem:[%s1604 + $0x152] sm:$0xff]
        %v1698 = vld [vmem:[%s1604 + $0x15a] sm:$0xff]
        %v1699 = vld [vmem:[%s1604 + $0x16a] sm:$0xff]
        %v1700 = vld [vmem:[%s1604 + $0x172] sm:$0xff]
        %1733 = vrot.lane.b32.xlu0 %v1444, 64
        %v1734 = vpop.permute.xlu0 %1733
        %1735 = vrot.lane.b32.xlu0 %v1445, 64
        %v1736 = vpop.permute.xlu0 %1735
        %1737 = vrot.lane.b32.xlu0 %v1446, 64
        %v1738 = vpop.permute.xlu0 %1737
        %1739 = vrot.lane.b32.xlu0 %v1447, 64
        %v1740 = vpop.permute.xlu0 %1739
        %1741 = vrot.lane.b32.xlu0 %v1448, 64
        %v1742 = vpop.permute.xlu0 %1741
        %1743 = vrot.lane.b32.xlu0 %v1449, 64
        %v1744 = vpop.permute.xlu0 %1743
        %1745 = vrot.lane.b32.xlu0 %v1450, 64
        %v1746 = vpop.permute.xlu0 %1745
        %1747 = vrot.lane.b32.xlu0 %v1451, 64
        %v1748 = vpop.permute.xlu0 %1747
        %1749 = vrot.lane.b32.xlu0 %v1452, 64
        %v1750 = vpop.permute.xlu0 %1749
        %1751 = vrot.lane.b32.xlu0 %v1453, 64
        %v1752 = vpop.permute.xlu0 %1751
        %1753 = vrot.lane.b32.xlu0 %v1454, 64
        %v1754 = vpop.permute.xlu0 %1753
        %1755 = vrot.lane.b32.xlu0 %v1455, 64
        %v1756 = vpop.permute.xlu0 %1755
        %1757 = vrot.lane.b32.xlu0 %v1456, 64
        %v1758 = vpop.permute.xlu0 %1757
        %1759 = vrot.lane.b32.xlu0 %v1457, 64
        %v1760 = vpop.permute.xlu0 %1759
        %1761 = vrot.lane.b32.xlu0 %v1458, 64
        %v1762 = vpop.permute.xlu0 %1761
        %1763 = vrot.lane.b32.xlu0 %v1459, 64
        %v1764 = vpop.permute.xlu0 %1763
        %1765 = vrot.lane.b32.xlu0 %v1460, 64
        %v1766 = vpop.permute.xlu0 %1765
        %1767 = vrot.lane.b32.xlu0 %v1461, 64
        %v1768 = vpop.permute.xlu0 %1767
        %1769 = vrot.lane.b32.xlu0 %v1462, 64
        %v1770 = vpop.permute.xlu0 %1769
        %1771 = vrot.lane.b32.xlu0 %v1463, 64
        %v1772 = vpop.permute.xlu0 %1771
        %1773 = vrot.lane.b32.xlu0 %v1464, 64
        %v1774 = vpop.permute.xlu0 %1773
        %1775 = vrot.lane.b32.xlu0 %v1465, 64
        %v1776 = vpop.permute.xlu0 %1775
        %1777 = vrot.lane.b32.xlu0 %v1466, 64
        %v1778 = vpop.permute.xlu0 %1777
        %1779 = vrot.lane.b32.xlu0 %v1467, 64
        %v1780 = vpop.permute.xlu0 %1779
        %1781 = vrot.lane.b32.xlu0 %v1468, 64
        %v1782 = vpop.permute.xlu0 %1781
        %1783 = vrot.lane.b32.xlu0 %v1469, 64
        %v1784 = vpop.permute.xlu0 %1783
        %1785 = vrot.lane.b32.xlu0 %v1470, 64
        %v1786 = vpop.permute.xlu0 %1785
        %1787 = vrot.lane.b32.xlu0 %v1471, 64
        %v1788 = vpop.permute.xlu0 %1787
        %1789 = vrot.lane.b32.xlu0 %v1472, 64
        %v1790 = vpop.permute.xlu0 %1789
        %1791 = vrot.lane.b32.xlu0 %v1473, 64
        %v1792 = vpop.permute.xlu0 %1791
        %1793 = vrot.lane.b32.xlu0 %v1474, 64
        %v1794 = vpop.permute.xlu0 %1793
        %1795 = vrot.lane.b32.xlu0 %v1475, 64
        %v1796 = vpop.permute.xlu0 %1795
        %1861 = vrot.lane.b32.xlu0 %v1508, 64
        %v1862 = vpop.permute.xlu0 %1861
        %1863 = vrot.lane.b32.xlu0 %v1509, 64
        %v1864 = vpop.permute.xlu0 %1863
        %1865 = vrot.lane.b32.xlu0 %v1510, 64
        %v1866 = vpop.permute.xlu0 %1865
        %1867 = vrot.lane.b32.xlu0 %v1511, 64
        %v1868 = vpop.permute.xlu0 %1867
        %1869 = vrot.lane.b32.xlu0 %v1512, 64
        %v1870 = vpop.permute.xlu0 %1869
        %1871 = vrot.lane.b32.xlu0 %v1513, 64
        %v1872 = vpop.permute.xlu0 %1871
        %1873 = vrot.lane.b32.xlu0 %v1514, 64
        %v1874 = vpop.permute.xlu0 %1873
        %1875 = vrot.lane.b32.xlu0 %v1515, 64
        %v1876 = vpop.permute.xlu0 %1875
        %1877 = vrot.lane.b32.xlu0 %v1516, 64
        %v1878 = vpop.permute.xlu0 %1877
        %1879 = vrot.lane.b32.xlu0 %v1517, 64
        %v1880 = vpop.permute.xlu0 %1879
        %1881 = vrot.lane.b32.xlu0 %v1518, 64
        %v1882 = vpop.permute.xlu0 %1881
        %1883 = vrot.lane.b32.xlu0 %v1519, 64
        %v1884 = vpop.permute.xlu0 %1883
        %1885 = vrot.lane.b32.xlu0 %v1520, 64
        %v1886 = vpop.permute.xlu0 %1885
        %1887 = vrot.lane.b32.xlu0 %v1521, 64
        %v1888 = vpop.permute.xlu0 %1887
        %1889 = vrot.lane.b32.xlu0 %v1522, 64
        %v1890 = vpop.permute.xlu0 %1889
        %1891 = vrot.lane.b32.xlu0 %v1523, 64
        %v1892 = vpop.permute.xlu0 %1891
        %1893 = vrot.lane.b32.xlu0 %v1524, 64
        %v1894 = vpop.permute.xlu0 %1893
        %1895 = vrot.lane.b32.xlu0 %v1525, 64
        %v1896 = vpop.permute.xlu0 %1895
        %1897 = vrot.lane.b32.xlu0 %v1526, 64
        %v1898 = vpop.permute.xlu0 %1897
        %1899 = vrot.lane.b32.xlu0 %v1527, 64
        %v1900 = vpop.permute.xlu0 %1899
        %1901 = vrot.lane.b32.xlu0 %v1528, 64
        %v1902 = vpop.permute.xlu0 %1901
        %1903 = vrot.lane.b32.xlu0 %v1529, 64
        %v1904 = vpop.permute.xlu0 %1903
        %1905 = vrot.lane.b32.xlu0 %v1530, 64
        %v1906 = vpop.permute.xlu0 %1905
        %1907 = vrot.lane.b32.xlu0 %v1531, 64
        %v1908 = vpop.permute.xlu0 %1907
        %1909 = vrot.lane.b32.xlu0 %v1532, 64
        %v1910 = vpop.permute.xlu0 %1909
        %1911 = vrot.lane.b32.xlu0 %v1533, 64
        %v1912 = vpop.permute.xlu0 %1911
        %1913 = vrot.lane.b32.xlu0 %v1534, 64
        %v1914 = vpop.permute.xlu0 %1913
        %1915 = vrot.lane.b32.xlu0 %v1535, 64
        %v1916 = vpop.permute.xlu0 %1915
        %1917 = vrot.lane.b32.xlu0 %v1536, 64
        %v1918 = vpop.permute.xlu0 %1917
        %1919 = vrot.lane.b32.xlu0 %v1537, 64
        %v1920 = vpop.permute.xlu0 %1919
        %1921 = vrot.lane.b32.xlu0 %v1538, 64
        %v1922 = vpop.permute.xlu0 %1921
        %1923 = vrot.lane.b32.xlu0 %v1539, 64
        %v1924 = vpop.permute.xlu0 %1923
        %1989 = vrot.lane.b32.xlu0 %v1572, 64
        %v1990 = vpop.permute.xlu0 %1989
        %1991 = vrot.lane.b32.xlu0 %v1573, 64
        %v1992 = vpop.permute.xlu0 %1991
        %1993 = vrot.lane.b32.xlu0 %v1574, 64
        %v1994 = vpop.permute.xlu0 %1993
        %1995 = vrot.lane.b32.xlu0 %v1575, 64
        %v1996 = vpop.permute.xlu0 %1995
        %1997 = vrot.lane.b32.xlu0 %v1576, 64
        %v1998 = vpop.permute.xlu0 %1997
        %1999 = vrot.lane.b32.xlu0 %v1577, 64
        %v2000 = vpop.permute.xlu0 %1999
        %2001 = vrot.lane.b32.xlu0 %v1578, 64
        %v2002 = vpop.permute.xlu0 %2001
        %2003 = vrot.lane.b32.xlu0 %v1579, 64
        %v2004 = vpop.permute.xlu0 %2003
        %2005 = vrot.lane.b32.xlu0 %v1580, 64
        %v2006 = vpop.permute.xlu0 %2005
        %2007 = vrot.lane.b32.xlu0 %v1581, 64
        %v2008 = vpop.permute.xlu0 %2007
        %2009 = vrot.lane.b32.xlu0 %v1582, 64
        %v2010 = vpop.permute.xlu0 %2009
        %2011 = vrot.lane.b32.xlu0 %v1583, 64
        %v2012 = vpop.permute.xlu0 %2011
        %2013 = vrot.lane.b32.xlu0 %v1584, 64
        %v2014 = vpop.permute.xlu0 %2013
        %2015 = vrot.lane.b32.xlu0 %v1585, 64
        %v2016 = vpop.permute.xlu0 %2015
        %2017 = vrot.lane.b32.xlu0 %v1586, 64
        %v2018 = vpop.permute.xlu0 %2017
        %2019 = vrot.lane.b32.xlu0 %v1587, 64
        %v2020 = vpop.permute.xlu0 %2019
        %2021 = vrot.lane.b32.xlu0 %v1588, 64
        %v2022 = vpop.permute.xlu0 %2021
        %2023 = vrot.lane.b32.xlu0 %v1589, 64
        %v2024 = vpop.permute.xlu0 %2023
        %2025 = vrot.lane.b32.xlu0 %v1590, 64
        %v2026 = vpop.permute.xlu0 %2025
        %2027 = vrot.lane.b32.xlu0 %v1591, 64
        %v2028 = vpop.permute.xlu0 %2027
        %2029 = vrot.lane.b32.xlu0 %v1592, 64
        %v2030 = vpop.permute.xlu0 %2029
        %2031 = vrot.lane.b32.xlu0 %v1593, 64
        %v2032 = vpop.permute.xlu0 %2031
        %2033 = vrot.lane.b32.xlu0 %v1594, 64
        %v2034 = vpop.permute.xlu0 %2033
        %2035 = vrot.lane.b32.xlu0 %v1595, 64
        %v2036 = vpop.permute.xlu0 %2035
        %2037 = vrot.lane.b32.xlu0 %v1596, 64
        %v2038 = vpop.permute.xlu0 %2037
        %2039 = vrot.lane.b32.xlu0 %v1597, 64
        %v2040 = vpop.permute.xlu0 %2039
        %2041 = vrot.lane.b32.xlu0 %v1598, 64
        %v2042 = vpop.permute.xlu0 %2041
        %2043 = vrot.lane.b32.xlu0 %v1599, 64
        %v2044 = vpop.permute.xlu0 %2043
        %2045 = vrot.lane.b32.xlu0 %v1600, 64
        %v2046 = vpop.permute.xlu0 %2045
        %2047 = vrot.lane.b32.xlu0 %v1601, 64
        %v2048 = vpop.permute.xlu0 %2047
        %2049 = vrot.lane.b32.xlu0 %v1602, 64
        %v2050 = vpop.permute.xlu0 %2049
        %2051 = vrot.lane.b32.xlu0 %v1603, 64
        %v2052 = vpop.permute.xlu0 %2051
        %2117 = vrot.lane.b32.xlu0 %v1637, 64
        %v2118 = vpop.permute.xlu0 %2117
        %2119 = vrot.lane.b32.xlu0 %v1638, 64
        %v2120 = vpop.permute.xlu0 %2119
        %2121 = vrot.lane.b32.xlu0 %v1639, 64
        %v2122 = vpop.permute.xlu0 %2121
        %2123 = vrot.lane.b32.xlu0 %v1640, 64
        %v2124 = vpop.permute.xlu0 %2123
        %2125 = vrot.lane.b32.xlu0 %v1641, 64
        %v2126 = vpop.permute.xlu0 %2125
        %2127 = vrot.lane.b32.xlu0 %v1642, 64
        %v2128 = vpop.permute.xlu0 %2127
        %2129 = vrot.lane.b32.xlu0 %v1643, 64
        %v2130 = vpop.permute.xlu0 %2129
        %2131 = vrot.lane.b32.xlu0 %v1644, 64
        %v2132 = vpop.permute.xlu0 %2131
        %2133 = vrot.lane.b32.xlu0 %v1645, 64
        %v2134 = vpop.permute.xlu0 %2133
        %2135 = vrot.lane.b32.xlu0 %v1646, 64
        %v2136 = vpop.permute.xlu0 %2135
        %2137 = vrot.lane.b32.xlu0 %v1647, 64
        %v2138 = vpop.permute.xlu0 %2137
        %2139 = vrot.lane.b32.xlu0 %v1648, 64
        %v2140 = vpop.permute.xlu0 %2139
        %2141 = vrot.lane.b32.xlu0 %v1649, 64
        %v2142 = vpop.permute.xlu0 %2141
        %2143 = vrot.lane.b32.xlu0 %v1650, 64
        %v2144 = vpop.permute.xlu0 %2143
        %2145 = vrot.lane.b32.xlu0 %v1651, 64
        %v2146 = vpop.permute.xlu0 %2145
        %2147 = vrot.lane.b32.xlu0 %v1652, 64
        %v2148 = vpop.permute.xlu0 %2147
        %2149 = vrot.lane.b32.xlu0 %v1653, 64
        %v2150 = vpop.permute.xlu0 %2149
        %2151 = vrot.lane.b32.xlu0 %v1654, 64
        %v2152 = vpop.permute.xlu0 %2151
        %2153 = vrot.lane.b32.xlu0 %v1655, 64
        %v2154 = vpop.permute.xlu0 %2153
        %2155 = vrot.lane.b32.xlu0 %v1656, 64
        %v2156 = vpop.permute.xlu0 %2155
        %2157 = vrot.lane.b32.xlu0 %v1657, 64
        %v2158 = vpop.permute.xlu0 %2157
        %2159 = vrot.lane.b32.xlu0 %v1658, 64
        %v2160 = vpop.permute.xlu0 %2159
        %2161 = vrot.lane.b32.xlu0 %v1659, 64
        %v2162 = vpop.permute.xlu0 %2161
        %2163 = vrot.lane.b32.xlu0 %v1660, 64
        %v2164 = vpop.permute.xlu0 %2163
        %2165 = vrot.lane.b32.xlu0 %v1661, 64
        %v2166 = vpop.permute.xlu0 %2165
        %2167 = vrot.lane.b32.xlu0 %v1662, 64
        %v2168 = vpop.permute.xlu0 %2167
        %2169 = vrot.lane.b32.xlu0 %v1663, 64
        %v2170 = vpop.permute.xlu0 %2169
        %2171 = vrot.lane.b32.xlu0 %v1664, 64
        %v2172 = vpop.permute.xlu0 %2171
        %2173 = vrot.lane.b32.xlu0 %v1665, 64
        %v2174 = vpop.permute.xlu0 %2173
        %2175 = vrot.lane.b32.xlu0 %v1666, 64
        %v2176 = vpop.permute.xlu0 %2175
        %2177 = vrot.lane.b32.xlu0 %v1667, 64
        %v2178 = vpop.permute.xlu0 %2177
        %2179 = vrot.lane.b32.xlu0 %v1668, 64
        %v2180 = vpop.permute.xlu0 %2179
        %v2213 = vsel %vm1145, %v1412, %v1734
        %v2214 = vsel %vm1145, %v1413, %v1736
        %v2215 = vsel %vm1145, %v1414, %v1738
        %v2216 = vsel %vm1145, %v1415, %v1740
        %v2217 = vsel %vm1145, %v1416, %v1742
        %v2218 = vsel %vm1145, %v1417, %v1744
        %v2219 = vsel %vm1145, %v1418, %v1746
        %v2220 = vsel %vm1145, %v1419, %v1748
        %v2221 = vsel %vm1145, %v1420, %v1750
        %v2222 = vsel %vm1145, %v1421, %v1752
        %v2223 = vsel %vm1145, %v1422, %v1754
        %v2224 = vsel %vm1145, %v1423, %v1756
        %v2225 = vsel %vm1145, %v1424, %v1758
        %v2226 = vsel %vm1145, %v1425, %v1760
        %v2227 = vsel %vm1145, %v1426, %v1762
        %v2228 = vsel %vm1145, %v1427, %v1764
        %v2229 = vsel %vm1145, %v1428, %v1766
        %v2230 = vsel %vm1145, %v1429, %v1768
        %v2231 = vsel %vm1145, %v1430, %v1770
        %v2232 = vsel %vm1145, %v1431, %v1772
        %v2233 = vsel %vm1145, %v1432, %v1774
        %v2234 = vsel %vm1145, %v1433, %v1776
        %v2235 = vsel %vm1145, %v1434, %v1778
        %v2236 = vsel %vm1145, %v1435, %v1780
        %v2237 = vsel %vm1145, %v1436, %v1782
        %v2238 = vsel %vm1145, %v1437, %v1784
        %v2239 = vsel %vm1145, %v1438, %v1786
        %v2240 = vsel %vm1145, %v1439, %v1788
        %v2241 = vsel %vm1145, %v1440, %v1790
        %v2242 = vsel %vm1145, %v1441, %v1792
        %v2243 = vsel %vm1145, %v1442, %v1794
        %v2244 = vsel %vm1145, %v1443, %v1796
        %v2245 = vsel %vm1145, %v1476, %v1862
        %v2246 = vsel %vm1145, %v1477, %v1864
        %v2247 = vsel %vm1145, %v1478, %v1866
        %v2248 = vsel %vm1145, %v1479, %v1868
        %v2249 = vsel %vm1145, %v1480, %v1870
        %v2250 = vsel %vm1145, %v1481, %v1872
        %v2251 = vsel %vm1145, %v1482, %v1874
        %v2252 = vsel %vm1145, %v1483, %v1876
        %v2253 = vsel %vm1145, %v1484, %v1878
        %v2254 = vsel %vm1145, %v1485, %v1880
        %v2255 = vsel %vm1145, %v1486, %v1882
        %v2256 = vsel %vm1145, %v1487, %v1884
        %v2257 = vsel %vm1145, %v1488, %v1886
        %v2258 = vsel %vm1145, %v1489, %v1888
        %v2259 = vsel %vm1145, %v1490, %v1890
        %v2260 = vsel %vm1145, %v1491, %v1892
        %v2261 = vsel %vm1145, %v1492, %v1894
        %v2262 = vsel %vm1145, %v1493, %v1896
        %v2263 = vsel %vm1145, %v1494, %v1898
        %v2264 = vsel %vm1145, %v1495, %v1900
        %v2265 = vsel %vm1145, %v1496, %v1902
        %v2266 = vsel %vm1145, %v1497, %v1904
        %v2267 = vsel %vm1145, %v1498, %v1906
        %v2268 = vsel %vm1145, %v1499, %v1908
        %v2269 = vsel %vm1145, %v1500, %v1910
        %v2270 = vsel %vm1145, %v1501, %v1912
        %v2271 = vsel %vm1145, %v1502, %v1914
        %v2272 = vsel %vm1145, %v1503, %v1916
        %v2273 = vsel %vm1145, %v1504, %v1918
        %v2274 = vsel %vm1145, %v1505, %v1920
        %v2275 = vsel %vm1145, %v1506, %v1922
        %v2276 = vsel %vm1145, %v1507, %v1924
        %v2277 = vsel %vm1145, %v1540, %v1990
        %v2278 = vsel %vm1145, %v1541, %v1992
        %v2279 = vsel %vm1145, %v1542, %v1994
        %v2280 = vsel %vm1145, %v1543, %v1996
        %v2281 = vsel %vm1145, %v1544, %v1998
        %v2282 = vsel %vm1145, %v1545, %v2000
        %v2283 = vsel %vm1145, %v1546, %v2002
        %v2284 = vsel %vm1145, %v1547, %v2004
        %v2285 = vsel %vm1145, %v1548, %v2006
        %v2286 = vsel %vm1145, %v1549, %v2008
        %v2287 = vsel %vm1145, %v1550, %v2010
        %v2288 = vsel %vm1145, %v1551, %v2012
        %v2289 = vsel %vm1145, %v1552, %v2014
        %v2290 = vsel %vm1145, %v1553, %v2016
        %v2291 = vsel %vm1145, %v1554, %v2018
        %v2292 = vsel %vm1145, %v1555, %v2020
        %v2293 = vsel %vm1145, %v1556, %v2022
        %v2294 = vsel %vm1145, %v1557, %v2024
        %v2295 = vsel %vm1145, %v1558, %v2026
        %v2296 = vsel %vm1145, %v1559, %v2028
        %v2297 = vsel %vm1145, %v1560, %v2030
        %v2298 = vsel %vm1145, %v1561, %v2032
        %v2299 = vsel %vm1145, %v1562, %v2034
        %v2300 = vsel %vm1145, %v1563, %v2036
        %v2301 = vsel %vm1145, %v1564, %v2038
        %v2302 = vsel %vm1145, %v1565, %v2040
        %v2303 = vsel %vm1145, %v1566, %v2042
        %v2304 = vsel %vm1145, %v1567, %v2044
        %v2305 = vsel %vm1145, %v1568, %v2046
        %v2306 = vsel %vm1145, %v1569, %v2048
        %v2307 = vsel %vm1145, %v1570, %v2050
        %v2308 = vsel %vm1145, %v1571, %v2052
        %v2309 = vsel %vm1145, %v1605, %v2118
        %v2310 = vsel %vm1145, %v1606, %v2120
        %v2311 = vsel %vm1145, %v1607, %v2122
        %v2312 = vsel %vm1145, %v1608, %v2124
        %v2313 = vsel %vm1145, %v1609, %v2126
        %v2314 = vsel %vm1145, %v1610, %v2128
        %v2315 = vsel %vm1145, %v1611, %v2130
        %v2316 = vsel %vm1145, %v1612, %v2132
        %v2317 = vsel %vm1145, %v1613, %v2134
        %v2318 = vsel %vm1145, %v1614, %v2136
        %v2319 = vsel %vm1145, %v1615, %v2138
        %v2320 = vsel %vm1145, %v1616, %v2140
        %v2321 = vsel %vm1145, %v1617, %v2142
        %v2322 = vsel %vm1145, %v1618, %v2144
        %v2323 = vsel %vm1145, %v1619, %v2146
        %v2324 = vsel %vm1145, %v1620, %v2148
        %v2325 = vsel %vm1145, %v1621, %v2150
        %v2326 = vsel %vm1145, %v1622, %v2152
        %v2327 = vsel %vm1145, %v1623, %v2154
        %v2328 = vsel %vm1145, %v1624, %v2156
        %v2329 = vsel %vm1145, %v1625, %v2158
        %v2330 = vsel %vm1145, %v1626, %v2160
        %v2331 = vsel %vm1145, %v1627, %v2162
        %v2332 = vsel %vm1145, %v1628, %v2164
        %v2333 = vsel %vm1145, %v1629, %v2166
        %v2334 = vsel %vm1145, %v1630, %v2168
        %v2335 = vsel %vm1145, %v1631, %v2170
        %v2336 = vsel %vm1145, %v1632, %v2172
        %v2337 = vsel %vm1145, %v1633, %v2174
        %v2338 = vsel %vm1145, %v1634, %v2176
        %v2339 = vsel %vm1145, %v1635, %v2178
        %v2340 = vsel %vm1145, %v1636, %v2180
        %v2341 = vpack.c.bf16 %v2214, %v2213
        %v2342 = vpack.c.bf16 %v2246, %v2245
        %v2343 = vpack.c.bf16 %v2278, %v2277
        %v2344 = vpack.c.bf16 %v2310, %v2309
        %v2345 = vpack.c.bf16 %v1670, %v1669
        %v2346 = vpack.c.bf16 %v2216, %v2215
        %v2347 = vpack.c.bf16 %v2248, %v2247
        %v2348 = vpack.c.bf16 %v2280, %v2279
        %v2349 = vpack.c.bf16 %v2312, %v2311
        %v2350 = vpack.c.bf16 %v1672, %v1671
        %v2351 = vpack.c.bf16 %v2218, %v2217
        %v2352 = vpack.c.bf16 %v2250, %v2249
        %v2353 = vpack.c.bf16 %v2282, %v2281
        %v2354 = vpack.c.bf16 %v2314, %v2313
        %v2355 = vpack.c.bf16 %v1674, %v1673
        %v2356 = vpack.c.bf16 %v2220, %v2219
        %v2357 = vpack.c.bf16 %v2252, %v2251
        %v2358 = vpack.c.bf16 %v2284, %v2283
        %v2359 = vpack.c.bf16 %v2316, %v2315
        %v2360 = vpack.c.bf16 %v1676, %v1675
        %v2361 = vpack.c.bf16 %v2222, %v2221
        %v2362 = vpack.c.bf16 %v2254, %v2253
        %v2363 = vpack.c.bf16 %v2286, %v2285
        %v2364 = vpack.c.bf16 %v2318, %v2317
        %v2365 = vpack.c.bf16 %v1678, %v1677
        %v2366 = vpack.c.bf16 %v2224, %v2223
        %v2367 = vpack.c.bf16 %v2256, %v2255
        %v2368 = vpack.c.bf16 %v2288, %v2287
        %v2369 = vpack.c.bf16 %v2320, %v2319
        %v2370 = vpack.c.bf16 %v1680, %v1679
        %v2371 = vpack.c.bf16 %v2226, %v2225
        %v2372 = vpack.c.bf16 %v2258, %v2257
        %v2373 = vpack.c.bf16 %v2290, %v2289
        %v2374 = vpack.c.bf16 %v2322, %v2321
        %v2375 = vpack.c.bf16 %v1682, %v1681
        %v2376 = vpack.c.bf16 %v2228, %v2227
        %v2377 = vpack.c.bf16 %v2260, %v2259
        %v2378 = vpack.c.bf16 %v2292, %v2291
        %v2379 = vpack.c.bf16 %v2324, %v2323
        %v2380 = vpack.c.bf16 %v1684, %v1683
        %v2381 = vpack.c.bf16 %v2230, %v2229
        %v2382 = vpack.c.bf16 %v2262, %v2261
        %v2383 = vpack.c.bf16 %v2294, %v2293
        %v2384 = vpack.c.bf16 %v2326, %v2325
        %v2385 = vpack.c.bf16 %v1686, %v1685
        %v2386 = vpack.c.bf16 %v2232, %v2231
        %v2387 = vpack.c.bf16 %v2264, %v2263
        %v2388 = vpack.c.bf16 %v2296, %v2295
        %v2389 = vpack.c.bf16 %v2328, %v2327
        %v2390 = vpack.c.bf16 %v1688, %v1687
        %v2391 = vpack.c.bf16 %v2234, %v2233
        %v2392 = vpack.c.bf16 %v2266, %v2265
        %v2393 = vpack.c.bf16 %v2298, %v2297
        %v2394 = vpack.c.bf16 %v2330, %v2329
        %v2395 = vpack.c.bf16 %v1690, %v1689
        %v2396 = vpack.c.bf16 %v2236, %v2235
        %v2397 = vpack.c.bf16 %v2268, %v2267
        %v2398 = vpack.c.bf16 %v2300, %v2299
        %v2399 = vpack.c.bf16 %v2332, %v2331
        %v2400 = vpack.c.bf16 %v1692, %v1691
        %v2401 = vpack.c.bf16 %v2238, %v2237
        %v2402 = vpack.c.bf16 %v2270, %v2269
        %v2403 = vpack.c.bf16 %v2302, %v2301
        %v2404 = vpack.c.bf16 %v2334, %v2333
        %v2405 = vpack.c.bf16 %v1694, %v1693
        %v2406 = vpack.c.bf16 %v2240, %v2239
        %v2407 = vpack.c.bf16 %v2272, %v2271
        %v2408 = vpack.c.bf16 %v2304, %v2303
        %v2409 = vpack.c.bf16 %v2336, %v2335
        %v2410 = vpack.c.bf16 %v1696, %v1695
        %v2411 = vpack.c.bf16 %v2242, %v2241
        %v2412 = vpack.c.bf16 %v2274, %v2273
        %v2413 = vpack.c.bf16 %v2306, %v2305
        %v2414 = vpack.c.bf16 %v2338, %v2337
        %v2415 = vpack.c.bf16 %v1698, %v1697
        %v2416 = vpack.c.bf16 %v2244, %v2243
        %v2417 = vpack.c.bf16 %v2276, %v2275
        %v2418 = vpack.c.bf16 %v2308, %v2307
        %v2419 = vpack.c.bf16 %v2340, %v2339
        %v2420 = vpack.c.bf16 %v1700, %v1699
        %v2421 = vld [vmem:[%s3] sm:$0xf]
        %v2422 = vld [vmem:[%s3 + $0x4] sm:$0xf]
        %v2423 = vld [vmem:[%s3 + $0x8] sm:$0xf]
        %v2424 = vld [vmem:[%s3 + $0xc] sm:$0xf]
        %v2425 = vld [vmem:[%s3 + $0x10] sm:$0xf]
        %v2426 = vld [vmem:[%s3 + $0x14] sm:$0xf]
        %v2427 = vld [vmem:[%s3 + $0x18] sm:$0xf]
        %v2428 = vld [vmem:[%s3 + $0x1c] sm:$0xf]
        %v2429 = vld [vmem:[%s3 + $0x20] sm:$0xf]
        %v2430 = vld [vmem:[%s3 + $0x24] sm:$0xf]
        %v2431 = vld [vmem:[%s3 + $0x28] sm:$0xf]
        %v2432 = vld [vmem:[%s3 + $0x2c] sm:$0xf]
        %v2433 = vld [vmem:[%s3 + $0x30] sm:$0xf]
        %v2434 = vld [vmem:[%s3 + $0x34] sm:$0xf]
        %v2435 = vld [vmem:[%s3 + $0x38] sm:$0xf]
        %v2436 = vld [vmem:[%s3 + $0x3c] sm:$0xf]
        %v2437 = vld [vmem:[%s3 + $0x40] sm:$0xf]
        %v2438 = vld [vmem:[%s3 + $0x44] sm:$0xf]
        %v2439 = vld [vmem:[%s3 + $0x48] sm:$0xf]
        %v2440 = vld [vmem:[%s3 + $0x4c] sm:$0xf]
        %v2441 = vld [vmem:[%s3 + $0x50] sm:$0xf]
        %v2442 = vld [vmem:[%s3 + $0x54] sm:$0xf]
        %v2443 = vld [vmem:[%s3 + $0x58] sm:$0xf]
        %v2444 = vld [vmem:[%s3 + $0x5c] sm:$0xf]
        %v2445 = vld [vmem:[%s3 + $0x60] sm:$0xf]
        %v2446 = vld [vmem:[%s3 + $0x64] sm:$0xf]
        %v2447 = vld [vmem:[%s3 + $0x68] sm:$0xf]
        %v2448 = vld [vmem:[%s3 + $0x6c] sm:$0xf]
        %v2449 = vld [vmem:[%s3 + $0x70] sm:$0xf]
        %v2450 = vld [vmem:[%s3 + $0x74] sm:$0xf]
        %v2451 = vld [vmem:[%s3 + $0x78] sm:$0xf]
        %v2452 = vld [vmem:[%s3 + $0x7c] sm:$0xf]
        %v2453 = vld [vmem:[%s3 + $0x80] sm:$0xf]
        %v2454 = vld [vmem:[%s3 + $0x84] sm:$0xf]
        %v2455 = vld [vmem:[%s3 + $0x88] sm:$0xf]
        %v2456 = vld [vmem:[%s3 + $0x8c] sm:$0xf]
        %v2457 = vld [vmem:[%s3 + $0x90] sm:$0xf]
        %v2458 = vld [vmem:[%s3 + $0x94] sm:$0xf]
        %v2459 = vld [vmem:[%s3 + $0x98] sm:$0xf]
        %v2460 = vld [vmem:[%s3 + $0x9c] sm:$0xf]
        %v2461 = vld [vmem:[%s3 + $0xa0] sm:$0xf]
        %v2462 = vld [vmem:[%s3 + $0xa4] sm:$0xf]
        %v2463 = vld [vmem:[%s3 + $0xa8] sm:$0xf]
        %v2464 = vld [vmem:[%s3 + $0xac] sm:$0xf]
        %v2465 = vld [vmem:[%s3 + $0xb0] sm:$0xf]
        %v2466 = vld [vmem:[%s3 + $0xb4] sm:$0xf]
        %v2467 = vld [vmem:[%s3 + $0xb8] sm:$0xf]
        %v2468 = vld [vmem:[%s3 + $0xbc] sm:$0xf]
        %v2469 = vld [vmem:[%s3 + $0xc0] sm:$0xf]
        %v2470 = vld [vmem:[%s3 + $0xc4] sm:$0xf]
        %v2471 = vld [vmem:[%s3 + $0xc8] sm:$0xf]
        %v2472 = vld [vmem:[%s3 + $0xcc] sm:$0xf]
        %v2473 = vld [vmem:[%s3 + $0xd0] sm:$0xf]
        %v2474 = vld [vmem:[%s3 + $0xd4] sm:$0xf]
        %v2475 = vld [vmem:[%s3 + $0xd8] sm:$0xf]
        %v2476 = vld [vmem:[%s3 + $0xdc] sm:$0xf]
        %v2477 = vld [vmem:[%s3 + $0xe0] sm:$0xf]
        %v2478 = vld [vmem:[%s3 + $0xe4] sm:$0xf]
        %v2479 = vld [vmem:[%s3 + $0xe8] sm:$0xf]
        %v2480 = vld [vmem:[%s3 + $0xec] sm:$0xf]
        %v2481 = vld [vmem:[%s3 + $0xf0] sm:$0xf]
        %v2482 = vld [vmem:[%s3 + $0xf4] sm:$0xf]
        %v2483 = vld [vmem:[%s3 + $0xf8] sm:$0xf]
        %v2484 = vld [vmem:[%s3 + $0xfc] sm:$0xf]
        %v2485 = vld [vmem:[%s3 + $0x100] sm:$0xf]
        %v2486 = vld [vmem:[%s3 + $0x104] sm:$0xf]
        %v2487 = vld [vmem:[%s3 + $0x108] sm:$0xf]
        %v2488 = vld [vmem:[%s3 + $0x10c] sm:$0xf]
        %v2489 = vld [vmem:[%s3 + $0x110] sm:$0xf]
        %v2490 = vld [vmem:[%s3 + $0x114] sm:$0xf]
        %v2491 = vld [vmem:[%s3 + $0x118] sm:$0xf]
        %v2492 = vld [vmem:[%s3 + $0x11c] sm:$0xf]
        %v2565 = vunpack.c.l.b16 %v2421
        %v2566 = vunpack.c.l.b16 %v2422
        %v2567 = vunpack.c.l.b16 %v2423
        %v2568 = vunpack.c.l.b16 %v2424
        %v2569 = vunpack.c.l.b16 %v2425
        %v2570 = vunpack.c.l.b16 %v2426
        %v2571 = vunpack.c.l.b16 %v2427
        %v2572 = vunpack.c.l.b16 %v2428
        %v2573 = vunpack.c.l.b16 %v2429
        %v2574 = vunpack.c.l.b16 %v2430
        %v2575 = vunpack.c.l.b16 %v2431
        %v2576 = vunpack.c.l.b16 %v2432
        %v2577 = vunpack.c.l.b16 %v2433
        %v2578 = vunpack.c.l.b16 %v2434
        %v2579 = vunpack.c.l.b16 %v2435
        %v2580 = vunpack.c.l.b16 %v2436
        %v2581 = vunpack.c.l.b16 %v2437
        %v2582 = vunpack.c.l.b16 %v2438
        %v2583 = vunpack.c.l.b16 %v2439
        %v2584 = vunpack.c.l.b16 %v2440
        %v2585 = vunpack.c.l.b16 %v2441
        %v2586 = vunpack.c.l.b16 %v2442
        %v2587 = vunpack.c.l.b16 %v2443
        %v2588 = vunpack.c.l.b16 %v2444
        %v2589 = vunpack.c.l.b16 %v2445
        %v2590 = vunpack.c.l.b16 %v2446
        %v2591 = vunpack.c.l.b16 %v2447
        %v2592 = vunpack.c.l.b16 %v2448
        %v2593 = vunpack.c.l.b16 %v2449
        %v2594 = vunpack.c.l.b16 %v2450
        %v2595 = vunpack.c.l.b16 %v2451
        %v2596 = vunpack.c.l.b16 %v2452
        %v2597 = vunpack.c.l.b16 %v2453
        %v2598 = vunpack.c.l.b16 %v2454
        %v2599 = vunpack.c.l.b16 %v2455
        %v2600 = vunpack.c.l.b16 %v2456
        %v2601 = vunpack.c.l.b16 %v2457
        %v2602 = vunpack.c.l.b16 %v2458
        %v2603 = vunpack.c.l.b16 %v2459
        %v2604 = vunpack.c.l.b16 %v2460
        %v2605 = vunpack.c.l.b16 %v2461
        %v2606 = vunpack.c.l.b16 %v2462
        %v2607 = vunpack.c.l.b16 %v2463
        %v2608 = vunpack.c.l.b16 %v2464
        %v2609 = vunpack.c.l.b16 %v2465
        %v2610 = vunpack.c.l.b16 %v2466
        %v2611 = vunpack.c.l.b16 %v2467
        %v2612 = vunpack.c.l.b16 %v2468
        %v2613 = vunpack.c.l.b16 %v2469
        %v2614 = vunpack.c.l.b16 %v2470
        %v2615 = vunpack.c.l.b16 %v2471
        %v2616 = vunpack.c.l.b16 %v2472
        %v2617 = vunpack.c.l.b16 %v2473
        %v2618 = vunpack.c.l.b16 %v2474
        %v2619 = vunpack.c.l.b16 %v2475
        %v2620 = vunpack.c.l.b16 %v2476
        %v2621 = vunpack.c.l.b16 %v2477
        %v2622 = vunpack.c.l.b16 %v2478
        %v2623 = vunpack.c.l.b16 %v2479
        %v2624 = vunpack.c.l.b16 %v2480
        %v2625 = vunpack.c.l.b16 %v2481
        %v2626 = vunpack.c.l.b16 %v2482
        %v2627 = vunpack.c.l.b16 %v2483
        %v2628 = vunpack.c.l.b16 %v2484
        %v2629 = vunpack.c.l.b16 %v2485
        %v2630 = vunpack.c.l.b16 %v2486
        %v2631 = vunpack.c.l.b16 %v2487
        %v2632 = vunpack.c.l.b16 %v2488
        %v2633 = vunpack.c.l.b16 %v2489
        %v2634 = vunpack.c.l.b16 %v2490
        %v2635 = vunpack.c.l.b16 %v2491
        %v2636 = vunpack.c.l.b16 %v2492
        %v2637 = vpack.c.b16 %v2566, %v2565
        %v2638 = vpack.c.b16 %v2568, %v2567
        %v2639 = vpack.c.b16 %v2570, %v2569
        %v2640 = vpack.c.b16 %v2572, %v2571
        %v2641 = vpack.c.b16 %v2574, %v2573
        %v2642 = vpack.c.b16 %v2576, %v2575
        %v2643 = vpack.c.b16 %v2578, %v2577
        %v2644 = vpack.c.b16 %v2580, %v2579
        %v2645 = vpack.c.b16 %v2582, %v2581
        %v2646 = vpack.c.b16 %v2584, %v2583
        %v2647 = vpack.c.b16 %v2586, %v2585
        %v2648 = vpack.c.b16 %v2588, %v2587
        %v2649 = vpack.c.b16 %v2590, %v2589
        %v2650 = vpack.c.b16 %v2592, %v2591
        %v2651 = vpack.c.b16 %v2594, %v2593
        %v2652 = vpack.c.b16 %v2596, %v2595
        %v2653 = vpack.c.b16 %v2598, %v2597
        %v2654 = vpack.c.b16 %v2600, %v2599
        %v2655 = vpack.c.b16 %v2602, %v2601
        %v2656 = vpack.c.b16 %v2604, %v2603
        %v2657 = vpack.c.b16 %v2606, %v2605
        %v2658 = vpack.c.b16 %v2608, %v2607
        %v2659 = vpack.c.b16 %v2610, %v2609
        %v2660 = vpack.c.b16 %v2612, %v2611
        %v2661 = vpack.c.b16 %v2614, %v2613
        %v2662 = vpack.c.b16 %v2616, %v2615
        %v2663 = vpack.c.b16 %v2618, %v2617
        %v2664 = vpack.c.b16 %v2620, %v2619
        %v2665 = vpack.c.b16 %v2622, %v2621
        %v2666 = vpack.c.b16 %v2624, %v2623
        %v2667 = vpack.c.b16 %v2626, %v2625
        %v2668 = vpack.c.b16 %v2628, %v2627
        %v2669 = vpack.c.b16 %v2630, %v2629
        %v2670 = vpack.c.b16 %v2632, %v2631
        %v2671 = vpack.c.b16 %v2634, %v2633
        %v2672 = vpack.c.b16 %v2636, %v2635
        %v2710 = vsel %vm1145, %v2345, 0
        %v2713 = vsel %vm1145, %v2350, 0
        %v2716 = vsel %vm1145, %v2355, 0
        %v2719 = vsel %vm1145, %v2360, 0
        %v2722 = vsel %vm1145, %v2365, 0
        %v2725 = vsel %vm1145, %v2370, 0
        %v2728 = vsel %vm1145, %v2375, 0
        %v2731 = vsel %vm1145, %v2380, 0
        %v2734 = vsel %vm1145, %v2385, 0
        %v2737 = vsel %vm1145, %v2390, 0
        %v2740 = vsel %vm1145, %v2395, 0
        %v2743 = vsel %vm1145, %v2400, 0
        %v2746 = vsel %vm1145, %v2405, 0
        %v2749 = vsel %vm1145, %v2410, 0
        %v2752 = vsel %vm1145, %v2415, 0
        %v2755 = vsel %vm1145, %v2420, 0
        %2757 = vmatpush.bf16.msra.mxu0 %v2644
        %2758 = vmatpush.bf16.msra.mxu0 %v2643
        %2759 = vmatpush.bf16.msra.mxu0 %v2642
        %2760 = vmatpush.bf16.msra.mxu0 %v2641
        %2761 = vmatpush.bf16.msra.mxu0 %v2640
        %2762 = vmatpush.bf16.msra.mxu0 %v2639
        %2763 = vmatpush.bf16.msra.mxu0 %v2638
        %2764 = vmatpush.bf16.msra.mxu0 %v2637
        %2765 = vmatmul.bf16.gmra.mxu0 %v2341
        %v2766 = vpop.f32.mrf.mxu0
        %v2767 = vadd.f32 0.0, %v2766
        %v2768 = vpop.f32.mrf.mxu0
        %v2769 = vadd.f32 0.0, %v2768
        %2770 = vmatmul.bf16.gmra.mxu0 %v2346
        %v2771 = vpop.f32.mrf.mxu0
        %v2772 = vadd.f32 0.0, %v2771
        %v2773 = vpop.f32.mrf.mxu0
        %v2774 = vadd.f32 0.0, %v2773
        %2775 = vmatmul.bf16.gmra.mxu0 %v2351
        %v2776 = vpop.f32.mrf.mxu0
        %v2777 = vadd.f32 0.0, %v2776
        %v2778 = vpop.f32.mrf.mxu0
        %v2779 = vadd.f32 0.0, %v2778
        %2780 = vmatmul.bf16.gmra.mxu0 %v2356
        %v2781 = vpop.f32.mrf.mxu0
        %v2782 = vadd.f32 0.0, %v2781
        %v2783 = vpop.f32.mrf.mxu0
        %v2784 = vadd.f32 0.0, %v2783
        %2785 = vmatmul.bf16.gmra.mxu0 %v2361
        %v2786 = vpop.f32.mrf.mxu0
        %v2787 = vadd.f32 0.0, %v2786
        %v2788 = vpop.f32.mrf.mxu0
        %v2789 = vadd.f32 0.0, %v2788
        %2790 = vmatmul.bf16.gmra.mxu0 %v2366
        %v2791 = vpop.f32.mrf.mxu0
        %v2792 = vadd.f32 0.0, %v2791
        %v2793 = vpop.f32.mrf.mxu0
        %v2794 = vadd.f32 0.0, %v2793
        %2795 = vmatmul.bf16.gmra.mxu0 %v2371
        %v2796 = vpop.f32.mrf.mxu0
        %v2797 = vadd.f32 0.0, %v2796
        %v2798 = vpop.f32.mrf.mxu0
        %v2799 = vadd.f32 0.0, %v2798
        %2800 = vmatmul.bf16.gmra.mxu0 %v2376
        %v2801 = vpop.f32.mrf.mxu0
        %v2802 = vadd.f32 0.0, %v2801
        %v2803 = vpop.f32.mrf.mxu0
        %v2804 = vadd.f32 0.0, %v2803
        %2805 = vmatmul.bf16.gmra.mxu0 %v2381
        %v2806 = vpop.f32.mrf.mxu0
        %v2807 = vadd.f32 0.0, %v2806
        %v2808 = vpop.f32.mrf.mxu0
        %v2809 = vadd.f32 0.0, %v2808
        %2810 = vmatmul.bf16.gmra.mxu0 %v2386
        %v2811 = vpop.f32.mrf.mxu0
        %v2812 = vadd.f32 0.0, %v2811
        %v2813 = vpop.f32.mrf.mxu0
        %v2814 = vadd.f32 0.0, %v2813
        %2815 = vmatmul.bf16.gmra.mxu0 %v2391
        %v2816 = vpop.f32.mrf.mxu0
        %v2817 = vadd.f32 0.0, %v2816
        %v2818 = vpop.f32.mrf.mxu0
        %v2819 = vadd.f32 0.0, %v2818
        %2820 = vmatmul.bf16.gmra.mxu0 %v2396
        %v2821 = vpop.f32.mrf.mxu0
        %v2822 = vadd.f32 0.0, %v2821
        %v2823 = vpop.f32.mrf.mxu0
        %v2824 = vadd.f32 0.0, %v2823
        %2825 = vmatmul.bf16.gmra.mxu0 %v2401
        %v2826 = vpop.f32.mrf.mxu0
        %v2827 = vadd.f32 0.0, %v2826
        %v2828 = vpop.f32.mrf.mxu0
        %v2829 = vadd.f32 0.0, %v2828
        %2830 = vmatmul.bf16.gmra.mxu0 %v2406
        %v2831 = vpop.f32.mrf.mxu0
        %v2832 = vadd.f32 0.0, %v2831
        %v2833 = vpop.f32.mrf.mxu0
        %v2834 = vadd.f32 0.0, %v2833
        %2835 = vmatmul.bf16.gmra.mxu0 %v2411
        %v2836 = vpop.f32.mrf.mxu0
        %v2837 = vadd.f32 0.0, %v2836
        %v2838 = vpop.f32.mrf.mxu0
        %v2839 = vadd.f32 0.0, %v2838
        %2840 = vmatmul.bf16.gmra.mxu0 %v2416
        %v2841 = vpop.f32.mrf.mxu0
        %v2842 = vadd.f32 0.0, %v2841
        %v2843 = vpop.f32.mrf.mxu0
        %v2844 = vadd.f32 0.0, %v2843
        %2845 = vdwg.mxu0
        %2846 = vmatpush.bf16.msra.mxu0 %v2652
        %2847 = vmatpush.bf16.msra.mxu0 %v2651
        %2848 = vmatpush.bf16.msra.mxu0 %v2650
        %2849 = vmatpush.bf16.msra.mxu0 %v2649
        %2850 = vmatpush.bf16.msra.mxu0 %v2648
        %2851 = vmatpush.bf16.msra.mxu0 %v2647
        %2852 = vmatpush.bf16.msra.mxu0 %v2646
        %2853 = vmatpush.bf16.msra.mxu0 %v2645
        %2854 = vmatmul.bf16.gmra.mxu0 %v2342
        %v2855 = vpop.f32.mrf.mxu0
        %v2856 = vadd.f32 %v2767, %v2855
        %v2857 = vpop.f32.mrf.mxu0
        %v2858 = vadd.f32 %v2769, %v2857
        %2859 = vmatmul.bf16.gmra.mxu0 %v2347
        %v2860 = vpop.f32.mrf.mxu0
        %v2861 = vadd.f32 %v2772, %v2860
        %v2862 = vpop.f32.mrf.mxu0
        %v2863 = vadd.f32 %v2774, %v2862
        %2864 = vmatmul.bf16.gmra.mxu0 %v2352
        %v2865 = vpop.f32.mrf.mxu0
        %v2866 = vadd.f32 %v2777, %v2865
        %v2867 = vpop.f32.mrf.mxu0
        %v2868 = vadd.f32 %v2779, %v2867
        %2869 = vmatmul.bf16.gmra.mxu0 %v2357
        %v2870 = vpop.f32.mrf.mxu0
        %v2871 = vadd.f32 %v2782, %v2870
        %v2872 = vpop.f32.mrf.mxu0
        %v2873 = vadd.f32 %v2784, %v2872
        %2874 = vmatmul.bf16.gmra.mxu0 %v2362
        %v2875 = vpop.f32.mrf.mxu0
        %v2876 = vadd.f32 %v2787, %v2875
        %v2877 = vpop.f32.mrf.mxu0
        %v2878 = vadd.f32 %v2789, %v2877
        %2879 = vmatmul.bf16.gmra.mxu0 %v2367
        %v2880 = vpop.f32.mrf.mxu0
        %v2881 = vadd.f32 %v2792, %v2880
        %v2882 = vpop.f32.mrf.mxu0
        %v2883 = vadd.f32 %v2794, %v2882
        %2884 = vmatmul.bf16.gmra.mxu0 %v2372
        %v2885 = vpop.f32.mrf.mxu0
        %v2886 = vadd.f32 %v2797, %v2885
        %v2887 = vpop.f32.mrf.mxu0
        %v2888 = vadd.f32 %v2799, %v2887
        %2889 = vmatmul.bf16.gmra.mxu0 %v2377
        %v2890 = vpop.f32.mrf.mxu0
        %v2891 = vadd.f32 %v2802, %v2890
        %v2892 = vpop.f32.mrf.mxu0
        %v2893 = vadd.f32 %v2804, %v2892
        %2894 = vmatmul.bf16.gmra.mxu0 %v2382
        %v2895 = vpop.f32.mrf.mxu0
        %v2896 = vadd.f32 %v2807, %v2895
        %v2897 = vpop.f32.mrf.mxu0
        %v2898 = vadd.f32 %v2809, %v2897
        %2899 = vmatmul.bf16.gmra.mxu0 %v2387
        %v2900 = vpop.f32.mrf.mxu0
        %v2901 = vadd.f32 %v2812, %v2900
        %v2902 = vpop.f32.mrf.mxu0
        %v2903 = vadd.f32 %v2814, %v2902
        %2904 = vmatmul.bf16.gmra.mxu0 %v2392
        %v2905 = vpop.f32.mrf.mxu0
        %v2906 = vadd.f32 %v2817, %v2905
        %v2907 = vpop.f32.mrf.mxu0
        %v2908 = vadd.f32 %v2819, %v2907
        %2909 = vmatmul.bf16.gmra.mxu0 %v2397
        %v2910 = vpop.f32.mrf.mxu0
        %v2911 = vadd.f32 %v2822, %v2910
        %v2912 = vpop.f32.mrf.mxu0
        %v2913 = vadd.f32 %v2824, %v2912
        %2914 = vmatmul.bf16.gmra.mxu0 %v2402
        %v2915 = vpop.f32.mrf.mxu0
        %v2916 = vadd.f32 %v2827, %v2915
        %v2917 = vpop.f32.mrf.mxu0
        %v2918 = vadd.f32 %v2829, %v2917
        %2919 = vmatmul.bf16.gmra.mxu0 %v2407
        %v2920 = vpop.f32.mrf.mxu0
        %v2921 = vadd.f32 %v2832, %v2920
        %v2922 = vpop.f32.mrf.mxu0
        %v2923 = vadd.f32 %v2834, %v2922
        %2924 = vmatmul.bf16.gmra.mxu0 %v2412
        %v2925 = vpop.f32.mrf.mxu0
        %v2926 = vadd.f32 %v2837, %v2925
        %v2927 = vpop.f32.mrf.mxu0
        %v2928 = vadd.f32 %v2839, %v2927
        %2929 = vmatmul.bf16.gmra.mxu0 %v2417
        %v2930 = vpop.f32.mrf.mxu0
        %v2931 = vadd.f32 %v2842, %v2930
        %v2932 = vpop.f32.mrf.mxu0
        %v2933 = vadd.f32 %v2844, %v2932
        %2934 = vdwg.mxu0
        %2935 = vmatpush.bf16.msra.mxu0 %v2660
        %2936 = vmatpush.bf16.msra.mxu0 %v2659
        %2937 = vmatpush.bf16.msra.mxu0 %v2658
        %2938 = vmatpush.bf16.msra.mxu0 %v2657
        %2939 = vmatpush.bf16.msra.mxu0 %v2656
        %2940 = vmatpush.bf16.msra.mxu0 %v2655
        %2941 = vmatpush.bf16.msra.mxu0 %v2654
        %2942 = vmatpush.bf16.msra.mxu0 %v2653
        %2943 = vmatmul.bf16.gmra.mxu0 %v2343
        %v2944 = vpop.f32.mrf.mxu0
        %v2945 = vadd.f32 %v2856, %v2944
        %v2946 = vpop.f32.mrf.mxu0
        %v2947 = vadd.f32 %v2858, %v2946
        %2948 = vmatmul.bf16.gmra.mxu0 %v2348
        %v2949 = vpop.f32.mrf.mxu0
        %v2950 = vadd.f32 %v2861, %v2949
        %v2951 = vpop.f32.mrf.mxu0
        %v2952 = vadd.f32 %v2863, %v2951
        %2953 = vmatmul.bf16.gmra.mxu0 %v2353
        %v2954 = vpop.f32.mrf.mxu0
        %v2955 = vadd.f32 %v2866, %v2954
        %v2956 = vpop.f32.mrf.mxu0
        %v2957 = vadd.f32 %v2868, %v2956
        %2958 = vmatmul.bf16.gmra.mxu0 %v2358
        %v2959 = vpop.f32.mrf.mxu0
        %v2960 = vadd.f32 %v2871, %v2959
        %v2961 = vpop.f32.mrf.mxu0
        %v2962 = vadd.f32 %v2873, %v2961
        %2963 = vmatmul.bf16.gmra.mxu0 %v2363
        %v2964 = vpop.f32.mrf.mxu0
        %v2965 = vadd.f32 %v2876, %v2964
        %v2966 = vpop.f32.mrf.mxu0
        %v2967 = vadd.f32 %v2878, %v2966
        %2968 = vmatmul.bf16.gmra.mxu0 %v2368
        %v2969 = vpop.f32.mrf.mxu0
        %v2970 = vadd.f32 %v2881, %v2969
        %v2971 = vpop.f32.mrf.mxu0
        %v2972 = vadd.f32 %v2883, %v2971
        %2973 = vmatmul.bf16.gmra.mxu0 %v2373
        %v2974 = vpop.f32.mrf.mxu0
        %v2975 = vadd.f32 %v2886, %v2974
        %v2976 = vpop.f32.mrf.mxu0
        %v2977 = vadd.f32 %v2888, %v2976
        %2978 = vmatmul.bf16.gmra.mxu0 %v2378
        %v2979 = vpop.f32.mrf.mxu0
        %v2980 = vadd.f32 %v2891, %v2979
        %v2981 = vpop.f32.mrf.mxu0
        %v2982 = vadd.f32 %v2893, %v2981
        %2983 = vmatmul.bf16.gmra.mxu0 %v2383
        %v2984 = vpop.f32.mrf.mxu0
        %v2985 = vadd.f32 %v2896, %v2984
        %v2986 = vpop.f32.mrf.mxu0
        %v2987 = vadd.f32 %v2898, %v2986
        %2988 = vmatmul.bf16.gmra.mxu0 %v2388
        %v2989 = vpop.f32.mrf.mxu0
        %v2990 = vadd.f32 %v2901, %v2989
        %v2991 = vpop.f32.mrf.mxu0
        %v2992 = vadd.f32 %v2903, %v2991
        %2993 = vmatmul.bf16.gmra.mxu0 %v2393
        %v2994 = vpop.f32.mrf.mxu0
        %v2995 = vadd.f32 %v2906, %v2994
        %v2996 = vpop.f32.mrf.mxu0
        %v2997 = vadd.f32 %v2908, %v2996
        %2998 = vmatmul.bf16.gmra.mxu0 %v2398
        %v2999 = vpop.f32.mrf.mxu0
        %v3000 = vadd.f32 %v2911, %v2999
        %v3001 = vpop.f32.mrf.mxu0
        %v3002 = vadd.f32 %v2913, %v3001
        %3003 = vmatmul.bf16.gmra.mxu0 %v2403
        %v3004 = vpop.f32.mrf.mxu0
        %v3005 = vadd.f32 %v2916, %v3004
        %v3006 = vpop.f32.mrf.mxu0
        %v3007 = vadd.f32 %v2918, %v3006
        %3008 = vmatmul.bf16.gmra.mxu0 %v2408
        %v3009 = vpop.f32.mrf.mxu0
        %v3010 = vadd.f32 %v2921, %v3009
        %v3011 = vpop.f32.mrf.mxu0
        %v3012 = vadd.f32 %v2923, %v3011
        %3013 = vmatmul.bf16.gmra.mxu0 %v2413
        %v3014 = vpop.f32.mrf.mxu0
        %v3015 = vadd.f32 %v2926, %v3014
        %v3016 = vpop.f32.mrf.mxu0
        %v3017 = vadd.f32 %v2928, %v3016
        %3018 = vmatmul.bf16.gmra.mxu0 %v2418
        %v3019 = vpop.f32.mrf.mxu0
        %v3020 = vadd.f32 %v2931, %v3019
        %v3021 = vpop.f32.mrf.mxu0
        %v3022 = vadd.f32 %v2933, %v3021
        %3023 = vdwg.mxu0
        %3024 = vmatpush.bf16.msra.mxu0 %v2668
        %3025 = vmatpush.bf16.msra.mxu0 %v2667
        %3026 = vmatpush.bf16.msra.mxu0 %v2666
        %3027 = vmatpush.bf16.msra.mxu0 %v2665
        %3028 = vmatpush.bf16.msra.mxu0 %v2664
        %3029 = vmatpush.bf16.msra.mxu0 %v2663
        %3030 = vmatpush.bf16.msra.mxu0 %v2662
        %3031 = vmatpush.bf16.msra.mxu0 %v2661
        %3032 = vmatmul.bf16.gmra.mxu0 %v2344
        %v3033 = vpop.f32.mrf.mxu0
        %v3034 = vadd.f32 %v2945, %v3033
        %v3035 = vpop.f32.mrf.mxu0
        %v3036 = vadd.f32 %v2947, %v3035
        %3037 = vmatmul.bf16.gmra.mxu0 %v2349
        %v3038 = vpop.f32.mrf.mxu0
        %v3039 = vadd.f32 %v2950, %v3038
        %v3040 = vpop.f32.mrf.mxu0
        %v3041 = vadd.f32 %v2952, %v3040
        %3042 = vmatmul.bf16.gmra.mxu0 %v2354
        %v3043 = vpop.f32.mrf.mxu0
        %v3044 = vadd.f32 %v2955, %v3043
        %v3045 = vpop.f32.mrf.mxu0
        %v3046 = vadd.f32 %v2957, %v3045
        %3047 = vmatmul.bf16.gmra.mxu0 %v2359
        %v3048 = vpop.f32.mrf.mxu0
        %v3049 = vadd.f32 %v2960, %v3048
        %v3050 = vpop.f32.mrf.mxu0
        %v3051 = vadd.f32 %v2962, %v3050
        %3052 = vmatmul.bf16.gmra.mxu0 %v2364
        %v3053 = vpop.f32.mrf.mxu0
        %v3054 = vadd.f32 %v2965, %v3053
        %v3055 = vpop.f32.mrf.mxu0
        %v3056 = vadd.f32 %v2967, %v3055
        %3057 = vmatmul.bf16.gmra.mxu0 %v2369
        %v3058 = vpop.f32.mrf.mxu0
        %v3059 = vadd.f32 %v2970, %v3058
        %v3060 = vpop.f32.mrf.mxu0
        %v3061 = vadd.f32 %v2972, %v3060
        %3062 = vmatmul.bf16.gmra.mxu0 %v2374
        %v3063 = vpop.f32.mrf.mxu0
        %v3064 = vadd.f32 %v2975, %v3063
        %v3065 = vpop.f32.mrf.mxu0
        %v3066 = vadd.f32 %v2977, %v3065
        %3067 = vmatmul.bf16.gmra.mxu0 %v2379
        %v3068 = vpop.f32.mrf.mxu0
        %v3069 = vadd.f32 %v2980, %v3068
        %v3070 = vpop.f32.mrf.mxu0
        %v3071 = vadd.f32 %v2982, %v3070
        %3072 = vmatmul.bf16.gmra.mxu0 %v2384
        %v3073 = vpop.f32.mrf.mxu0
        %v3074 = vadd.f32 %v2985, %v3073
        %v3075 = vpop.f32.mrf.mxu0
        %v3076 = vadd.f32 %v2987, %v3075
        %3077 = vmatmul.bf16.gmra.mxu0 %v2389
        %v3078 = vpop.f32.mrf.mxu0
        %v3079 = vadd.f32 %v2990, %v3078
        %v3080 = vpop.f32.mrf.mxu0
        %v3081 = vadd.f32 %v2992, %v3080
        %3082 = vmatmul.bf16.gmra.mxu0 %v2394
        %v3083 = vpop.f32.mrf.mxu0
        %v3084 = vadd.f32 %v2995, %v3083
        %v3085 = vpop.f32.mrf.mxu0
        %v3086 = vadd.f32 %v2997, %v3085
        %3087 = vmatmul.bf16.gmra.mxu0 %v2399
        %v3088 = vpop.f32.mrf.mxu0
        %v3089 = vadd.f32 %v3000, %v3088
        %v3090 = vpop.f32.mrf.mxu0
        %v3091 = vadd.f32 %v3002, %v3090
        %3092 = vmatmul.bf16.gmra.mxu0 %v2404
        %v3093 = vpop.f32.mrf.mxu0
        %v3094 = vadd.f32 %v3005, %v3093
        %v3095 = vpop.f32.mrf.mxu0
        %v3096 = vadd.f32 %v3007, %v3095
        %3097 = vmatmul.bf16.gmra.mxu0 %v2409
        %v3098 = vpop.f32.mrf.mxu0
        %v3099 = vadd.f32 %v3010, %v3098
        %v3100 = vpop.f32.mrf.mxu0
        %v3101 = vadd.f32 %v3012, %v3100
        %3102 = vmatmul.bf16.gmra.mxu0 %v2414
        %v3103 = vpop.f32.mrf.mxu0
        %v3104 = vadd.f32 %v3015, %v3103
        %v3105 = vpop.f32.mrf.mxu0
        %v3106 = vadd.f32 %v3017, %v3105
        %3107 = vmatmul.bf16.gmra.mxu0 %v2419
        %v3108 = vpop.f32.mrf.mxu0
        %v3109 = vadd.f32 %v3020, %v3108
        %v3110 = vpop.f32.mrf.mxu0
        %v3111 = vadd.f32 %v3022, %v3110
        %3112 = vdwg.mxu0
        %3113 = vmatpush.bf16.msra.mxu0 0
        %3114 = vmatpush.bf16.msra.mxu0 0
        %3115 = vmatpush.bf16.msra.mxu0 0
        %3116 = vmatpush.bf16.msra.mxu0 0
        %3117 = vmatpush.bf16.msra.mxu0 %v2672
        %3118 = vmatpush.bf16.msra.mxu0 %v2671
        %3119 = vmatpush.bf16.msra.mxu0 %v2670
        %3120 = vmatpush.bf16.msra.mxu0 %v2669
        %3121 = vmatmul.bf16.gmra.mxu0 %v2710
        %v3122 = vpop.f32.mrf.mxu0
        %v3123 = vadd.f32 %v3034, %v3122
        %v3124 = vpop.f32.mrf.mxu0
        %v3125 = vadd.f32 %v3036, %v3124
        %3126 = vmatmul.bf16.gmra.mxu0 %v2713
        %v3127 = vpop.f32.mrf.mxu0
        %v3128 = vadd.f32 %v3039, %v3127
        %v3129 = vpop.f32.mrf.mxu0
        %v3130 = vadd.f32 %v3041, %v3129
        %3131 = vmatmul.bf16.gmra.mxu0 %v2716
        %v3132 = vpop.f32.mrf.mxu0
        %v3133 = vadd.f32 %v3044, %v3132
        %v3134 = vpop.f32.mrf.mxu0
        %v3135 = vadd.f32 %v3046, %v3134
        %3136 = vmatmul.bf16.gmra.mxu0 %v2719
        %v3137 = vpop.f32.mrf.mxu0
        %v3138 = vadd.f32 %v3049, %v3137
        %v3139 = vpop.f32.mrf.mxu0
        %v3140 = vadd.f32 %v3051, %v3139
        %3141 = vmatmul.bf16.gmra.mxu0 %v2722
        %v3142 = vpop.f32.mrf.mxu0
        %v3143 = vadd.f32 %v3054, %v3142
        %v3144 = vpop.f32.mrf.mxu0
        %v3145 = vadd.f32 %v3056, %v3144
        %3146 = vmatmul.bf16.gmra.mxu0 %v2725
        %v3147 = vpop.f32.mrf.mxu0
        %v3148 = vadd.f32 %v3059, %v3147
        %v3149 = vpop.f32.mrf.mxu0
        %v3150 = vadd.f32 %v3061, %v3149
        %3151 = vmatmul.bf16.gmra.mxu0 %v2728
        %v3152 = vpop.f32.mrf.mxu0
        %v3153 = vadd.f32 %v3064, %v3152
        %v3154 = vpop.f32.mrf.mxu0
        %v3155 = vadd.f32 %v3066, %v3154
        %3156 = vmatmul.bf16.gmra.mxu0 %v2731
        %v3157 = vpop.f32.mrf.mxu0
        %v3158 = vadd.f32 %v3069, %v3157
        %v3159 = vpop.f32.mrf.mxu0
        %v3160 = vadd.f32 %v3071, %v3159
        %3161 = vmatmul.bf16.gmra.mxu0 %v2734
        %v3162 = vpop.f32.mrf.mxu0
        %v3163 = vadd.f32 %v3074, %v3162
        %v3164 = vpop.f32.mrf.mxu0
        %v3165 = vadd.f32 %v3076, %v3164
        %3166 = vmatmul.bf16.gmra.mxu0 %v2737
        %v3167 = vpop.f32.mrf.mxu0
        %v3168 = vadd.f32 %v3079, %v3167
        %v3169 = vpop.f32.mrf.mxu0
        %v3170 = vadd.f32 %v3081, %v3169
        %3171 = vmatmul.bf16.gmra.mxu0 %v2740
        %v3172 = vpop.f32.mrf.mxu0
        %v3173 = vadd.f32 %v3084, %v3172
        %v3174 = vpop.f32.mrf.mxu0
        %v3175 = vadd.f32 %v3086, %v3174
        %3176 = vmatmul.bf16.gmra.mxu0 %v2743
        %v3177 = vpop.f32.mrf.mxu0
        %v3178 = vadd.f32 %v3089, %v3177
        %v3179 = vpop.f32.mrf.mxu0
        %v3180 = vadd.f32 %v3091, %v3179
        %3181 = vmatmul.bf16.gmra.mxu0 %v2746
        %v3182 = vpop.f32.mrf.mxu0
        %v3183 = vadd.f32 %v3094, %v3182
        %v3184 = vpop.f32.mrf.mxu0
        %v3185 = vadd.f32 %v3096, %v3184
        %3186 = vmatmul.bf16.gmra.mxu0 %v2749
        %v3187 = vpop.f32.mrf.mxu0
        %v3188 = vadd.f32 %v3099, %v3187
        %v3189 = vpop.f32.mrf.mxu0
        %v3190 = vadd.f32 %v3101, %v3189
        %3191 = vmatmul.bf16.gmra.mxu0 %v2752
        %v3192 = vpop.f32.mrf.mxu0
        %v3193 = vadd.f32 %v3104, %v3192
        %v3194 = vpop.f32.mrf.mxu0
        %v3195 = vadd.f32 %v3106, %v3194
        %3196 = vmatmul.bf16.gmra.mxu0 %v2755
        %v3197 = vpop.f32.mrf.mxu0
        %v3198 = vadd.f32 %v3109, %v3197
        %v3199 = vpop.f32.mrf.mxu0
        %v3200 = vadd.f32 %v3111, %v3199
        %3201 = vdwg.mxu0
        %v3202 = vand.u32 2147483647, %v3123
        %v3203 = vand.u32 2147483647, %v3125
        %v3204 = vand.u32 2147483647, %v3128
        %v3205 = vand.u32 2147483647, %v3130
        %v3206 = vand.u32 2147483647, %v3133
        %v3207 = vand.u32 2147483647, %v3135
        %v3208 = vand.u32 2147483647, %v3138
        %v3209 = vand.u32 2147483647, %v3140
        %v3210 = vand.u32 2147483647, %v3143
        %v3211 = vand.u32 2147483647, %v3145
        %v3212 = vand.u32 2147483647, %v3148
        %v3213 = vand.u32 2147483647, %v3150
        %v3214 = vand.u32 2147483647, %v3153
        %v3215 = vand.u32 2147483647, %v3155
        %v3216 = vand.u32 2147483647, %v3158
        %v3217 = vand.u32 2147483647, %v3160
        %v3218 = vand.u32 2147483647, %v3163
        %v3219 = vand.u32 2147483647, %v3165
        %v3220 = vand.u32 2147483647, %v3168
        %v3221 = vand.u32 2147483647, %v3170
        %v3222 = vand.u32 2147483647, %v3173
        %v3223 = vand.u32 2147483647, %v3175
        %v3224 = vand.u32 2147483647, %v3178
        %v3225 = vand.u32 2147483647, %v3180
        %v3226 = vand.u32 2147483647, %v3183
        %v3227 = vand.u32 2147483647, %v3185
        %v3228 = vand.u32 2147483647, %v3188
        %v3229 = vand.u32 2147483647, %v3190
        %v3230 = vand.u32 2147483647, %v3193
        %v3231 = vand.u32 2147483647, %v3195
        %v3232 = vand.u32 2147483647, %v3198
        %v3233 = vand.u32 2147483647, %v3200
        %v3234 = vsel %vm1145, %v3202, 0.0
        %v3235 = vsel %vm1145, %v3203, 0.0
        %v3236 = vadd.f32 %v3234, %v3235
        %v3237 = vsel %vm1145, %v3204, 0.0
        %v3238 = vadd.f32 %v3236, %v3237
        %v3239 = vsel %vm1145, %v3205, 0.0
        %v3240 = vadd.f32 %v3238, %v3239
        %v3241 = vsel %vm1145, %v3206, 0.0
        %v3242 = vadd.f32 %v3240, %v3241
        %v3243 = vsel %vm1145, %v3207, 0.0
        %v3244 = vadd.f32 %v3242, %v3243
        %v3245 = vsel %vm1145, %v3208, 0.0
        %v3246 = vadd.f32 %v3244, %v3245
        %v3247 = vsel %vm1145, %v3209, 0.0
        %v3248 = vadd.f32 %v3246, %v3247
        %v3249 = vsel %vm1145, %v3210, 0.0
        %v3250 = vadd.f32 %v3248, %v3249
        %v3251 = vsel %vm1145, %v3211, 0.0
        %v3252 = vadd.f32 %v3250, %v3251
        %v3253 = vsel %vm1145, %v3212, 0.0
        %v3254 = vadd.f32 %v3252, %v3253
        %v3255 = vsel %vm1145, %v3213, 0.0
        %v3256 = vadd.f32 %v3254, %v3255
        %v3257 = vsel %vm1145, %v3214, 0.0
        %v3258 = vadd.f32 %v3256, %v3257
        %v3259 = vsel %vm1145, %v3215, 0.0
        %v3260 = vadd.f32 %v3258, %v3259
        %v3261 = vsel %vm1145, %v3216, 0.0
        %v3262 = vadd.f32 %v3260, %v3261
        %v3263 = vsel %vm1145, %v3217, 0.0
        %v3264 = vadd.f32 %v3262, %v3263
        %v3265 = vsel %vm1145, %v3218, 0.0
        %v3266 = vadd.f32 %v3264, %v3265
        %v3267 = vsel %vm1145, %v3219, 0.0
        %v3268 = vadd.f32 %v3266, %v3267
        %v3269 = vsel %vm1145, %v3220, 0.0
        %v3270 = vadd.f32 %v3268, %v3269
        %v3271 = vsel %vm1145, %v3221, 0.0
        %v3272 = vadd.f32 %v3270, %v3271
        %v3273 = vsel %vm1145, %v3222, 0.0
        %v3274 = vadd.f32 %v3272, %v3273
        %v3275 = vsel %vm1145, %v3223, 0.0
        %v3276 = vadd.f32 %v3274, %v3275
        %v3277 = vsel %vm1145, %v3224, 0.0
        %v3278 = vadd.f32 %v3276, %v3277
        %v3279 = vsel %vm1145, %v3225, 0.0
        %v3280 = vadd.f32 %v3278, %v3279
        %v3281 = vsel %vm1145, %v3226, 0.0
        %v3282 = vadd.f32 %v3280, %v3281
        %v3283 = vsel %vm1145, %v3227, 0.0
        %v3284 = vadd.f32 %v3282, %v3283
        %v3285 = vsel %vm1145, %v3228, 0.0
        %v3286 = vadd.f32 %v3284, %v3285
        %v3287 = vsel %vm1145, %v3229, 0.0
        %v3288 = vadd.f32 %v3286, %v3287
        %v3289 = vsel %vm1145, %v3230, 0.0
        %v3290 = vadd.f32 %v3288, %v3289
        %v3291 = vsel %vm1145, %v3231, 0.0
        %v3292 = vadd.f32 %v3290, %v3291
        %v3293 = vsel %vm1145, %v3232, 0.0
        %v3294 = vadd.f32 %v3292, %v3293
        %v3295 = vsel %vm1145, %v3233, 0.0
        %v3296 = vadd.f32 %v3294, %v3295
        %v3297 = vrot.slane %v3296, 4
        %v3298 = vadd.f32 %v3296, %v3297
        %v3299 = vrot.slane %v3298, 2
        %v3300 = vadd.f32 %v3298, %v3299
        %v3301 = vrot.slane %v3300, 1
        %v3302 = vadd.f32 %v3300, %v3301
        %v3303 = vld [vmem:[%s506] sm:$0x1]
        %3305 = vrot.lane.b32.xlu0 %v3302, 64
        %v3306 = vpop.permute.xlu0 %3305
        %v3308 = vsel %vm1145, %v1214, %v3306
        %v3309 = vadd.f32 %v3303, %v3308
        %3310 = vst [vmem:[%s506] sm:$0x1] %v3309
        %p3311 = scmp.lt.s32.totalorder %s19, 1
        %s3312 = scalar_select %p3311, %s19, 1
        %s3313 = scalar_lea.vmem %s4, %s3312
        // Predicated region
        $region82: #{perceptual_loss2.1} parent=72 // pred_check
          %p3314 = pneg %p136
        $region83: #{perceptual_loss2.1} parent=72 // pred_check_branch
          %3316 = sbr.rel (%p3314) target = $region85
        $region84: #{perceptual_loss2.1} parent=72 // pred_region
          _
        $region85: #{perceptual_loss2.1} parent=72 // pred_fallthru
          _
      $region73: #{perceptual_loss2.1} parent=5 // pred_fallthru
        _
      %p3317 = scmp.le.s32.totalorder 2, %s10
      // Predicated region
      $region86: #{perceptual_loss2.1} parent=5 // pred_check
        %p3318 = pneg %p3317
      $region87: #{perceptual_loss2.1} parent=5 // pred_check_branch
        %3320 = sbr.rel (%p3318) target = $region89
      $region88: #{perceptual_loss2.1} parent=5 // pred_region
        %s3321 = ssub.s32 %s10, 2
        // Predicated region
        $region90: #{perceptual_loss2.1} parent=88 // pred_check
          %p3322 = pneg %p142
        $region91: #{perceptual_loss2.1} parent=88 // pred_check_branch
          %3324 = sbr.rel (%p3322) target = $region93
        $region92: #{perceptual_loss2.1} parent=88 // pred_region
          %p3325 = scmp.lt.s32.totalorder %s21, 1
          %s3326 = scalar_select %p3325, %s21, 1
          %s3327 = scalar_lea.vmem %s4, %s3326
        $region93: #{perceptual_loss2.1} parent=88 // pred_fallthru
          _
      $region89: #{perceptual_loss2.1} parent=5 // pred_fallthru
        _
    $region6: #{perceptual_loss2.1} parent=1 // loop_footer
      %s14 = sadd.s32 1, %s10
    $region7: #{perceptual_loss2.1} parent=1 // loop_footer_branch
      %9 = sbr.rel target = $region3
    $region8: #{perceptual_loss2.1} parent=1 // loop_exit
      _

// kernel: perceptual_loss2.1
$region0: #{perceptual_loss2.1}
  #allocation0 [shape = 'u32[]', space=smem, size = 0x4, offset = 0x4, fixed_abs, tag = 'smem constant byte address 0x4 - core index']
  #allocation1 [shape = 'u32[72,128]{1,0:T(1,128)}', space=vmem, size = 0x9000, scoped, tag = 'internal scratch']
  #allocation2 [shape = 'f32[1,18,18,64]{3,2,1,0:T(8,128)}', space=vmem, size = 0x36000, scoped, tag = 'scratch operand']
  %s0 = inlined_call_operand.vmem [shape: bf16[2,512,27], index: 0, kind: input, shape index: {}]
  %s1 = inlined_call_operand.vmem [shape: bf16[27,64], index: 1, kind: input, shape index: {}]
  %s2 = inlined_call_operand.vmem [shape: f32[1,64], index: 2, kind: input, shape index: {}]
  %s3 = inlined_call_operand.vmem [shape: bf16[576,64], index: 3, kind: input, shape index: {}]
  %s4 = inlined_call_operand.vmem [shape: f32[2,1,128], index: 4, kind: output, shape index: {}]
  %s5 = sld [smem:[#allocation0]]
  $region94: #{perceptual_loss2.1} parent=0
    _
  %s7 = ssub.s32 1, %s5
  %s8 = scalar_select 0, %s7, %s5
  $region1: #{perceptual_loss2.1} parent=0
    #allocation3 [shape = 'u8[262144]{0}', space=vmem, size = 0x40000, scoped, tag = 'input window, operand 0']
    loop: start=0, step=1, limit=4
    $region2: #{perceptual_loss2.1} parent=1 // loop_pre_header
      _
    $region3: #{perceptual_loss2.1} parent=1 // loop_header
      %s10 = sphi 0, %s14
      %p11 = scmp.ge.s32.totalorder %s10, 4
      %s17 = sphi 0, %s29
      %s18 = sphi 0, %s25
      %s19 = sphi 0, %s17
      %s20 = sphi 0, %s18
      %s21 = sphi 0, %s19
      %s22 = sphi 0, %s20
      %s34 = sphi 0, %s36
      %s37 = sphi 0, %s34
      %s38 = sphi 0, %s37
      %s54 = sphi 0, %s38
      %s58 = sphi 0, %s58
      %s60 = sphi 0, %s58
      %s61 = sphi 0, %s60
      %s75 = sphi 0, %s61
      %s79 = sphi 0, %s79
      %s81 = sphi 0, %s79
      %s82 = sphi 0, %s81
      %s96 = sphi 0, %s82
      %s100 = sphi 0, %s100
      %s102 = sphi 0, %s100
      %s103 = sphi 0, %s102
      %s117 = sphi 0, %s103
      %s123 = sphi 0, %s125
      %s126 = sphi 0, %s123
      %s127 = sphi 0, %s126
      %s143 = sphi 0, %s127
    $region4: #{perceptual_loss2.1} parent=1 // loop_header_branch
      %13 = sbr.rel (%p11) target = $region8
    $region5: #{perceptual_loss2.1} parent=1 // loop_body
      %s15 = ssub.s32 %s10, 1
      %s16 = ssub.s32 %s10, 2
      %s23 = sadd.s32 1, %s18
      %p24 = scmp.ge.s32.totalorder %s23, 1
      %s25 = scalar_select %p24, 0, %s23
      %s26 = sadd.s32 1, %s17
      %s27 = scalar_select %p24, %s26, %s17
      %p28 = scmp.ge.s32.totalorder %s27, 2
      %s29 = scalar_select %p28, 0, %s27
      %s30 = sadd.s32 %s17, %s18
      %s31 = sadd.s32 %s29, %s25
      %s32 = ssub.s32 %s30, %s31
      %p33 = scmp.eq.s32.totalorder %s32, 0
      %s35 = sadd.s32 %s34, 1
      %s36 = scalar_select %p33, %s34, %s35
      %p39 = pneg %p33
      %p40 = scmp.eq.s32.totalorder %s10, 1
      %p41 = por %p39, %p40
      %p42 = scmp.ne.s32.totalorder %s34, %s37
      %p43 = scmp.eq.s32.totalorder %s10, 0
      %p44 = por %p42, %p43
      %p45 = scmp.ne.s32.totalorder %s34, %s37
      %p46 = scmp.eq.s32.totalorder %s15, 1
      %p47 = por %p45, %p46
      %p48 = scmp.ne.s32.totalorder %s37, %s38
      %p49 = scmp.eq.s32.totalorder %s15, 0
      %p50 = por %p48, %p49
      %p51 = scmp.ne.s32.totalorder %s37, %s38
      %p52 = scmp.eq.s32.totalorder %s16, 1
      %p53 = por %p51, %p52
      %p55 = scmp.ne.s32.totalorder %s38, %s54
      %p56 = scmp.eq.s32.totalorder %s16, 0
      %p57 = por %p55, %p56
      %s59 = sadd.s32 %s58, 1
      %p62 = scmp.eq.s32.totalorder %s10, 1
      %p63 = scmp.ne.s32.totalorder %s58, %s60
      %p64 = scmp.eq.s32.totalorder %s10, 0
      %p65 = por %p63, %p64
      %p66 = scmp.ne.s32.totalorder %s58, %s60
      %p67 = scmp.eq.s32.totalorder %s15, 1
      %p68 = por %p66, %p67
      %p69 = scmp.ne.s32.totalorder %s60, %s61
      %p70 = scmp.eq.s32.totalorder %s15, 0
      %p71 = por %p69, %p70
      %p72 = scmp.ne.s32.totalorder %s60, %s61
      %p73 = scmp.eq.s32.totalorder %s16, 1
      %p74 = por %p72, %p73
      %p76 = scmp.ne.s32.totalorder %s61, %s75
      %p77 = scmp.eq.s32.totalorder %s16, 0
      %p78 = por %p76, %p77
      %s80 = sadd.s32 %s79, 1
      %p83 = scmp.eq.s32.totalorder %s10, 1
      %p84 = scmp.ne.s32.totalorder %s79, %s81
      %p85 = scmp.eq.s32.totalorder %s10, 0
      %p86 = por %p84, %p85
      %p87 = scmp.ne.s32.totalorder %s79, %s81
      %p88 = scmp.eq.s32.totalorder %s15, 1
      %p89 = por %p87, %p88
      %p90 = scmp.ne.s32.totalorder %s81, %s82
      %p91 = scmp.eq.s32.totalorder %s15, 0
      %p92 = por %p90, %p91
      %p93 = scmp.ne.s32.totalorder %s81, %s82
      %p94 = scmp.eq.s32.totalorder %s16, 1
      %p95 = por %p93, %p94
      %p97 = scmp.ne.s32.totalorder %s82, %s96
      %p98 = scmp.eq.s32.totalorder %s16, 0
      %p99 = por %p97, %p98
      %s101 = sadd.s32 %s100, 1
      %p104 = scmp.eq.s32.totalorder %s10, 1
      %p105 = scmp.ne.s32.totalorder %s100, %s102
      %p106 = scmp.eq.s32.totalorder %s10, 0
      %p107 = por %p105, %p106
      %p108 = scmp.ne.s32.totalorder %s100, %s102
      %p109 = scmp.eq.s32.totalorder %s15, 1
      %p110 = por %p108, %p109
      %p111 = scmp.ne.s32.totalorder %s102, %s103
      %p112 = scmp.eq.s32.totalorder %s15, 0
      %p113 = por %p111, %p112
      %p114 = scmp.ne.s32.totalorder %s102, %s103
      %p115 = scmp.eq.s32.totalorder %s16, 1
      %p116 = por %p114, %p115
      %p118 = scmp.ne.s32.totalorder %s103, %s117
      %p119 = scmp.eq.s32.totalorder %s16, 0
      %p120 = por %p118, %p119
      %s121 = ssub.s32 %s17, %s29
      %p122 = scmp.eq.s32.totalorder %s121, 0
      %s124 = sadd.s32 %s123, 1
      %s125 = scalar_select %p122, %s123, %s124
      %p128 = pneg %p122
      %p129 = scmp.eq.s32.totalorder %s10, 1
      %p130 = por %p128, %p129
      %p131 = scmp.ne.s32.totalorder %s123, %s126
      %p132 = scmp.eq.s32.totalorder %s10, 0
      %p133 = por %p131, %p132
      %p134 = scmp.ne.s32.totalorder %s123, %s126
      %p135 = scmp.eq.s32.totalorder %s15, 1
      %p136 = por %p134, %p135
      %p137 = scmp.ne.s32.totalorder %s126, %s127
      %p138 = scmp.eq.s32.totalorder %s15, 0
      %p139 = por %p137, %p138
      %p140 = scmp.ne.s32.totalorder %s126, %s127
      %p141 = scmp.eq.s32.totalorder %s16, 1
      %p142 = por %p140, %p141
      %p144 = scmp.ne.s32.totalorder %s127, %s143
      %p145 = scmp.eq.s32.totalorder %s16, 0
      %p146 = por %p144, %p145
      %p147 = scmp.le.s32.totalorder 1, %s10
      %p148 = scmp.lt.s32.totalorder %s10, 3
      %p149 = pnand %p147, %p148
      %p150 = pneg %p149
      // Predicated region
      $region9: #{perceptual_loss2.1} parent=5 // pred_check
        _
      $region10: #{perceptual_loss2.1} parent=5 // pred_check_branch
        %152 = sbr.rel (%p149) target = $region12
      $region11: #{perceptual_loss2.1} parent=5 // pred_region
        %s153 = ssub.s32 %s10, 1
        // Predicated region
        $region13: #{perceptual_loss2.1} parent=11 // pred_check
          %p154 = pneg %p71
        $region14: #{perceptual_loss2.1} parent=11 // pred_check_branch
          %156 = sbr.rel (%p154) target = $region16
        $region15: #{perceptual_loss2.1} parent=11 // pred_region
          _
        $region16: #{perceptual_loss2.1} parent=11 // pred_fallthru
          _
        // Predicated region
        $region17: #{perceptual_loss2.1} parent=11 // pred_check
          %p157 = pneg %p92
        $region18: #{perceptual_loss2.1} parent=11 // pred_check_branch
          %159 = sbr.rel (%p157) target = $region20
        $region19: #{perceptual_loss2.1} parent=11 // pred_region
          _
        $region20: #{perceptual_loss2.1} parent=11 // pred_fallthru
          _
        // Predicated region
        $region21: #{perceptual_loss2.1} parent=11 // pred_check
          %p160 = pneg %p113
        $region22: #{perceptual_loss2.1} parent=11 // pred_check_branch
          %162 = sbr.rel (%p160) target = $region24
        $region23: #{perceptual_loss2.1} parent=11 // pred_region
          _
        $region24: #{perceptual_loss2.1} parent=11 // pred_fallthru
          _
      $region12: #{perceptual_loss2.1} parent=5 // pred_fallthru
        _
      %p163 = scmp.lt.s32.totalorder %s10, 2
      // Predicated region
      $region25: #{perceptual_loss2.1} parent=5 // pred_check
        %p164 = pneg %p163
      $region26: #{perceptual_loss2.1} parent=5 // pred_check_branch
        %166 = sbr.rel (%p164) target = $region28
      $region27: #{perceptual_loss2.1} parent=5 // pred_region
        // Predicated region
        $region29: #{perceptual_loss2.1} parent=27 // pred_check
          %p167 = pneg %p44
        $region30: #{perceptual_loss2.1} parent=27 // pred_check_branch
          %169 = sbr.rel (%p167) target = $region32
        $region31: #{perceptual_loss2.1} parent=27 // pred_region
          %s170 = sand.u32 %s34, 1
          %s171 = sand.u32 %s34, 1
          %s172 = smul.addr %s171, 256
          %s173 = scalar_lea.vmem [#allocation3], %s172
          %s174 = sadd.s32 %s17, %s18
          %s175 = smul.u32 32, %s174
          %s176 = smul.addr %s175, 4
          %s177 = scalar_lea.vmem %s0, %s176
          // Predicated region
          $region33: #{perceptual_loss2.1} parent=31 // pred_check
            _
          $region34: #{perceptual_loss2.1} parent=31 // pred_check_branch
            %179 = sbr.rel (0) target = $region36
          $region35: #{perceptual_loss2.1} parent=31 // pred_region
            // Predicated region
            $region37: #{perceptual_loss2.1} parent=35 // pred_check
              _
            $region38: #{perceptual_loss2.1} parent=35 // pred_check_branch
              %181 = sbr.rel target = $region40
            $region39: #{perceptual_loss2.1} parent=35 // pred_region
              // Predicated region
              $region52: #{perceptual_loss2.1} parent=39 // pred_check
                _
              $region53: #{perceptual_loss2.1} parent=39 // pred_check_branch
                %323 = sbr.rel (0) target = $region55
              $region54: #{perceptual_loss2.1} parent=39 // pred_region
                loop: start=0, step=1, limit=1
                $region56: #{perceptual_loss2.1} parent=54 // loop_pre_header
                  _
                $region57: #{perceptual_loss2.1} parent=54 // loop_header
                  %s325 = sphi 0, %s329
                  %p326 = scmp.ge.s32.totalorder %s325, 1
                  %s330 = sphi %s177, %s177
                  %s331 = sphi %s173, %s173
                $region58: #{perceptual_loss2.1} parent=54 // loop_header_branch
                  %328 = sbr.rel (%p326) target = $region62
                $region59: #{perceptual_loss2.1} parent=54 // loop_body
                  _
                $region60: #{perceptual_loss2.1} parent=54 // loop_footer
                  %s329 = sadd.s32 1, %s325
                $region61: #{perceptual_loss2.1} parent=54 // loop_footer_branch
                  %324 = sbr.rel target = $region57
                $region62: #{perceptual_loss2.1} parent=54 // loop_exit
                  _
                %s333 = ssub.s32 16, 1
                loop: start=0, step=1, limit=1
                $region63: #{perceptual_loss2.1} parent=54 // loop_pre_header
                  _
                $region64: #{perceptual_loss2.1} parent=54 // loop_header
                  %s335 = sphi 0, %s339
                  %p336 = scmp.ge.s32.totalorder %s335, 1
                  %s340 = sphi %s177, %s177
                  %s341 = sphi %s173, %s173
                $region65: #{perceptual_loss2.1} parent=54 // loop_header_branch
                  %338 = sbr.rel (%p336) target = $region69
                $region66: #{perceptual_loss2.1} parent=54 // loop_body
                  %v342 = vld [vmem:[%s340] sm:%s333]
                  %343 = vst [vmem:[%s341] sm:%s333] %v342
                  %v344 = vld [vmem:[%s340 + $0x4] sm:%s333]
                  %345 = vst [vmem:[%s341 + $0x4] sm:%s333] %v344
                  %v346 = vld [vmem:[%s340 + $0x8] sm:%s333]
                  %347 = vst [vmem:[%s341 + $0x8] sm:%s333] %v346
                  %v348 = vld [vmem:[%s340 + $0xc] sm:%s333]
                  %349 = vst [vmem:[%s341 + $0xc] sm:%s333] %v348
                  %v350 = vld [vmem:[%s340 + $0x10] sm:%s333]
                  %351 = vst [vmem:[%s341 + $0x10] sm:%s333] %v350
                  %v352 = vld [vmem:[%s340 + $0x14] sm:%s333]
                  %353 = vst [vmem:[%s341 + $0x14] sm:%s333] %v352
                  %v354 = vld [vmem:[%s340 + $0x18] sm:%s333]
                  %355 = vst [vmem:[%s341 + $0x18] sm:%s333] %v354
                  %v356 = vld [vmem:[%s340 + $0x1c] sm:%s333]
                  %357 = vst [vmem:[%s341 + $0x1c] sm:%s333] %v356
                  %v358 = vld [vmem:[%s340 + $0x20] sm:%s333]
                  %359 = vst [vmem:[%s341 + $0x20] sm:%s333] %v358
                  %v360 = vld [vmem:[%s340 + $0x24] sm:%s333]
                  %361 = vst [vmem:[%s341 + $0x24] sm:%s333] %v360
                  %v362 = vld [vmem:[%s340 + $0x28] sm:%s333]
                  %363 = vst [vmem:[%s341 + $0x28] sm:%s333] %v362
                  %v364 = vld [vmem:[%s340 + $0x2c] sm:%s333]
                  %365 = vst [vmem:[%s341 + $0x2c] sm:%s333] %v364
                  %v366 = vld [vmem:[%s340 + $0x30] sm:%s333]
                  %367 = vst [vmem:[%s341 + $0x30] sm:%s333] %v366
                  %v368 = vld [vmem:[%s340 + $0x34] sm:%s333]
                  %369 = vst [vmem:[%s341 + $0x34] sm:%s333] %v368
                  %v370 = vld [vmem:[%s340 + $0x38] sm:%s333]
                  %371 = vst [vmem:[%s341 + $0x38] sm:%s333] %v370
                  %v372 = vld [vmem:[%s340 + $0x3c] sm:%s333]
                  %373 = vst [vmem:[%s341 + $0x3c] sm:%s333] %v372
                  %v374 = vld [vmem:[%s340 + $0x40] sm:%s333]
                  %375 = vst [vmem:[%s341 + $0x40] sm:%s333] %v374
                  %v376 = vld [vmem:[%s340 + $0x44] sm:%s333]
                  %377 = vst [vmem:[%s341 + $0x44] sm:%s333] %v376
                  %v378 = vld [vmem:[%s340 + $0x48] sm:%s333]
                  %379 = vst [vmem:[%s341 + $0x48] sm:%s333] %v378
                  %v380 = vld [vmem:[%s340 + $0x4c] sm:%s333]
                  %381 = vst [vmem:[%s341 + $0x4c] sm:%s333] %v380
                  %v382 = vld [vmem:[%s340 + $0x50] sm:%s333]
                  %383 = vst [vmem:[%s341 + $0x50] sm:%s333] %v382
                  %v384 = vld [vmem:[%s340 + $0x54] sm:%s333]
                  %385 = vst [vmem:[%s341 + $0x54] sm:%s333] %v384
                  %v386 = vld [vmem:[%s340 + $0x58] sm:%s333]
                  %387 = vst [vmem:[%s341 + $0x58] sm:%s333] %v386
                  %v388 = vld [vmem:[%s340 + $0x5c] sm:%s333]
                  %389 = vst [vmem:[%s341 + $0x5c] sm:%s333] %v388
                  %v390 = vld [vmem:[%s340 + $0x60] sm:%s333]
                  %391 = vst [vmem:[%s341 + $0x60] sm:%s333] %v390
                  %v392 = vld [vmem:[%s340 + $0x64] sm:%s333]
                  %393 = vst [vmem:[%s341 + $0x64] sm:%s333] %v392
                  %v394 = vld [vmem:[%s340 + $0x68] sm:%s333]
                  %395 = vst [vmem:[%s341 + $0x68] sm:%s333] %v394
                  %v396 = vld [vmem:[%s340 + $0x6c] sm:%s333]
                  %397 = vst [vmem:[%s341 + $0x6c] sm:%s333] %v396
                  %v398 = vld [vmem:[%s340 + $0x70] sm:%s333]
                  %399 = vst [vmem:[%s341 + $0x70] sm:%s333] %v398
                  %v400 = vld [vmem:[%s340 + $0x74] sm:%s333]
                  %401 = vst [vmem:[%s341 + $0x74] sm:%s333] %v400
                  %v402 = vld [vmem:[%s340 + $0x78] sm:%s333]
                  %403 = vst [vmem:[%s341 + $0x78] sm:%s333] %v402
                  %v404 = vld [vmem:[%s340 + $0x7c] sm:%s333]
                  %405 = vst [vmem:[%s341 + $0x7c] sm:%s333] %v404
                  %v406 = vld [vmem:[%s340 + $0x100] sm:%s333]
                  %407 = vst [vmem:[%s341 + $0x80] sm:%s333] %v406
                  %v408 = vld [vmem:[%s340 + $0x104] sm:%s333]
                  %409 = vst [vmem:[%s341 + $0x84] sm:%s333] %v408
                  %v410 = vld [vmem:[%s340 + $0x108] sm:%s333]
                  %411 = vst [vmem:[%s341 + $0x88] sm:%s333] %v410
                  %v412 = vld [vmem:[%s340 + $0x10c] sm:%s333]
                  %413 = vst [vmem:[%s341 + $0x8c] sm:%s333] %v412
                  %v414 = vld [vmem:[%s340 + $0x110] sm:%s333]
                  %415 = vst [vmem:[%s341 + $0x90] sm:%s333] %v414
                  %v416 = vld [vmem:[%s340 + $0x114] sm:%s333]
                  %417 = vst [vmem:[%s341 + $0x94] sm:%s333] %v416
                  %v418 = vld [vmem:[%s340 + $0x118] sm:%s333]
                  %419 = vst [vmem:[%s341 + $0x98] sm:%s333] %v418
                  %v420 = vld [vmem:[%s340 + $0x11c] sm:%s333]
                  %421 = vst [vmem:[%s341 + $0x9c] sm:%s333] %v420
                  %v422 = vld [vmem:[%s340 + $0x120] sm:%s333]
                  %423 = vst [vmem:[%s341 + $0xa0] sm:%s333] %v422
                  %v424 = vld [vmem:[%s340 + $0x124] sm:%s333]
                  %425 = vst [vmem:[%s341 + $0xa4] sm:%s333] %v424
                  %v426 = vld [vmem:[%s340 + $0x128] sm:%s333]
                  %427 = vst [vmem:[%s341 + $0xa8] sm:%s333] %v426
                  %v428 = vld [vmem:[%s340 + $0x12c] sm:%s333]
                  %429 = vst [vmem:[%s341 + $0xac] sm:%s333] %v428
                  %v430 = vld [vmem:[%s340 + $0x130] sm:%s333]
                  %431 = vst [vmem:[%s341 + $0xb0] sm:%s333] %v430
                  %v432 = vld [vmem:[%s340 + $0x134] sm:%s333]
                  %433 = vst [vmem:[%s341 + $0xb4] sm:%s333] %v432
                  %v434 = vld [vmem:[%s340 + $0x138] sm:%s333]
                  %435 = vst [vmem:[%s341 + $0xb8] sm:%s333] %v434
                  %v436 = vld [vmem:[%s340 + $0x13c] sm:%s333]
                  %437 = vst [vmem:[%s341 + $0xbc] sm:%s333] %v436
                  %v438 = vld [vmem:[%s340 + $0x140] sm:%s333]
                  %439 = vst [vmem:[%s341 + $0xc0] sm:%s333] %v438
                  %v440 = vld [vmem:[%s340 + $0x144] sm:%s333]
                  %441 = vst [vmem:[%s341 + $0xc4] sm:%s333] %v440
                  %v442 = vld [vmem:[%s340 + $0x148] sm:%s333]
                  %443 = vst [vmem:[%s341 + $0xc8] sm:%s333] %v442
                  %v444 = vld [vmem:[%s340 + $0x14c] sm:%s333]
                  %445 = vst [vmem:[%s341 + $0xcc] sm:%s333] %v444
                  %v446 = vld [vmem:[%s340 + $0x150] sm:%s333]
                  %447 = vst [vmem:[%s341 + $0xd0] sm:%s333] %v446
                  %v448 = vld [vmem:[%s340 + $0x154] sm:%s333]
                  %449 = vst [vmem:[%s341 + $0xd4] sm:%s333] %v448
                  %v450 = vld [vmem:[%s340 + $0x158] sm:%s333]
                  %451 = vst [vmem:[%s341 + $0xd8] sm:%s333] %v450
                  %v452 = vld [vmem:[%s340 + $0x15c] sm:%s333]
                  %453 = vst [vmem:[%s341 + $0xdc] sm:%s333] %v452
                  %v454 = vld [vmem:[%s340 + $0x160] sm:%s333]
                  %455 = vst [vmem:[%s341 + $0xe0] sm:%s333] %v454
                  %v456 = vld [vmem:[%s340 + $0x164] sm:%s333]
                  %457 = vst [vmem:[%s341 + $0xe4] sm:%s333] %v456
                  %v458 = vld [vmem:[%s340 + $0x168] sm:%s333]
                  %459 = vst [vmem:[%s341 + $0xe8] sm:%s333] %v458
                  %v460 = vld [vmem:[%s340 + $0x16c] sm:%s333]
                  %461 = vst [vmem:[%s341 + $0xec] sm:%s333] %v460
                  %v462 = vld [vmem:[%s340 + $0x170] sm:%s333]
                  %463 = vst [vmem:[%s341 + $0xf0] sm:%s333] %v462
                  %v464 = vld [vmem:[%s340 + $0x174] sm:%s333]
                  %465 = vst [vmem:[%s341 + $0xf4] sm:%s333] %v464
                  %v466 = vld [vmem:[%s340 + $0x178] sm:%s333]
                  %467 = vst [vmem:[%s341 + $0xf8] sm:%s333] %v466
                  %v468 = vld [vmem:[%s340 + $0x17c] sm:%s333]
                  %469 = vst [vmem:[%s341 + $0xfc] sm:%s333] %v468
                $region67: #{perceptual_loss2.1} parent=54 // loop_footer
                  %s339 = sadd.s32 1, %s335
                $region68: #{perceptual_loss2.1} parent=54 // loop_footer_branch
                  %334 = sbr.rel target = $region64
                $region69: #{perceptual_loss2.1} parent=54 // loop_exit
                  _
              $region55: #{perceptual_loss2.1} parent=39 // pred_fallthru
                _
            $region40: #{perceptual_loss2.1} parent=35 // pred_fallthru
              _
            // Predicated region
            $region41: #{perceptual_loss2.1} parent=35 // pred_check
              _
            $region42: #{perceptual_loss2.1} parent=35 // pred_check_branch
              %183 = sbr.rel (0) target = $region44
            $region43: #{perceptual_loss2.1} parent=35 // pred_region
              %s185 = ssub.s32 16, 1
              loop: start=0, step=1, limit=1
              $region45: #{perceptual_loss2.1} parent=43 // loop_pre_header
                _
              $region46: #{perceptual_loss2.1} parent=43 // loop_header
                %s187 = sphi 0, %s191
                %p188 = scmp.ge.s32.totalorder %s187, 1
                %s192 = sphi %s177, %s177
                %s193 = sphi %s173, %s173
              $region47: #{perceptual_loss2.1} parent=43 // loop_header_branch
                %190 = sbr.rel (%p188) target = $region51
              $region48: #{perceptual_loss2.1} parent=43 // loop_body
                %v194 = vld [vmem:[%s192] sm:%s185]
                %195 = vst [vmem:[%s193] sm:%s185] %v194
                %v196 = vld [vmem:[%s192 + $0x4] sm:%s185]
                %197 = vst [vmem:[%s193 + $0x4] sm:%s185] %v196
                %v198 = vld [vmem:[%s192 + $0x8] sm:%s185]
                %199 = vst [vmem:[%s193 + $0x8] sm:%s185] %v198
                %v200 = vld [vmem:[%s192 + $0xc] sm:%s185]
                %201 = vst [vmem:[%s193 + $0xc] sm:%s185] %v200
                %v202 = vld [vmem:[%s192 + $0x10] sm:%s185]
                %203 = vst [vmem:[%s193 + $0x10] sm:%s185] %v202
                %v204 = vld [vmem:[%s192 + $0x14] sm:%s185]
                %205 = vst [vmem:[%s193 + $0x14] sm:%s185] %v204
                %v206 = vld [vmem:[%s192 + $0x18] sm:%s185]
                %207 = vst [vmem:[%s193 + $0x18] sm:%s185] %v206
                %v208 = vld [vmem:[%s192 + $0x1c] sm:%s185]
                %209 = vst [vmem:[%s193 + $0x1c] sm:%s185] %v208
                %v210 = vld [vmem:[%s192 + $0x20] sm:%s185]
                %211 = vst [vmem:[%s193 + $0x20] sm:%s185] %v210
                %v212 = vld [vmem:[%s192 + $0x24] sm:%s185]
                %213 = vst [vmem:[%s193 + $0x24] sm:%s185] %v212
                %v214 = vld [vmem:[%s192 + $0x28] sm:%s185]
                %215 = vst [vmem:[%s193 + $0x28] sm:%s185] %v214
                %v216 = vld [vmem:[%s192 + $0x2c] sm:%s185]
                %217 = vst [vmem:[%s193 + $0x2c] sm:%s185] %v216
                %v218 = vld [vmem:[%s192 + $0x30] sm:%s185]
                %219 = vst [vmem:[%s193 + $0x30] sm:%s185] %v218
                %v220 = vld [vmem:[%s192 + $0x34] sm:%s185]
                %221 = vst [vmem:[%s193 + $0x34] sm:%s185] %v220
                %v222 = vld [vmem:[%s192 + $0x38] sm:%s185]
                %223 = vst [vmem:[%s193 + $0x38] sm:%s185] %v222
                %v224 = vld [vmem:[%s192 + $0x3c] sm:%s185]
                %225 = vst [vmem:[%s193 + $0x3c] sm:%s185] %v224
                %v226 = vld [vmem:[%s192 + $0x40] sm:%s185]
                %227 = vst [vmem:[%s193 + $0x40] sm:%s185] %v226
                %v228 = vld [vmem:[%s192 + $0x44] sm:%s185]
                %229 = vst [vmem:[%s193 + $0x44] sm:%s185] %v228
                %v230 = vld [vmem:[%s192 + $0x48] sm:%s185]
                %231 = vst [vmem:[%s193 + $0x48] sm:%s185] %v230
                %v232 = vld [vmem:[%s192 + $0x4c] sm:%s185]
                %233 = vst [vmem:[%s193 + $0x4c] sm:%s185] %v232
                %v234 = vld [vmem:[%s192 + $0x50] sm:%s185]
                %235 = vst [vmem:[%s193 + $0x50] sm:%s185] %v234
                %v236 = vld [vmem:[%s192 + $0x54] sm:%s185]
                %237 = vst [vmem:[%s193 + $0x54] sm:%s185] %v236
                %v238 = vld [vmem:[%s192 + $0x58] sm:%s185]
                %239 = vst [vmem:[%s193 + $0x58] sm:%s185] %v238
                %v240 = vld [vmem:[%s192 + $0x5c] sm:%s185]
                %241 = vst [vmem:[%s193 + $0x5c] sm:%s185] %v240
                %v242 = vld [vmem:[%s192 + $0x60] sm:%s185]
                %243 = vst [vmem:[%s193 + $0x60] sm:%s185] %v242
                %v244 = vld [vmem:[%s192 + $0x64] sm:%s185]
                %245 = vst [vmem:[%s193 + $0x64] sm:%s185] %v244
                %v246 = vld [vmem:[%s192 + $0x68] sm:%s185]
                %247 = vst [vmem:[%s193 + $0x68] sm:%s185] %v246
                %v248 = vld [vmem:[%s192 + $0x6c] sm:%s185]
                %249 = vst [vmem:[%s193 + $0x6c] sm:%s185] %v248
                %v250 = vld [vmem:[%s192 + $0x70] sm:%s185]
                %251 = vst [vmem:[%s193 + $0x70] sm:%s185] %v250
                %v252 = vld [vmem:[%s192 + $0x74] sm:%s185]
                %253 = vst [vmem:[%s193 + $0x74] sm:%s185] %v252
                %v254 = vld [vmem:[%s192 + $0x78] sm:%s185]
                %255 = vst [vmem:[%s193 + $0x78] sm:%s185] %v254
                %v256 = vld [vmem:[%s192 + $0x7c] sm:%s185]
                %257 = vst [vmem:[%s193 + $0x7c] sm:%s185] %v256
                %v258 = vld [vmem:[%s192 + $0x100] sm:%s185]
                %259 = vst [vmem:[%s193 + $0x80] sm:%s185] %v258
                %v260 = vld [vmem:[%s192 + $0x104] sm:%s185]
                %261 = vst [vmem:[%s193 + $0x84] sm:%s185] %v260
                %v262 = vld [vmem:[%s192 + $0x108] sm:%s185]
                %263 = vst [vmem:[%s193 + $0x88] sm:%s185] %v262
                %v264 = vld [vmem:[%s192 + $0x10c] sm:%s185]
                %265 = vst [vmem:[%s193 + $0x8c] sm:%s185] %v264
                %v266 = vld [vmem:[%s192 + $0x110] sm:%s185]
                %267 = vst [vmem:[%s193 + $0x90] sm:%s185] %v266
                %v268 = vld [vmem:[%s192 + $0x114] sm:%s185]
                %269 = vst [vmem:[%s193 + $0x94] sm:%s185] %v268
                %v270 = vld [vmem:[%s192 + $0x118] sm:%s185]
                %271 = vst [vmem:[%s193 + $0x98] sm:%s185] %v270
                %v272 = vld [vmem:[%s192 + $0x11c] sm:%s185]
                %273 = vst [vmem:[%s193 + $0x9c] sm:%s185] %v272
                %v274 = vld [vmem:[%s192 + $0x120] sm:%s185]
                %275 = vst [vmem:[%s193 + $0xa0] sm:%s185] %v274
                %v276 = vld [vmem:[%s192 + $0x124] sm:%s185]
                %277 = vst [vmem:[%s193 + $0xa4] sm:%s185] %v276
                %v278 = vld [vmem:[%s192 + $0x128] sm:%s185]
                %279 = vst [vmem:[%s193 + $0xa8] sm:%s185] %v278
                %v280 = vld [vmem:[%s192 + $0x12c] sm:%s185]
                %281 = vst [vmem:[%s193 + $0xac] sm:%s185] %v280
                %v282 = vld [vmem:[%s192 + $0x130] sm:%s185]
                %283 = vst [vmem:[%s193 + $0xb0] sm:%s185] %v282
                %v284 = vld [vmem:[%s192 + $0x134] sm:%s185]
                %285 = vst [vmem:[%s193 + $0xb4] sm:%s185] %v284
                %v286 = vld [vmem:[%s192 + $0x138] sm:%s185]
                %287 = vst [vmem:[%s193 + $0xb8] sm:%s185] %v286
                %v288 = vld [vmem:[%s192 + $0x13c] sm:%s185]
                %289 = vst [vmem:[%s193 + $0xbc] sm:%s185] %v288
                %v290 = vld [vmem:[%s192 + $0x140] sm:%s185]
                %291 = vst [vmem:[%s193 + $0xc0] sm:%s185] %v290
                %v292 = vld [vmem:[%s192 + $0x144] sm:%s185]
                %293 = vst [vmem:[%s193 + $0xc4] sm:%s185] %v292
                %v294 = vld [vmem:[%s192 + $0x148] sm:%s185]
                %295 = vst [vmem:[%s193 + $0xc8] sm:%s185] %v294
                %v296 = vld [vmem:[%s192 + $0x14c] sm:%s185]
                %297 = vst [vmem:[%s193 + $0xcc] sm:%s185] %v296
                %v298 = vld [vmem:[%s192 + $0x150] sm:%s185]
                %299 = vst [vmem:[%s193 + $0xd0] sm:%s185] %v298
                %v300 = vld [vmem:[%s192 + $0x154] sm:%s185]
                %301 = vst [vmem:[%s193 + $0xd4] sm:%s185] %v300
                %v302 = vld [vmem:[%s192 + $0x158] sm:%s185]
                %303 = vst [vmem:[%s193 + $0xd8] sm:%s185] %v302
                %v304 = vld [vmem:[%s192 + $0x15c] sm:%s185]
                %305 = vst [vmem:[%s193 + $0xdc] sm:%s185] %v304
                %v306 = vld [vmem:[%s192 + $0x160] sm:%s185]
                %307 = vst [vmem:[%s193 + $0xe0] sm:%s185] %v306
                %v308 = vld [vmem:[%s192 + $0x164] sm:%s185]
                %309 = vst [vmem:[%s193 + $0xe4] sm:%s185] %v308
                %v310 = vld [vmem:[%s192 + $0x168] sm:%s185]
                %311 = vst [vmem:[%s193 + $0xe8] sm:%s185] %v310
                %v312 = vld [vmem:[%s192 + $0x16c] sm:%s185]
                %313 = vst [vmem:[%s193 + $0xec] sm:%s185] %v312
                %v314 = vld [vmem:[%s192 + $0x170] sm:%s185]
                %315 = vst [vmem:[%s193 + $0xf0] sm:%s185] %v314
                %v316 = vld [vmem:[%s192 + $0x174] sm:%s185]
                %317 = vst [vmem:[%s193 + $0xf4] sm:%s185] %v316
                %v318 = vld [vmem:[%s192 + $0x178] sm:%s185]
                %319 = vst [vmem:[%s193 + $0xf8] sm:%s185] %v318
                %v320 = vld [vmem:[%s192 + $0x17c] sm:%s185]
                %321 = vst [vmem:[%s193 + $0xfc] sm:%s185] %v320
              $region49: #{perceptual_loss2.1} parent=43 // loop_footer
                %s191 = sadd.s32 1, %s187
              $region50: #{perceptual_loss2.1} parent=43 // loop_footer_branch
                %186 = sbr.rel target = $region46
              $region51: #{perceptual_loss2.1} parent=43 // loop_exit
                _
            $region44: #{perceptual_loss2.1} parent=35 // pred_fallthru
              _
          $region36: #{perceptual_loss2.1} parent=31 // pred_fallthru
            _
          %470 = vnop
        $region32: #{perceptual_loss2.1} parent=27 // pred_fallthru
          _
      $region28: #{perceptual_loss2.1} parent=5 // pred_fallthru
        _
      %p471 = scmp.le.s32.totalorder 1, %s10
      %p472 = scmp.lt.s32.totalorder %s10, 3
      %p473 = pnand %p471, %p472
      %p474 = pneg %p473
      // Predicated region
      $region70: #{perceptual_loss2.1} parent=5 // pred_check
        _
      $region71: #{perceptual_loss2.1} parent=5 // pred_check_branch
        %476 = sbr.rel (%p473) target = $region73
      $region72: #{perceptual_loss2.1} parent=5 // pred_region
        %s477 = ssub.s32 %s10, 1
        %s478 = sand.u32 %s37, 1
        %s479 = sand.u32 %s37, 1
        %s480 = smul.addr %s479, 256
        %s481 = scalar_lea.vmem [#allocation3], %s480
        // Predicated region
        $region74: #{perceptual_loss2.1} parent=72 // pred_check
          %p482 = pneg %p50
        $region75: #{perceptual_loss2.1} parent=72 // pred_check_branch
          %484 = sbr.rel (%p482) target = $region77
        $region76: #{perceptual_loss2.1} parent=72 // pred_region
          _
        $region77: #{perceptual_loss2.1} parent=72 // pred_fallthru
          _
        %s485 = sand.u32 %s37, 1
        %s486 = sand.u32 %s37, 1
        %s487 = smul.addr %s486, 256
        %s488 = scalar_lea.vmem [#allocation3], %s487
        %p489 = pneg %p50
        %p490 = pneg %p47
        %p491 = pneg %p71
        %p492 = pneg %p68
        %p493 = pneg %p92
        %p494 = pneg %p89
        %p495 = pneg %p113
        %p496 = pneg %p110
        %p497 = pneg %p139
        %p498 = pneg %p136
        %p499 = scmp.lt.s32.totalorder %s19, 1
        %s500 = scalar_select %p499, %s19, 1
        %s501 = scalar_lea.vmem %s4, %s500
        %s502 = sadd.s32 %s19, %s20
        %s503 = smul.u32 32, %s502
        %p504 = scmp.lt.s32.totalorder %s19, 1
        %s505 = scalar_select %p504, %s19, 1
        %s506 = scalar_lea.vmem %s4, %s505
        %p508 = scmp.eq.s32.totalorder %s20, 0
        // Predicated region
        $region78: #{perceptual_loss2.1} parent=72 // pred_check
          %p509 = pneg %p508
        $region79: #{perceptual_loss2.1} parent=72 // pred_check_branch
          %511 = sbr.rel (%p509) target = $region81
        $region80: #{perceptual_loss2.1} parent=72 // pred_region
          %512 = vst [vmem:[%s506] sm:$0x1] 0.0
          %vm513 = vcmask 523264
          %514 = vst.msk [vmem:[#allocation2] sm:$0xff] %vm513, 0.0
          %515 = vst.msk [vmem:[#allocation2 + $0x8] sm:$0xff] %vm513, 0.0
          %vm516 = vcmask 517120
          %517 = vst.msk [vmem:[#allocation2 + $0x10] sm:$0x3] %vm516, 0.0
          %518 = vst.msk [vmem:[#allocation2 + $0x18] sm:$0xff] %vm513, 0.0
          %519 = vst.msk [vmem:[#allocation2 + $0x20] sm:$0xff] %vm513, 0.0
          %520 = vst.msk [vmem:[#allocation2 + $0x28] sm:$0x3] %vm516, 0.0
          %521 = vst.msk [vmem:[#allocation2 + $0x30] sm:$0xff] %vm513, 0.0
          %522 = vst.msk [vmem:[#allocation2 + $0x38] sm:$0xff] %vm513, 0.0
          %523 = vst.msk [vmem:[#allocation2 + $0x40] sm:$0x3] %vm516, 0.0
          %524 = vst.msk [vmem:[#allocation2 + $0x48] sm:$0xff] %vm513, 0.0
          %525 = vst.msk [vmem:[#allocation2 + $0x50] sm:$0xff] %vm513, 0.0
          %526 = vst.msk [vmem:[#allocation2 + $0x58] sm:$0x3] %vm516, 0.0
          %527 = vst.msk [vmem:[#allocation2 + $0x60] sm:$0xff] %vm513, 0.0
          %528 = vst.msk [vmem:[#allocation2 + $0x68] sm:$0xff] %vm513, 0.0
          %529 = vst.msk [vmem:[#allocation2 + $0x70] sm:$0x3] %vm516, 0.0
          %530 = vst.msk [vmem:[#allocation2 + $0x78] sm:$0xff] %vm513, 0.0
          %531 = vst.msk [vmem:[#allocation2 + $0x80] sm:$0xff] %vm513, 0.0
          %532 = vst.msk [vmem:[#allocation2 + $0x88] sm:$0x3] %vm516, 0.0
          %533 = vst.msk [vmem:[#allocation2 + $0x90] sm:$0xff] %vm513, 0.0
          %534 = vst.msk [vmem:[#allocation2 + $0x98] sm:$0xff] %vm513, 0.0
          %535 = vst.msk [vmem:[#allocation2 + $0xa0] sm:$0x3] %vm516, 0.0
          %536 = vst.msk [vmem:[#allocation2 + $0xa8] sm:$0xff] %vm513, 0.0
          %537 = vst.msk [vmem:[#allocation2 + $0xb0] sm:$0xff] %vm513, 0.0
          %538 = vst.msk [vmem:[#allocation2 + $0xb8] sm:$0x3] %vm516, 0.0
          %539 = vst.msk [vmem:[#allocation2 + $0xc0] sm:$0xff] %vm513, 0.0
          %540 = vst.msk [vmem:[#allocation2 + $0xc8] sm:$0xff] %vm513, 0.0
          %541 = vst.msk [vmem:[#allocation2 + $0xd0] sm:$0x3] %vm516, 0.0
          %542 = vst.msk [vmem:[#allocation2 + $0xd8] sm:$0xff] %vm513, 0.0
          %543 = vst.msk [vmem:[#allocation2 + $0xe0] sm:$0xff] %vm513, 0.0
          %544 = vst.msk [vmem:[#allocation2 + $0xe8] sm:$0x3] %vm516, 0.0
          %545 = vst.msk [vmem:[#allocation2 + $0xf0] sm:$0xff] %vm513, 0.0
          %546 = vst.msk [vmem:[#allocation2 + $0xf8] sm:$0xff] %vm513, 0.0
          %547 = vst.msk [vmem:[#allocation2 + $0x100] sm:$0x3] %vm516, 0.0
          %548 = vst.msk [vmem:[#allocation2 + $0x108] sm:$0xff] %vm513, 0.0
          %549 = vst.msk [vmem:[#allocation2 + $0x110] sm:$0xff] %vm513, 0.0
          %550 = vst.msk [vmem:[#allocation2 + $0x118] sm:$0x3] %vm516, 0.0
          %551 = vst.msk [vmem:[#allocation2 + $0x120] sm:$0xff] %vm513, 0.0
          %552 = vst.msk [vmem:[#allocation2 + $0x128] sm:$0xff] %vm513, 0.0
          %553 = vst.msk [vmem:[#allocation2 + $0x130] sm:$0x3] %vm516, 0.0
          %554 = vst.msk [vmem:[#allocation2 + $0x138] sm:$0xff] %vm513, 0.0
          %555 = vst.msk [vmem:[#allocation2 + $0x140] sm:$0xff] %vm513, 0.0
          %556 = vst.msk [vmem:[#allocation2 + $0x148] sm:$0x3] %vm516, 0.0
          %557 = vst.msk [vmem:[#allocation2 + $0x150] sm:$0xff] %vm513, 0.0
          %558 = vst.msk [vmem:[#allocation2 + $0x158] sm:$0xff] %vm513, 0.0
          %559 = vst.msk [vmem:[#allocation2 + $0x160] sm:$0x3] %vm516, 0.0
          %560 = vst.msk [vmem:[#allocation2 + $0x168] sm:$0xff] %vm513, 0.0
          %561 = vst.msk [vmem:[#allocation2 + $0x170] sm:$0xff] %vm513, 0.0
          %562 = vst.msk [vmem:[#allocation2 + $0x178] sm:$0x3] %vm516, 0.0
          %563 = vst.msk [vmem:[#allocation2 + $0x180] sm:$0xff] %vm513, 0.0
          %564 = vst.msk [vmem:[#allocation2 + $0x188] sm:$0xff] %vm513, 0.0
          %565 = vst.msk [vmem:[#allocation2 + $0x190] sm:$0x3] %vm516, 0.0
          %566 = vst.msk [vmem:[#allocation2 + $0x198] sm:$0xff] %vm513, 0.0
          %567 = vst.msk [vmem:[#allocation2 + $0x1a0] sm:$0xff] %vm513, 0.0
          %568 = vst.msk [vmem:[#allocation2 + $0x1a8] sm:$0x3] %vm516, 0.0
        $region81: #{perceptual_loss2.1} parent=72 // pred_fallthru
          _
        %v569 = vld [vmem:[%s481] sm:$0xf]
        %v570 = vld [vmem:[%s481 + $0x4] sm:$0xf]
        %v571 = vld [vmem:[%s481 + $0x8] sm:$0xf]
        %v572 = vld [vmem:[%s481 + $0xc] sm:$0xf]
        %v573 = vld [vmem:[%s481 + $0x10] sm:$0xf]
        %v574 = vld [vmem:[%s481 + $0x14] sm:$0xf]
        %v575 = vld [vmem:[%s481 + $0x18] sm:$0xf]
        %v576 = vld [vmem:[%s481 + $0x1c] sm:$0xf]
        %v577 = vld [vmem:[%s481 + $0x20] sm:$0xf]
        %v578 = vld [vmem:[%s481 + $0x24] sm:$0xf]
        %v579 = vld [vmem:[%s481 + $0x28] sm:$0xf]
        %v580 = vld [vmem:[%s481 + $0x2c] sm:$0xf]
        %v581 = vld [vmem:[%s481 + $0x30] sm:$0xf]
        %v582 = vld [vmem:[%s481 + $0x34] sm:$0xf]
        %v583 = vld [vmem:[%s481 + $0x38] sm:$0xf]
        %v584 = vld [vmem:[%s481 + $0x3c] sm:$0xf]
        %v585 = vld [vmem:[%s481 + $0x40] sm:$0xf]
        %v586 = vld [vmem:[%s481 + $0x44] sm:$0xf]
        %v587 = vld [vmem:[%s481 + $0x48] sm:$0xf]
        %v588 = vld [vmem:[%s481 + $0x4c] sm:$0xf]
        %v589 = vld [vmem:[%s481 + $0x50] sm:$0xf]
        %v590 = vld [vmem:[%s481 + $0x54] sm:$0xf]
        %v591 = vld [vmem:[%s481 + $0x58] sm:$0xf]
        %v592 = vld [vmem:[%s481 + $0x5c] sm:$0xf]
        %v593 = vld [vmem:[%s481 + $0x60] sm:$0xf]
        %v594 = vld [vmem:[%s481 + $0x64] sm:$0xf]
        %v595 = vld [vmem:[%s481 + $0x68] sm:$0xf]
        %v596 = vld [vmem:[%s481 + $0x6c] sm:$0xf]
        %v597 = vld [vmem:[%s481 + $0x70] sm:$0xf]
        %v598 = vld [vmem:[%s481 + $0x74] sm:$0xf]
        %v599 = vld [vmem:[%s481 + $0x78] sm:$0xf]
        %v600 = vld [vmem:[%s481 + $0x7c] sm:$0xf]
        %v601 = vld [vmem:[%s481 + $0x80] sm:$0xf]
        %v602 = vld [vmem:[%s481 + $0x84] sm:$0xf]
        %v603 = vld [vmem:[%s481 + $0x88] sm:$0xf]
        %v604 = vld [vmem:[%s481 + $0x8c] sm:$0xf]
        %v605 = vld [vmem:[%s481 + $0x90] sm:$0xf]
        %v606 = vld [vmem:[%s481 + $0x94] sm:$0xf]
        %v607 = vld [vmem:[%s481 + $0x98] sm:$0xf]
        %v608 = vld [vmem:[%s481 + $0x9c] sm:$0xf]
        %v609 = vld [vmem:[%s481 + $0xa0] sm:$0xf]
        %v610 = vld [vmem:[%s481 + $0xa4] sm:$0xf]
        %v611 = vld [vmem:[%s481 + $0xa8] sm:$0xf]
        %v612 = vld [vmem:[%s481 + $0xac] sm:$0xf]
        %v613 = vld [vmem:[%s481 + $0xb0] sm:$0xf]
        %v614 = vld [vmem:[%s481 + $0xb4] sm:$0xf]
        %v615 = vld [vmem:[%s481 + $0xb8] sm:$0xf]
        %v616 = vld [vmem:[%s481 + $0xbc] sm:$0xf]
        %v617 = vld [vmem:[%s481 + $0xc0] sm:$0xf]
        %v618 = vld [vmem:[%s481 + $0xc4] sm:$0xf]
        %v619 = vld [vmem:[%s481 + $0xc8] sm:$0xf]
        %v620 = vld [vmem:[%s481 + $0xcc] sm:$0xf]
        %v621 = vld [vmem:[%s481 + $0xd0] sm:$0xf]
        %v622 = vld [vmem:[%s481 + $0xd4] sm:$0xf]
        %v623 = vld [vmem:[%s481 + $0xd8] sm:$0xf]
        %v624 = vld [vmem:[%s481 + $0xdc] sm:$0xf]
        %v625 = vld [vmem:[%s481 + $0xe0] sm:$0xf]
        %v626 = vld [vmem:[%s481 + $0xe4] sm:$0xf]
        %v627 = vld [vmem:[%s481 + $0xe8] sm:$0xf]
        %v628 = vld [vmem:[%s481 + $0xec] sm:$0xf]
        %v629 = vld [vmem:[%s481 + $0xf0] sm:$0xf]
        %v630 = vld [vmem:[%s481 + $0xf4] sm:$0xf]
        %v631 = vld [vmem:[%s481 + $0xf8] sm:$0xf]
        %v632 = vld [vmem:[%s481 + $0xfc] sm:$0xf]
        %v633 = vld [vmem:[%s1] sm:$0xf]
        %v634 = vld [vmem:[%s1 + $0x4] sm:$0xf]
        %v635 = vld [vmem:[%s1 + $0x8] sm:$0xf]
        %v636 = vld [vmem:[%s1 + $0xc] sm:$0x3]
        %v701 = vunpack.c.l.b16 %v569
        %v702 = vunpack.c.l.b16 %v570
        %v703 = vunpack.c.l.b16 %v571
        %v704 = vunpack.c.l.b16 %v572
        %v705 = vunpack.c.l.b16 %v573
        %v706 = vunpack.c.l.b16 %v574
        %v707 = vunpack.c.l.b16 %v575
        %v708 = vunpack.c.l.b16 %v576
        %v709 = vunpack.c.l.b16 %v577
        %v710 = vunpack.c.l.b16 %v578
        %v711 = vunpack.c.l.b16 %v579
        %v712 = vunpack.c.l.b16 %v580
        %v713 = vunpack.c.l.b16 %v581
        %v714 = vunpack.c.l.b16 %v582
        %v715 = vunpack.c.l.b16 %v583
        %v716 = vunpack.c.l.b16 %v584
        %v717 = vunpack.c.l.b16 %v585
        %v718 = vunpack.c.l.b16 %v586
        %v719 = vunpack.c.l.b16 %v587
        %v720 = vunpack.c.l.b16 %v588
        %v721 = vunpack.c.l.b16 %v589
        %v722 = vunpack.c.l.b16 %v590
        %v723 = vunpack.c.l.b16 %v591
        %v724 = vunpack.c.l.b16 %v592
        %v725 = vunpack.c.l.b16 %v593
        %v726 = vunpack.c.l.b16 %v594
        %v727 = vunpack.c.l.b16 %v595
        %v728 = vunpack.c.l.b16 %v596
        %v729 = vunpack.c.l.b16 %v597
        %v730 = vunpack.c.l.b16 %v598
        %v731 = vunpack.c.l.b16 %v599
        %v732 = vunpack.c.l.b16 %v600
        %v733 = vunpack.c.l.b16 %v601
        %v734 = vunpack.c.l.b16 %v602
        %v735 = vunpack.c.l.b16 %v603
        %v736 = vunpack.c.l.b16 %v604
        %v737 = vunpack.c.l.b16 %v605
        %v738 = vunpack.c.l.b16 %v606
        %v739 = vunpack.c.l.b16 %v607
        %v740 = vunpack.c.l.b16 %v608
        %v741 = vunpack.c.l.b16 %v609
        %v742 = vunpack.c.l.b16 %v610
        %v743 = vunpack.c.l.b16 %v611
        %v744 = vunpack.c.l.b16 %v612
        %v745 = vunpack.c.l.b16 %v613
        %v746 = vunpack.c.l.b16 %v614
        %v747 = vunpack.c.l.b16 %v615
        %v748 = vunpack.c.l.b16 %v616
        %v749 = vunpack.c.l.b16 %v617
        %v750 = vunpack.c.l.b16 %v618
        %v751 = vunpack.c.l.b16 %v619
        %v752 = vunpack.c.l.b16 %v620
        %v753 = vunpack.c.l.b16 %v621
        %v754 = vunpack.c.l.b16 %v622
        %v755 = vunpack.c.l.b16 %v623
        %v756 = vunpack.c.l.b16 %v624
        %v757 = vunpack.c.l.b16 %v625
        %v758 = vunpack.c.l.b16 %v626
        %v759 = vunpack.c.l.b16 %v627
        %v760 = vunpack.c.l.b16 %v628
        %v761 = vunpack.c.l.b16 %v629
        %v762 = vunpack.c.l.b16 %v630
        %v763 = vunpack.c.l.b16 %v631
        %v764 = vunpack.c.l.b16 %v632
        %v765 = vpack.c.b16 %v702, %v701
        %v766 = vpack.c.b16 %v704, %v703
        %v767 = vpack.c.b16 %v706, %v705
        %v768 = vpack.c.b16 %v708, %v707
        %v769 = vpack.c.b16 %v710, %v709
        %v770 = vpack.c.b16 %v712, %v711
        %v771 = vpack.c.b16 %v714, %v713
        %v772 = vpack.c.b16 %v716, %v715
        %v773 = vpack.c.b16 %v718, %v717
        %v774 = vpack.c.b16 %v720, %v719
        %v775 = vpack.c.b16 %v722, %v721
        %v776 = vpack.c.b16 %v724, %v723
        %v777 = vpack.c.b16 %v726, %v725
        %v778 = vpack.c.b16 %v728, %v727
        %v779 = vpack.c.b16 %v730, %v729
        %v780 = vpack.c.b16 %v732, %v731
        %v781 = vpack.c.b16 %v734, %v733
        %v782 = vpack.c.b16 %v736, %v735
        %v783 = vpack.c.b16 %v738, %v737
        %v784 = vpack.c.b16 %v740, %v739
        %v785 = vpack.c.b16 %v742, %v741
        %v786 = vpack.c.b16 %v744, %v743
        %v787 = vpack.c.b16 %v746, %v745
        %v788 = vpack.c.b16 %v748, %v747
        %v789 = vpack.c.b16 %v750, %v749
        %v790 = vpack.c.b16 %v752, %v751
        %v791 = vpack.c.b16 %v754, %v753
        %v792 = vpack.c.b16 %v756, %v755
        %v793 = vpack.c.b16 %v758, %v757
        %v794 = vpack.c.b16 %v760, %v759
        %v795 = vpack.c.b16 %v762, %v761
        %v796 = vpack.c.b16 %v764, %v763
        %v801 = vunpack.c.l.b16 %v633
        %v802 = vunpack.c.l.b16 %v634
        %v803 = vunpack.c.l.b16 %v635
        %v804 = vunpack.c.l.b16 %v636
        %v805 = vpack.c.b16 %v802, %v801
        %v806 = vpack.c.b16 %v804, %v803
        %vm808 = vcmask 220160
        %v810 = vsel %vm808, %v765, 0
        %v813 = vsel %vm808, %v766, 0
        %v816 = vsel %vm808, %v767, 0
        %v819 = vsel %vm808, %v768, 0
        %v822 = vsel %vm808, %v769, 0
        %v825 = vsel %vm808, %v770, 0
        %v828 = vsel %vm808, %v771, 0
        %v831 = vsel %vm808, %v772, 0
        %v834 = vsel %vm808, %v773, 0
        %v837 = vsel %vm808, %v774, 0
        %v840 = vsel %vm808, %v775, 0
        %v843 = vsel %vm808, %v776, 0
        %v846 = vsel %vm808, %v777, 0
        %v849 = vsel %vm808, %v778, 0
        %v852 = vsel %vm808, %v779, 0
        %v855 = vsel %vm808, %v780, 0
        %v858 = vsel %vm808, %v781, 0
        %v861 = vsel %vm808, %v782, 0
        %v864 = vsel %vm808, %v783, 0
        %v867 = vsel %vm808, %v784, 0
        %v870 = vsel %vm808, %v785, 0
        %v873 = vsel %vm808, %v786, 0
        %v876 = vsel %vm808, %v787, 0
        %v879 = vsel %vm808, %v788, 0
        %v882 = vsel %vm808, %v789, 0
        %v885 = vsel %vm808, %v790, 0
        %v888 = vsel %vm808, %v791, 0
        %v891 = vsel %vm808, %v792, 0
        %v894 = vsel %vm808, %v793, 0
        %v897 = vsel %vm808, %v794, 0
        %v900 = vsel %vm808, %v795, 0
        %v903 = vsel %vm808, %v796, 0
        %vm905 = vcmask 1044480
        %vm906 = vcmask 1045504
        %v907 = vsel %vm905, 4294967295, 65535
        %v908 = vsel %vm906, %v907, 0
        %v910 = vand.u32 %v806, %v908
        %912 = vmatpush.bf16.msra.mxu0 0
        %913 = vmatpush.bf16.msra.mxu0 0
        %914 = vmatpush.bf16.msra.mxu0 0
        %915 = vmatpush.bf16.msra.mxu0 0
        %916 = vmatpush.bf16.msra.mxu0 0
        %917 = vmatpush.bf16.msra.mxu0 0
        %918 = vmatpush.bf16.msra.mxu0 %v910
        %919 = vmatpush.bf16.msra.mxu0 %v805
        %920 = vmatmul.bf16.gmra.mxu0 %v810
        %v921 = vpop.f32.mrf.mxu0
        %v922 = vadd.f32 0.0, %v921
        %v923 = vpop.f32.mrf.mxu0
        %v924 = vadd.f32 0.0, %v923
        %925 = vmatmul.bf16.gmra.mxu0 %v813
        %v926 = vpop.f32.mrf.mxu0
        %v927 = vadd.f32 0.0, %v926
        %v928 = vpop.f32.mrf.mxu0
        %v929 = vadd.f32 0.0, %v928
        %930 = vmatmul.bf16.gmra.mxu0 %v816
        %v931 = vpop.f32.mrf.mxu0
        %v932 = vadd.f32 0.0, %v931
        %v933 = vpop.f32.mrf.mxu0
        %v934 = vadd.f32 0.0, %v933
        %935 = vmatmul.bf16.gmra.mxu0 %v819
        %v936 = vpop.f32.mrf.mxu0
        %v937 = vadd.f32 0.0, %v936
        %v938 = vpop.f32.mrf.mxu0
        %v939 = vadd.f32 0.0, %v938
        %940 = vmatmul.bf16.gmra.mxu0 %v822
        %v941 = vpop.f32.mrf.mxu0
        %v942 = vadd.f32 0.0, %v941
        %v943 = vpop.f32.mrf.mxu0
        %v944 = vadd.f32 0.0, %v943
        %945 = vmatmul.bf16.gmra.mxu0 %v825
        %v946 = vpop.f32.mrf.mxu0
        %v947 = vadd.f32 0.0, %v946
        %v948 = vpop.f32.mrf.mxu0
        %v949 = vadd.f32 0.0, %v948
        %950 = vmatmul.bf16.gmra.mxu0 %v828
        %v951 = vpop.f32.mrf.mxu0
        %v952 = vadd.f32 0.0, %v951
        %v953 = vpop.f32.mrf.mxu0
        %v954 = vadd.f32 0.0, %v953
        %955 = vmatmul.bf16.gmra.mxu0 %v831
        %v956 = vpop.f32.mrf.mxu0
        %v957 = vadd.f32 0.0, %v956
        %v958 = vpop.f32.mrf.mxu0
        %v959 = vadd.f32 0.0, %v958
        %960 = vmatmul.bf16.gmra.mxu0 %v834
        %v961 = vpop.f32.mrf.mxu0
        %v962 = vadd.f32 0.0, %v961
        %v963 = vpop.f32.mrf.mxu0
        %v964 = vadd.f32 0.0, %v963
        %965 = vmatmul.bf16.gmra.mxu0 %v837
        %v966 = vpop.f32.mrf.mxu0
        %v967 = vadd.f32 0.0, %v966
        %v968 = vpop.f32.mrf.mxu0
        %v969 = vadd.f32 0.0, %v968
        %970 = vmatmul.bf16.gmra.mxu0 %v840
        %v971 = vpop.f32.mrf.mxu0
        %v972 = vadd.f32 0.0, %v971
        %v973 = vpop.f32.mrf.mxu0
        %v974 = vadd.f32 0.0, %v973
        %975 = vmatmul.bf16.gmra.mxu0 %v843
        %v976 = vpop.f32.mrf.mxu0
        %v977 = vadd.f32 0.0, %v976
        %v978 = vpop.f32.mrf.mxu0
        %v979 = vadd.f32 0.0, %v978
        %980 = vmatmul.bf16.gmra.mxu0 %v846
        %v981 = vpop.f32.mrf.mxu0
        %v982 = vadd.f32 0.0, %v981
        %v983 = vpop.f32.mrf.mxu0
        %v984 = vadd.f32 0.0, %v983
        %985 = vmatmul.bf16.gmra.mxu0 %v849
        %v986 = vpop.f32.mrf.mxu0
        %v987 = vadd.f32 0.0, %v986
        %v988 = vpop.f32.mrf.mxu0
        %v989 = vadd.f32 0.0, %v988
        %990 = vmatmul.bf16.gmra.mxu0 %v852
        %v991 = vpop.f32.mrf.mxu0
        %v992 = vadd.f32 0.0, %v991
        %v993 = vpop.f32.mrf.mxu0
        %v994 = vadd.f32 0.0, %v993
        %995 = vmatmul.bf16.gmra.mxu0 %v855
        %v996 = vpop.f32.mrf.mxu0
        %v997 = vadd.f32 0.0, %v996
        %v998 = vpop.f32.mrf.mxu0
        %v999 = vadd.f32 0.0, %v998
        %1000 = vmatmul.bf16.gmra.mxu0 %v858
        %v1001 = vpop.f32.mrf.mxu0
        %v1002 = vadd.f32 0.0, %v1001
        %v1003 = vpop.f32.mrf.mxu0
        %v1004 = vadd.f32 0.0, %v1003
        %1005 = vmatmul.bf16.gmra.mxu0 %v861
        %v1006 = vpop.f32.mrf.mxu0
        %v1007 = vadd.f32 0.0, %v1006
        %v1008 = vpop.f32.mrf.mxu0
        %v1009 = vadd.f32 0.0, %v1008
        %1010 = vmatmul.bf16.gmra.mxu0 %v864
        %v1011 = vpop.f32.mrf.mxu0
        %v1012 = vadd.f32 0.0, %v1011
        %v1013 = vpop.f32.mrf.mxu0
        %v1014 = vadd.f32 0.0, %v1013
        %1015 = vmatmul.bf16.gmra.mxu0 %v867
        %v1016 = vpop.f32.mrf.mxu0
        %v1017 = vadd.f32 0.0, %v1016
        %v1018 = vpop.f32.mrf.mxu0
        %v1019 = vadd.f32 0.0, %v1018
        %1020 = vmatmul.bf16.gmra.mxu0 %v870
        %v1021 = vpop.f32.mrf.mxu0
        %v1022 = vadd.f32 0.0, %v1021
        %v1023 = vpop.f32.mrf.mxu0
        %v1024 = vadd.f32 0.0, %v1023
        %1025 = vmatmul.bf16.gmra.mxu0 %v873
        %v1026 = vpop.f32.mrf.mxu0
        %v1027 = vadd.f32 0.0, %v1026
        %v1028 = vpop.f32.mrf.mxu0
        %v1029 = vadd.f32 0.0, %v1028
        %1030 = vmatmul.bf16.gmra.mxu0 %v876
        %v1031 = vpop.f32.mrf.mxu0
        %v1032 = vadd.f32 0.0, %v1031
        %v1033 = vpop.f32.mrf.mxu0
        %v1034 = vadd.f32 0.0, %v1033
        %1035 = vmatmul.bf16.gmra.mxu0 %v879
        %v1036 = vpop.f32.mrf.mxu0
        %v1037 = vadd.f32 0.0, %v1036
        %v1038 = vpop.f32.mrf.mxu0
        %v1039 = vadd.f32 0.0, %v1038
        %1040 = vmatmul.bf16.gmra.mxu0 %v882
        %v1041 = vpop.f32.mrf.mxu0
        %v1042 = vadd.f32 0.0, %v1041
        %v1043 = vpop.f32.mrf.mxu0
        %v1044 = vadd.f32 0.0, %v1043
        %1045 = vmatmul.bf16.gmra.mxu0 %v885
        %v1046 = vpop.f32.mrf.mxu0
        %v1047 = vadd.f32 0.0, %v1046
        %v1048 = vpop.f32.mrf.mxu0
        %v1049 = vadd.f32 0.0, %v1048
        %1050 = vmatmul.bf16.gmra.mxu0 %v888
        %v1051 = vpop.f32.mrf.mxu0
        %v1052 = vadd.f32 0.0, %v1051
        %v1053 = vpop.f32.mrf.mxu0
        %v1054 = vadd.f32 0.0, %v1053
        %1055 = vmatmul.bf16.gmra.mxu0 %v891
        %v1056 = vpop.f32.mrf.mxu0
        %v1057 = vadd.f32 0.0, %v1056
        %v1058 = vpop.f32.mrf.mxu0
        %v1059 = vadd.f32 0.0, %v1058
        %1060 = vmatmul.bf16.gmra.mxu0 %v894
        %v1061 = vpop.f32.mrf.mxu0
        %v1062 = vadd.f32 0.0, %v1061
        %v1063 = vpop.f32.mrf.mxu0
        %v1064 = vadd.f32 0.0, %v1063
        %1065 = vmatmul.bf16.gmra.mxu0 %v897
        %v1066 = vpop.f32.mrf.mxu0
        %v1067 = vadd.f32 0.0, %v1066
        %v1068 = vpop.f32.mrf.mxu0
        %v1069 = vadd.f32 0.0, %v1068
        %1070 = vmatmul.bf16.gmra.mxu0 %v900
        %v1071 = vpop.f32.mrf.mxu0
        %v1072 = vadd.f32 0.0, %v1071
        %v1073 = vpop.f32.mrf.mxu0
        %v1074 = vadd.f32 0.0, %v1073
        %1075 = vmatmul.bf16.gmra.mxu0 %v903
        %v1076 = vpop.f32.mrf.mxu0
        %v1077 = vadd.f32 0.0, %v1076
        %v1078 = vpop.f32.mrf.mxu0
        %v1079 = vadd.f32 0.0, %v1078
        %1080 = vdwg.mxu0
        %v1081 = vsub.f32 %v922, %v1002
        %v1082 = vsub.f32 %v924, %v1004
        %v1083 = vsub.f32 %v927, %v1007
        %v1084 = vsub.f32 %v929, %v1009
        %v1085 = vsub.f32 %v932, %v1012
        %v1086 = vsub.f32 %v934, %v1014
        %v1087 = vsub.f32 %v937, %v1017
        %v1088 = vsub.f32 %v939, %v1019
        %v1089 = vsub.f32 %v942, %v1022
        %v1090 = vsub.f32 %v944, %v1024
        %v1091 = vsub.f32 %v947, %v1027
        %v1092 = vsub.f32 %v949, %v1029
        %v1093 = vsub.f32 %v952, %v1032
        %v1094 = vsub.f32 %v954, %v1034
        %v1095 = vsub.f32 %v957, %v1037
        %v1096 = vsub.f32 %v959, %v1039
        %v1097 = vsub.f32 %v962, %v1042
        %v1098 = vsub.f32 %v964, %v1044
        %v1099 = vsub.f32 %v967, %v1047
        %v1100 = vsub.f32 %v969, %v1049
        %v1101 = vsub.f32 %v972, %v1052
        %v1102 = vsub.f32 %v974, %v1054
        %v1103 = vsub.f32 %v977, %v1057
        %v1104 = vsub.f32 %v979, %v1059
        %v1105 = vsub.f32 %v982, %v1062
        %v1106 = vsub.f32 %v984, %v1064
        %v1107 = vsub.f32 %v987, %v1067
        %v1108 = vsub.f32 %v989, %v1069
        %v1109 = vsub.f32 %v992, %v1072
        %v1110 = vsub.f32 %v994, %v1074
        %v1111 = vsub.f32 %v997, %v1077
        %v1112 = vsub.f32 %v999, %v1079
        %v1113 = vand.u32 2147483647, %v1081
        %v1114 = vand.u32 2147483647, %v1082
        %v1115 = vand.u32 2147483647, %v1083
        %v1116 = vand.u32 2147483647, %v1084
        %v1117 = vand.u32 2147483647, %v1085
        %v1118 = vand.u32 2147483647, %v1086
        %v1119 = vand.u32 2147483647, %v1087
        %v1120 = vand.u32 2147483647, %v1088
        %v1121 = vand.u32 2147483647, %v1089
        %v1122 = vand.u32 2147483647, %v1090
        %v1123 = vand.u32 2147483647, %v1091
        %v1124 = vand.u32 2147483647, %v1092
        %v1125 = vand.u32 2147483647, %v1093
        %v1126 = vand.u32 2147483647, %v1094
        %v1127 = vand.u32 2147483647, %v1095
        %v1128 = vand.u32 2147483647, %v1096
        %v1129 = vand.u32 2147483647, %v1097
        %v1130 = vand.u32 2147483647, %v1098
        %v1131 = vand.u32 2147483647, %v1099
        %v1132 = vand.u32 2147483647, %v1100
        %v1133 = vand.u32 2147483647, %v1101
        %v1134 = vand.u32 2147483647, %v1102
        %v1135 = vand.u32 2147483647, %v1103
        %v1136 = vand.u32 2147483647, %v1104
        %v1137 = vand.u32 2147483647, %v1105
        %v1138 = vand.u32 2147483647, %v1106
        %v1139 = vand.u32 2147483647, %v1107
        %v1140 = vand.u32 2147483647, %v1108
        %v1141 = vand.u32 2147483647, %v1109
        %v1142 = vand.u32 2147483647, %v1110
        %v1143 = vand.u32 2147483647, %v1111
        %v1144 = vand.u32 2147483647, %v1112
        %vm1145 = vcmask 523264
        %v1146 = vsel %vm1145, %v1113, 0.0
        %v1147 = vsel %vm1145, %v1114, 0.0
        %v1148 = vadd.f32 %v1146, %v1147
        %v1149 = vsel %vm1145, %v1115, 0.0
        %v1150 = vadd.f32 %v1148, %v1149
        %v1151 = vsel %vm1145, %v1116, 0.0
        %v1152 = vadd.f32 %v1150, %v1151
        %v1153 = vsel %vm1145, %v1117, 0.0
        %v1154 = vadd.f32 %v1152, %v1153
        %v1155 = vsel %vm1145, %v1118, 0.0
        %v1156 = vadd.f32 %v1154, %v1155
        %v1157 = vsel %vm1145, %v1119, 0.0
        %v1158 = vadd.f32 %v1156, %v1157
        %v1159 = vsel %vm1145, %v1120, 0.0
        %v1160 = vadd.f32 %v1158, %v1159
        %v1161 = vsel %vm1145, %v1121, 0.0
        %v1162 = vadd.f32 %v1160, %v1161
        %v1163 = vsel %vm1145, %v1122, 0.0
        %v1164 = vadd.f32 %v1162, %v1163
        %v1165 = vsel %vm1145, %v1123, 0.0
        %v1166 = vadd.f32 %v1164, %v1165
        %v1167 = vsel %vm1145, %v1124, 0.0
        %v1168 = vadd.f32 %v1166, %v1167
        %v1169 = vsel %vm1145, %v1125, 0.0
        %v1170 = vadd.f32 %v1168, %v1169
        %v1171 = vsel %vm1145, %v1126, 0.0
        %v1172 = vadd.f32 %v1170, %v1171
        %v1173 = vsel %vm1145, %v1127, 0.0
        %v1174 = vadd.f32 %v1172, %v1173
        %v1175 = vsel %vm1145, %v1128, 0.0
        %v1176 = vadd.f32 %v1174, %v1175
        %v1177 = vsel %vm1145, %v1129, 0.0
        %v1178 = vadd.f32 %v1176, %v1177
        %v1179 = vsel %vm1145, %v1130, 0.0
        %v1180 = vadd.f32 %v1178, %v1179
        %v1181 = vsel %vm1145, %v1131, 0.0
        %v1182 = vadd.f32 %v1180, %v1181
        %v1183 = vsel %vm1145, %v1132, 0.0
        %v1184 = vadd.f32 %v1182, %v1183
        %v1185 = vsel %vm1145, %v1133, 0.0
        %v1186 = vadd.f32 %v1184, %v1185
        %v1187 = vsel %vm1145, %v1134, 0.0
        %v1188 = vadd.f32 %v1186, %v1187
        %v1189 = vsel %vm1145, %v1135, 0.0
        %v1190 = vadd.f32 %v1188, %v1189
        %v1191 = vsel %vm1145, %v1136, 0.0
        %v1192 = vadd.f32 %v1190, %v1191
        %v1193 = vsel %vm1145, %v1137, 0.0
        %v1194 = vadd.f32 %v1192, %v1193
        %v1195 = vsel %vm1145, %v1138, 0.0
        %v1196 = vadd.f32 %v1194, %v1195
        %v1197 = vsel %vm1145, %v1139, 0.0
        %v1198 = vadd.f32 %v1196, %v1197
        %v1199 = vsel %vm1145, %v1140, 0.0
        %v1200 = vadd.f32 %v1198, %v1199
        %v1201 = vsel %vm1145, %v1141, 0.0
        %v1202 = vadd.f32 %v1200, %v1201
        %v1203 = vsel %vm1145, %v1142, 0.0
        %v1204 = vadd.f32 %v1202, %v1203
        %v1205 = vsel %vm1145, %v1143, 0.0
        %v1206 = vadd.f32 %v1204, %v1205
        %v1207 = vsel %vm1145, %v1144, 0.0
        %v1208 = vadd.f32 %v1206, %v1207
        %v1209 = vrot.slane %v1208, 4
        %v1210 = vadd.f32 %v1208, %v1209
        %v1211 = vrot.slane %v1210, 2
        %v1212 = vadd.f32 %v1210, %v1211
        %v1213 = vrot.slane %v1212, 1
        %v1214 = vadd.f32 %v1212, %v1213
        %v1215 = vld [vmem:[%s2] sm:$0x1]
        %v1217 = vperm.slane %v1215, 0
        %v1219 = vadd.f32 %v922, %v1217
        %v1220 = vadd.f32 %v924, %v1217
        %v1221 = vadd.f32 %v927, %v1217
        %v1222 = vadd.f32 %v929, %v1217
        %v1223 = vadd.f32 %v932, %v1217
        %v1224 = vadd.f32 %v934, %v1217
        %v1225 = vadd.f32 %v937, %v1217
        %v1226 = vadd.f32 %v939, %v1217
        %v1227 = vadd.f32 %v942, %v1217
        %v1228 = vadd.f32 %v944, %v1217
        %v1229 = vadd.f32 %v947, %v1217
        %v1230 = vadd.f32 %v949, %v1217
        %v1231 = vadd.f32 %v952, %v1217
        %v1232 = vadd.f32 %v954, %v1217
        %v1233 = vadd.f32 %v957, %v1217
        %v1234 = vadd.f32 %v959, %v1217
        %v1235 = vadd.f32 %v962, %v1217
        %v1236 = vadd.f32 %v964, %v1217
        %v1237 = vadd.f32 %v967, %v1217
        %v1238 = vadd.f32 %v969, %v1217
        %v1239 = vadd.f32 %v972, %v1217
        %v1240 = vadd.f32 %v974, %v1217
        %v1241 = vadd.f32 %v977, %v1217
        %v1242 = vadd.f32 %v979, %v1217
        %v1243 = vadd.f32 %v982, %v1217
        %v1244 = vadd.f32 %v984, %v1217
        %v1245 = vadd.f32 %v987, %v1217
        %v1246 = vadd.f32 %v989, %v1217
        %v1247 = vadd.f32 %v992, %v1217
        %v1248 = vadd.f32 %v994, %v1217
        %v1249 = vadd.f32 %v997, %v1217
        %v1250 = vadd.f32 %v999, %v1217
        %v1251 = vadd.f32 %v1002, %v1217
        %v1252 = vadd.f32 %v1004, %v1217
        %v1253 = vadd.f32 %v1007, %v1217
        %v1254 = vadd.f32 %v1009, %v1217
        %v1255 = vadd.f32 %v1012, %v1217
        %v1256 = vadd.f32 %v1014, %v1217
        %v1257 = vadd.f32 %v1017, %v1217
        %v1258 = vadd.f32 %v1019, %v1217
        %v1259 = vadd.f32 %v1022, %v1217
        %v1260 = vadd.f32 %v1024, %v1217
        %v1261 = vadd.f32 %v1027, %v1217
        %v1262 = vadd.f32 %v1029, %v1217
        %v1263 = vadd.f32 %v1032, %v1217
        %v1264 = vadd.f32 %v1034, %v1217
        %v1265 = vadd.f32 %v1037, %v1217
        %v1266 = vadd.f32 %v1039, %v1217
        %v1267 = vadd.f32 %v1042, %v1217
        %v1268 = vadd.f32 %v1044, %v1217
        %v1269 = vadd.f32 %v1047, %v1217
        %v1270 = vadd.f32 %v1049, %v1217
        %v1271 = vadd.f32 %v1052, %v1217
        %v1272 = vadd.f32 %v1054, %v1217
        %v1273 = vadd.f32 %v1057, %v1217
        %v1274 = vadd.f32 %v1059, %v1217
        %v1275 = vadd.f32 %v1062, %v1217
        %v1276 = vadd.f32 %v1064, %v1217
        %v1277 = vadd.f32 %v1067, %v1217
        %v1278 = vadd.f32 %v1069, %v1217
        %v1279 = vadd.f32 %v1072, %v1217
        %v1280 = vadd.f32 %v1074, %v1217
        %v1281 = vadd.f32 %v1077, %v1217
        %v1282 = vadd.f32 %v1079, %v1217
        %v1283 = vmax.f32 %v1219, 0.0
        %v1284 = vmax.f32 %v1220, 0.0
        %v1285 = vmax.f32 %v1221, 0.0
        %v1286 = vmax.f32 %v1222, 0.0
        %v1287 = vmax.f32 %v1223, 0.0
        %v1288 = vmax.f32 %v1224, 0.0
        %v1289 = vmax.f32 %v1225, 0.0
        %v1290 = vmax.f32 %v1226, 0.0
        %v1291 = vmax.f32 %v1227, 0.0
        %v1292 = vmax.f32 %v1228, 0.0
        %v1293 = vmax.f32 %v1229, 0.0
        %v1294 = vmax.f32 %v1230, 0.0
        %v1295 = vmax.f32 %v1231, 0.0
        %v1296 = vmax.f32 %v1232, 0.0
        %v1297 = vmax.f32 %v1233, 0.0
        %v1298 = vmax.f32 %v1234, 0.0
        %v1299 = vmax.f32 %v1235, 0.0
        %v1300 = vmax.f32 %v1236, 0.0
        %v1301 = vmax.f32 %v1237, 0.0
        %v1302 = vmax.f32 %v1238, 0.0
        %v1303 = vmax.f32 %v1239, 0.0
        %v1304 = vmax.f32 %v1240, 0.0
        %v1305 = vmax.f32 %v1241, 0.0
        %v1306 = vmax.f32 %v1242, 0.0
        %v1307 = vmax.f32 %v1243, 0.0
        %v1308 = vmax.f32 %v1244, 0.0
        %v1309 = vmax.f32 %v1245, 0.0
        %v1310 = vmax.f32 %v1246, 0.0
        %v1311 = vmax.f32 %v1247, 0.0
        %v1312 = vmax.f32 %v1248, 0.0
        %v1313 = vmax.f32 %v1249, 0.0
        %v1314 = vmax.f32 %v1250, 0.0
        %v1315 = vmax.f32 %v1251, 0.0
        %v1316 = vmax.f32 %v1252, 0.0
        %v1317 = vmax.f32 %v1253, 0.0
        %v1318 = vmax.f32 %v1254, 0.0
        %v1319 = vmax.f32 %v1255, 0.0
        %v1320 = vmax.f32 %v1256, 0.0
        %v1321 = vmax.f32 %v1257, 0.0
        %v1322 = vmax.f32 %v1258, 0.0
        %v1323 = vmax.f32 %v1259, 0.0
        %v1324 = vmax.f32 %v1260, 0.0
        %v1325 = vmax.f32 %v1261, 0.0
        %v1326 = vmax.f32 %v1262, 0.0
        %v1327 = vmax.f32 %v1263, 0.0
        %v1328 = vmax.f32 %v1264, 0.0
        %v1329 = vmax.f32 %v1265, 0.0
        %v1330 = vmax.f32 %v1266, 0.0
        %v1331 = vmax.f32 %v1267, 0.0
        %v1332 = vmax.f32 %v1268, 0.0
        %v1333 = vmax.f32 %v1269, 0.0
        %v1334 = vmax.f32 %v1270, 0.0
        %v1335 = vmax.f32 %v1271, 0.0
        %v1336 = vmax.f32 %v1272, 0.0
        %v1337 = vmax.f32 %v1273, 0.0
        %v1338 = vmax.f32 %v1274, 0.0
        %v1339 = vmax.f32 %v1275, 0.0
        %v1340 = vmax.f32 %v1276, 0.0
        %v1341 = vmax.f32 %v1277, 0.0
        %v1342 = vmax.f32 %v1278, 0.0
        %v1343 = vmax.f32 %v1279, 0.0
        %v1344 = vmax.f32 %v1280, 0.0
        %v1345 = vmax.f32 %v1281, 0.0
        %v1346 = vmax.f32 %v1282, 0.0
        %v1347 = vsub.f32 %v1283, %v1315
        %v1348 = vsub.f32 %v1284, %v1316
        %v1349 = vsub.f32 %v1285, %v1317
        %v1350 = vsub.f32 %v1286, %v1318
        %v1351 = vsub.f32 %v1287, %v1319
        %v1352 = vsub.f32 %v1288, %v1320
        %v1353 = vsub.f32 %v1289, %v1321
        %v1354 = vsub.f32 %v1290, %v1322
        %v1355 = vsub.f32 %v1291, %v1323
        %v1356 = vsub.f32 %v1292, %v1324
        %v1357 = vsub.f32 %v1293, %v1325
        %v1358 = vsub.f32 %v1294, %v1326
        %v1359 = vsub.f32 %v1295, %v1327
        %v1360 = vsub.f32 %v1296, %v1328
        %v1361 = vsub.f32 %v1297, %v1329
        %v1362 = vsub.f32 %v1298, %v1330
        %v1363 = vsub.f32 %v1299, %v1331
        %v1364 = vsub.f32 %v1300, %v1332
        %v1365 = vsub.f32 %v1301, %v1333
        %v1366 = vsub.f32 %v1302, %v1334
        %v1367 = vsub.f32 %v1303, %v1335
        %v1368 = vsub.f32 %v1304, %v1336
        %v1369 = vsub.f32 %v1305, %v1337
        %v1370 = vsub.f32 %v1306, %v1338
        %v1371 = vsub.f32 %v1307, %v1339
        %v1372 = vsub.f32 %v1308, %v1340
        %v1373 = vsub.f32 %v1309, %v1341
        %v1374 = vsub.f32 %v1310, %v1342
        %v1375 = vsub.f32 %v1311, %v1343
        %v1376 = vsub.f32 %v1312, %v1344
        %v1377 = vsub.f32 %v1313, %v1345
        %v1378 = vsub.f32 %v1314, %v1346
        %s1379 = scalar_lea.vmem [#allocation2], 24
        %1380 = vst.msk [vmem:[%s1379 + $0x1] sm:$0xff] %vm1145, %v1347
        %1381 = vst.msk [vmem:[%s1379 + $0x9] sm:$0xff] %vm1145, %v1348
        %1382 = vst.msk [vmem:[%s1379 + $0x19] sm:$0xff] %vm1145, %v1349
        %1383 = vst.msk [vmem:[%s1379 + $0x21] sm:$0xff] %vm1145, %v1350
        %1384 = vst.msk [vmem:[%s1379 + $0x31] sm:$0xff] %vm1145, %v1351
        %1385 = vst.msk [vmem:[%s1379 + $0x39] sm:$0xff] %vm1145, %v1352
        %1386 = vst.msk [vmem:[%s1379 + $0x49] sm:$0xff] %vm1145, %v1353
        %1387 = vst.msk [vmem:[%s1379 + $0x51] sm:$0xff] %vm1145, %v1354
        %1388 = vst.msk [vmem:[%s1379 + $0x61] sm:$0xff] %vm1145, %v1355
        %1389 = vst.msk [vmem:[%s1379 + $0x69] sm:$0xff] %vm1145, %v1356
        %1390 = vst.msk [vmem:[%s1379 + $0x79] sm:$0xff] %vm1145, %v1357
        %1391 = vst.msk [vmem:[%s1379 + $0x81] sm:$0xff] %vm1145, %v1358
        %1392 = vst.msk [vmem:[%s1379 + $0x91] sm:$0xff] %vm1145, %v1359
        %1393 = vst.msk [vmem:[%s1379 + $0x99] sm:$0xff] %vm1145, %v1360
        %1394 = vst.msk [vmem:[%s1379 + $0xa9] sm:$0xff] %vm1145, %v1361
        %1395 = vst.msk [vmem:[%s1379 + $0xb1] sm:$0xff] %vm1145, %v1362
        %1396 = vst.msk [vmem:[%s1379 + $0xc1] sm:$0xff] %vm1145, %v1363
        %1397 = vst.msk [vmem:[%s1379 + $0xc9] sm:$0xff] %vm1145, %v1364
        %1398 = vst.msk [vmem:[%s1379 + $0xd9] sm:$0xff] %vm1145, %v1365
        %1399 = vst.msk [vmem:[%s1379 + $0xe1] sm:$0xff] %vm1145, %v1366
        %1400 = vst.msk [vmem:[%s1379 + $0xf1] sm:$0xff] %vm1145, %v1367
        %1401 = vst.msk [vmem:[%s1379 + $0xf9] sm:$0xff] %vm1145, %v1368
        %1402 = vst.msk [vmem:[%s1379 + $0x109] sm:$0xff] %vm1145, %v1369
        %1403 = vst.msk [vmem:[%s1379 + $0x111] sm:$0xff] %vm1145, %v1370
        %1404 = vst.msk [vmem:[%s1379 + $0x121] sm:$0xff] %vm1145, %v1371
        %1405 = vst.msk [vmem:[%s1379 + $0x129] sm:$0xff] %vm1145, %v1372
        %1406 = vst.msk [vmem:[%s1379 + $0x139] sm:$0xff] %vm1145, %v1373
        %1407 = vst.msk [vmem:[%s1379 + $0x141] sm:$0xff] %vm1145, %v1374
        %1408 = vst.msk [vmem:[%s1379 + $0x151] sm:$0xff] %vm1145, %v1375
        %1409 = vst.msk [vmem:[%s1379 + $0x159] sm:$0xff] %vm1145, %v1376
        %1410 = vst.msk [vmem:[%s1379 + $0x169] sm:$0xff] %vm1145, %v1377
        %1411 = vst.msk [vmem:[%s1379 + $0x171] sm:$0xff] %vm1145, %v1378
        %v1412 = vld [vmem:[#allocation2] sm:$0xff]
        %v1413 = vld [vmem:[#allocation2 + $0x8] sm:$0xff]
        %v1414 = vld [vmem:[#allocation2 + $0x18] sm:$0xff]
        %v1415 = vld [vmem:[#allocation2 + $0x20] sm:$0xff]
        %v1416 = vld [vmem:[#allocation2 + $0x30] sm:$0xff]
        %v1417 = vld [vmem:[#allocation2 + $0x38] sm:$0xff]
        %v1418 = vld [vmem:[#allocation2 + $0x48] sm:$0xff]
        %v1419 = vld [vmem:[#allocation2 + $0x50] sm:$0xff]
        %v1420 = vld [vmem:[#allocation2 + $0x60] sm:$0xff]
        %v1421 = vld [vmem:[#allocation2 + $0x68] sm:$0xff]
        %v1422 = vld [vmem:[#allocation2 + $0x78] sm:$0xff]
        %v1423 = vld [vmem:[#allocation2 + $0x80] sm:$0xff]
        %v1424 = vld [vmem:[#allocation2 + $0x90] sm:$0xff]
        %v1425 = vld [vmem:[#allocation2 + $0x98] sm:$0xff]
        %v1426 = vld [vmem:[#allocation2 + $0xa8] sm:$0xff]
        %v1427 = vld [vmem:[#allocation2 + $0xb0] sm:$0xff]
        %v1428 = vld [vmem:[#allocation2 + $0xc0] sm:$0xff]
        %v1429 = vld [vmem:[#allocation2 + $0xc8] sm:$0xff]
        %v1430 = vld [vmem:[#allocation2 + $0xd8] sm:$0xff]
        %v1431 = vld [vmem:[#allocation2 + $0xe0] sm:$0xff]
        %v1432 = vld [vmem:[#allocation2 + $0xf0] sm:$0xff]
        %v1433 = vld [vmem:[#allocation2 + $0xf8] sm:$0xff]
        %v1434 = vld [vmem:[#allocation2 + $0x108] sm:$0xff]
        %v1435 = vld [vmem:[#allocation2 + $0x110] sm:$0xff]
        %v1436 = vld [vmem:[#allocation2 + $0x120] sm:$0xff]
        %v1437 = vld [vmem:[#allocation2 + $0x128] sm:$0xff]
        %v1438 = vld [vmem:[#allocation2 + $0x138] sm:$0xff]
        %v1439 = vld [vmem:[#allocation2 + $0x140] sm:$0xff]
        %v1440 = vld [vmem:[#allocation2 + $0x150] sm:$0xff]
        %v1441 = vld [vmem:[#allocation2 + $0x158] sm:$0xff]
        %v1442 = vld [vmem:[#allocation2 + $0x168] sm:$0xff]
        %v1443 = vld [vmem:[#allocation2 + $0x170] sm:$0xff]
        %v1444 = vld [vmem:[#allocation2 + $0x1] sm:$0xff]
        %v1445 = vld [vmem:[#allocation2 + $0x9] sm:$0xff]
        %v1446 = vld [vmem:[#allocation2 + $0x19] sm:$0xff]
        %v1447 = vld [vmem:[#allocation2 + $0x21] sm:$0xff]
        %v1448 = vld [vmem:[#allocation2 + $0x31] sm:$0xff]
        %v1449 = vld [vmem:[#allocation2 + $0x39] sm:$0xff]
        %v1450 = vld [vmem:[#allocation2 + $0x49] sm:$0xff]
        %v1451 = vld [vmem:[#allocation2 + $0x51] sm:$0xff]
        %v1452 = vld [vmem:[#allocation2 + $0x61] sm:$0xff]
        %v1453 = vld [vmem:[#allocation2 + $0x69] sm:$0xff]
        %v1454 = vld [vmem:[#allocation2 + $0x79] sm:$0xff]
        %v1455 = vld [vmem:[#allocation2 + $0x81] sm:$0xff]
        %v1456 = vld [vmem:[#allocation2 + $0x91] sm:$0xff]
        %v1457 = vld [vmem:[#allocation2 + $0x99] sm:$0xff]
        %v1458 = vld [vmem:[#allocation2 + $0xa9] sm:$0xff]
        %v1459 = vld [vmem:[#allocation2 + $0xb1] sm:$0xff]
        %v1460 = vld [vmem:[#allocation2 + $0xc1] sm:$0xff]
        %v1461 = vld [vmem:[#allocation2 + $0xc9] sm:$0xff]
        %v1462 = vld [vmem:[#allocation2 + $0xd9] sm:$0xff]
        %v1463 = vld [vmem:[#allocation2 + $0xe1] sm:$0xff]
        %v1464 = vld [vmem:[#allocation2 + $0xf1] sm:$0xff]
        %v1465 = vld [vmem:[#allocation2 + $0xf9] sm:$0xff]
        %v1466 = vld [vmem:[#allocation2 + $0x109] sm:$0xff]
        %v1467 = vld [vmem:[#allocation2 + $0x111] sm:$0xff]
        %v1468 = vld [vmem:[#allocation2 + $0x121] sm:$0xff]
        %v1469 = vld [vmem:[#allocation2 + $0x129] sm:$0xff]
        %v1470 = vld [vmem:[#allocation2 + $0x139] sm:$0xff]
        %v1471 = vld [vmem:[#allocation2 + $0x141] sm:$0xff]
        %v1472 = vld [vmem:[#allocation2 + $0x151] sm:$0xff]
        %v1473 = vld [vmem:[#allocation2 + $0x159] sm:$0xff]
        %v1474 = vld [vmem:[#allocation2 + $0x169] sm:$0xff]
        %v1475 = vld [vmem:[#allocation2 + $0x171] sm:$0xff]
        %v1476 = vld [vmem:[#allocation2 + $0x2] sm:$0xff]
        %v1477 = vld [vmem:[#allocation2 + $0xa] sm:$0xff]
        %v1478 = vld [vmem:[#allocation2 + $0x1a] sm:$0xff]
        %v1479 = vld [vmem:[#allocation2 + $0x22] sm:$0xff]
        %v1480 = vld [vmem:[#allocation2 + $0x32] sm:$0xff]
        %v1481 = vld [vmem:[#allocation2 + $0x3a] sm:$0xff]
        %v1482 = vld [vmem:[#allocation2 + $0x4a] sm:$0xff]
        %v1483 = vld [vmem:[#allocation2 + $0x52] sm:$0xff]
        %v1484 = vld [vmem:[#allocation2 + $0x62] sm:$0xff]
        %v1485 = vld [vmem:[#allocation2 + $0x6a] sm:$0xff]
        %v1486 = vld [vmem:[#allocation2 + $0x7a] sm:$0xff]
        %v1487 = vld [vmem:[#allocation2 + $0x82] sm:$0xff]
        %v1488 = vld [vmem:[#allocation2 + $0x92] sm:$0xff]
        %v1489 = vld [vmem:[#allocation2 + $0x9a] sm:$0xff]
        %v1490 = vld [vmem:[#allocation2 + $0xaa] sm:$0xff]
        %v1491 = vld [vmem:[#allocation2 + $0xb2] sm:$0xff]
        %v1492 = vld [vmem:[#allocation2 + $0xc2] sm:$0xff]
        %v1493 = vld [vmem:[#allocation2 + $0xca] sm:$0xff]
        %v1494 = vld [vmem:[#allocation2 + $0xda] sm:$0xff]
        %v1495 = vld [vmem:[#allocation2 + $0xe2] sm:$0xff]
        %v1496 = vld [vmem:[#allocation2 + $0xf2] sm:$0xff]
        %v1497 = vld [vmem:[#allocation2 + $0xfa] sm:$0xff]
        %v1498 = vld [vmem:[#allocation2 + $0x10a] sm:$0xff]
        %v1499 = vld [vmem:[#allocation2 + $0x112] sm:$0xff]
        %v1500 = vld [vmem:[#allocation2 + $0x122] sm:$0xff]
        %v1501 = vld [vmem:[#allocation2 + $0x12a] sm:$0xff]
        %v1502 = vld [vmem:[#allocation2 + $0x13a] sm:$0xff]
        %v1503 = vld [vmem:[#allocation2 + $0x142] sm:$0xff]
        %v1504 = vld [vmem:[#allocation2 + $0x152] sm:$0xff]
        %v1505 = vld [vmem:[#allocation2 + $0x15a] sm:$0xff]
        %v1506 = vld [vmem:[#allocation2 + $0x16a] sm:$0xff]
        %v1507 = vld [vmem:[#allocation2 + $0x172] sm:$0xff]
        %v1508 = vld [vmem:[%s1379] sm:$0xff]
        %v1509 = vld [vmem:[%s1379 + $0x8] sm:$0xff]
        %v1510 = vld [vmem:[%s1379 + $0x18] sm:$0xff]
        %v1511 = vld [vmem:[%s1379 + $0x20] sm:$0xff]
        %v1512 = vld [vmem:[%s1379 + $0x30] sm:$0xff]
        %v1513 = vld [vmem:[%s1379 + $0x38] sm:$0xff]
        %v1514 = vld [vmem:[%s1379 + $0x48] sm:$0xff]
        %v1515 = vld [vmem:[%s1379 + $0x50] sm:$0xff]
        %v1516 = vld [vmem:[%s1379 + $0x60] sm:$0xff]
        %v1517 = vld [vmem:[%s1379 + $0x68] sm:$0xff]
        %v1518 = vld [vmem:[%s1379 + $0x78] sm:$0xff]
        %v1519 = vld [vmem:[%s1379 + $0x80] sm:$0xff]
        %v1520 = vld [vmem:[%s1379 + $0x90] sm:$0xff]
        %v1521 = vld [vmem:[%s1379 + $0x98] sm:$0xff]
        %v1522 = vld [vmem:[%s1379 + $0xa8] sm:$0xff]
        %v1523 = vld [vmem:[%s1379 + $0xb0] sm:$0xff]
        %v1524 = vld [vmem:[%s1379 + $0xc0] sm:$0xff]
        %v1525 = vld [vmem:[%s1379 + $0xc8] sm:$0xff]
        %v1526 = vld [vmem:[%s1379 + $0xd8] sm:$0xff]
        %v1527 = vld [vmem:[%s1379 + $0xe0] sm:$0xff]
        %v1528 = vld [vmem:[%s1379 + $0xf0] sm:$0xff]
        %v1529 = vld [vmem:[%s1379 + $0xf8] sm:$0xff]
        %v1530 = vld [vmem:[%s1379 + $0x108] sm:$0xff]
        %v1531 = vld [vmem:[%s1379 + $0x110] sm:$0xff]
        %v1532 = vld [vmem:[%s1379 + $0x120] sm:$0xff]
        %v1533 = vld [vmem:[%s1379 + $0x128] sm:$0xff]
        %v1534 = vld [vmem:[%s1379 + $0x138] sm:$0xff]
        %v1535 = vld [vmem:[%s1379 + $0x140] sm:$0xff]
        %v1536 = vld [vmem:[%s1379 + $0x150] sm:$0xff]
        %v1537 = vld [vmem:[%s1379 + $0x158] sm:$0xff]
        %v1538 = vld [vmem:[%s1379 + $0x168] sm:$0xff]
        %v1539 = vld [vmem:[%s1379 + $0x170] sm:$0xff]
        %v1540 = vld [vmem:[%s1379 + $0x1] sm:$0xff]
        %v1541 = vld [vmem:[%s1379 + $0x9] sm:$0xff]
        %v1542 = vld [vmem:[%s1379 + $0x19] sm:$0xff]
        %v1543 = vld [vmem:[%s1379 + $0x21] sm:$0xff]
        %v1544 = vld [vmem:[%s1379 + $0x31] sm:$0xff]
        %v1545 = vld [vmem:[%s1379 + $0x39] sm:$0xff]
        %v1546 = vld [vmem:[%s1379 + $0x49] sm:$0xff]
        %v1547 = vld [vmem:[%s1379 + $0x51] sm:$0xff]
        %v1548 = vld [vmem:[%s1379 + $0x61] sm:$0xff]
        %v1549 = vld [vmem:[%s1379 + $0x69] sm:$0xff]
        %v1550 = vld [vmem:[%s1379 + $0x79] sm:$0xff]
        %v1551 = vld [vmem:[%s1379 + $0x81] sm:$0xff]
        %v1552 = vld [vmem:[%s1379 + $0x91] sm:$0xff]
        %v1553 = vld [vmem:[%s1379 + $0x99] sm:$0xff]
        %v1554 = vld [vmem:[%s1379 + $0xa9] sm:$0xff]
        %v1555 = vld [vmem:[%s1379 + $0xb1] sm:$0xff]
        %v1556 = vld [vmem:[%s1379 + $0xc1] sm:$0xff]
        %v1557 = vld [vmem:[%s1379 + $0xc9] sm:$0xff]
        %v1558 = vld [vmem:[%s1379 + $0xd9] sm:$0xff]
        %v1559 = vld [vmem:[%s1379 + $0xe1] sm:$0xff]
        %v1560 = vld [vmem:[%s1379 + $0xf1] sm:$0xff]
        %v1561 = vld [vmem:[%s1379 + $0xf9] sm:$0xff]
        %v1562 = vld [vmem:[%s1379 + $0x109] sm:$0xff]
        %v1563 = vld [vmem:[%s1379 + $0x111] sm:$0xff]
        %v1564 = vld [vmem:[%s1379 + $0x121] sm:$0xff]
        %v1565 = vld [vmem:[%s1379 + $0x129] sm:$0xff]
        %v1566 = vld [vmem:[%s1379 + $0x139] sm:$0xff]
        %v1567 = vld [vmem:[%s1379 + $0x141] sm:$0xff]
        %v1568 = vld [vmem:[%s1379 + $0x151] sm:$0xff]
        %v1569 = vld [vmem:[%s1379 + $0x159] sm:$0xff]
        %v1570 = vld [vmem:[%s1379 + $0x169] sm:$0xff]
        %v1571 = vld [vmem:[%s1379 + $0x171] sm:$0xff]
        %v1572 = vld [vmem:[%s1379 + $0x2] sm:$0xff]
        %v1573 = vld [vmem:[%s1379 + $0xa] sm:$0xff]
        %v1574 = vld [vmem:[%s1379 + $0x1a] sm:$0xff]
        %v1575 = vld [vmem:[%s1379 + $0x22] sm:$0xff]
        %v1576 = vld [vmem:[%s1379 + $0x32] sm:$0xff]
        %v1577 = vld [vmem:[%s1379 + $0x3a] sm:$0xff]
        %v1578 = vld [vmem:[%s1379 + $0x4a] sm:$0xff]
        %v1579 = vld [vmem:[%s1379 + $0x52] sm:$0xff]
        %v1580 = vld [vmem:[%s1379 + $0x62] sm:$0xff]
        %v1581 = vld [vmem:[%s1379 + $0x6a] sm:$0xff]
        %v1582 = vld [vmem:[%s1379 + $0x7a] sm:$0xff]
        %v1583 = vld [vmem:[%s1379 + $0x82] sm:$0xff]
        %v1584 = vld [vmem:[%s1379 + $0x92] sm:$0xff]
        %v1585 = vld [vmem:[%s1379 + $0x9a] sm:$0xff]
        %v1586 = vld [vmem:[%s1379 + $0xaa] sm:$0xff]
        %v1587 = vld [vmem:[%s1379 + $0xb2] sm:$0xff]
        %v1588 = vld [vmem:[%s1379 + $0xc2] sm:$0xff]
        %v1589 = vld [vmem:[%s1379 + $0xca] sm:$0xff]
        %v1590 = vld [vmem:[%s1379 + $0xda] sm:$0xff]
        %v1591 = vld [vmem:[%s1379 + $0xe2] sm:$0xff]
        %v1592 = vld [vmem:[%s1379 + $0xf2] sm:$0xff]
        %v1593 = vld [vmem:[%s1379 + $0xfa] sm:$0xff]
        %v1594 = vld [vmem:[%s1379 + $0x10a] sm:$0xff]
        %v1595 = vld [vmem:[%s1379 + $0x112] sm:$0xff]
        %v1596 = vld [vmem:[%s1379 + $0x122] sm:$0xff]
        %v1597 = vld [vmem:[%s1379 + $0x12a] sm:$0xff]
        %v1598 = vld [vmem:[%s1379 + $0x13a] sm:$0xff]
        %v1599 = vld [vmem:[%s1379 + $0x142] sm:$0xff]
        %v1600 = vld [vmem:[%s1379 + $0x152] sm:$0xff]
        %v1601 = vld [vmem:[%s1379 + $0x15a] sm:$0xff]
        %v1602 = vld [vmem:[%s1379 + $0x16a] sm:$0xff]
        %v1603 = vld [vmem:[%s1379 + $0x172] sm:$0xff]
        %s1604 = scalar_lea.vmem [#allocation2], 48
        %v1605 = vld [vmem:[%s1604] sm:$0xff]
        %v1606 = vld [vmem:[%s1604 + $0x8] sm:$0xff]
        %v1607 = vld [vmem:[%s1604 + $0x18] sm:$0xff]
        %v1608 = vld [vmem:[%s1604 + $0x20] sm:$0xff]
        %v1609 = vld [vmem:[%s1604 + $0x30] sm:$0xff]
        %v1610 = vld [vmem:[%s1604 + $0x38] sm:$0xff]
        %v1611 = vld [vmem:[%s1604 + $0x48] sm:$0xff]
        %v1612 = vld [vmem:[%s1604 + $0x50] sm:$0xff]
        %v1613 = vld [vmem:[%s1604 + $0x60] sm:$0xff]
        %v1614 = vld [vmem:[%s1604 + $0x68] sm:$0xff]
        %v1615 = vld [vmem:[%s1604 + $0x78] sm:$0xff]
        %v1616 = vld [vmem:[%s1604 + $0x80] sm:$0xff]
        %v1617 = vld [vmem:[%s1604 + $0x90] sm:$0xff]
        %v1618 = vld [vmem:[%s1604 + $0x98] sm:$0xff]
        %v1619 = vld [vmem:[%s1604 + $0xa8] sm:$0xff]
        %v1620 = vld [vmem:[%s1604 + $0xb0] sm:$0xff]
        %v1621 = vld [vmem:[%s1604 + $0xc0] sm:$0xff]
        %v1622 = vld [vmem:[%s1604 + $0xc8] sm:$0xff]
        %v1623 = vld [vmem:[%s1604 + $0xd8] sm:$0xff]
        %v1624 = vld [vmem:[%s1604 + $0xe0] sm:$0xff]
        %v1625 = vld [vmem:[%s1604 + $0xf0] sm:$0xff]
        %v1626 = vld [vmem:[%s1604 + $0xf8] sm:$0xff]
        %v1627 = vld [vmem:[%s1604 + $0x108] sm:$0xff]
        %v1628 = vld [vmem:[%s1604 + $0x110] sm:$0xff]
        %v1629 = vld [vmem:[%s1604 + $0x120] sm:$0xff]
        %v1630 = vld [vmem:[%s1604 + $0x128] sm:$0xff]
        %v1631 = vld [vmem:[%s1604 + $0x138] sm:$0xff]
        %v1632 = vld [vmem:[%s1604 + $0x140] sm:$0xff]
        %v1633 = vld [vmem:[%s1604 + $0x150] sm:$0xff]
        %v1634 = vld [vmem:[%s1604 + $0x158] sm:$0xff]
        %v1635 = vld [vmem:[%s1604 + $0x168] sm:$0xff]
        %v1636 = vld [vmem:[%s1604 + $0x170] sm:$0xff]
        %v1637 = vld [vmem:[%s1604 + $0x1] sm:$0xff]
        %v1638 = vld [vmem:[%s1604 + $0x9] sm:$0xff]
        %v1639 = vld [vmem:[%s1604 + $0x19] sm:$0xff]
        %v1640 = vld [vmem:[%s1604 + $0x21] sm:$0xff]
        %v1641 = vld [vmem:[%s1604 + $0x31] sm:$0xff]
        %v1642 = vld [vmem:[%s1604 + $0x39] sm:$0xff]
        %v1643 = vld [vmem:[%s1604 + $0x49] sm:$0xff]
        %v1644 = vld [vmem:[%s1604 + $0x51] sm:$0xff]
        %v1645 = vld [vmem:[%s1604 + $0x61] sm:$0xff]
        %v1646 = vld [vmem:[%s1604 + $0x69] sm:$0xff]
        %v1647 = vld [vmem:[%s1604 + $0x79] sm:$0xff]
        %v1648 = vld [vmem:[%s1604 + $0x81] sm:$0xff]
        %v1649 = vld [vmem:[%s1604 + $0x91] sm:$0xff]
        %v1650 = vld [vmem:[%s1604 + $0x99] sm:$0xff]
        %v1651 = vld [vmem:[%s1604 + $0xa9] sm:$0xff]
        %v1652 = vld [vmem:[%s1604 + $0xb1] sm:$0xff]
        %v1653 = vld [vmem:[%s1604 + $0xc1] sm:$0xff]
        %v1654 = vld [vmem:[%s1604 + $0xc9] sm:$0xff]
        %v1655 = vld [vmem:[%s1604 + $0xd9] sm:$0xff]
        %v1656 = vld [vmem:[%s1604 + $0xe1] sm:$0xff]
        %v1657 = vld [vmem:[%s1604 + $0xf1] sm:$0xff]
        %v1658 = vld [vmem:[%s1604 + $0xf9] sm:$0xff]
        %v1659 = vld [vmem:[%s1604 + $0x109] sm:$0xff]
        %v1660 = vld [vmem:[%s1604 + $0x111] sm:$0xff]
        %v1661 = vld [vmem:[%s1604 + $0x121] sm:$0xff]
        %v1662 = vld [vmem:[%s1604 + $0x129] sm:$0xff]
        %v1663 = vld [vmem:[%s1604 + $0x139] sm:$0xff]
        %v1664 = vld [vmem:[%s1604 + $0x141] sm:$0xff]
        %v1665 = vld [vmem:[%s1604 + $0x151] sm:$0xff]
        %v1666 = vld [vmem:[%s1604 + $0x159] sm:$0xff]
        %v1667 = vld [vmem:[%s1604 + $0x169] sm:$0xff]
        %v1668 = vld [vmem:[%s1604 + $0x171] sm:$0xff]
        %v1669 = vld [vmem:[%s1604 + $0x2] sm:$0xff]
        %v1670 = vld [vmem:[%s1604 + $0xa] sm:$0xff]
        %v1671 = vld [vmem:[%s1604 + $0x1a] sm:$0xff]
        %v1672 = vld [vmem:[%s1604 + $0x22] sm:$0xff]
        %v1673 = vld [vmem:[%s1604 + $0x32] sm:$0xff]
        %v1674 = vld [vmem:[%s1604 + $0x3a] sm:$0xff]
        %v1675 = vld [vmem:[%s1604 + $0x4a] sm:$0xff]
        %v1676 = vld [vmem:[%s1604 + $0x52] sm:$0xff]
        %v1677 = vld [vmem:[%s1604 + $0x62] sm:$0xff]
        %v1678 = vld [vmem:[%s1604 + $0x6a] sm:$0xff]
        %v1679 = vld [vmem:[%s1604 + $0x7a] sm:$0xff]
        %v1680 = vld [vmem:[%s1604 + $0x82] sm:$0xff]
        %v1681 = vld [vmem:[%s1604 + $0x92] sm:$0xff]
        %v1682 = vld [vmem:[%s1604 + $0x9a] sm:$0xff]
        %v1683 = vld [vmem:[%s1604 + $0xaa] sm:$0xff]
        %v1684 = vld [vmem:[%s1604 + $0xb2] sm:$0xff]
        %v1685 = vld [vmem:[%s1604 + $0xc2] sm:$0xff]
        %v1686 = vld [vmem:[%s1604 + $0xca] sm:$0xff]
        %v1687 = vld [vmem:[%s1604 + $0xda] sm:$0xff]
        %v1688 = vld [vmem:[%s1604 + $0xe2] sm:$0xff]
        %v1689 = vld [vmem:[%s1604 + $0xf2] sm:$0xff]
        %v1690 = vld [vmem:[%s1604 + $0xfa] sm:$0xff]
        %v1691 = vld [vmem:[%s1604 + $0x10a] sm:$0xff]
        %v1692 = vld [vmem:[%s1604 + $0x112] sm:$0xff]
        %v1693 = vld [vmem:[%s1604 + $0x122] sm:$0xff]
        %v1694 = vld [vmem:[%s1604 + $0x12a] sm:$0xff]
        %v1695 = vld [vmem:[%s1604 + $0x13a] sm:$0xff]
        %v1696 = vld [vmem:[%s1604 + $0x142] sm:$0xff]
        %v1697 = vld [vmem:[%s1604 + $0x152] sm:$0xff]
        %v1698 = vld [vmem:[%s1604 + $0x15a] sm:$0xff]
        %v1699 = vld [vmem:[%s1604 + $0x16a] sm:$0xff]
        %v1700 = vld [vmem:[%s1604 + $0x172] sm:$0xff]
        %v1701 = vpack.c.bf16 %v1413, %v1412
        %v1702 = vpack.c.bf16 %v1415, %v1414
        %v1703 = vpack.c.bf16 %v1417, %v1416
        %v1704 = vpack.c.bf16 %v1419, %v1418
        %v1705 = vpack.c.bf16 %v1421, %v1420
        %v1706 = vpack.c.bf16 %v1423, %v1422
        %v1707 = vpack.c.bf16 %v1425, %v1424
        %v1708 = vpack.c.bf16 %v1427, %v1426
        %v1709 = vpack.c.bf16 %v1429, %v1428
        %v1710 = vpack.c.bf16 %v1431, %v1430
        %v1711 = vpack.c.bf16 %v1433, %v1432
        %v1712 = vpack.c.bf16 %v1435, %v1434
        %v1713 = vpack.c.bf16 %v1437, %v1436
        %v1714 = vpack.c.bf16 %v1439, %v1438
        %v1715 = vpack.c.bf16 %v1441, %v1440
        %v1716 = vpack.c.bf16 %v1443, %v1442
        %v1717 = vld [vmem:[%s3] sm:$0xf]
        %v1718 = vld [vmem:[%s3 + $0x4] sm:$0xf]
        %v1719 = vld [vmem:[%s3 + $0x8] sm:$0xf]
        %v1720 = vld [vmem:[%s3 + $0xc] sm:$0xf]
        %v1721 = vld [vmem:[%s3 + $0x10] sm:$0xf]
        %v1722 = vld [vmem:[%s3 + $0x14] sm:$0xf]
        %v1723 = vld [vmem:[%s3 + $0x18] sm:$0xf]
        %v1724 = vld [vmem:[%s3 + $0x1c] sm:$0xf]
        %v1725 = vpack.c.bf16 %v1445, %v1444
        %v1726 = vpack.c.bf16 %v1447, %v1446
        %v1727 = vpack.c.bf16 %v1449, %v1448
        %v1728 = vpack.c.bf16 %v1451, %v1450
        %v1729 = vpack.c.bf16 %v1453, %v1452
        %v1730 = vpack.c.bf16 %v1455, %v1454
        %v1731 = vpack.c.bf16 %v1457, %v1456
        %v1732 = vpack.c.bf16 %v1459, %v1458
        %v1733 = vpack.c.bf16 %v1461, %v1460
        %v1734 = vpack.c.bf16 %v1463, %v1462
        %v1735 = vpack.c.bf16 %v1465, %v1464
        %v1736 = vpack.c.bf16 %v1467, %v1466
        %v1737 = vpack.c.bf16 %v1469, %v1468
        %v1738 = vpack.c.bf16 %v1471, %v1470
        %v1739 = vpack.c.bf16 %v1473, %v1472
        %v1740 = vpack.c.bf16 %v1475, %v1474
        %v1741 = vld [vmem:[%s3 + $0x20] sm:$0xf]
        %v1742 = vld [vmem:[%s3 + $0x24] sm:$0xf]
        %v1743 = vld [vmem:[%s3 + $0x28] sm:$0xf]
        %v1744 = vld [vmem:[%s3 + $0x2c] sm:$0xf]
        %v1745 = vld [vmem:[%s3 + $0x30] sm:$0xf]
        %v1746 = vld [vmem:[%s3 + $0x34] sm:$0xf]
        %v1747 = vld [vmem:[%s3 + $0x38] sm:$0xf]
        %v1748 = vld [vmem:[%s3 + $0x3c] sm:$0xf]
        %v1757 = vunpack.c.l.b16 %v1741
        %v1758 = vunpack.c.l.b16 %v1742
        %v1759 = vunpack.c.l.b16 %v1743
        %v1760 = vunpack.c.l.b16 %v1744
        %v1761 = vunpack.c.l.b16 %v1745
        %v1762 = vunpack.c.l.b16 %v1746
        %v1763 = vunpack.c.l.b16 %v1747
        %v1764 = vunpack.c.l.b16 %v1748
        %v1765 = vpack.c.b16 %v1758, %v1757
        %v1766 = vpack.c.b16 %v1760, %v1759
        %v1767 = vpack.c.b16 %v1762, %v1761
        %v1768 = vpack.c.b16 %v1764, %v1763
        %v1774 = vsel %vm1145, %v1725, 0
        %v1777 = vsel %vm1145, %v1726, 0
        %v1780 = vsel %vm1145, %v1727, 0
        %v1783 = vsel %vm1145, %v1728, 0
        %v1786 = vsel %vm1145, %v1729, 0
        %v1789 = vsel %vm1145, %v1730, 0
        %v1792 = vsel %vm1145, %v1731, 0
        %v1795 = vsel %vm1145, %v1732, 0
        %v1798 = vsel %vm1145, %v1733, 0
        %v1801 = vsel %vm1145, %v1734, 0
        %v1804 = vsel %vm1145, %v1735, 0
        %v1807 = vsel %vm1145, %v1736, 0
        %v1810 = vsel %vm1145, %v1737, 0
        %v1813 = vsel %vm1145, %v1738, 0
        %v1816 = vsel %vm1145, %v1739, 0
        %v1819 = vsel %vm1145, %v1740, 0
        %1821 = vmatpush.bf16.msra.mxu0 0
        %1822 = vmatpush.bf16.msra.mxu0 0
        %1823 = vmatpush.bf16.msra.mxu0 0
        %1824 = vmatpush.bf16.msra.mxu0 0
        %1825 = vmatpush.bf16.msra.mxu0 %v1768
        %1826 = vmatpush.bf16.msra.mxu0 %v1767
        %1827 = vmatpush.bf16.msra.mxu0 %v1766
        %1828 = vmatpush.bf16.msra.mxu0 %v1765
        %1829 = vmatmul.bf16.gmra.mxu0 %v1774
        %v1830 = vpop.f32.mrf.mxu0
        %v1831 = vadd.f32 0.0, %v1830
        %v1832 = vpop.f32.mrf.mxu0
        %v1833 = vadd.f32 0.0, %v1832
        %1834 = vmatmul.bf16.gmra.mxu0 %v1777
        %v1835 = vpop.f32.mrf.mxu0
        %v1836 = vadd.f32 0.0, %v1835
        %v1837 = vpop.f32.mrf.mxu0
        %v1838 = vadd.f32 0.0, %v1837
        %1839 = vmatmul.bf16.gmra.mxu0 %v1780
        %v1840 = vpop.f32.mrf.mxu0
        %v1841 = vadd.f32 0.0, %v1840
        %v1842 = vpop.f32.mrf.mxu0
        %v1843 = vadd.f32 0.0, %v1842
        %1844 = vmatmul.bf16.gmra.mxu0 %v1783
        %v1845 = vpop.f32.mrf.mxu0
        %v1846 = vadd.f32 0.0, %v1845
        %v1847 = vpop.f32.mrf.mxu0
        %v1848 = vadd.f32 0.0, %v1847
        %1849 = vmatmul.bf16.gmra.mxu0 %v1786
        %v1850 = vpop.f32.mrf.mxu0
        %v1851 = vadd.f32 0.0, %v1850
        %v1852 = vpop.f32.mrf.mxu0
        %v1853 = vadd.f32 0.0, %v1852
        %1854 = vmatmul.bf16.gmra.mxu0 %v1789
        %v1855 = vpop.f32.mrf.mxu0
        %v1856 = vadd.f32 0.0, %v1855
        %v1857 = vpop.f32.mrf.mxu0
        %v1858 = vadd.f32 0.0, %v1857
        %1859 = vmatmul.bf16.gmra.mxu0 %v1792
        %v1860 = vpop.f32.mrf.mxu0
        %v1861 = vadd.f32 0.0, %v1860
        %v1862 = vpop.f32.mrf.mxu0
        %v1863 = vadd.f32 0.0, %v1862
        %1864 = vmatmul.bf16.gmra.mxu0 %v1795
        %v1865 = vpop.f32.mrf.mxu0
        %v1866 = vadd.f32 0.0, %v1865
        %v1867 = vpop.f32.mrf.mxu0
        %v1868 = vadd.f32 0.0, %v1867
        %1869 = vmatmul.bf16.gmra.mxu0 %v1798
        %v1870 = vpop.f32.mrf.mxu0
        %v1871 = vadd.f32 0.0, %v1870
        %v1872 = vpop.f32.mrf.mxu0
        %v1873 = vadd.f32 0.0, %v1872
        %1874 = vmatmul.bf16.gmra.mxu0 %v1801
        %v1875 = vpop.f32.mrf.mxu0
        %v1876 = vadd.f32 0.0, %v1875
        %v1877 = vpop.f32.mrf.mxu0
        %v1878 = vadd.f32 0.0, %v1877
        %1879 = vmatmul.bf16.gmra.mxu0 %v1804
        %v1880 = vpop.f32.mrf.mxu0
        %v1881 = vadd.f32 0.0, %v1880
        %v1882 = vpop.f32.mrf.mxu0
        %v1883 = vadd.f32 0.0, %v1882
        %1884 = vmatmul.bf16.gmra.mxu0 %v1807
        %v1885 = vpop.f32.mrf.mxu0
        %v1886 = vadd.f32 0.0, %v1885
        %v1887 = vpop.f32.mrf.mxu0
        %v1888 = vadd.f32 0.0, %v1887
        %1889 = vmatmul.bf16.gmra.mxu0 %v1810
        %v1890 = vpop.f32.mrf.mxu0
        %v1891 = vadd.f32 0.0, %v1890
        %v1892 = vpop.f32.mrf.mxu0
        %v1893 = vadd.f32 0.0, %v1892
        %1894 = vmatmul.bf16.gmra.mxu0 %v1813
        %v1895 = vpop.f32.mrf.mxu0
        %v1896 = vadd.f32 0.0, %v1895
        %v1897 = vpop.f32.mrf.mxu0
        %v1898 = vadd.f32 0.0, %v1897
        %1899 = vmatmul.bf16.gmra.mxu0 %v1816
        %v1900 = vpop.f32.mrf.mxu0
        %v1901 = vadd.f32 0.0, %v1900
        %v1902 = vpop.f32.mrf.mxu0
        %v1903 = vadd.f32 0.0, %v1902
        %1904 = vmatmul.bf16.gmra.mxu0 %v1819
        %v1905 = vpop.f32.mrf.mxu0
        %v1906 = vadd.f32 0.0, %v1905
        %v1907 = vpop.f32.mrf.mxu0
        %v1908 = vadd.f32 0.0, %v1907
        %1909 = vdwg.mxu0
        %v1918 = vunpack.c.l.b16 %v1717
        %v1919 = vunpack.c.l.b16 %v1718
        %v1920 = vunpack.c.l.b16 %v1719
        %v1921 = vunpack.c.l.b16 %v1720
        %v1922 = vunpack.c.l.b16 %v1721
        %v1923 = vunpack.c.l.b16 %v1722
        %v1924 = vunpack.c.l.b16 %v1723
        %v1925 = vunpack.c.l.b16 %v1724
        %v1926 = vpack.c.b16 %v1919, %v1918
        %v1927 = vpack.c.b16 %v1921, %v1920
        %v1928 = vpack.c.b16 %v1923, %v1922
        %v1929 = vpack.c.b16 %v1925, %v1924
        %v1935 = vsel %vm1145, %v1701, 0
        %v1938 = vsel %vm1145, %v1702, 0
        %v1941 = vsel %vm1145, %v1703, 0
        %v1944 = vsel %vm1145, %v1704, 0
        %v1947 = vsel %vm1145, %v1705, 0
        %v1950 = vsel %vm1145, %v1706, 0
        %v1953 = vsel %vm1145, %v1707, 0
        %v1956 = vsel %vm1145, %v1708, 0
        %v1959 = vsel %vm1145, %v1709, 0
        %v1962 = vsel %vm1145, %v1710, 0
        %v1965 = vsel %vm1145, %v1711, 0
        %v1968 = vsel %vm1145, %v1712, 0
        %v1971 = vsel %vm1145, %v1713, 0
        %v1974 = vsel %vm1145, %v1714, 0
        %v1977 = vsel %vm1145, %v1715, 0
        %v1980 = vsel %vm1145, %v1716, 0
        %1982 = vmatpush.bf16.msra.mxu0 0
        %1983 = vmatpush.bf16.msra.mxu0 0
        %1984 = vmatpush.bf16.msra.mxu0 0
        %1985 = vmatpush.bf16.msra.mxu0 0
        %1986 = vmatpush.bf16.msra.mxu0 %v1929
        %1987 = vmatpush.bf16.msra.mxu0 %v1928
        %1988 = vmatpush.bf16.msra.mxu0 %v1927
        %1989 = vmatpush.bf16.msra.mxu0 %v1926
        %1990 = vmatmul.bf16.gmra.mxu0 %v1935
        %v1991 = vpop.f32.mrf.mxu0
        %v1992 = vadd.f32 %v1831, %v1991
        %v1993 = vpop.f32.mrf.mxu0
        %v1994 = vadd.f32 %v1833, %v1993
        %1995 = vmatmul.bf16.gmra.mxu0 %v1938
        %v1996 = vpop.f32.mrf.mxu0
        %v1997 = vadd.f32 %v1836, %v1996
        %v1998 = vpop.f32.mrf.mxu0
        %v1999 = vadd.f32 %v1838, %v1998
        %2000 = vmatmul.bf16.gmra.mxu0 %v1941
        %v2001 = vpop.f32.mrf.mxu0
        %v2002 = vadd.f32 %v1841, %v2001
        %v2003 = vpop.f32.mrf.mxu0
        %v2004 = vadd.f32 %v1843, %v2003
        %2005 = vmatmul.bf16.gmra.mxu0 %v1944
        %v2006 = vpop.f32.mrf.mxu0
        %v2007 = vadd.f32 %v1846, %v2006
        %v2008 = vpop.f32.mrf.mxu0
        %v2009 = vadd.f32 %v1848, %v2008
        %2010 = vmatmul.bf16.gmra.mxu0 %v1947
        %v2011 = vpop.f32.mrf.mxu0
        %v2012 = vadd.f32 %v1851, %v2011
        %v2013 = vpop.f32.mrf.mxu0
        %v2014 = vadd.f32 %v1853, %v2013
        %2015 = vmatmul.bf16.gmra.mxu0 %v1950
        %v2016 = vpop.f32.mrf.mxu0
        %v2017 = vadd.f32 %v1856, %v2016
        %v2018 = vpop.f32.mrf.mxu0
        %v2019 = vadd.f32 %v1858, %v2018
        %2020 = vmatmul.bf16.gmra.mxu0 %v1953
        %v2021 = vpop.f32.mrf.mxu0
        %v2022 = vadd.f32 %v1861, %v2021
        %v2023 = vpop.f32.mrf.mxu0
        %v2024 = vadd.f32 %v1863, %v2023
        %2025 = vmatmul.bf16.gmra.mxu0 %v1956
        %v2026 = vpop.f32.mrf.mxu0
        %v2027 = vadd.f32 %v1866, %v2026
        %v2028 = vpop.f32.mrf.mxu0
        %v2029 = vadd.f32 %v1868, %v2028
        %2030 = vmatmul.bf16.gmra.mxu0 %v1959
        %v2031 = vpop.f32.mrf.mxu0
        %v2032 = vadd.f32 %v1871, %v2031
        %v2033 = vpop.f32.mrf.mxu0
        %v2034 = vadd.f32 %v1873, %v2033
        %2035 = vmatmul.bf16.gmra.mxu0 %v1962
        %v2036 = vpop.f32.mrf.mxu0
        %v2037 = vadd.f32 %v1876, %v2036
        %v2038 = vpop.f32.mrf.mxu0
        %v2039 = vadd.f32 %v1878, %v2038
        %2040 = vmatmul.bf16.gmra.mxu0 %v1965
        %v2041 = vpop.f32.mrf.mxu0
        %v2042 = vadd.f32 %v1881, %v2041
        %v2043 = vpop.f32.mrf.mxu0
        %v2044 = vadd.f32 %v1883, %v2043
        %2045 = vmatmul.bf16.gmra.mxu0 %v1968
        %v2046 = vpop.f32.mrf.mxu0
        %v2047 = vadd.f32 %v1886, %v2046
        %v2048 = vpop.f32.mrf.mxu0
        %v2049 = vadd.f32 %v1888, %v2048
        %2050 = vmatmul.bf16.gmra.mxu0 %v1971
        %v2051 = vpop.f32.mrf.mxu0
        %v2052 = vadd.f32 %v1891, %v2051
        %v2053 = vpop.f32.mrf.mxu0
        %v2054 = vadd.f32 %v1893, %v2053
        %2055 = vmatmul.bf16.gmra.mxu0 %v1974
        %v2056 = vpop.f32.mrf.mxu0
        %v2057 = vadd.f32 %v1896, %v2056
        %v2058 = vpop.f32.mrf.mxu0
        %v2059 = vadd.f32 %v1898, %v2058
        %2060 = vmatmul.bf16.gmra.mxu0 %v1977
        %v2061 = vpop.f32.mrf.mxu0
        %v2062 = vadd.f32 %v1901, %v2061
        %v2063 = vpop.f32.mrf.mxu0
        %v2064 = vadd.f32 %v1903, %v2063
        %2065 = vmatmul.bf16.gmra.mxu0 %v1980
        %v2066 = vpop.f32.mrf.mxu0
        %v2067 = vadd.f32 %v1906, %v2066
        %v2068 = vpop.f32.mrf.mxu0
        %v2069 = vadd.f32 %v1908, %v2068
        %2070 = vdwg.mxu0
        %v2071 = vpack.c.bf16 %v1477, %v1476
        %v2072 = vpack.c.bf16 %v1479, %v1478
        %v2073 = vpack.c.bf16 %v1481, %v1480
        %v2074 = vpack.c.bf16 %v1483, %v1482
        %v2075 = vpack.c.bf16 %v1485, %v1484
        %v2076 = vpack.c.bf16 %v1487, %v1486
        %v2077 = vpack.c.bf16 %v1489, %v1488
        %v2078 = vpack.c.bf16 %v1491, %v1490
        %v2079 = vpack.c.bf16 %v1493, %v1492
        %v2080 = vpack.c.bf16 %v1495, %v1494
        %v2081 = vpack.c.bf16 %v1497, %v1496
        %v2082 = vpack.c.bf16 %v1499, %v1498
        %v2083 = vpack.c.bf16 %v1501, %v1500
        %v2084 = vpack.c.bf16 %v1503, %v1502
        %v2085 = vpack.c.bf16 %v1505, %v1504
        %v2086 = vpack.c.bf16 %v1507, %v1506
        %v2087 = vld [vmem:[%s3 + $0x40] sm:$0xf]
        %v2088 = vld [vmem:[%s3 + $0x44] sm:$0xf]
        %v2089 = vld [vmem:[%s3 + $0x48] sm:$0xf]
        %v2090 = vld [vmem:[%s3 + $0x4c] sm:$0xf]
        %v2091 = vld [vmem:[%s3 + $0x50] sm:$0xf]
        %v2092 = vld [vmem:[%s3 + $0x54] sm:$0xf]
        %v2093 = vld [vmem:[%s3 + $0x58] sm:$0xf]
        %v2094 = vld [vmem:[%s3 + $0x5c] sm:$0xf]
        %v2103 = vunpack.c.l.b16 %v2087
        %v2104 = vunpack.c.l.b16 %v2088
        %v2105 = vunpack.c.l.b16 %v2089
        %v2106 = vunpack.c.l.b16 %v2090
        %v2107 = vunpack.c.l.b16 %v2091
        %v2108 = vunpack.c.l.b16 %v2092
        %v2109 = vunpack.c.l.b16 %v2093
        %v2110 = vunpack.c.l.b16 %v2094
        %v2111 = vpack.c.b16 %v2104, %v2103
        %v2112 = vpack.c.b16 %v2106, %v2105
        %v2113 = vpack.c.b16 %v2108, %v2107
        %v2114 = vpack.c.b16 %v2110, %v2109
        %v2120 = vsel %vm1145, %v2071, 0
        %v2123 = vsel %vm1145, %v2072, 0
        %v2126 = vsel %vm1145, %v2073, 0
        %v2129 = vsel %vm1145, %v2074, 0
        %v2132 = vsel %vm1145, %v2075, 0
        %v2135 = vsel %vm1145, %v2076, 0
        %v2138 = vsel %vm1145, %v2077, 0
        %v2141 = vsel %vm1145, %v2078, 0
        %v2144 = vsel %vm1145, %v2079, 0
        %v2147 = vsel %vm1145, %v2080, 0
        %v2150 = vsel %vm1145, %v2081, 0
        %v2153 = vsel %vm1145, %v2082, 0
        %v2156 = vsel %vm1145, %v2083, 0
        %v2159 = vsel %vm1145, %v2084, 0
        %v2162 = vsel %vm1145, %v2085, 0
        %v2165 = vsel %vm1145, %v2086, 0
        %2167 = vmatpush.bf16.msra.mxu0 0
        %2168 = vmatpush.bf16.msra.mxu0 0
        %2169 = vmatpush.bf16.msra.mxu0 0
        %2170 = vmatpush.bf16.msra.mxu0 0
        %2171 = vmatpush.bf16.msra.mxu0 %v2114
        %2172 = vmatpush.bf16.msra.mxu0 %v2113
        %2173 = vmatpush.bf16.msra.mxu0 %v2112
        %2174 = vmatpush.bf16.msra.mxu0 %v2111
        %2175 = vmatmul.bf16.gmra.mxu0 %v2120
        %v2176 = vpop.f32.mrf.mxu0
        %v2177 = vadd.f32 0.0, %v2176
        %v2178 = vpop.f32.mrf.mxu0
        %v2179 = vadd.f32 0.0, %v2178
        %2180 = vmatmul.bf16.gmra.mxu0 %v2123
        %v2181 = vpop.f32.mrf.mxu0
        %v2182 = vadd.f32 0.0, %v2181
        %v2183 = vpop.f32.mrf.mxu0
        %v2184 = vadd.f32 0.0, %v2183
        %2185 = vmatmul.bf16.gmra.mxu0 %v2126
        %v2186 = vpop.f32.mrf.mxu0
        %v2187 = vadd.f32 0.0, %v2186
        %v2188 = vpop.f32.mrf.mxu0
        %v2189 = vadd.f32 0.0, %v2188
        %2190 = vmatmul.bf16.gmra.mxu0 %v2129
        %v2191 = vpop.f32.mrf.mxu0
        %v2192 = vadd.f32 0.0, %v2191
        %v2193 = vpop.f32.mrf.mxu0
        %v2194 = vadd.f32 0.0, %v2193
        %2195 = vmatmul.bf16.gmra.mxu0 %v2132
        %v2196 = vpop.f32.mrf.mxu0
        %v2197 = vadd.f32 0.0, %v2196
        %v2198 = vpop.f32.mrf.mxu0
        %v2199 = vadd.f32 0.0, %v2198
        %2200 = vmatmul.bf16.gmra.mxu0 %v2135
        %v2201 = vpop.f32.mrf.mxu0
        %v2202 = vadd.f32 0.0, %v2201
        %v2203 = vpop.f32.mrf.mxu0
        %v2204 = vadd.f32 0.0, %v2203
        %2205 = vmatmul.bf16.gmra.mxu0 %v2138
        %v2206 = vpop.f32.mrf.mxu0
        %v2207 = vadd.f32 0.0, %v2206
        %v2208 = vpop.f32.mrf.mxu0
        %v2209 = vadd.f32 0.0, %v2208
        %2210 = vmatmul.bf16.gmra.mxu0 %v2141
        %v2211 = vpop.f32.mrf.mxu0
        %v2212 = vadd.f32 0.0, %v2211
        %v2213 = vpop.f32.mrf.mxu0
        %v2214 = vadd.f32 0.0, %v2213
        %2215 = vmatmul.bf16.gmra.mxu0 %v2144
        %v2216 = vpop.f32.mrf.mxu0
        %v2217 = vadd.f32 0.0, %v2216
        %v2218 = vpop.f32.mrf.mxu0
        %v2219 = vadd.f32 0.0, %v2218
        %2220 = vmatmul.bf16.gmra.mxu0 %v2147
        %v2221 = vpop.f32.mrf.mxu0
        %v2222 = vadd.f32 0.0, %v2221
        %v2223 = vpop.f32.mrf.mxu0
        %v2224 = vadd.f32 0.0, %v2223
        %2225 = vmatmul.bf16.gmra.mxu0 %v2150
        %v2226 = vpop.f32.mrf.mxu0
        %v2227 = vadd.f32 0.0, %v2226
        %v2228 = vpop.f32.mrf.mxu0
        %v2229 = vadd.f32 0.0, %v2228
        %2230 = vmatmul.bf16.gmra.mxu0 %v2153
        %v2231 = vpop.f32.mrf.mxu0
        %v2232 = vadd.f32 0.0, %v2231
        %v2233 = vpop.f32.mrf.mxu0
        %v2234 = vadd.f32 0.0, %v2233
        %2235 = vmatmul.bf16.gmra.mxu0 %v2156
        %v2236 = vpop.f32.mrf.mxu0
        %v2237 = vadd.f32 0.0, %v2236
        %v2238 = vpop.f32.mrf.mxu0
        %v2239 = vadd.f32 0.0, %v2238
        %2240 = vmatmul.bf16.gmra.mxu0 %v2159
        %v2241 = vpop.f32.mrf.mxu0
        %v2242 = vadd.f32 0.0, %v2241
        %v2243 = vpop.f32.mrf.mxu0
        %v2244 = vadd.f32 0.0, %v2243
        %2245 = vmatmul.bf16.gmra.mxu0 %v2162
        %v2246 = vpop.f32.mrf.mxu0
        %v2247 = vadd.f32 0.0, %v2246
        %v2248 = vpop.f32.mrf.mxu0
        %v2249 = vadd.f32 0.0, %v2248
        %2250 = vmatmul.bf16.gmra.mxu0 %v2165
        %v2251 = vpop.f32.mrf.mxu0
        %v2252 = vadd.f32 0.0, %v2251
        %v2253 = vpop.f32.mrf.mxu0
        %v2254 = vadd.f32 0.0, %v2253
        %2255 = vdwg.mxu0
        %v2256 = vadd.f32 %v1992, %v2177
        %v2257 = vadd.f32 %v1994, %v2179
        %v2258 = vadd.f32 %v1997, %v2182
        %v2259 = vadd.f32 %v1999, %v2184
        %v2260 = vadd.f32 %v2002, %v2187
        %v2261 = vadd.f32 %v2004, %v2189
        %v2262 = vadd.f32 %v2007, %v2192
        %v2263 = vadd.f32 %v2009, %v2194
        %v2264 = vadd.f32 %v2012, %v2197
        %v2265 = vadd.f32 %v2014, %v2199
        %v2266 = vadd.f32 %v2017, %v2202
        %v2267 = vadd.f32 %v2019, %v2204
        %v2268 = vadd.f32 %v2022, %v2207
        %v2269 = vadd.f32 %v2024, %v2209
        %v2270 = vadd.f32 %v2027, %v2212
        %v2271 = vadd.f32 %v2029, %v2214
        %v2272 = vadd.f32 %v2032, %v2217
        %v2273 = vadd.f32 %v2034, %v2219
        %v2274 = vadd.f32 %v2037, %v2222
        %v2275 = vadd.f32 %v2039, %v2224
        %v2276 = vadd.f32 %v2042, %v2227
        %v2277 = vadd.f32 %v2044, %v2229
        %v2278 = vadd.f32 %v2047, %v2232
        %v2279 = vadd.f32 %v2049, %v2234
        %v2280 = vadd.f32 %v2052, %v2237
        %v2281 = vadd.f32 %v2054, %v2239
        %v2282 = vadd.f32 %v2057, %v2242
        %v2283 = vadd.f32 %v2059, %v2244
        %v2284 = vadd.f32 %v2062, %v2247
        %v2285 = vadd.f32 %v2064, %v2249
        %v2286 = vadd.f32 %v2067, %v2252
        %v2287 = vadd.f32 %v2069, %v2254
        %v2288 = vpack.c.bf16 %v1509, %v1508
        %v2289 = vpack.c.bf16 %v1511, %v1510
        %v2290 = vpack.c.bf16 %v1513, %v1512
        %v2291 = vpack.c.bf16 %v1515, %v1514
        %v2292 = vpack.c.bf16 %v1517, %v1516
        %v2293 = vpack.c.bf16 %v1519, %v1518
        %v2294 = vpack.c.bf16 %v1521, %v1520
        %v2295 = vpack.c.bf16 %v1523, %v1522
        %v2296 = vpack.c.bf16 %v1525, %v1524
        %v2297 = vpack.c.bf16 %v1527, %v1526
        %v2298 = vpack.c.bf16 %v1529, %v1528
        %v2299 = vpack.c.bf16 %v1531, %v1530
        %v2300 = vpack.c.bf16 %v1533, %v1532
        %v2301 = vpack.c.bf16 %v1535, %v1534
        %v2302 = vpack.c.bf16 %v1537, %v1536
        %v2303 = vpack.c.bf16 %v1539, %v1538
        %v2304 = vld [vmem:[%s3 + $0x60] sm:$0xf]
        %v2305 = vld [vmem:[%s3 + $0x64] sm:$0xf]
        %v2306 = vld [vmem:[%s3 + $0x68] sm:$0xf]
        %v2307 = vld [vmem:[%s3 + $0x6c] sm:$0xf]
        %v2308 = vld [vmem:[%s3 + $0x70] sm:$0xf]
        %v2309 = vld [vmem:[%s3 + $0x74] sm:$0xf]
        %v2310 = vld [vmem:[%s3 + $0x78] sm:$0xf]
        %v2311 = vld [vmem:[%s3 + $0x7c] sm:$0xf]
        %v2320 = vunpack.c.l.b16 %v2304
        %v2321 = vunpack.c.l.b16 %v2305
        %v2322 = vunpack.c.l.b16 %v2306
        %v2323 = vunpack.c.l.b16 %v2307
        %v2324 = vunpack.c.l.b16 %v2308
        %v2325 = vunpack.c.l.b16 %v2309
        %v2326 = vunpack.c.l.b16 %v2310
        %v2327 = vunpack.c.l.b16 %v2311
        %v2328 = vpack.c.b16 %v2321, %v2320
        %v2329 = vpack.c.b16 %v2323, %v2322
        %v2330 = vpack.c.b16 %v2325, %v2324
        %v2331 = vpack.c.b16 %v2327, %v2326
        %v2337 = vsel %vm1145, %v2288, 0
        %v2340 = vsel %vm1145, %v2289, 0
        %v2343 = vsel %vm1145, %v2290, 0
        %v2346 = vsel %vm1145, %v2291, 0
        %v2349 = vsel %vm1145, %v2292, 0
        %v2352 = vsel %vm1145, %v2293, 0
        %v2355 = vsel %vm1145, %v2294, 0
        %v2358 = vsel %vm1145, %v2295, 0
        %v2361 = vsel %vm1145, %v2296, 0
        %v2364 = vsel %vm1145, %v2297, 0
        %v2367 = vsel %vm1145, %v2298, 0
        %v2370 = vsel %vm1145, %v2299, 0
        %v2373 = vsel %vm1145, %v2300, 0
        %v2376 = vsel %vm1145, %v2301, 0
        %v2379 = vsel %vm1145, %v2302, 0
        %v2382 = vsel %vm1145, %v2303, 0
        %2384 = vmatpush.bf16.msra.mxu0 0
        %2385 = vmatpush.bf16.msra.mxu0 0
        %2386 = vmatpush.bf16.msra.mxu0 0
        %2387 = vmatpush.bf16.msra.mxu0 0
        %2388 = vmatpush.bf16.msra.mxu0 %v2331
        %2389 = vmatpush.bf16.msra.mxu0 %v2330
        %2390 = vmatpush.bf16.msra.mxu0 %v2329
        %2391 = vmatpush.bf16.msra.mxu0 %v2328
        %2392 = vmatmul.bf16.gmra.mxu0 %v2337
        %v2393 = vpop.f32.mrf.mxu0
        %v2394 = vadd.f32 0.0, %v2393
        %v2395 = vpop.f32.mrf.mxu0
        %v2396 = vadd.f32 0.0, %v2395
        %2397 = vmatmul.bf16.gmra.mxu0 %v2340
        %v2398 = vpop.f32.mrf.mxu0
        %v2399 = vadd.f32 0.0, %v2398
        %v2400 = vpop.f32.mrf.mxu0
        %v2401 = vadd.f32 0.0, %v2400
        %2402 = vmatmul.bf16.gmra.mxu0 %v2343
        %v2403 = vpop.f32.mrf.mxu0
        %v2404 = vadd.f32 0.0, %v2403
        %v2405 = vpop.f32.mrf.mxu0
        %v2406 = vadd.f32 0.0, %v2405
        %2407 = vmatmul.bf16.gmra.mxu0 %v2346
        %v2408 = vpop.f32.mrf.mxu0
        %v2409 = vadd.f32 0.0, %v2408
        %v2410 = vpop.f32.mrf.mxu0
        %v2411 = vadd.f32 0.0, %v2410
        %2412 = vmatmul.bf16.gmra.mxu0 %v2349
        %v2413 = vpop.f32.mrf.mxu0
        %v2414 = vadd.f32 0.0, %v2413
        %v2415 = vpop.f32.mrf.mxu0
        %v2416 = vadd.f32 0.0, %v2415
        %2417 = vmatmul.bf16.gmra.mxu0 %v2352
        %v2418 = vpop.f32.mrf.mxu0
        %v2419 = vadd.f32 0.0, %v2418
        %v2420 = vpop.f32.mrf.mxu0
        %v2421 = vadd.f32 0.0, %v2420
        %2422 = vmatmul.bf16.gmra.mxu0 %v2355
        %v2423 = vpop.f32.mrf.mxu0
        %v2424 = vadd.f32 0.0, %v2423
        %v2425 = vpop.f32.mrf.mxu0
        %v2426 = vadd.f32 0.0, %v2425
        %2427 = vmatmul.bf16.gmra.mxu0 %v2358
        %v2428 = vpop.f32.mrf.mxu0
        %v2429 = vadd.f32 0.0, %v2428
        %v2430 = vpop.f32.mrf.mxu0
        %v2431 = vadd.f32 0.0, %v2430
        %2432 = vmatmul.bf16.gmra.mxu0 %v2361
        %v2433 = vpop.f32.mrf.mxu0
        %v2434 = vadd.f32 0.0, %v2433
        %v2435 = vpop.f32.mrf.mxu0
        %v2436 = vadd.f32 0.0, %v2435
        %2437 = vmatmul.bf16.gmra.mxu0 %v2364
        %v2438 = vpop.f32.mrf.mxu0
        %v2439 = vadd.f32 0.0, %v2438
        %v2440 = vpop.f32.mrf.mxu0
        %v2441 = vadd.f32 0.0, %v2440
        %2442 = vmatmul.bf16.gmra.mxu0 %v2367
        %v2443 = vpop.f32.mrf.mxu0
        %v2444 = vadd.f32 0.0, %v2443
        %v2445 = vpop.f32.mrf.mxu0
        %v2446 = vadd.f32 0.0, %v2445
        %2447 = vmatmul.bf16.gmra.mxu0 %v2370
        %v2448 = vpop.f32.mrf.mxu0
        %v2449 = vadd.f32 0.0, %v2448
        %v2450 = vpop.f32.mrf.mxu0
        %v2451 = vadd.f32 0.0, %v2450
        %2452 = vmatmul.bf16.gmra.mxu0 %v2373
        %v2453 = vpop.f32.mrf.mxu0
        %v2454 = vadd.f32 0.0, %v2453
        %v2455 = vpop.f32.mrf.mxu0
        %v2456 = vadd.f32 0.0, %v2455
        %2457 = vmatmul.bf16.gmra.mxu0 %v2376
        %v2458 = vpop.f32.mrf.mxu0
        %v2459 = vadd.f32 0.0, %v2458
        %v2460 = vpop.f32.mrf.mxu0
        %v2461 = vadd.f32 0.0, %v2460
        %2462 = vmatmul.bf16.gmra.mxu0 %v2379
        %v2463 = vpop.f32.mrf.mxu0
        %v2464 = vadd.f32 0.0, %v2463
        %v2465 = vpop.f32.mrf.mxu0
        %v2466 = vadd.f32 0.0, %v2465
        %2467 = vmatmul.bf16.gmra.mxu0 %v2382
        %v2468 = vpop.f32.mrf.mxu0
        %v2469 = vadd.f32 0.0, %v2468
        %v2470 = vpop.f32.mrf.mxu0
        %v2471 = vadd.f32 0.0, %v2470
        %2472 = vdwg.mxu0
        %v2473 = vadd.f32 %v2256, %v2394
        %v2474 = vadd.f32 %v2257, %v2396
        %v2475 = vadd.f32 %v2258, %v2399
        %v2476 = vadd.f32 %v2259, %v2401
        %v2477 = vadd.f32 %v2260, %v2404
        %v2478 = vadd.f32 %v2261, %v2406
        %v2479 = vadd.f32 %v2262, %v2409
        %v2480 = vadd.f32 %v2263, %v2411
        %v2481 = vadd.f32 %v2264, %v2414
        %v2482 = vadd.f32 %v2265, %v2416
        %v2483 = vadd.f32 %v2266, %v2419
        %v2484 = vadd.f32 %v2267, %v2421
        %v2485 = vadd.f32 %v2268, %v2424
        %v2486 = vadd.f32 %v2269, %v2426
        %v2487 = vadd.f32 %v2270, %v2429
        %v2488 = vadd.f32 %v2271, %v2431
        %v2489 = vadd.f32 %v2272, %v2434
        %v2490 = vadd.f32 %v2273, %v2436
        %v2491 = vadd.f32 %v2274, %v2439
        %v2492 = vadd.f32 %v2275, %v2441
        %v2493 = vadd.f32 %v2276, %v2444
        %v2494 = vadd.f32 %v2277, %v2446
        %v2495 = vadd.f32 %v2278, %v2449
        %v2496 = vadd.f32 %v2279, %v2451
        %v2497 = vadd.f32 %v2280, %v2454
        %v2498 = vadd.f32 %v2281, %v2456
        %v2499 = vadd.f32 %v2282, %v2459
        %v2500 = vadd.f32 %v2283, %v2461
        %v2501 = vadd.f32 %v2284, %v2464
        %v2502 = vadd.f32 %v2285, %v2466
        %v2503 = vadd.f32 %v2286, %v2469
        %v2504 = vadd.f32 %v2287, %v2471
        %v2505 = vpack.c.bf16 %v1541, %v1540
        %v2506 = vpack.c.bf16 %v1543, %v1542
        %v2507 = vpack.c.bf16 %v1545, %v1544
        %v2508 = vpack.c.bf16 %v1547, %v1546
        %v2509 = vpack.c.bf16 %v1549, %v1548
        %v2510 = vpack.c.bf16 %v1551, %v1550
        %v2511 = vpack.c.bf16 %v1553, %v1552
        %v2512 = vpack.c.bf16 %v1555, %v1554
        %v2513 = vpack.c.bf16 %v1557, %v1556
        %v2514 = vpack.c.bf16 %v1559, %v1558
        %v2515 = vpack.c.bf16 %v1561, %v1560
        %v2516 = vpack.c.bf16 %v1563, %v1562
        %v2517 = vpack.c.bf16 %v1565, %v1564
        %v2518 = vpack.c.bf16 %v1567, %v1566
        %v2519 = vpack.c.bf16 %v1569, %v1568
        %v2520 = vpack.c.bf16 %v1571, %v1570
        %v2521 = vld [vmem:[%s3 + $0x80] sm:$0xf]
        %v2522 = vld [vmem:[%s3 + $0x84] sm:$0xf]
        %v2523 = vld [vmem:[%s3 + $0x88] sm:$0xf]
        %v2524 = vld [vmem:[%s3 + $0x8c] sm:$0xf]
        %v2525 = vld [vmem:[%s3 + $0x90] sm:$0xf]
        %v2526 = vld [vmem:[%s3 + $0x94] sm:$0xf]
        %v2527 = vld [vmem:[%s3 + $0x98] sm:$0xf]
        %v2528 = vld [vmem:[%s3 + $0x9c] sm:$0xf]
        %v2537 = vunpack.c.l.b16 %v2521
        %v2538 = vunpack.c.l.b16 %v2522
        %v2539 = vunpack.c.l.b16 %v2523
        %v2540 = vunpack.c.l.b16 %v2524
        %v2541 = vunpack.c.l.b16 %v2525
        %v2542 = vunpack.c.l.b16 %v2526
        %v2543 = vunpack.c.l.b16 %v2527
        %v2544 = vunpack.c.l.b16 %v2528
        %v2545 = vpack.c.b16 %v2538, %v2537
        %v2546 = vpack.c.b16 %v2540, %v2539
        %v2547 = vpack.c.b16 %v2542, %v2541
        %v2548 = vpack.c.b16 %v2544, %v2543
        %v2554 = vsel %vm1145, %v2505, 0
        %v2557 = vsel %vm1145, %v2506, 0
        %v2560 = vsel %vm1145, %v2507, 0
        %v2563 = vsel %vm1145, %v2508, 0
        %v2566 = vsel %vm1145, %v2509, 0
        %v2569 = vsel %vm1145, %v2510, 0
        %v2572 = vsel %vm1145, %v2511, 0
        %v2575 = vsel %vm1145, %v2512, 0
        %v2578 = vsel %vm1145, %v2513, 0
        %v2581 = vsel %vm1145, %v2514, 0
        %v2584 = vsel %vm1145, %v2515, 0
        %v2587 = vsel %vm1145, %v2516, 0
        %v2590 = vsel %vm1145, %v2517, 0
        %v2593 = vsel %vm1145, %v2518, 0
        %v2596 = vsel %vm1145, %v2519, 0
        %v2599 = vsel %vm1145, %v2520, 0
        %2601 = vmatpush.bf16.msra.mxu0 0
        %2602 = vmatpush.bf16.msra.mxu0 0
        %2603 = vmatpush.bf16.msra.mxu0 0
        %2604 = vmatpush.bf16.msra.mxu0 0
        %2605 = vmatpush.bf16.msra.mxu0 %v2548
        %2606 = vmatpush.bf16.msra.mxu0 %v2547
        %2607 = vmatpush.bf16.msra.mxu0 %v2546
        %2608 = vmatpush.bf16.msra.mxu0 %v2545
        %2609 = vmatmul.bf16.gmra.mxu0 %v2554
        %v2610 = vpop.f32.mrf.mxu0
        %v2611 = vadd.f32 0.0, %v2610
        %v2612 = vpop.f32.mrf.mxu0
        %v2613 = vadd.f32 0.0, %v2612
        %2614 = vmatmul.bf16.gmra.mxu0 %v2557
        %v2615 = vpop.f32.mrf.mxu0
        %v2616 = vadd.f32 0.0, %v2615
        %v2617 = vpop.f32.mrf.mxu0
        %v2618 = vadd.f32 0.0, %v2617
        %2619 = vmatmul.bf16.gmra.mxu0 %v2560
        %v2620 = vpop.f32.mrf.mxu0
        %v2621 = vadd.f32 0.0, %v2620
        %v2622 = vpop.f32.mrf.mxu0
        %v2623 = vadd.f32 0.0, %v2622
        %2624 = vmatmul.bf16.gmra.mxu0 %v2563
        %v2625 = vpop.f32.mrf.mxu0
        %v2626 = vadd.f32 0.0, %v2625
        %v2627 = vpop.f32.mrf.mxu0
        %v2628 = vadd.f32 0.0, %v2627
        %2629 = vmatmul.bf16.gmra.mxu0 %v2566
        %v2630 = vpop.f32.mrf.mxu0
        %v2631 = vadd.f32 0.0, %v2630
        %v2632 = vpop.f32.mrf.mxu0
        %v2633 = vadd.f32 0.0, %v2632
        %2634 = vmatmul.bf16.gmra.mxu0 %v2569
        %v2635 = vpop.f32.mrf.mxu0
        %v2636 = vadd.f32 0.0, %v2635
        %v2637 = vpop.f32.mrf.mxu0
        %v2638 = vadd.f32 0.0, %v2637
        %2639 = vmatmul.bf16.gmra.mxu0 %v2572
        %v2640 = vpop.f32.mrf.mxu0
        %v2641 = vadd.f32 0.0, %v2640
        %v2642 = vpop.f32.mrf.mxu0
        %v2643 = vadd.f32 0.0, %v2642
        %2644 = vmatmul.bf16.gmra.mxu0 %v2575
        %v2645 = vpop.f32.mrf.mxu0
        %v2646 = vadd.f32 0.0, %v2645
        %v2647 = vpop.f32.mrf.mxu0
        %v2648 = vadd.f32 0.0, %v2647
        %2649 = vmatmul.bf16.gmra.mxu0 %v2578
        %v2650 = vpop.f32.mrf.mxu0
        %v2651 = vadd.f32 0.0, %v2650
        %v2652 = vpop.f32.mrf.mxu0
        %v2653 = vadd.f32 0.0, %v2652
        %2654 = vmatmul.bf16.gmra.mxu0 %v2581
        %v2655 = vpop.f32.mrf.mxu0
        %v2656 = vadd.f32 0.0, %v2655
        %v2657 = vpop.f32.mrf.mxu0
        %v2658 = vadd.f32 0.0, %v2657
        %2659 = vmatmul.bf16.gmra.mxu0 %v2584
        %v2660 = vpop.f32.mrf.mxu0
        %v2661 = vadd.f32 0.0, %v2660
        %v2662 = vpop.f32.mrf.mxu0
        %v2663 = vadd.f32 0.0, %v2662
        %2664 = vmatmul.bf16.gmra.mxu0 %v2587
        %v2665 = vpop.f32.mrf.mxu0
        %v2666 = vadd.f32 0.0, %v2665
        %v2667 = vpop.f32.mrf.mxu0
        %v2668 = vadd.f32 0.0, %v2667
        %2669 = vmatmul.bf16.gmra.mxu0 %v2590
        %v2670 = vpop.f32.mrf.mxu0
        %v2671 = vadd.f32 0.0, %v2670
        %v2672 = vpop.f32.mrf.mxu0
        %v2673 = vadd.f32 0.0, %v2672
        %2674 = vmatmul.bf16.gmra.mxu0 %v2593
        %v2675 = vpop.f32.mrf.mxu0
        %v2676 = vadd.f32 0.0, %v2675
        %v2677 = vpop.f32.mrf.mxu0
        %v2678 = vadd.f32 0.0, %v2677
        %2679 = vmatmul.bf16.gmra.mxu0 %v2596
        %v2680 = vpop.f32.mrf.mxu0
        %v2681 = vadd.f32 0.0, %v2680
        %v2682 = vpop.f32.mrf.mxu0
        %v2683 = vadd.f32 0.0, %v2682
        %2684 = vmatmul.bf16.gmra.mxu0 %v2599
        %v2685 = vpop.f32.mrf.mxu0
        %v2686 = vadd.f32 0.0, %v2685
        %v2687 = vpop.f32.mrf.mxu0
        %v2688 = vadd.f32 0.0, %v2687
        %2689 = vdwg.mxu0
        %v2690 = vadd.f32 %v2473, %v2611
        %v2691 = vadd.f32 %v2474, %v2613
        %v2692 = vadd.f32 %v2475, %v2616
        %v2693 = vadd.f32 %v2476, %v2618
        %v2694 = vadd.f32 %v2477, %v2621
        %v2695 = vadd.f32 %v2478, %v2623
        %v2696 = vadd.f32 %v2479, %v2626
        %v2697 = vadd.f32 %v2480, %v2628
        %v2698 = vadd.f32 %v2481, %v2631
        %v2699 = vadd.f32 %v2482, %v2633
        %v2700 = vadd.f32 %v2483, %v2636
        %v2701 = vadd.f32 %v2484, %v2638
        %v2702 = vadd.f32 %v2485, %v2641
        %v2703 = vadd.f32 %v2486, %v2643
        %v2704 = vadd.f32 %v2487, %v2646
        %v2705 = vadd.f32 %v2488, %v2648
        %v2706 = vadd.f32 %v2489, %v2651
        %v2707 = vadd.f32 %v2490, %v2653
        %v2708 = vadd.f32 %v2491, %v2656
        %v2709 = vadd.f32 %v2492, %v2658
        %v2710 = vadd.f32 %v2493, %v2661
        %v2711 = vadd.f32 %v2494, %v2663
        %v2712 = vadd.f32 %v2495, %v2666
        %v2713 = vadd.f32 %v2496, %v2668
        %v2714 = vadd.f32 %v2497, %v2671
        %v2715 = vadd.f32 %v2498, %v2673
        %v2716 = vadd.f32 %v2499, %v2676
        %v2717 = vadd.f32 %v2500, %v2678
        %v2718 = vadd.f32 %v2501, %v2681
        %v2719 = vadd.f32 %v2502, %v2683
        %v2720 = vadd.f32 %v2503, %v2686
        %v2721 = vadd.f32 %v2504, %v2688
        %v2722 = vpack.c.bf16 %v1573, %v1572
        %v2723 = vpack.c.bf16 %v1575, %v1574
        %v2724 = vpack.c.bf16 %v1577, %v1576
        %v2725 = vpack.c.bf16 %v1579, %v1578
        %v2726 = vpack.c.bf16 %v1581, %v1580
        %v2727 = vpack.c.bf16 %v1583, %v1582
        %v2728 = vpack.c.bf16 %v1585, %v1584
        %v2729 = vpack.c.bf16 %v1587, %v1586
        %v2730 = vpack.c.bf16 %v1589, %v1588
        %v2731 = vpack.c.bf16 %v1591, %v1590
        %v2732 = vpack.c.bf16 %v1593, %v1592
        %v2733 = vpack.c.bf16 %v1595, %v1594
        %v2734 = vpack.c.bf16 %v1597, %v1596
        %v2735 = vpack.c.bf16 %v1599, %v1598
        %v2736 = vpack.c.bf16 %v1601, %v1600
        %v2737 = vpack.c.bf16 %v1603, %v1602
        %v2738 = vld [vmem:[%s3 + $0xa0] sm:$0xf]
        %v2739 = vld [vmem:[%s3 + $0xa4] sm:$0xf]
        %v2740 = vld [vmem:[%s3 + $0xa8] sm:$0xf]
        %v2741 = vld [vmem:[%s3 + $0xac] sm:$0xf]
        %v2742 = vld [vmem:[%s3 + $0xb0] sm:$0xf]
        %v2743 = vld [vmem:[%s3 + $0xb4] sm:$0xf]
        %v2744 = vld [vmem:[%s3 + $0xb8] sm:$0xf]
        %v2745 = vld [vmem:[%s3 + $0xbc] sm:$0xf]
        %v2754 = vunpack.c.l.b16 %v2738
        %v2755 = vunpack.c.l.b16 %v2739
        %v2756 = vunpack.c.l.b16 %v2740
        %v2757 = vunpack.c.l.b16 %v2741
        %v2758 = vunpack.c.l.b16 %v2742
        %v2759 = vunpack.c.l.b16 %v2743
        %v2760 = vunpack.c.l.b16 %v2744
        %v2761 = vunpack.c.l.b16 %v2745
        %v2762 = vpack.c.b16 %v2755, %v2754
        %v2763 = vpack.c.b16 %v2757, %v2756
        %v2764 = vpack.c.b16 %v2759, %v2758
        %v2765 = vpack.c.b16 %v2761, %v2760
        %v2771 = vsel %vm1145, %v2722, 0
        %v2774 = vsel %vm1145, %v2723, 0
        %v2777 = vsel %vm1145, %v2724, 0
        %v2780 = vsel %vm1145, %v2725, 0
        %v2783 = vsel %vm1145, %v2726, 0
        %v2786 = vsel %vm1145, %v2727, 0
        %v2789 = vsel %vm1145, %v2728, 0
        %v2792 = vsel %vm1145, %v2729, 0
        %v2795 = vsel %vm1145, %v2730, 0
        %v2798 = vsel %vm1145, %v2731, 0
        %v2801 = vsel %vm1145, %v2732, 0
        %v2804 = vsel %vm1145, %v2733, 0
        %v2807 = vsel %vm1145, %v2734, 0
        %v2810 = vsel %vm1145, %v2735, 0
        %v2813 = vsel %vm1145, %v2736, 0
        %v2816 = vsel %vm1145, %v2737, 0
        %2818 = vmatpush.bf16.msra.mxu0 0
        %2819 = vmatpush.bf16.msra.mxu0 0
        %2820 = vmatpush.bf16.msra.mxu0 0
        %2821 = vmatpush.bf16.msra.mxu0 0
        %2822 = vmatpush.bf16.msra.mxu0 %v2765
        %2823 = vmatpush.bf16.msra.mxu0 %v2764
        %2824 = vmatpush.bf16.msra.mxu0 %v2763
        %2825 = vmatpush.bf16.msra.mxu0 %v2762
        %2826 = vmatmul.bf16.gmra.mxu0 %v2771
        %v2827 = vpop.f32.mrf.mxu0
        %v2828 = vadd.f32 0.0, %v2827
        %v2829 = vpop.f32.mrf.mxu0
        %v2830 = vadd.f32 0.0, %v2829
        %2831 = vmatmul.bf16.gmra.mxu0 %v2774
        %v2832 = vpop.f32.mrf.mxu0
        %v2833 = vadd.f32 0.0, %v2832
        %v2834 = vpop.f32.mrf.mxu0
        %v2835 = vadd.f32 0.0, %v2834
        %2836 = vmatmul.bf16.gmra.mxu0 %v2777
        %v2837 = vpop.f32.mrf.mxu0
        %v2838 = vadd.f32 0.0, %v2837
        %v2839 = vpop.f32.mrf.mxu0
        %v2840 = vadd.f32 0.0, %v2839
        %2841 = vmatmul.bf16.gmra.mxu0 %v2780
        %v2842 = vpop.f32.mrf.mxu0
        %v2843 = vadd.f32 0.0, %v2842
        %v2844 = vpop.f32.mrf.mxu0
        %v2845 = vadd.f32 0.0, %v2844
        %2846 = vmatmul.bf16.gmra.mxu0 %v2783
        %v2847 = vpop.f32.mrf.mxu0
        %v2848 = vadd.f32 0.0, %v2847
        %v2849 = vpop.f32.mrf.mxu0
        %v2850 = vadd.f32 0.0, %v2849
        %2851 = vmatmul.bf16.gmra.mxu0 %v2786
        %v2852 = vpop.f32.mrf.mxu0
        %v2853 = vadd.f32 0.0, %v2852
        %v2854 = vpop.f32.mrf.mxu0
        %v2855 = vadd.f32 0.0, %v2854
        %2856 = vmatmul.bf16.gmra.mxu0 %v2789
        %v2857 = vpop.f32.mrf.mxu0
        %v2858 = vadd.f32 0.0, %v2857
        %v2859 = vpop.f32.mrf.mxu0
        %v2860 = vadd.f32 0.0, %v2859
        %2861 = vmatmul.bf16.gmra.mxu0 %v2792
        %v2862 = vpop.f32.mrf.mxu0
        %v2863 = vadd.f32 0.0, %v2862
        %v2864 = vpop.f32.mrf.mxu0
        %v2865 = vadd.f32 0.0, %v2864
        %2866 = vmatmul.bf16.gmra.mxu0 %v2795
        %v2867 = vpop.f32.mrf.mxu0
        %v2868 = vadd.f32 0.0, %v2867
        %v2869 = vpop.f32.mrf.mxu0
        %v2870 = vadd.f32 0.0, %v2869
        %2871 = vmatmul.bf16.gmra.mxu0 %v2798
        %v2872 = vpop.f32.mrf.mxu0
        %v2873 = vadd.f32 0.0, %v2872
        %v2874 = vpop.f32.mrf.mxu0
        %v2875 = vadd.f32 0.0, %v2874
        %2876 = vmatmul.bf16.gmra.mxu0 %v2801
        %v2877 = vpop.f32.mrf.mxu0
        %v2878 = vadd.f32 0.0, %v2877
        %v2879 = vpop.f32.mrf.mxu0
        %v2880 = vadd.f32 0.0, %v2879
        %2881 = vmatmul.bf16.gmra.mxu0 %v2804
        %v2882 = vpop.f32.mrf.mxu0
        %v2883 = vadd.f32 0.0, %v2882
        %v2884 = vpop.f32.mrf.mxu0
        %v2885 = vadd.f32 0.0, %v2884
        %2886 = vmatmul.bf16.gmra.mxu0 %v2807
        %v2887 = vpop.f32.mrf.mxu0
        %v2888 = vadd.f32 0.0, %v2887
        %v2889 = vpop.f32.mrf.mxu0
        %v2890 = vadd.f32 0.0, %v2889
        %2891 = vmatmul.bf16.gmra.mxu0 %v2810
        %v2892 = vpop.f32.mrf.mxu0
        %v2893 = vadd.f32 0.0, %v2892
        %v2894 = vpop.f32.mrf.mxu0
        %v2895 = vadd.f32 0.0, %v2894
        %2896 = vmatmul.bf16.gmra.mxu0 %v2813
        %v2897 = vpop.f32.mrf.mxu0
        %v2898 = vadd.f32 0.0, %v2897
        %v2899 = vpop.f32.mrf.mxu0
        %v2900 = vadd.f32 0.0, %v2899
        %2901 = vmatmul.bf16.gmra.mxu0 %v2816
        %v2902 = vpop.f32.mrf.mxu0
        %v2903 = vadd.f32 0.0, %v2902
        %v2904 = vpop.f32.mrf.mxu0
        %v2905 = vadd.f32 0.0, %v2904
        %2906 = vdwg.mxu0
        %v2907 = vadd.f32 %v2690, %v2828
        %v2908 = vadd.f32 %v2691, %v2830
        %v2909 = vadd.f32 %v2692, %v2833
        %v2910 = vadd.f32 %v2693, %v2835
        %v2911 = vadd.f32 %v2694, %v2838
        %v2912 = vadd.f32 %v2695, %v2840
        %v2913 = vadd.f32 %v2696, %v2843
        %v2914 = vadd.f32 %v2697, %v2845
        %v2915 = vadd.f32 %v2698, %v2848
        %v2916 = vadd.f32 %v2699, %v2850
        %v2917 = vadd.f32 %v2700, %v2853
        %v2918 = vadd.f32 %v2701, %v2855
        %v2919 = vadd.f32 %v2702, %v2858
        %v2920 = vadd.f32 %v2703, %v2860
        %v2921 = vadd.f32 %v2704, %v2863
        %v2922 = vadd.f32 %v2705, %v2865
        %v2923 = vadd.f32 %v2706, %v2868
        %v2924 = vadd.f32 %v2707, %v2870
        %v2925 = vadd.f32 %v2708, %v2873
        %v2926 = vadd.f32 %v2709, %v2875
        %v2927 = vadd.f32 %v2710, %v2878
        %v2928 = vadd.f32 %v2711, %v2880
        %v2929 = vadd.f32 %v2712, %v2883
        %v2930 = vadd.f32 %v2713, %v2885
        %v2931 = vadd.f32 %v2714, %v2888
        %v2932 = vadd.f32 %v2715, %v2890
        %v2933 = vadd.f32 %v2716, %v2893
        %v2934 = vadd.f32 %v2717, %v2895
        %v2935 = vadd.f32 %v2718, %v2898
        %v2936 = vadd.f32 %v2719, %v2900
        %v2937 = vadd.f32 %v2720, %v2903
        %v2938 = vadd.f32 %v2721, %v2905
        %v2939 = vpack.c.bf16 %v1606, %v1605
        %v2940 = vpack.c.bf16 %v1608, %v1607
        %v2941 = vpack.c.bf16 %v1610, %v1609
        %v2942 = vpack.c.bf16 %v1612, %v1611
        %v2943 = vpack.c.bf16 %v1614, %v1613
        %v2944 = vpack.c.bf16 %v1616, %v1615
        %v2945 = vpack.c.bf16 %v1618, %v1617
        %v2946 = vpack.c.bf16 %v1620, %v1619
        %v2947 = vpack.c.bf16 %v1622, %v1621
        %v2948 = vpack.c.bf16 %v1624, %v1623
        %v2949 = vpack.c.bf16 %v1626, %v1625
        %v2950 = vpack.c.bf16 %v1628, %v1627
        %v2951 = vpack.c.bf16 %v1630, %v1629
        %v2952 = vpack.c.bf16 %v1632, %v1631
        %v2953 = vpack.c.bf16 %v1634, %v1633
        %v2954 = vpack.c.bf16 %v1636, %v1635
        %v2955 = vld [vmem:[%s3 + $0xc0] sm:$0xf]
        %v2956 = vld [vmem:[%s3 + $0xc4] sm:$0xf]
        %v2957 = vld [vmem:[%s3 + $0xc8] sm:$0xf]
        %v2958 = vld [vmem:[%s3 + $0xcc] sm:$0xf]
        %v2959 = vld [vmem:[%s3 + $0xd0] sm:$0xf]
        %v2960 = vld [vmem:[%s3 + $0xd4] sm:$0xf]
        %v2961 = vld [vmem:[%s3 + $0xd8] sm:$0xf]
        %v2962 = vld [vmem:[%s3 + $0xdc] sm:$0xf]
        %v2971 = vunpack.c.l.b16 %v2955
        %v2972 = vunpack.c.l.b16 %v2956
        %v2973 = vunpack.c.l.b16 %v2957
        %v2974 = vunpack.c.l.b16 %v2958
        %v2975 = vunpack.c.l.b16 %v2959
        %v2976 = vunpack.c.l.b16 %v2960
        %v2977 = vunpack.c.l.b16 %v2961
        %v2978 = vunpack.c.l.b16 %v2962
        %v2979 = vpack.c.b16 %v2972, %v2971
        %v2980 = vpack.c.b16 %v2974, %v2973
        %v2981 = vpack.c.b16 %v2976, %v2975
        %v2982 = vpack.c.b16 %v2978, %v2977
        %v2988 = vsel %vm1145, %v2939, 0
        %v2991 = vsel %vm1145, %v2940, 0
        %v2994 = vsel %vm1145, %v2941, 0
        %v2997 = vsel %vm1145, %v2942, 0
        %v3000 = vsel %vm1145, %v2943, 0
        %v3003 = vsel %vm1145, %v2944, 0
        %v3006 = vsel %vm1145, %v2945, 0
        %v3009 = vsel %vm1145, %v2946, 0
        %v3012 = vsel %vm1145, %v2947, 0
        %v3015 = vsel %vm1145, %v2948, 0
        %v3018 = vsel %vm1145, %v2949, 0
        %v3021 = vsel %vm1145, %v2950, 0
        %v3024 = vsel %vm1145, %v2951, 0
        %v3027 = vsel %vm1145, %v2952, 0
        %v3030 = vsel %vm1145, %v2953, 0
        %v3033 = vsel %vm1145, %v2954, 0
        %3035 = vmatpush.bf16.msra.mxu0 0
        %3036 = vmatpush.bf16.msra.mxu0 0
        %3037 = vmatpush.bf16.msra.mxu0 0
        %3038 = vmatpush.bf16.msra.mxu0 0
        %3039 = vmatpush.bf16.msra.mxu0 %v2982
        %3040 = vmatpush.bf16.msra.mxu0 %v2981
        %3041 = vmatpush.bf16.msra.mxu0 %v2980
        %3042 = vmatpush.bf16.msra.mxu0 %v2979
        %3043 = vmatmul.bf16.gmra.mxu0 %v2988
        %v3044 = vpop.f32.mrf.mxu0
        %v3045 = vadd.f32 0.0, %v3044
        %v3046 = vpop.f32.mrf.mxu0
        %v3047 = vadd.f32 0.0, %v3046
        %3048 = vmatmul.bf16.gmra.mxu0 %v2991
        %v3049 = vpop.f32.mrf.mxu0
        %v3050 = vadd.f32 0.0, %v3049
        %v3051 = vpop.f32.mrf.mxu0
        %v3052 = vadd.f32 0.0, %v3051
        %3053 = vmatmul.bf16.gmra.mxu0 %v2994
        %v3054 = vpop.f32.mrf.mxu0
        %v3055 = vadd.f32 0.0, %v3054
        %v3056 = vpop.f32.mrf.mxu0
        %v3057 = vadd.f32 0.0, %v3056
        %3058 = vmatmul.bf16.gmra.mxu0 %v2997
        %v3059 = vpop.f32.mrf.mxu0
        %v3060 = vadd.f32 0.0, %v3059
        %v3061 = vpop.f32.mrf.mxu0
        %v3062 = vadd.f32 0.0, %v3061
        %3063 = vmatmul.bf16.gmra.mxu0 %v3000
        %v3064 = vpop.f32.mrf.mxu0
        %v3065 = vadd.f32 0.0, %v3064
        %v3066 = vpop.f32.mrf.mxu0
        %v3067 = vadd.f32 0.0, %v3066
        %3068 = vmatmul.bf16.gmra.mxu0 %v3003
        %v3069 = vpop.f32.mrf.mxu0
        %v3070 = vadd.f32 0.0, %v3069
        %v3071 = vpop.f32.mrf.mxu0
        %v3072 = vadd.f32 0.0, %v3071
        %3073 = vmatmul.bf16.gmra.mxu0 %v3006
        %v3074 = vpop.f32.mrf.mxu0
        %v3075 = vadd.f32 0.0, %v3074
        %v3076 = vpop.f32.mrf.mxu0
        %v3077 = vadd.f32 0.0, %v3076
        %3078 = vmatmul.bf16.gmra.mxu0 %v3009
        %v3079 = vpop.f32.mrf.mxu0
        %v3080 = vadd.f32 0.0, %v3079
        %v3081 = vpop.f32.mrf.mxu0
        %v3082 = vadd.f32 0.0, %v3081
        %3083 = vmatmul.bf16.gmra.mxu0 %v3012
        %v3084 = vpop.f32.mrf.mxu0
        %v3085 = vadd.f32 0.0, %v3084
        %v3086 = vpop.f32.mrf.mxu0
        %v3087 = vadd.f32 0.0, %v3086
        %3088 = vmatmul.bf16.gmra.mxu0 %v3015
        %v3089 = vpop.f32.mrf.mxu0
        %v3090 = vadd.f32 0.0, %v3089
        %v3091 = vpop.f32.mrf.mxu0
        %v3092 = vadd.f32 0.0, %v3091
        %3093 = vmatmul.bf16.gmra.mxu0 %v3018
        %v3094 = vpop.f32.mrf.mxu0
        %v3095 = vadd.f32 0.0, %v3094
        %v3096 = vpop.f32.mrf.mxu0
        %v3097 = vadd.f32 0.0, %v3096
        %3098 = vmatmul.bf16.gmra.mxu0 %v3021
        %v3099 = vpop.f32.mrf.mxu0
        %v3100 = vadd.f32 0.0, %v3099
        %v3101 = vpop.f32.mrf.mxu0
        %v3102 = vadd.f32 0.0, %v3101
        %3103 = vmatmul.bf16.gmra.mxu0 %v3024
        %v3104 = vpop.f32.mrf.mxu0
        %v3105 = vadd.f32 0.0, %v3104
        %v3106 = vpop.f32.mrf.mxu0
        %v3107 = vadd.f32 0.0, %v3106
        %3108 = vmatmul.bf16.gmra.mxu0 %v3027
        %v3109 = vpop.f32.mrf.mxu0
        %v3110 = vadd.f32 0.0, %v3109
        %v3111 = vpop.f32.mrf.mxu0
        %v3112 = vadd.f32 0.0, %v3111
        %3113 = vmatmul.bf16.gmra.mxu0 %v3030
        %v3114 = vpop.f32.mrf.mxu0
        %v3115 = vadd.f32 0.0, %v3114
        %v3116 = vpop.f32.mrf.mxu0
        %v3117 = vadd.f32 0.0, %v3116
        %3118 = vmatmul.bf16.gmra.mxu0 %v3033
        %v3119 = vpop.f32.mrf.mxu0
        %v3120 = vadd.f32 0.0, %v3119
        %v3121 = vpop.f32.mrf.mxu0
        %v3122 = vadd.f32 0.0, %v3121
        %3123 = vdwg.mxu0
        %v3124 = vadd.f32 %v2907, %v3045
        %v3125 = vadd.f32 %v2908, %v3047
        %v3126 = vadd.f32 %v2909, %v3050
        %v3127 = vadd.f32 %v2910, %v3052
        %v3128 = vadd.f32 %v2911, %v3055
        %v3129 = vadd.f32 %v2912, %v3057
        %v3130 = vadd.f32 %v2913, %v3060
        %v3131 = vadd.f32 %v2914, %v3062
        %v3132 = vadd.f32 %v2915, %v3065
        %v3133 = vadd.f32 %v2916, %v3067
        %v3134 = vadd.f32 %v2917, %v3070
        %v3135 = vadd.f32 %v2918, %v3072
        %v3136 = vadd.f32 %v2919, %v3075
        %v3137 = vadd.f32 %v2920, %v3077
        %v3138 = vadd.f32 %v2921, %v3080
        %v3139 = vadd.f32 %v2922, %v3082
        %v3140 = vadd.f32 %v2923, %v3085
        %v3141 = vadd.f32 %v2924, %v3087
        %v3142 = vadd.f32 %v2925, %v3090
        %v3143 = vadd.f32 %v2926, %v3092
        %v3144 = vadd.f32 %v2927, %v3095
        %v3145 = vadd.f32 %v2928, %v3097
        %v3146 = vadd.f32 %v2929, %v3100
        %v3147 = vadd.f32 %v2930, %v3102
        %v3148 = vadd.f32 %v2931, %v3105
        %v3149 = vadd.f32 %v2932, %v3107
        %v3150 = vadd.f32 %v2933, %v3110
        %v3151 = vadd.f32 %v2934, %v3112
        %v3152 = vadd.f32 %v2935, %v3115
        %v3153 = vadd.f32 %v2936, %v3117
        %v3154 = vadd.f32 %v2937, %v3120
        %v3155 = vadd.f32 %v2938, %v3122
        %v3156 = vpack.c.bf16 %v1638, %v1637
        %v3157 = vpack.c.bf16 %v1640, %v1639
        %v3158 = vpack.c.bf16 %v1642, %v1641
        %v3159 = vpack.c.bf16 %v1644, %v1643
        %v3160 = vpack.c.bf16 %v1646, %v1645
        %v3161 = vpack.c.bf16 %v1648, %v1647
        %v3162 = vpack.c.bf16 %v1650, %v1649
        %v3163 = vpack.c.bf16 %v1652, %v1651
        %v3164 = vpack.c.bf16 %v1654, %v1653
        %v3165 = vpack.c.bf16 %v1656, %v1655
        %v3166 = vpack.c.bf16 %v1658, %v1657
        %v3167 = vpack.c.bf16 %v1660, %v1659
        %v3168 = vpack.c.bf16 %v1662, %v1661
        %v3169 = vpack.c.bf16 %v1664, %v1663
        %v3170 = vpack.c.bf16 %v1666, %v1665
        %v3171 = vpack.c.bf16 %v1668, %v1667
        %v3172 = vld [vmem:[%s3 + $0xe0] sm:$0xf]
        %v3173 = vld [vmem:[%s3 + $0xe4] sm:$0xf]
        %v3174 = vld [vmem:[%s3 + $0xe8] sm:$0xf]
        %v3175 = vld [vmem:[%s3 + $0xec] sm:$0xf]
        %v3176 = vld [vmem:[%s3 + $0xf0] sm:$0xf]
        %v3177 = vld [vmem:[%s3 + $0xf4] sm:$0xf]
        %v3178 = vld [vmem:[%s3 + $0xf8] sm:$0xf]
        %v3179 = vld [vmem:[%s3 + $0xfc] sm:$0xf]
        %v3188 = vunpack.c.l.b16 %v3172
        %v3189 = vunpack.c.l.b16 %v3173
        %v3190 = vunpack.c.l.b16 %v3174
        %v3191 = vunpack.c.l.b16 %v3175
        %v3192 = vunpack.c.l.b16 %v3176
        %v3193 = vunpack.c.l.b16 %v3177
        %v3194 = vunpack.c.l.b16 %v3178
        %v3195 = vunpack.c.l.b16 %v3179
        %v3196 = vpack.c.b16 %v3189, %v3188
        %v3197 = vpack.c.b16 %v3191, %v3190
        %v3198 = vpack.c.b16 %v3193, %v3192
        %v3199 = vpack.c.b16 %v3195, %v3194
        %v3205 = vsel %vm1145, %v3156, 0
        %v3208 = vsel %vm1145, %v3157, 0
        %v3211 = vsel %vm1145, %v3158, 0
        %v3214 = vsel %vm1145, %v3159, 0
        %v3217 = vsel %vm1145, %v3160, 0
        %v3220 = vsel %vm1145, %v3161, 0
        %v3223 = vsel %vm1145, %v3162, 0
        %v3226 = vsel %vm1145, %v3163, 0
        %v3229 = vsel %vm1145, %v3164, 0
        %v3232 = vsel %vm1145, %v3165, 0
        %v3235 = vsel %vm1145, %v3166, 0
        %v3238 = vsel %vm1145, %v3167, 0
        %v3241 = vsel %vm1145, %v3168, 0
        %v3244 = vsel %vm1145, %v3169, 0
        %v3247 = vsel %vm1145, %v3170, 0
        %v3250 = vsel %vm1145, %v3171, 0
        %3252 = vmatpush.bf16.msra.mxu0 0
        %3253 = vmatpush.bf16.msra.mxu0 0
        %3254 = vmatpush.bf16.msra.mxu0 0
        %3255 = vmatpush.bf16.msra.mxu0 0
        %3256 = vmatpush.bf16.msra.mxu0 %v3199
        %3257 = vmatpush.bf16.msra.mxu0 %v3198
        %3258 = vmatpush.bf16.msra.mxu0 %v3197
        %3259 = vmatpush.bf16.msra.mxu0 %v3196
        %3260 = vmatmul.bf16.gmra.mxu0 %v3205
        %v3261 = vpop.f32.mrf.mxu0
        %v3262 = vadd.f32 0.0, %v3261
        %v3263 = vpop.f32.mrf.mxu0
        %v3264 = vadd.f32 0.0, %v3263
        %3265 = vmatmul.bf16.gmra.mxu0 %v3208
        %v3266 = vpop.f32.mrf.mxu0
        %v3267 = vadd.f32 0.0, %v3266
        %v3268 = vpop.f32.mrf.mxu0
        %v3269 = vadd.f32 0.0, %v3268
        %3270 = vmatmul.bf16.gmra.mxu0 %v3211
        %v3271 = vpop.f32.mrf.mxu0
        %v3272 = vadd.f32 0.0, %v3271
        %v3273 = vpop.f32.mrf.mxu0
        %v3274 = vadd.f32 0.0, %v3273
        %3275 = vmatmul.bf16.gmra.mxu0 %v3214
        %v3276 = vpop.f32.mrf.mxu0
        %v3277 = vadd.f32 0.0, %v3276
        %v3278 = vpop.f32.mrf.mxu0
        %v3279 = vadd.f32 0.0, %v3278
        %3280 = vmatmul.bf16.gmra.mxu0 %v3217
        %v3281 = vpop.f32.mrf.mxu0
        %v3282 = vadd.f32 0.0, %v3281
        %v3283 = vpop.f32.mrf.mxu0
        %v3284 = vadd.f32 0.0, %v3283
        %3285 = vmatmul.bf16.gmra.mxu0 %v3220
        %v3286 = vpop.f32.mrf.mxu0
        %v3287 = vadd.f32 0.0, %v3286
        %v3288 = vpop.f32.mrf.mxu0
        %v3289 = vadd.f32 0.0, %v3288
        %3290 = vmatmul.bf16.gmra.mxu0 %v3223
        %v3291 = vpop.f32.mrf.mxu0
        %v3292 = vadd.f32 0.0, %v3291
        %v3293 = vpop.f32.mrf.mxu0
        %v3294 = vadd.f32 0.0, %v3293
        %3295 = vmatmul.bf16.gmra.mxu0 %v3226
        %v3296 = vpop.f32.mrf.mxu0
        %v3297 = vadd.f32 0.0, %v3296
        %v3298 = vpop.f32.mrf.mxu0
        %v3299 = vadd.f32 0.0, %v3298
        %3300 = vmatmul.bf16.gmra.mxu0 %v3229
        %v3301 = vpop.f32.mrf.mxu0
        %v3302 = vadd.f32 0.0, %v3301
        %v3303 = vpop.f32.mrf.mxu0
        %v3304 = vadd.f32 0.0, %v3303
        %3305 = vmatmul.bf16.gmra.mxu0 %v3232
        %v3306 = vpop.f32.mrf.mxu0
        %v3307 = vadd.f32 0.0, %v3306
        %v3308 = vpop.f32.mrf.mxu0
        %v3309 = vadd.f32 0.0, %v3308
        %3310 = vmatmul.bf16.gmra.mxu0 %v3235
        %v3311 = vpop.f32.mrf.mxu0
        %v3312 = vadd.f32 0.0, %v3311
        %v3313 = vpop.f32.mrf.mxu0
        %v3314 = vadd.f32 0.0, %v3313
        %3315 = vmatmul.bf16.gmra.mxu0 %v3238
        %v3316 = vpop.f32.mrf.mxu0
        %v3317 = vadd.f32 0.0, %v3316
        %v3318 = vpop.f32.mrf.mxu0
        %v3319 = vadd.f32 0.0, %v3318
        %3320 = vmatmul.bf16.gmra.mxu0 %v3241
        %v3321 = vpop.f32.mrf.mxu0
        %v3322 = vadd.f32 0.0, %v3321
        %v3323 = vpop.f32.mrf.mxu0
        %v3324 = vadd.f32 0.0, %v3323
        %3325 = vmatmul.bf16.gmra.mxu0 %v3244
        %v3326 = vpop.f32.mrf.mxu0
        %v3327 = vadd.f32 0.0, %v3326
        %v3328 = vpop.f32.mrf.mxu0
        %v3329 = vadd.f32 0.0, %v3328
        %3330 = vmatmul.bf16.gmra.mxu0 %v3247
        %v3331 = vpop.f32.mrf.mxu0
        %v3332 = vadd.f32 0.0, %v3331
        %v3333 = vpop.f32.mrf.mxu0
        %v3334 = vadd.f32 0.0, %v3333
        %3335 = vmatmul.bf16.gmra.mxu0 %v3250
        %v3336 = vpop.f32.mrf.mxu0
        %v3337 = vadd.f32 0.0, %v3336
        %v3338 = vpop.f32.mrf.mxu0
        %v3339 = vadd.f32 0.0, %v3338
        %3340 = vdwg.mxu0
        %v3341 = vadd.f32 %v3124, %v3262
        %v3342 = vadd.f32 %v3125, %v3264
        %v3343 = vadd.f32 %v3126, %v3267
        %v3344 = vadd.f32 %v3127, %v3269
        %v3345 = vadd.f32 %v3128, %v3272
        %v3346 = vadd.f32 %v3129, %v3274
        %v3347 = vadd.f32 %v3130, %v3277
        %v3348 = vadd.f32 %v3131, %v3279
        %v3349 = vadd.f32 %v3132, %v3282
        %v3350 = vadd.f32 %v3133, %v3284
        %v3351 = vadd.f32 %v3134, %v3287
        %v3352 = vadd.f32 %v3135, %v3289
        %v3353 = vadd.f32 %v3136, %v3292
        %v3354 = vadd.f32 %v3137, %v3294
        %v3355 = vadd.f32 %v3138, %v3297
        %v3356 = vadd.f32 %v3139, %v3299
        %v3357 = vadd.f32 %v3140, %v3302
        %v3358 = vadd.f32 %v3141, %v3304
        %v3359 = vadd.f32 %v3142, %v3307
        %v3360 = vadd.f32 %v3143, %v3309
        %v3361 = vadd.f32 %v3144, %v3312
        %v3362 = vadd.f32 %v3145, %v3314
        %v3363 = vadd.f32 %v3146, %v3317
        %v3364 = vadd.f32 %v3147, %v3319
        %v3365 = vadd.f32 %v3148, %v3322
        %v3366 = vadd.f32 %v3149, %v3324
        %v3367 = vadd.f32 %v3150, %v3327
        %v3368 = vadd.f32 %v3151, %v3329
        %v3369 = vadd.f32 %v3152, %v3332
        %v3370 = vadd.f32 %v3153, %v3334
        %v3371 = vadd.f32 %v3154, %v3337
        %v3372 = vadd.f32 %v3155, %v3339
        %v3373 = vpack.c.bf16 %v1670, %v1669
        %v3374 = vpack.c.bf16 %v1672, %v1671
        %v3375 = vpack.c.bf16 %v1674, %v1673
        %v3376 = vpack.c.bf16 %v1676, %v1675
        %v3377 = vpack.c.bf16 %v1678, %v1677
        %v3378 = vpack.c.bf16 %v1680, %v1679
        %v3379 = vpack.c.bf16 %v1682, %v1681
        %v3380 = vpack.c.bf16 %v1684, %v1683
        %v3381 = vpack.c.bf16 %v1686, %v1685
        %v3382 = vpack.c.bf16 %v1688, %v1687
        %v3383 = vpack.c.bf16 %v1690, %v1689
        %v3384 = vpack.c.bf16 %v1692, %v1691
        %v3385 = vpack.c.bf16 %v1694, %v1693
        %v3386 = vpack.c.bf16 %v1696, %v1695
        %v3387 = vpack.c.bf16 %v1698, %v1697
        %v3388 = vpack.c.bf16 %v1700, %v1699
        %v3389 = vld [vmem:[%s3 + $0x100] sm:$0xf]
        %v3390 = vld [vmem:[%s3 + $0x104] sm:$0xf]
        %v3391 = vld [vmem:[%s3 + $0x108] sm:$0xf]
        %v3392 = vld [vmem:[%s3 + $0x10c] sm:$0xf]
        %v3393 = vld [vmem:[%s3 + $0x110] sm:$0xf]
        %v3394 = vld [vmem:[%s3 + $0x114] sm:$0xf]
        %v3395 = vld [vmem:[%s3 + $0x118] sm:$0xf]
        %v3396 = vld [vmem:[%s3 + $0x11c] sm:$0xf]
        %v3405 = vunpack.c.l.b16 %v3389
        %v3406 = vunpack.c.l.b16 %v3390
        %v3407 = vunpack.c.l.b16 %v3391
        %v3408 = vunpack.c.l.b16 %v3392
        %v3409 = vunpack.c.l.b16 %v3393
        %v3410 = vunpack.c.l.b16 %v3394
        %v3411 = vunpack.c.l.b16 %v3395
        %v3412 = vunpack.c.l.b16 %v3396
        %v3413 = vpack.c.b16 %v3406, %v3405
        %v3414 = vpack.c.b16 %v3408, %v3407
        %v3415 = vpack.c.b16 %v3410, %v3409
        %v3416 = vpack.c.b16 %v3412, %v3411
        %v3422 = vsel %vm1145, %v3373, 0
        %v3425 = vsel %vm1145, %v3374, 0
        %v3428 = vsel %vm1145, %v3375, 0
        %v3431 = vsel %vm1145, %v3376, 0
        %v3434 = vsel %vm1145, %v3377, 0
        %v3437 = vsel %vm1145, %v3378, 0
        %v3440 = vsel %vm1145, %v3379, 0
        %v3443 = vsel %vm1145, %v3380, 0
        %v3446 = vsel %vm1145, %v3381, 0
        %v3449 = vsel %vm1145, %v3382, 0
        %v3452 = vsel %vm1145, %v3383, 0
        %v3455 = vsel %vm1145, %v3384, 0
        %v3458 = vsel %vm1145, %v3385, 0
        %v3461 = vsel %vm1145, %v3386, 0
        %v3464 = vsel %vm1145, %v3387, 0
        %v3467 = vsel %vm1145, %v3388, 0
        %3469 = vmatpush.bf16.msra.mxu0 0
        %3470 = vmatpush.bf16.msra.mxu0 0
        %3471 = vmatpush.bf16.msra.mxu0 0
        %3472 = vmatpush.bf16.msra.mxu0 0
        %3473 = vmatpush.bf16.msra.mxu0 %v3416
        %3474 = vmatpush.bf16.msra.mxu0 %v3415
        %3475 = vmatpush.bf16.msra.mxu0 %v3414
        %3476 = vmatpush.bf16.msra.mxu0 %v3413
        %3477 = vmatmul.bf16.gmra.mxu0 %v3422
        %v3478 = vpop.f32.mrf.mxu0
        %v3479 = vadd.f32 0.0, %v3478
        %v3480 = vpop.f32.mrf.mxu0
        %v3481 = vadd.f32 0.0, %v3480
        %3482 = vmatmul.bf16.gmra.mxu0 %v3425
        %v3483 = vpop.f32.mrf.mxu0
        %v3484 = vadd.f32 0.0, %v3483
        %v3485 = vpop.f32.mrf.mxu0
        %v3486 = vadd.f32 0.0, %v3485
        %3487 = vmatmul.bf16.gmra.mxu0 %v3428
        %v3488 = vpop.f32.mrf.mxu0
        %v3489 = vadd.f32 0.0, %v3488
        %v3490 = vpop.f32.mrf.mxu0
        %v3491 = vadd.f32 0.0, %v3490
        %3492 = vmatmul.bf16.gmra.mxu0 %v3431
        %v3493 = vpop.f32.mrf.mxu0
        %v3494 = vadd.f32 0.0, %v3493
        %v3495 = vpop.f32.mrf.mxu0
        %v3496 = vadd.f32 0.0, %v3495
        %3497 = vmatmul.bf16.gmra.mxu0 %v3434
        %v3498 = vpop.f32.mrf.mxu0
        %v3499 = vadd.f32 0.0, %v3498
        %v3500 = vpop.f32.mrf.mxu0
        %v3501 = vadd.f32 0.0, %v3500
        %3502 = vmatmul.bf16.gmra.mxu0 %v3437
        %v3503 = vpop.f32.mrf.mxu0
        %v3504 = vadd.f32 0.0, %v3503
        %v3505 = vpop.f32.mrf.mxu0
        %v3506 = vadd.f32 0.0, %v3505
        %3507 = vmatmul.bf16.gmra.mxu0 %v3440
        %v3508 = vpop.f32.mrf.mxu0
        %v3509 = vadd.f32 0.0, %v3508
        %v3510 = vpop.f32.mrf.mxu0
        %v3511 = vadd.f32 0.0, %v3510
        %3512 = vmatmul.bf16.gmra.mxu0 %v3443
        %v3513 = vpop.f32.mrf.mxu0
        %v3514 = vadd.f32 0.0, %v3513
        %v3515 = vpop.f32.mrf.mxu0
        %v3516 = vadd.f32 0.0, %v3515
        %3517 = vmatmul.bf16.gmra.mxu0 %v3446
        %v3518 = vpop.f32.mrf.mxu0
        %v3519 = vadd.f32 0.0, %v3518
        %v3520 = vpop.f32.mrf.mxu0
        %v3521 = vadd.f32 0.0, %v3520
        %3522 = vmatmul.bf16.gmra.mxu0 %v3449
        %v3523 = vpop.f32.mrf.mxu0
        %v3524 = vadd.f32 0.0, %v3523
        %v3525 = vpop.f32.mrf.mxu0
        %v3526 = vadd.f32 0.0, %v3525
        %3527 = vmatmul.bf16.gmra.mxu0 %v3452
        %v3528 = vpop.f32.mrf.mxu0
        %v3529 = vadd.f32 0.0, %v3528
        %v3530 = vpop.f32.mrf.mxu0
        %v3531 = vadd.f32 0.0, %v3530
        %3532 = vmatmul.bf16.gmra.mxu0 %v3455
        %v3533 = vpop.f32.mrf.mxu0
        %v3534 = vadd.f32 0.0, %v3533
        %v3535 = vpop.f32.mrf.mxu0
        %v3536 = vadd.f32 0.0, %v3535
        %3537 = vmatmul.bf16.gmra.mxu0 %v3458
        %v3538 = vpop.f32.mrf.mxu0
        %v3539 = vadd.f32 0.0, %v3538
        %v3540 = vpop.f32.mrf.mxu0
        %v3541 = vadd.f32 0.0, %v3540
        %3542 = vmatmul.bf16.gmra.mxu0 %v3461
        %v3543 = vpop.f32.mrf.mxu0
        %v3544 = vadd.f32 0.0, %v3543
        %v3545 = vpop.f32.mrf.mxu0
        %v3546 = vadd.f32 0.0, %v3545
        %3547 = vmatmul.bf16.gmra.mxu0 %v3464
        %v3548 = vpop.f32.mrf.mxu0
        %v3549 = vadd.f32 0.0, %v3548
        %v3550 = vpop.f32.mrf.mxu0
        %v3551 = vadd.f32 0.0, %v3550
        %3552 = vmatmul.bf16.gmra.mxu0 %v3467
        %v3553 = vpop.f32.mrf.mxu0
        %v3554 = vadd.f32 0.0, %v3553
        %v3555 = vpop.f32.mrf.mxu0
        %v3556 = vadd.f32 0.0, %v3555
        %3557 = vdwg.mxu0
        %v3558 = vadd.f32 %v3341, %v3479
        %v3559 = vadd.f32 %v3342, %v3481
        %v3560 = vadd.f32 %v3343, %v3484
        %v3561 = vadd.f32 %v3344, %v3486
        %v3562 = vadd.f32 %v3345, %v3489
        %v3563 = vadd.f32 %v3346, %v3491
        %v3564 = vadd.f32 %v3347, %v3494
        %v3565 = vadd.f32 %v3348, %v3496
        %v3566 = vadd.f32 %v3349, %v3499
        %v3567 = vadd.f32 %v3350, %v3501
        %v3568 = vadd.f32 %v3351, %v3504
        %v3569 = vadd.f32 %v3352, %v3506
        %v3570 = vadd.f32 %v3353, %v3509
        %v3571 = vadd.f32 %v3354, %v3511
        %v3572 = vadd.f32 %v3355, %v3514
        %v3573 = vadd.f32 %v3356, %v3516
        %v3574 = vadd.f32 %v3357, %v3519
        %v3575 = vadd.f32 %v3358, %v3521
        %v3576 = vadd.f32 %v3359, %v3524
        %v3577 = vadd.f32 %v3360, %v3526
        %v3578 = vadd.f32 %v3361, %v3529
        %v3579 = vadd.f32 %v3362, %v3531
        %v3580 = vadd.f32 %v3363, %v3534
        %v3581 = vadd.f32 %v3364, %v3536
        %v3582 = vadd.f32 %v3365, %v3539
        %v3583 = vadd.f32 %v3366, %v3541
        %v3584 = vadd.f32 %v3367, %v3544
        %v3585 = vadd.f32 %v3368, %v3546
        %v3586 = vadd.f32 %v3369, %v3549
        %v3587 = vadd.f32 %v3370, %v3551
        %v3588 = vadd.f32 %v3371, %v3554
        %v3589 = vadd.f32 %v3372, %v3556
        %v3590 = vand.u32 2147483647, %v3558
        %v3591 = vand.u32 2147483647, %v3559
        %v3592 = vand.u32 2147483647, %v3560
        %v3593 = vand.u32 2147483647, %v3561
        %v3594 = vand.u32 2147483647, %v3562
        %v3595 = vand.u32 2147483647, %v3563
        %v3596 = vand.u32 2147483647, %v3564
        %v3597 = vand.u32 2147483647, %v3565
        %v3598 = vand.u32 2147483647, %v3566
        %v3599 = vand.u32 2147483647, %v3567
        %v3600 = vand.u32 2147483647, %v3568
        %v3601 = vand.u32 2147483647, %v3569
        %v3602 = vand.u32 2147483647, %v3570
        %v3603 = vand.u32 2147483647, %v3571
        %v3604 = vand.u32 2147483647, %v3572
        %v3605 = vand.u32 2147483647, %v3573
        %v3606 = vand.u32 2147483647, %v3574
        %v3607 = vand.u32 2147483647, %v3575
        %v3608 = vand.u32 2147483647, %v3576
        %v3609 = vand.u32 2147483647, %v3577
        %v3610 = vand.u32 2147483647, %v3578
        %v3611 = vand.u32 2147483647, %v3579
        %v3612 = vand.u32 2147483647, %v3580
        %v3613 = vand.u32 2147483647, %v3581
        %v3614 = vand.u32 2147483647, %v3582
        %v3615 = vand.u32 2147483647, %v3583
        %v3616 = vand.u32 2147483647, %v3584
        %v3617 = vand.u32 2147483647, %v3585
        %v3618 = vand.u32 2147483647, %v3586
        %v3619 = vand.u32 2147483647, %v3587
        %v3620 = vand.u32 2147483647, %v3588
        %v3621 = vand.u32 2147483647, %v3589
        %v3622 = vsel %vm1145, %v3590, 0.0
        %v3623 = vsel %vm1145, %v3591, 0.0
        %v3624 = vadd.f32 %v3622, %v3623
        %v3625 = vsel %vm1145, %v3592, 0.0
        %v3626 = vadd.f32 %v3624, %v3625
        %v3627 = vsel %vm1145, %v3593, 0.0
        %v3628 = vadd.f32 %v3626, %v3627
        %v3629 = vsel %vm1145, %v3594, 0.0
        %v3630 = vadd.f32 %v3628, %v3629
        %v3631 = vsel %vm1145, %v3595, 0.0
        %v3632 = vadd.f32 %v3630, %v3631
        %v3633 = vsel %vm1145, %v3596, 0.0
        %v3634 = vadd.f32 %v3632, %v3633
        %v3635 = vsel %vm1145, %v3597, 0.0
        %v3636 = vadd.f32 %v3634, %v3635
        %v3637 = vsel %vm1145, %v3598, 0.0
        %v3638 = vadd.f32 %v3636, %v3637
        %v3639 = vsel %vm1145, %v3599, 0.0
        %v3640 = vadd.f32 %v3638, %v3639
        %v3641 = vsel %vm1145, %v3600, 0.0
        %v3642 = vadd.f32 %v3640, %v3641
        %v3643 = vsel %vm1145, %v3601, 0.0
        %v3644 = vadd.f32 %v3642, %v3643
        %v3645 = vsel %vm1145, %v3602, 0.0
        %v3646 = vadd.f32 %v3644, %v3645
        %v3647 = vsel %vm1145, %v3603, 0.0
        %v3648 = vadd.f32 %v3646, %v3647
        %v3649 = vsel %vm1145, %v3604, 0.0
        %v3650 = vadd.f32 %v3648, %v3649
        %v3651 = vsel %vm1145, %v3605, 0.0
        %v3652 = vadd.f32 %v3650, %v3651
        %v3653 = vsel %vm1145, %v3606, 0.0
        %v3654 = vadd.f32 %v3652, %v3653
        %v3655 = vsel %vm1145, %v3607, 0.0
        %v3656 = vadd.f32 %v3654, %v3655
        %v3657 = vsel %vm1145, %v3608, 0.0
        %v3658 = vadd.f32 %v3656, %v3657
        %v3659 = vsel %vm1145, %v3609, 0.0
        %v3660 = vadd.f32 %v3658, %v3659
        %v3661 = vsel %vm1145, %v3610, 0.0
        %v3662 = vadd.f32 %v3660, %v3661
        %v3663 = vsel %vm1145, %v3611, 0.0
        %v3664 = vadd.f32 %v3662, %v3663
        %v3665 = vsel %vm1145, %v3612, 0.0
        %v3666 = vadd.f32 %v3664, %v3665
        %v3667 = vsel %vm1145, %v3613, 0.0
        %v3668 = vadd.f32 %v3666, %v3667
        %v3669 = vsel %vm1145, %v3614, 0.0
        %v3670 = vadd.f32 %v3668, %v3669
        %v3671 = vsel %vm1145, %v3615, 0.0
        %v3672 = vadd.f32 %v3670, %v3671
        %v3673 = vsel %vm1145, %v3616, 0.0
        %v3674 = vadd.f32 %v3672, %v3673
        %v3675 = vsel %vm1145, %v3617, 0.0
        %v3676 = vadd.f32 %v3674, %v3675
        %v3677 = vsel %vm1145, %v3618, 0.0
        %v3678 = vadd.f32 %v3676, %v3677
        %v3679 = vsel %vm1145, %v3619, 0.0
        %v3680 = vadd.f32 %v3678, %v3679
        %v3681 = vsel %vm1145, %v3620, 0.0
        %v3682 = vadd.f32 %v3680, %v3681
        %v3683 = vsel %vm1145, %v3621, 0.0
        %v3684 = vadd.f32 %v3682, %v3683
        %v3685 = vrot.slane %v3684, 4
        %v3686 = vadd.f32 %v3684, %v3685
        %v3687 = vrot.slane %v3686, 2
        %v3688 = vadd.f32 %v3686, %v3687
        %v3689 = vrot.slane %v3688, 1
        %v3690 = vadd.f32 %v3688, %v3689
        %v3691 = vld [vmem:[%s506] sm:$0x1]
        %3693 = vrot.lane.b32.xlu0 %v3690, 64
        %v3694 = vpop.permute.xlu0 %3693
        %v3696 = vsel %vm1145, %v1214, %v3694
        %v3697 = vadd.f32 %v3691, %v3696
        %3698 = vst [vmem:[%s506] sm:$0x1] %v3697
        %p3699 = scmp.lt.s32.totalorder %s19, 1
        %s3700 = scalar_select %p3699, %s19, 1
        %s3701 = scalar_lea.vmem %s4, %s3700
        // Predicated region
        $region82: #{perceptual_loss2.1} parent=72 // pred_check
          %p3702 = pneg %p136
        $region83: #{perceptual_loss2.1} parent=72 // pred_check_branch
          %3704 = sbr.rel (%p3702) target = $region85
        $region84: #{perceptual_loss2.1} parent=72 // pred_region
          _
        $region85: #{perceptual_loss2.1} parent=72 // pred_fallthru
          _
      $region73: #{perceptual_loss2.1} parent=5 // pred_fallthru
        _
      %p3705 = scmp.le.s32.totalorder 2, %s10
      // Predicated region
      $region86: #{perceptual_loss2.1} parent=5 // pred_check
        %p3706 = pneg %p3705
      $region87: #{perceptual_loss2.1} parent=5 // pred_check_branch
        %3708 = sbr.rel (%p3706) target = $region89
      $region88: #{perceptual_loss2.1} parent=5 // pred_region
        %s3709 = ssub.s32 %s10, 2
        // Predicated region
        $region90: #{perceptual_loss2.1} parent=88 // pred_check
          %p3710 = pneg %p142
        $region91: #{perceptual_loss2.1} parent=88 // pred_check_branch
          %3712 = sbr.rel (%p3710) target = $region93
        $region92: #{perceptual_loss2.1} parent=88 // pred_region
          %p3713 = scmp.lt.s32.totalorder %s21, 1
          %s3714 = scalar_select %p3713, %s21, 1
          %s3715 = scalar_lea.vmem %s4, %s3714
        $region93: #{perceptual_loss2.1} parent=88 // pred_fallthru
          _
      $region89: #{perceptual_loss2.1} parent=5 // pred_fallthru
        _
    $region6: #{perceptual_loss2.1} parent=1 // loop_footer
      %s14 = sadd.s32 1, %s10
    $region7: #{perceptual_loss2.1} parent=1 // loop_footer_branch
      %9 = sbr.rel target = $region3
    $region8: #{perceptual_loss2.1} parent=1 // loop_exit
      _

</llo_original>
